<compile_context>
chip_gen: v5e
topology: v5e:2x2
jax: 0.10.0
libtpu: 0.0.40
codegen_flags: <defaults>
</compile_context>

<pallas_src>
import numpy as np
import jax
import jax.numpy as jnp
from jax.experimental import pallas as pl
from jax.experimental.pallas import tpu as pltpu

EPS = 1e-5
# Explicit scoped-VMEM budget: well above what the 32-image blocks need
# (~25 MiB peak), below v7x's 64 MiB physical; harmless on 128 MiB v5e/v6e.
VMEM_LIMIT_BYTES = 44 * 1024 * 1024
NEG_BIG = -1e30     # bias for padded classes -> exp() underflows to 0


# --------------------------------------------------------------------------- #
# Kernels
# --------------------------------------------------------------------------- #
def _conv_pool(p_ref, w_ref, b_ref):
    """Conv2d(3x3,VALID) + BN2d(eval, folded) + ReLU + MaxPool(2,2).

    p_ref: (4, R, K) bf16  im2col patches at the 4 taps of every 2x2 pool
                           window, rows ordered (image, pooled_i, pooled_j).
    w_ref: (K, Cout) bf16  BN-folded conv weight.
    b_ref: (1, Cout) f32   BN-folded bias.
    returns (R, Cout) f32  maxpool2x2(relu(bn(conv(x)))).
    """
    four, R, K = p_ref.shape
    # Single MXU call for all 4 pool taps: (4R, K) @ (K, Cout), f32 accumulate.
    y = jnp.dot(p_ref[...].reshape(four * R, K), w_ref[...],
                preferred_element_type=jnp.float32)
    y = y.reshape(four, R, y.shape[-1])
    y = jnp.maximum(jnp.maximum(y[0], y[1]), jnp.maximum(y[2], y[3]))
    # bias + ReLU commute with the tap max (bias is per-channel, ReLU monotone).
    return jnp.maximum(y + b_ref[...], 0.0)


def _conv_pool_kernel(p_ref, w_ref, b_ref, o_ref):
    """Layer-1 block: conv+bn+relu+pool, bf16 activations out."""
    o_ref[...] = _conv_pool(p_ref, w_ref, b_ref).astype(o_ref.dtype)


def _conv_pool_head_kernel(p_ref, w_ref, b_ref, s_ref, t_ref, wfc_ref, bfc_ref,
                           o_ref):
    """Layer-2 block fused with the head.

    p/w/b            : as in _conv_pool (layer-2 patches / folded weights).
    s_ref, t_ref     : (S, Cmid) f32   BN1d(eval) scale/shift in the kernel's
                                       (spatial, channel) feature order.
    wfc_ref          : (S, Cmid, Cpad) bf16  permuted fc weight.
    bfc_ref          : (1, Cpad) f32   fc bias, padded classes set to -1e30.
    o_ref            : (B, Cpad) f32   log-probabilities (padded classes junk).
    """
    a = _conv_pool(p_ref, w_ref, b_ref)                    # (B*S, Cmid) f32
    S, Cmid = s_ref.shape
    B = o_ref.shape[0]
    # Flatten is a pure relabel: rows of `a` are already (image, spatial).
    h = a.reshape(B, S, Cmid) * s_ref[...] + t_ref[...]    # BatchNorm1d (eval)
    h = jnp.maximum(h, 0.0).astype(jnp.bfloat16)           # ReLU, bf16 operand
    # Linear(1024 -> classes) as S small matmuls against the resident fc
    # weight block; avoids reshaping the (B,S,Cmid) slab into 1024 lanes.
    acc = jnp.zeros(o_ref.shape, jnp.float32)
    for spos in range(S):
        acc = acc + jnp.dot(h[:, spos, :], wfc_ref[spos],
                            preferred_element_type=jnp.float32)
    logits = acc + bfc_ref[...]
    m = jnp.max(logits, axis=-1, keepdims=True)
    lse = jnp.log(jnp.sum(jnp.exp(logits - m), axis=-1, keepdims=True)) + m
    o_ref[...] = logits - lse


# --------------------------------------------------------------------------- #
# Glue (plain JAX / numpy)
# --------------------------------------------------------------------------- #
def _pool_tap_patches(x):
    """x: (N, H, W, C) -> (4, N*HP*WP, 9*C) im2col patches at the 4 taps of
    every 2x2 pool window of the 3x3-VALID conv output grid (pool-floor
    positions only, so discarded conv positions are never computed)."""
    N, H, W, C = x.shape
    Ho, Wo = H - 2, W - 2
    HP, WP = Ho // 2, Wo // 2
    taps = []
    for dh in range(2):
        for dw in range(2):
            cols = []
            for di in range(3):
                for dj in range(3):
                    r0, c0 = dh + di, dw + dj
                    # input pixel (2i+dh+di, 2j+dw+dj), i<HP, j<WP
                    sl = x[:, r0:r0 + 2 * HP - 1:2, c0:c0 + 2 * WP - 1:2, :]
                    cols.append(sl)                        # (N, HP, WP, C)
            p = jnp.stack(cols, axis=3)                    # (N, HP, WP, 9, C)
            taps.append(p.reshape(N, HP * WP, 9 * C))
    patches = jnp.stack(taps, axis=0).reshape(4, N * HP * WP, 9 * C)
    return patches, (HP, WP)


def _fold_bn_conv(w, b, gamma, beta, mean, var):
    """Fold eval-mode BatchNorm2d into conv weight (bf16) / bias (f32)."""
    s = gamma * jax.lax.rsqrt(var + EPS)                   # (Cout,)
    w_f = (w * s).reshape(-1, w.shape[-1]).astype(jnp.bfloat16)   # (9*Cin, Cout)
    b_f = ((b - mean) * s + beta).reshape(1, -1).astype(jnp.float32)
    return w_f, b_f


def conv_block(x_nhwc, w, b, gamma, beta, mean, var, *, images_per_step):
    """Conv2d(3x3,VALID)+BN2d+ReLU+MaxPool2d(2,2), gridded over image chunks."""
    N, H, W_, Cin = x_nhwc.shape
    Cout = w.shape[-1]
    assert N % images_per_step == 0
    w_f, b_f = _fold_bn_conv(w, b, gamma, beta, mean, var)
    patches, (HP, WP) = _pool_tap_patches(x_nhwc.astype(jnp.bfloat16))
    K = 9 * Cin
    rows_per_img = HP * WP
    R = images_per_step * rows_per_img

    out = pl.pallas_call(
        _conv_pool_kernel,
        out_shape=jax.ShapeDtypeStruct((N * rows_per_img, Cout), jnp.bfloat16),
        grid=(N // images_per_step,),
        in_specs=[
            pl.BlockSpec((4, R, K), lambda c: (0, c, 0)),
            pl.BlockSpec((K, Cout), lambda c: (0, 0)),
            pl.BlockSpec((1, Cout), lambda c: (0, 0)),
        ],
        out_specs=pl.BlockSpec((R, Cout), lambda c: (c, 0)),
        compiler_params=pltpu.CompilerParams(
            dimension_semantics=("parallel",),
            vmem_limit_bytes=VMEM_LIMIT_BYTES),
    )(patches, w_f, b_f)
    return out.reshape(N, HP, WP, Cout)


def conv_head_block(x_nhwc, w, b, gamma, beta, mean, var,
                    s1d, t1d, wfc_p, bfc, num_classes, *, images_per_step):
    """conv2+BN2d+ReLU+MaxPool fused with flatten+BN1d+ReLU+fc+log_softmax."""
    N, H, W_, Cin = x_nhwc.shape
    Cmid = w.shape[-1]
    assert N % images_per_step == 0
    w_f, b_f = _fold_bn_conv(w, b, gamma, beta, mean, var)
    patches, (HP, WP) = _pool_tap_patches(x_nhwc.astype(jnp.bfloat16))
    K = 9 * Cin
    S = HP * WP
    R = images_per_step * S
    Cpad = ((num_classes + 127) // 128) * 128              # lane-dense output

    # Head parameters in the kernel's (spatial, channel) feature order.
    s2 = s1d.reshape(S, Cmid).astype(jnp.float32)
    t2 = t1d.reshape(S, Cmid).astype(jnp.float32)
    wfc3 = jnp.pad(wfc_p.astype(jnp.float32),
                   ((0, 0), (0, Cpad - num_classes)))
    wfc3 = wfc3.reshape(S, Cmid, Cpad).astype(jnp.bfloat16)
    bfc_pad = jnp.full((1, Cpad), NEG_BIG, jnp.float32)
    bfc_pad = bfc_pad.at[0, :num_classes].set(bfc.astype(jnp.float32))

    out = pl.pallas_call(
        _conv_pool_head_kernel,
        out_shape=jax.ShapeDtypeStruct((N, Cpad), jnp.float32),
        grid=(N // images_per_step,),
        in_specs=[
            pl.BlockSpec((4, R, K), lambda c: (0, c, 0)),
            pl.BlockSpec((K, Cmid), lambda c: (0, 0)),
            pl.BlockSpec((1, Cmid), lambda c: (0, 0)),
            pl.BlockSpec((S, Cmid), lambda c: (0, 0)),
            pl.BlockSpec((S, Cmid), lambda c: (0, 0)),
            pl.BlockSpec((S, Cmid, Cpad), lambda c: (0, 0, 0)),
            pl.BlockSpec((1, Cpad), lambda c: (0, 0)),
        ],
        out_specs=pl.BlockSpec((images_per_step, Cpad), lambda c: (c, 0)),
        compiler_params=pltpu.CompilerParams(
            dimension_semantics=("parallel",),
            vmem_limit_bytes=VMEM_LIMIT_BYTES),
    )(patches, w_f, b_f, s2, t2, wfc3, bfc_pad)
    return out[:, :num_classes]


def letternet_slim_forward(x_nchw, p, *, images_per_step=32):
    """Full LetterNetSlim forward (eval mode).  x_nchw: (N, Cin, 24, 24)."""
    x = jnp.transpose(x_nchw, (0, 2, 3, 1)).astype(jnp.float32)   # NCHW -> NHWC
    N = x.shape[0]
    # Chunks must be multiples of 16 images (bf16 sublane tiling; 121 rows/img).
    chunk = max(16, (min(images_per_step, ((N + 15) // 16) * 16) // 16) * 16)
    Npad = ((N + chunk - 1) // chunk) * chunk
    if Npad != N:
        x = jnp.pad(x, ((0, Npad - N), (0, 0), (0, 0), (0, 0)))

    # conv1 + bn1 + relu + maxpool  -> (Npad, 11, 11, 32) bf16
    h = conv_block(x, p["w1"], p["b1"], p["g1"], p["be1"], p["m1"], p["v1"],
                   images_per_step=chunk)

    # PyTorch flattens NCHW (c*HW + i*W + j); permute the BN1d / fc parameters
    # once to the kernel's NHWC (spatial-major) feature order instead of
    # transposing the activations.
    HP2, WP2 = (h.shape[1] - 2) // 2, (h.shape[2] - 2) // 2
    Cc = p["w2"].shape[-1]
    D = Cc * HP2 * WP2
    perm = np.transpose(np.arange(D).reshape(Cc, HP2, WP2),
                        (1, 2, 0)).reshape(-1)             # perm[f_nhwc] = f_nchw
    inv = p["gf"][perm] * jax.lax.rsqrt(p["vf"][perm] + EPS)
    s1d = inv
    t1d = p["bef"][perm] - p["mf"][perm] * inv
    num_classes = p["wfc"].shape[-1]

    # Dropout2d / Dropout: identity in eval mode.
    out = conv_head_block(h, p["w2"], p["b2"], p["g2"], p["be2"], p["m2"],
                          p["v2"], s1d, t1d, p["wfc"][perm, :], p["bfc"],
                          num_classes, images_per_step=chunk)
    return out[:N]


# --------------------------------------------------------------------------- #
# Deterministic parameter init (synthetic; shapes match the PyTorch module)
# --------------------------------------------------------------------------- #
def init_params(key, input_channels=1, num_classes=10):
    ks = list(jax.random.split(key, 24))
    nrm = lambda k, s, sc: sc * jax.random.normal(k, s, jnp.float32)
    p = {}
    # conv1: Conv2d(in, 32, 3) + BatchNorm2d(32)
    p["w1"] = nrm(ks[0], (3, 3, input_channels, 32), 0.3)
    p["b1"] = nrm(ks[1], (32,), 0.1)
    p["g1"] = 1.0 + nrm(ks[2], (32,), 0.1)
    p["be1"] = nrm(ks[3], (32,), 0.1)
    p["m1"] = nrm(ks[4], (32,), 0.1)
    p["v1"] = 0.5 + jax.random.uniform(ks[5], (32,), jnp.float32)
    # conv2: Conv2d(32, 64, 3) + BatchNorm2d(64)
    p["w2"] = nrm(ks[6], (3, 3, 32, 64), 0.08)
    p["b2"] = nrm(ks[7], (64,), 0.1)
    p["g2"] = 1.0 + nrm(ks[8], (64,), 0.1)
    p["be2"] = nrm(ks[9], (64,), 0.1)
    p["m2"] = nrm(ks[10], (64,), 0.1)
    p["v2"] = 0.5 + jax.random.uniform(ks[11], (64,), jnp.float32)
    # BatchNorm1d(1024)
    p["gf"] = 1.0 + nrm(ks[12], (1024,), 0.1)
    p["bef"] = nrm(ks[13], (1024,), 0.1)
    p["mf"] = nrm(ks[14], (1024,), 0.1)
    p["vf"] = 0.5 + jax.random.uniform(ks[15], (1024,), jnp.float32)
    # fc: Linear(1024, num_classes)
    p["wfc"] = nrm(ks[16], (1024, num_classes), 0.03)
    p["bfc"] = nrm(ks[17], (num_classes,), 0.1)
    return p


# --------------------------------------------------------------------------- #
# Pure-JAX reference (for verification only)
# --------------------------------------------------------------------------- #
def reference_forward(x_nchw, p):
    x = jnp.transpose(x_nchw, (0, 2, 3, 1)).astype(jnp.float32)
    HI = jax.lax.Precision.HIGHEST

    def conv(x, w, b):
        y = jax.lax.conv_general_dilated(
            x, w, (1, 1), "VALID",
            dimension_numbers=("NHWC", "HWIO", "NHWC"), precision=HI)
        return y + b

    def bn(x, g, be, m, v):
        return (x - m) * jax.lax.rsqrt(v + EPS) * g + be

    def pool(x):
        return jax.lax.reduce_window(x, -jnp.inf, jax.lax.max,
                                     (1, 2, 2, 1), (1, 2, 2, 1), "VALID")

    h = pool(jnp.maximum(bn(conv(x, p["w1"], p["b1"]),
                            p["g1"], p["be1"], p["m1"], p["v1"]), 0.0))
    h = pool(jnp.maximum(bn(conv(h, p["w2"], p["b2"]),
                            p["g2"], p["be2"], p["m2"], p["v2"]), 0.0))
    N = h.shape[0]
    f = jnp.transpose(h, (0, 3, 1, 2)).reshape(N, -1)
    f = jnp.maximum(bn(f, p["gf"], p["bef"], p["mf"], p["vf"]), 0.0)
    logits = jnp.dot(f, p["wfc"], precision=HI) + p["bfc"]
    return jax.nn.log_softmax(logits, axis=-1)


# --------------------------------------------------------------------------- #
if __name__ == "__main__":
    key = jax.random.PRNGKey(0)
    kp, kx = jax.random.split(key)
    params = init_params(kp, input_channels=1, num_classes=10)

    # 24x24 single-channel input => 64 * 4 * 4 = 1024 flattened features,
    # exactly what LinearFeatures' Flatten(1024) expects.
    x = jax.random.normal(kx, (2, 1, 24, 24), jnp.float32)   # NCHW like PyTorch

    fwd = jax.jit(lambda xx: letternet_slim_forward(xx, params))
    out = jax.block_until_ready(fwd(x))
    assert out.shape == (2, 10), out.shape

    ref = reference_forward(x, params)
    # Kernels use bf16 MXU operands (DEFAULT precision, f32 accumulate), so
    # allow a bf16-sized tolerance against the f32 HIGHEST-precision reference.
    np.testing.assert_allclose(np.asarray(out), np.asarray(ref),
                               atol=5e-2, rtol=5e-2)
    print("KERNEL_OK")
</pallas_src>

<mosaic_0001>
module attributes {stable_mosaic.version = 11 : i64} {
  func.func @_conv_pool_kernel(%arg0: i32, %arg1: memref<4x1936x9xbf16, #tpu.memory_space<vmem>>, %arg2: memref<9x32xbf16, #tpu.memory_space<vmem>>, %arg3: memref<1x32xf32, #tpu.memory_space<vmem>>, %arg4: memref<1936x32xbf16, #tpu.memory_space<vmem>>) attributes {dimension_semantics = [#tpu.dimension_semantics<parallel>], iteration_bounds = array<i64: 1>, scalar_prefetch = 0 : i64, scratch_operands = 0 : i64, tpu.core_type = #tpu.core_type<tc>, window_params = [{transform_indices = @transform_0, window_bounds = array<i64: 4, 1936, 9>}, {pipeline_mode = #tpu.pipeline_mode<synchronous>, transform_indices = @transform_1, window_bounds = array<i64: 9, 32>}, {pipeline_mode = #tpu.pipeline_mode<synchronous>, transform_indices = @transform_2, window_bounds = array<i64: 1, 32>}, {transform_indices = @transform_3, window_bounds = array<i64: 1936, 32>}]} {
    %c0 = arith.constant 0 : index
    %c0_0 = arith.constant 0 : index
    %c0_1 = arith.constant 0 : index
    %0 = vector.load %arg1[%c0, %c0_0, %c0_1] : memref<4x1936x9xbf16, #tpu.memory_space<vmem>>, vector<4x1936x9xbf16>
    %1 = vector.shape_cast %0 : vector<4x1936x9xbf16> to vector<7744x9xbf16>
    %c0_2 = arith.constant 0 : index
    %c0_3 = arith.constant 0 : index
    %2 = vector.load %arg2[%c0_2, %c0_3] : memref<9x32xbf16, #tpu.memory_space<vmem>>, vector<9x32xbf16>
    %cst = arith.constant dense<0.000000e+00> : vector<7744x32xf32>
    %3 = tpu.matmul %1, %2, %cst {dimension_numbers = #tpu.dot_dimension_numbers<[1], [0], [0], [1], [0, 0, 1, 1], [], []>} : vector<7744x9xbf16>, vector<9x32xbf16>, vector<7744x32xf32> -> vector<7744x32xf32>
    %4 = vector.shape_cast %3 : vector<7744x32xf32> to vector<4x1936x32xf32>
    %5 = vector.extract_strided_slice %4 {offsets = [0, 0, 0], sizes = [1, 1936, 32], strides = [1, 1, 1]} : vector<4x1936x32xf32> to vector<1x1936x32xf32>
    %6 = vector.shape_cast %5 : vector<1x1936x32xf32> to vector<1936x32xf32>
    %7 = vector.extract_strided_slice %4 {offsets = [1, 0, 0], sizes = [1, 1936, 32], strides = [1, 1, 1]} : vector<4x1936x32xf32> to vector<1x1936x32xf32>
    %8 = vector.shape_cast %7 : vector<1x1936x32xf32> to vector<1936x32xf32>
    %9 = arith.maximumf %6, %8 : vector<1936x32xf32>
    %10 = vector.extract_strided_slice %4 {offsets = [2, 0, 0], sizes = [1, 1936, 32], strides = [1, 1, 1]} : vector<4x1936x32xf32> to vector<1x1936x32xf32>
    %11 = vector.shape_cast %10 : vector<1x1936x32xf32> to vector<1936x32xf32>
    %12 = vector.extract_strided_slice %4 {offsets = [3, 0, 0], sizes = [1, 1936, 32], strides = [1, 1, 1]} : vector<4x1936x32xf32> to vector<1x1936x32xf32>
    %13 = vector.shape_cast %12 : vector<1x1936x32xf32> to vector<1936x32xf32>
    %14 = arith.maximumf %11, %13 : vector<1936x32xf32>
    %15 = arith.maximumf %9, %14 : vector<1936x32xf32>
    %c0_4 = arith.constant 0 : index
    %c0_5 = arith.constant 0 : index
    %16 = vector.load %arg3[%c0_4, %c0_5] : memref<1x32xf32, #tpu.memory_space<vmem>>, vector<1x32xf32>
    %17 = vector.broadcast %16 : vector<1x32xf32> to vector<1936x32xf32>
    %18 = arith.addf %15, %17 : vector<1936x32xf32>
    %cst_6 = arith.constant 0.000000e+00 : f32
    %19 = vector.broadcast %cst_6 : f32 to vector<1936x32xf32>
    %20 = arith.maximumf %18, %19 : vector<1936x32xf32>
    %21 = arith.truncf %20 : vector<1936x32xf32> to vector<1936x32xbf16>
    %c0_7 = arith.constant 0 : index
    %c0_8 = arith.constant 0 : index
    %22 = vector.load %arg4[%c0_7, %c0_8] : memref<1936x32xbf16, #tpu.memory_space<vmem>>, vector<1936x32xbf16>
    tpu.vector_store %arg4[%c0_7, %c0_8], %21 {strides = array<i32>} : memref<1936x32xbf16, #tpu.memory_space<vmem>>, vector<1936x32xbf16>,
    return
  }
  func.func @transform_0(%arg0: i32) -> (i32, i32, i32) {
    %c0_i32 = arith.constant 0 : i32
    %c0_i32_0 = arith.constant 0 : i32
    %c0_i32_1 = arith.constant 0 : i32
    return %c0_i32, %arg0, %c0_i32_0 : i32, i32, i32
  }
  func.func @transform_1(%arg0: i32) -> (i32, i32) {
    %c0_i32 = arith.constant 0 : i32
    %c0_i32_0 = arith.constant 0 : i32
    %c0_i32_1 = arith.constant 0 : i32
    return %c0_i32, %c0_i32_0 : i32, i32
  }
  func.func @transform_2(%arg0: i32) -> (i32, i32) {
    %c0_i32 = arith.constant 0 : i32
    %c0_i32_0 = arith.constant 0 : i32
    %c0_i32_1 = arith.constant 0 : i32
    return %c0_i32, %c0_i32_0 : i32, i32
  }
  func.func @transform_3(%arg0: i32) -> (i32, i32) {
    %c0_i32 = arith.constant 0 : i32
    %c0_i32_0 = arith.constant 0 : i32
    return %arg0, %c0_i32 : i32, i32
  }
}

module attributes {stable_mosaic.version = 11 : i64} {
  func.func @_conv_pool_head_kernel(%arg0: i32, %arg1: memref<4x256x288xbf16, #tpu.memory_space<vmem>>, %arg2: memref<288x64xbf16, #tpu.memory_space<vmem>>, %arg3: memref<1x64xf32, #tpu.memory_space<vmem>>, %arg4: memref<16x64xf32, #tpu.memory_space<vmem>>, %arg5: memref<16x64xf32, #tpu.memory_space<vmem>>, %arg6: memref<16x64x128xbf16, #tpu.memory_space<vmem>>, %arg7: memref<1x128xf32, #tpu.memory_space<vmem>>, %arg8: memref<16x128xf32, #tpu.memory_space<vmem>>) attributes {dimension_semantics = [#tpu.dimension_semantics<parallel>], iteration_bounds = array<i64: 1>, scalar_prefetch = 0 : i64, scratch_operands = 0 : i64, tpu.core_type = #tpu.core_type<tc>, window_params = [{transform_indices = @transform_0, window_bounds = array<i64: 4, 256, 288>}, {pipeline_mode = #tpu.pipeline_mode<synchronous>, transform_indices = @transform_1, window_bounds = array<i64: 288, 64>}, {pipeline_mode = #tpu.pipeline_mode<synchronous>, transform_indices = @transform_2, window_bounds = array<i64: 1, 64>}, {pipeline_mode = #tpu.pipeline_mode<synchronous>, transform_indices = @transform_3, window_bounds = array<i64: 16, 64>}, {pipeline_mode = #tpu.pipeline_mode<synchronous>, transform_indices = @transform_4, window_bounds = array<i64: 16, 64>}, {pipeline_mode = #tpu.pipeline_mode<synchronous>, transform_indices = @transform_5, window_bounds = array<i64: 16, 64, 128>}, {pipeline_mode = #tpu.pipeline_mode<synchronous>, transform_indices = @transform_6, window_bounds = array<i64: 1, 128>}, {transform_indices = @transform_7, window_bounds = array<i64: 16, 128>}]} {
    %c0 = arith.constant 0 : index
    %c0_0 = arith.constant 0 : index
    %c0_1 = arith.constant 0 : index
    %0 = vector.load %arg1[%c0, %c0_0, %c0_1] : memref<4x256x288xbf16, #tpu.memory_space<vmem>>, vector<4x256x288xbf16>
    %1 = vector.shape_cast %0 : vector<4x256x288xbf16> to vector<1024x288xbf16>
    %c0_2 = arith.constant 0 : index
    %c0_3 = arith.constant 0 : index
    %2 = vector.load %arg2[%c0_2, %c0_3] : memref<288x64xbf16, #tpu.memory_space<vmem>>, vector<288x64xbf16>
    %cst = arith.constant dense<0.000000e+00> : vector<1024x64xf32>
    %3 = tpu.matmul %1, %2, %cst {dimension_numbers = #tpu.dot_dimension_numbers<[1], [0], [0], [1], [0, 0, 1, 1], [], []>} : vector<1024x288xbf16>, vector<288x64xbf16>, vector<1024x64xf32> -> vector<1024x64xf32>
    %4 = vector.shape_cast %3 : vector<1024x64xf32> to vector<4x256x64xf32>
    %5 = vector.extract_strided_slice %4 {offsets = [0, 0, 0], sizes = [1, 256, 64], strides = [1, 1, 1]} : vector<4x256x64xf32> to vector<1x256x64xf32>
    %6 = vector.shape_cast %5 : vector<1x256x64xf32> to vector<256x64xf32>
    %7 = vector.extract_strided_slice %4 {offsets = [1, 0, 0], sizes = [1, 256, 64], strides = [1, 1, 1]} : vector<4x256x64xf32> to vector<1x256x64xf32>
    %8 = vector.shape_cast %7 : vector<1x256x64xf32> to vector<256x64xf32>
    %9 = arith.maximumf %6, %8 : vector<256x64xf32>
    %10 = vector.extract_strided_slice %4 {offsets = [2, 0, 0], sizes = [1, 256, 64], strides = [1, 1, 1]} : vector<4x256x64xf32> to vector<1x256x64xf32>
    %11 = vector.shape_cast %10 : vector<1x256x64xf32> to vector<256x64xf32>
    %12 = vector.extract_strided_slice %4 {offsets = [3, 0, 0], sizes = [1, 256, 64], strides = [1, 1, 1]} : vector<4x256x64xf32> to vector<1x256x64xf32>
    %13 = vector.shape_cast %12 : vector<1x256x64xf32> to vector<256x64xf32>
    %14 = arith.maximumf %11, %13 : vector<256x64xf32>
    %15 = arith.maximumf %9, %14 : vector<256x64xf32>
    %c0_4 = arith.constant 0 : index
    %c0_5 = arith.constant 0 : index
    %16 = vector.load %arg3[%c0_4, %c0_5] : memref<1x64xf32, #tpu.memory_space<vmem>>, vector<1x64xf32>
    %17 = vector.broadcast %16 : vector<1x64xf32> to vector<256x64xf32>
    %18 = arith.addf %15, %17 : vector<256x64xf32>
    %cst_6 = arith.constant 0.000000e+00 : f32
    %19 = vector.broadcast %cst_6 : f32 to vector<256x64xf32>
    %20 = arith.maximumf %18, %19 : vector<256x64xf32>
    %21 = vector.shape_cast %20 : vector<256x64xf32> to vector<16x16x64xf32>
    %c0_7 = arith.constant 0 : index
    %c0_8 = arith.constant 0 : index
    %22 = vector.load %arg4[%c0_7, %c0_8] : memref<16x64xf32, #tpu.memory_space<vmem>>, vector<16x64xf32>
    %23 = vector.shape_cast %22 : vector<16x64xf32> to vector<1x16x64xf32>
    %24 = vector.broadcast %23 : vector<1x16x64xf32> to vector<16x16x64xf32>
    %25 = arith.mulf %21, %24 : vector<16x16x64xf32>
    %c0_9 = arith.constant 0 : index
    %c0_10 = arith.constant 0 : index
    %26 = vector.load %arg5[%c0_9, %c0_10] : memref<16x64xf32, #tpu.memory_space<vmem>>, vector<16x64xf32>
    %27 = vector.shape_cast %26 : vector<16x64xf32> to vector<1x16x64xf32>
    %28 = vector.broadcast %27 : vector<1x16x64xf32> to vector<16x16x64xf32>
    %29 = arith.addf %25, %28 : vector<16x16x64xf32>
    %cst_11 = arith.constant 0.000000e+00 : f32
    %30 = vector.broadcast %cst_11 : f32 to vector<16x16x64xf32>
    %31 = arith.maximumf %29, %30 : vector<16x16x64xf32>
    %32 = arith.truncf %31 : vector<16x16x64xf32> to vector<16x16x64xbf16>
    %cst_12 = arith.constant 0.000000e+00 : f32
    %33 = vector.broadcast %cst_12 : f32 to vector<16x128xf32>
    %34 = vector.extract_strided_slice %32 {offsets = [0, 0, 0], sizes = [16, 1, 64], strides = [1, 1, 1]} : vector<16x16x64xbf16> to vector<16x1x64xbf16>
    %35 = vector.shape_cast %34 : vector<16x1x64xbf16> to vector<16x64xbf16>
    %c0_13 = arith.constant 0 : index
    %c0_14 = arith.constant 0 : index
    %c0_15 = arith.constant 0 : index
    %36 = vector.load %arg6[%c0_13, %c0_14, %c0_15] : memref<16x64x128xbf16, #tpu.memory_space<vmem>>, vector<1x64x128xbf16>
    %37 = vector.shape_cast %36 : vector<1x64x128xbf16> to vector<64x128xbf16>
    %cst_16 = arith.constant dense<0.000000e+00> : vector<16x128xf32>
    %38 = tpu.matmul %35, %37, %cst_16 {dimension_numbers = #tpu.dot_dimension_numbers<[1], [0], [0], [1], [0, 0, 1, 1], [], []>} : vector<16x64xbf16>, vector<64x128xbf16>, vector<16x128xf32> -> vector<16x128xf32>
    %39 = arith.addf %33, %38 : vector<16x128xf32>
    %40 = vector.extract_strided_slice %32 {offsets = [0, 1, 0], sizes = [16, 1, 64], strides = [1, 1, 1]} : vector<16x16x64xbf16> to vector<16x1x64xbf16>
    %41 = vector.shape_cast %40 : vector<16x1x64xbf16> to vector<16x64xbf16>
    %c1 = arith.constant 1 : index
    %c0_17 = arith.constant 0 : index
    %c0_18 = arith.constant 0 : index
    %42 = vector.load %arg6[%c1, %c0_17, %c0_18] : memref<16x64x128xbf16, #tpu.memory_space<vmem>>, vector<1x64x128xbf16>
    %43 = vector.shape_cast %42 : vector<1x64x128xbf16> to vector<64x128xbf16>
    %cst_19 = arith.constant dense<0.000000e+00> : vector<16x128xf32>
    %44 = tpu.matmul %41, %43, %cst_19 {dimension_numbers = #tpu.dot_dimension_numbers<[1], [0], [0], [1], [0, 0, 1, 1], [], []>} : vector<16x64xbf16>, vector<64x128xbf16>, vector<16x128xf32> -> vector<16x128xf32>
    %45 = arith.addf %39, %44 : vector<16x128xf32>
    %46 = vector.extract_strided_slice %32 {offsets = [0, 2, 0], sizes = [16, 1, 64], strides = [1, 1, 1]} : vector<16x16x64xbf16> to vector<16x1x64xbf16>
    %47 = vector.shape_cast %46 : vector<16x1x64xbf16> to vector<16x64xbf16>
    %c2 = arith.constant 2 : index
    %c0_20 = arith.constant 0 : index
    %c0_21 = arith.constant 0 : index
    %48 = vector.load %arg6[%c2, %c0_20, %c0_21] : memref<16x64x128xbf16, #tpu.memory_space<vmem>>, vector<1x64x128xbf16>
    %49 = vector.shape_cast %48 : vector<1x64x128xbf16> to vector<64x128xbf16>
    %cst_22 = arith.constant dense<0.000000e+00> : vector<16x128xf32>
    %50 = tpu.matmul %47, %49, %cst_22 {dimension_numbers = #tpu.dot_dimension_numbers<[1], [0], [0], [1], [0, 0, 1, 1], [], []>} : vector<16x64xbf16>, vector<64x128xbf16>, vector<16x128xf32> -> vector<16x128xf32>
    %51 = arith.addf %45, %50 : vector<16x128xf32>
    %52 = vector.extract_strided_slice %32 {offsets = [0, 3, 0], sizes = [16, 1, 64], strides = [1, 1, 1]} : vector<16x16x64xbf16> to vector<16x1x64xbf16>
    %53 = vector.shape_cast %52 : vector<16x1x64xbf16> to vector<16x64xbf16>
    %c3 = arith.constant 3 : index
    %c0_23 = arith.constant 0 : index
    %c0_24 = arith.constant 0 : index
    %54 = vector.load %arg6[%c3, %c0_23, %c0_24] : memref<16x64x128xbf16, #tpu.memory_space<vmem>>, vector<1x64x128xbf16>
    %55 = vector.shape_cast %54 : vector<1x64x128xbf16> to vector<64x128xbf16>
    %cst_25 = arith.constant dense<0.000000e+00> : vector<16x128xf32>
    %56 = tpu.matmul %53, %55, %cst_25 {dimension_numbers = #tpu.dot_dimension_numbers<[1], [0], [0], [1], [0, 0, 1, 1], [], []>} : vector<16x64xbf16>, vector<64x128xbf16>, vector<16x128xf32> -> vector<16x128xf32>
    %57 = arith.addf %51, %56 : vector<16x128xf32>
    %58 = vector.extract_strided_slice %32 {offsets = [0, 4, 0], sizes = [16, 1, 64], strides = [1, 1, 1]} : vector<16x16x64xbf16> to vector<16x1x64xbf16>
    %59 = vector.shape_cast %58 : vector<16x1x64xbf16> to vector<16x64xbf16>
    %c4 = arith.constant 4 : index
    %c0_26 = arith.constant 0 : index
    %c0_27 = arith.constant 0 : index
    %60 = vector.load %arg6[%c4, %c0_26, %c0_27] : memref<16x64x128xbf16, #tpu.memory_space<vmem>>, vector<1x64x128xbf16>
    %61 = vector.shape_cast %60 : vector<1x64x128xbf16> to vector<64x128xbf16>
    %cst_28 = arith.constant dense<0.000000e+00> : vector<16x128xf32>
    %62 = tpu.matmul %59, %61, %cst_28 {dimension_numbers = #tpu.dot_dimension_numbers<[1], [0], [0], [1], [0, 0, 1, 1], [], []>} : vector<16x64xbf16>, vector<64x128xbf16>, vector<16x128xf32> -> vector<16x128xf32>
    %63 = arith.addf %57, %62 : vector<16x128xf32>
    %64 = vector.extract_strided_slice %32 {offsets = [0, 5, 0], sizes = [16, 1, 64], strides = [1, 1, 1]} : vector<16x16x64xbf16> to vector<16x1x64xbf16>
    %65 = vector.shape_cast %64 : vector<16x1x64xbf16> to vector<16x64xbf16>
    %c5 = arith.constant 5 : index
    %c0_29 = arith.constant 0 : index
    %c0_30 = arith.constant 0 : index
    %66 = vector.load %arg6[%c5, %c0_29, %c0_30] : memref<16x64x128xbf16, #tpu.memory_space<vmem>>, vector<1x64x128xbf16>
    %67 = vector.shape_cast %66 : vector<1x64x128xbf16> to vector<64x128xbf16>
    %cst_31 = arith.constant dense<0.000000e+00> : vector<16x128xf32>
    %68 = tpu.matmul %65, %67, %cst_31 {dimension_numbers = #tpu.dot_dimension_numbers<[1], [0], [0], [1], [0, 0, 1, 1], [], []>} : vector<16x64xbf16>, vector<64x128xbf16>, vector<16x128xf32> -> vector<16x128xf32>
    %69 = arith.addf %63, %68 : vector<16x128xf32>
    %70 = vector.extract_strided_slice %32 {offsets = [0, 6, 0], sizes = [16, 1, 64], strides = [1, 1, 1]} : vector<16x16x64xbf16> to vector<16x1x64xbf16>
    %71 = vector.shape_cast %70 : vector<16x1x64xbf16> to vector<16x64xbf16>
    %c6 = arith.constant 6 : index
    %c0_32 = arith.constant 0 : index
    %c0_33 = arith.constant 0 : index
    %72 = vector.load %arg6[%c6, %c0_32, %c0_33] : memref<16x64x128xbf16, #tpu.memory_space<vmem>>, vector<1x64x128xbf16>
    %73 = vector.shape_cast %72 : vector<1x64x128xbf16> to vector<64x128xbf16>
    %cst_34 = arith.constant dense<0.000000e+00> : vector<16x128xf32>
    %74 = tpu.matmul %71, %73, %cst_34 {dimension_numbers = #tpu.dot_dimension_numbers<[1], [0], [0], [1], [0, 0, 1, 1], [], []>} : vector<16x64xbf16>, vector<64x128xbf16>, vector<16x128xf32> -> vector<16x128xf32>
    %75 = arith.addf %69, %74 : vector<16x128xf32>
    %76 = vector.extract_strided_slice %32 {offsets = [0, 7, 0], sizes = [16, 1, 64], strides = [1, 1, 1]} : vector<16x16x64xbf16> to vector<16x1x64xbf16>
    %77 = vector.shape_cast %76 : vector<16x1x64xbf16> to vector<16x64xbf16>
    %c7 = arith.constant 7 : index
    %c0_35 = arith.constant 0 : index
    %c0_36 = arith.constant 0 : index
    %78 = vector.load %arg6[%c7, %c0_35, %c0_36] : memref<16x64x128xbf16, #tpu.memory_space<vmem>>, vector<1x64x128xbf16>
    %79 = vector.shape_cast %78 : vector<1x64x128xbf16> to vector<64x128xbf16>
    %cst_37 = arith.constant dense<0.000000e+00> : vector<16x128xf32>
    %80 = tpu.matmul %77, %79, %cst_37 {dimension_numbers = #tpu.dot_dimension_numbers<[1], [0], [0], [1], [0, 0, 1, 1], [], []>} : vector<16x64xbf16>, vector<64x128xbf16>, vector<16x128xf32> -> vector<16x128xf32>
    %81 = arith.addf %75, %80 : vector<16x128xf32>
    %82 = vector.extract_strided_slice %32 {offsets = [0, 8, 0], sizes = [16, 1, 64], strides = [1, 1, 1]} : vector<16x16x64xbf16> to vector<16x1x64xbf16>
    %83 = vector.shape_cast %82 : vector<16x1x64xbf16> to vector<16x64xbf16>
    %c8 = arith.constant 8 : index
    %c0_38 = arith.constant 0 : index
    %c0_39 = arith.constant 0 : index
    %84 = vector.load %arg6[%c8, %c0_38, %c0_39] : memref<16x64x128xbf16, #tpu.memory_space<vmem>>, vector<1x64x128xbf16>
    %85 = vector.shape_cast %84 : vector<1x64x128xbf16> to vector<64x128xbf16>
    %cst_40 = arith.constant dense<0.000000e+00> : vector<16x128xf32>
    %86 = tpu.matmul %83, %85, %cst_40 {dimension_numbers = #tpu.dot_dimension_numbers<[1], [0], [0], [1], [0, 0, 1, 1], [], []>} : vector<16x64xbf16>, vector<64x128xbf16>, vector<16x128xf32> -> vector<16x128xf32>
    %87 = arith.addf %81, %86 : vector<16x128xf32>
    %88 = vector.extract_strided_slice %32 {offsets = [0, 9, 0], sizes = [16, 1, 64], strides = [1, 1, 1]} : vector<16x16x64xbf16> to vector<16x1x64xbf16>
    %89 = vector.shape_cast %88 : vector<16x1x64xbf16> to vector<16x64xbf16>
    %c9 = arith.constant 9 : index
    %c0_41 = arith.constant 0 : index
    %c0_42 = arith.constant 0 : index
    %90 = vector.load %arg6[%c9, %c0_41, %c0_42] : memref<16x64x128xbf16, #tpu.memory_space<vmem>>, vector<1x64x128xbf16>
    %91 = vector.shape_cast %90 : vector<1x64x128xbf16> to vector<64x128xbf16>
    %cst_43 = arith.constant dense<0.000000e+00> : vector<16x128xf32>
    %92 = tpu.matmul %89, %91, %cst_43 {dimension_numbers = #tpu.dot_dimension_numbers<[1], [0], [0], [1], [0, 0, 1, 1], [], []>} : vector<16x64xbf16>, vector<64x128xbf16>, vector<16x128xf32> -> vector<16x128xf32>
    %93 = arith.addf %87, %92 : vector<16x128xf32>
    %94 = vector.extract_strided_slice %32 {offsets = [0, 10, 0], sizes = [16, 1, 64], strides = [1, 1, 1]} : vector<16x16x64xbf16> to vector<16x1x64xbf16>
    %95 = vector.shape_cast %94 : vector<16x1x64xbf16> to vector<16x64xbf16>
    %c10 = arith.constant 10 : index
    %c0_44 = arith.constant 0 : index
    %c0_45 = arith.constant 0 : index
    %96 = vector.load %arg6[%c10, %c0_44, %c0_45] : memref<16x64x128xbf16, #tpu.memory_space<vmem>>, vector<1x64x128xbf16>
    %97 = vector.shape_cast %96 : vector<1x64x128xbf16> to vector<64x128xbf16>
    %cst_46 = arith.constant dense<0.000000e+00> : vector<16x128xf32>
    %98 = tpu.matmul %95, %97, %cst_46 {dimension_numbers = #tpu.dot_dimension_numbers<[1], [0], [0], [1], [0, 0, 1, 1], [], []>} : vector<16x64xbf16>, vector<64x128xbf16>, vector<16x128xf32> -> vector<16x128xf32>
    %99 = arith.addf %93, %98 : vector<16x128xf32>
    %100 = vector.extract_strided_slice %32 {offsets = [0, 11, 0], sizes = [16, 1, 64], strides = [1, 1, 1]} : vector<16x16x64xbf16> to vector<16x1x64xbf16>
    %101 = vector.shape_cast %100 : vector<16x1x64xbf16> to vector<16x64xbf16>
    %c11 = arith.constant 11 : index
    %c0_47 = arith.constant 0 : index
    %c0_48 = arith.constant 0 : index
    %102 = vector.load %arg6[%c11, %c0_47, %c0_48] : memref<16x64x128xbf16, #tpu.memory_space<vmem>>, vector<1x64x128xbf16>
    %103 = vector.shape_cast %102 : vector<1x64x128xbf16> to vector<64x128xbf16>
    %cst_49 = arith.constant dense<0.000000e+00> : vector<16x128xf32>
    %104 = tpu.matmul %101, %103, %cst_49 {dimension_numbers = #tpu.dot_dimension_numbers<[1], [0], [0], [1], [0, 0, 1, 1], [], []>} : vector<16x64xbf16>, vector<64x128xbf16>, vector<16x128xf32> -> vector<16x128xf32>
    %105 = arith.addf %99, %104 : vector<16x128xf32>
    %106 = vector.extract_strided_slice %32 {offsets = [0, 12, 0], sizes = [16, 1, 64], strides = [1, 1, 1]} : vector<16x16x64xbf16> to vector<16x1x64xbf16>
    %107 = vector.shape_cast %106 : vector<16x1x64xbf16> to vector<16x64xbf16>
    %c12 = arith.constant 12 : index
    %c0_50 = arith.constant 0 : index
    %c0_51 = arith.constant 0 : index
    %108 = vector.load %arg6[%c12, %c0_50, %c0_51] : memref<16x64x128xbf16, #tpu.memory_space<vmem>>, vector<1x64x128xbf16>
    %109 = vector.shape_cast %108 : vector<1x64x128xbf16> to vector<64x128xbf16>
    %cst_52 = arith.constant dense<0.000000e+00> : vector<16x128xf32>
    %110 = tpu.matmul %107, %109, %cst_52 {dimension_numbers = #tpu.dot_dimension_numbers<[1], [0], [0], [1], [0, 0, 1, 1], [], []>} : vector<16x64xbf16>, vector<64x128xbf16>, vector<16x128xf32> -> vector<16x128xf32>
    %111 = arith.addf %105, %110 : vector<16x128xf32>
    %112 = vector.extract_strided_slice %32 {offsets = [0, 13, 0], sizes = [16, 1, 64], strides = [1, 1, 1]} : vector<16x16x64xbf16> to vector<16x1x64xbf16>
    %113 = vector.shape_cast %112 : vector<16x1x64xbf16> to vector<16x64xbf16>
    %c13 = arith.constant 13 : index
    %c0_53 = arith.constant 0 : index
    %c0_54 = arith.constant 0 : index
    %114 = vector.load %arg6[%c13, %c0_53, %c0_54] : memref<16x64x128xbf16, #tpu.memory_space<vmem>>, vector<1x64x128xbf16>
    %115 = vector.shape_cast %114 : vector<1x64x128xbf16> to vector<64x128xbf16>
    %cst_55 = arith.constant dense<0.000000e+00> : vector<16x128xf32>
    %116 = tpu.matmul %113, %115, %cst_55 {dimension_numbers = #tpu.dot_dimension_numbers<[1], [0], [0], [1], [0, 0, 1, 1], [], []>} : vector<16x64xbf16>, vector<64x128xbf16>, vector<16x128xf32> -> vector<16x128xf32>
    %117 = arith.addf %111, %116 : vector<16x128xf32>
    %118 = vector.extract_strided_slice %32 {offsets = [0, 14, 0], sizes = [16, 1, 64], strides = [1, 1, 1]} : vector<16x16x64xbf16> to vector<16x1x64xbf16>
    %119 = vector.shape_cast %118 : vector<16x1x64xbf16> to vector<16x64xbf16>
    %c14 = arith.constant 14 : index
    %c0_56 = arith.constant 0 : index
    %c0_57 = arith.constant 0 : index
    %120 = vector.load %arg6[%c14, %c0_56, %c0_57] : memref<16x64x128xbf16, #tpu.memory_space<vmem>>, vector<1x64x128xbf16>
    %121 = vector.shape_cast %120 : vector<1x64x128xbf16> to vector<64x128xbf16>
    %cst_58 = arith.constant dense<0.000000e+00> : vector<16x128xf32>
    %122 = tpu.matmul %119, %121, %cst_58 {dimension_numbers = #tpu.dot_dimension_numbers<[1], [0], [0], [1], [0, 0, 1, 1], [], []>} : vector<16x64xbf16>, vector<64x128xbf16>, vector<16x128xf32> -> vector<16x128xf32>
    %123 = arith.addf %117, %122 : vector<16x128xf32>
    %124 = vector.extract_strided_slice %32 {offsets = [0, 15, 0], sizes = [16, 1, 64], strides = [1, 1, 1]} : vector<16x16x64xbf16> to vector<16x1x64xbf16>
    %125 = vector.shape_cast %124 : vector<16x1x64xbf16> to vector<16x64xbf16>
    %c15 = arith.constant 15 : index
    %c0_59 = arith.constant 0 : index
    %c0_60 = arith.constant 0 : index
    %126 = vector.load %arg6[%c15, %c0_59, %c0_60] : memref<16x64x128xbf16, #tpu.memory_space<vmem>>, vector<1x64x128xbf16>
    %127 = vector.shape_cast %126 : vector<1x64x128xbf16> to vector<64x128xbf16>
    %cst_61 = arith.constant dense<0.000000e+00> : vector<16x128xf32>
    %128 = tpu.matmul %125, %127, %cst_61 {dimension_numbers = #tpu.dot_dimension_numbers<[1], [0], [0], [1], [0, 0, 1, 1], [], []>} : vector<16x64xbf16>, vector<64x128xbf16>, vector<16x128xf32> -> vector<16x128xf32>
    %129 = arith.addf %123, %128 : vector<16x128xf32>
    %c0_62 = arith.constant 0 : index
    %c0_63 = arith.constant 0 : index
    %130 = vector.load %arg7[%c0_62, %c0_63] : memref<1x128xf32, #tpu.memory_space<vmem>>, vector<1x128xf32>
    %131 = vector.broadcast %130 : vector<1x128xf32> to vector<16x128xf32>
    %132 = arith.addf %129, %131 : vector<16x128xf32>
    %cst_64 = arith.constant dense<0xFF800000> : vector<16xf32>
    %133 = vector.multi_reduction <maximumf>, %132, %cst_64 [1] : vector<16x128xf32> to vector<16xf32>
    %134 = vector.shape_cast %133 : vector<16xf32> to vector<16x1xf32>
    %135 = vector.broadcast %134 : vector<16x1xf32> to vector<16x128xf32>
    %136 = arith.subf %132, %135 : vector<16x128xf32>
    %137 = math.exp %136 : vector<16x128xf32>
    %cst_65 = arith.constant dense<0.000000e+00> : vector<16xf32>
    %138 = vector.multi_reduction <add>, %137, %cst_65 [1] : vector<16x128xf32> to vector<16xf32>
    %139 = vector.shape_cast %138 : vector<16xf32> to vector<16x1xf32>
    %140 = math.log %139 : vector<16x1xf32>
    %141 = arith.addf %140, %134 : vector<16x1xf32>
    %142 = vector.broadcast %141 : vector<16x1xf32> to vector<16x128xf32>
    %143 = arith.subf %132, %142 : vector<16x128xf32>
    %c0_66 = arith.constant 0 : index
    %c0_67 = arith.constant 0 : index
    %144 = vector.load %arg8[%c0_66, %c0_67] : memref<16x128xf32, #tpu.memory_space<vmem>>, vector<16x128xf32>
    tpu.vector_store %arg8[%c0_66, %c0_67], %143 {strides = array<i32>} : memref<16x128xf32, #tpu.memory_space<vmem>>, vector<16x128xf32>,
    return
  }
  func.func @transform_0(%arg0: i32) -> (i32, i32, i32) {
    %c0_i32 = arith.constant 0 : i32
    %c0_i32_0 = arith.constant 0 : i32
    %c0_i32_1 = arith.constant 0 : i32
    return %c0_i32, %arg0, %c0_i32_0 : i32, i32, i32
  }
  func.func @transform_1(%arg0: i32) -> (i32, i32) {
    %c0_i32 = arith.constant 0 : i32
    %c0_i32_0 = arith.constant 0 : i32
    %c0_i32_1 = arith.constant 0 : i32
    return %c0_i32, %c0_i32_0 : i32, i32
  }
  func.func @transform_2(%arg0: i32) -> (i32, i32) {
    %c0_i32 = arith.constant 0 : i32
    %c0_i32_0 = arith.constant 0 : i32
    %c0_i32_1 = arith.constant 0 : i32
    return %c0_i32, %c0_i32_0 : i32, i32
  }
  func.func @transform_3(%arg0: i32) -> (i32, i32) {
    %c0_i32 = arith.constant 0 : i32
    %c0_i32_0 = arith.constant 0 : i32
    %c0_i32_1 = arith.constant 0 : i32
    return %c0_i32, %c0_i32_0 : i32, i32
  }
  func.func @transform_4(%arg0: i32) -> (i32, i32) {
    %c0_i32 = arith.constant 0 : i32
    %c0_i32_0 = arith.constant 0 : i32
    %c0_i32_1 = arith.constant 0 : i32
    return %c0_i32, %c0_i32_0 : i32, i32
  }
  func.func @transform_5(%arg0: i32) -> (i32, i32, i32) {
    %c0_i32 = arith.constant 0 : i32
    %c0_i32_0 = arith.constant 0 : i32
    %c0_i32_1 = arith.constant 0 : i32
    %c0_i32_2 = arith.constant 0 : i32
    return %c0_i32, %c0_i32_0, %c0_i32_1 : i32, i32, i32
  }
  func.func @transform_6(%arg0: i32) -> (i32, i32) {
    %c0_i32 = arith.constant 0 : i32
    %c0_i32_0 = arith.constant 0 : i32
    %c0_i32_1 = arith.constant 0 : i32
    return %c0_i32, %c0_i32_0 : i32, i32
  }
  func.func @transform_7(%arg0: i32) -> (i32, i32) {
    %c0_i32 = arith.constant 0 : i32
    %c0_i32_0 = arith.constant 0 : i32
    return %arg0, %c0_i32 : i32, i32
  }
}

</mosaic_0001>

<llo_original>
// kernel: _lambda_.2
$region0: #{_lambda_.2}
  #allocation0 [shape = 'u32[]', space=smem, size = 0x4, offset = 0x4, fixed_abs, tag = 'smem constant byte address 0x4 - core index']
  #allocation1 [shape = 'u32[72,128]{1,0:T(1,128)}', space=vmem, size = 0x9000, scoped, tag = 'internal scratch']
  %s0 = inlined_call_operand.vmem [shape: bf16[4,1936,9], index: 0, kind: input, shape index: {}]
  %s1 = inlined_call_operand.vmem [shape: bf16[9,32], index: 1, kind: input, shape index: {}]
  %s2 = inlined_call_operand.vmem [shape: f32[1,32], index: 2, kind: input, shape index: {}]
  %s3 = inlined_call_operand.vmem [shape: bf16[1936,32], index: 3, kind: output, shape index: {}]
  %s4 = sld [smem:[#allocation0]]
  $region22: #{_lambda_.2} parent=0
    _
  %s6 = ssub.s32 1, %s4
  %s7 = scalar_select 0, %s6, %s4
  // Predicated region
  $region2: #{_lambda_.2} parent=0 // pred_check
    _
  $region3: #{_lambda_.2} parent=0 // pred_check_branch
    %9 = sbr.rel (0) target = $region5
  $region4: #{_lambda_.2} parent=0 // pred_region
    _
  $region5: #{_lambda_.2} parent=0 // pred_fallthru
    _
  // Predicated region
  $region6: #{_lambda_.2} parent=0 // pred_check
    _
  $region7: #{_lambda_.2} parent=0 // pred_check_branch
    %11 = sbr.rel (0) target = $region9
  $region8: #{_lambda_.2} parent=0 // pred_region
    _
  $region9: #{_lambda_.2} parent=0 // pred_fallthru
    _
  // Predicated region
  $region10: #{_lambda_.2} parent=0 // pred_check
    _
  $region11: #{_lambda_.2} parent=0 // pred_check_branch
    %13 = sbr.rel (0) target = $region13
  $region12: #{_lambda_.2} parent=0 // pred_region
    _
  $region13: #{_lambda_.2} parent=0 // pred_fallthru
    _
  %v15 = vld [vmem:[%s0] sm:$0xf]
  %v16 = vld [vmem:[%s0 + $0x4] sm:$0xf]
  %v17 = vld [vmem:[%s0 + $0x8] sm:$0xf]
  %v18 = vld [vmem:[%s0 + $0xc] sm:$0xf]
  %v19 = vld [vmem:[%s0 + $0x10] sm:$0xf]
  %v20 = vld [vmem:[%s0 + $0x14] sm:$0xf]
  %v21 = vld [vmem:[%s0 + $0x18] sm:$0xf]
  %v22 = vld [vmem:[%s0 + $0x1c] sm:$0xf]
  %v23 = vld [vmem:[%s0 + $0x20] sm:$0xf]
  %v24 = vld [vmem:[%s0 + $0x24] sm:$0xf]
  %v25 = vld [vmem:[%s0 + $0x28] sm:$0xf]
  %v26 = vld [vmem:[%s0 + $0x2c] sm:$0xf]
  %v27 = vld [vmem:[%s0 + $0x30] sm:$0xf]
  %v28 = vld [vmem:[%s0 + $0x34] sm:$0xf]
  %v29 = vld [vmem:[%s0 + $0x38] sm:$0xf]
  %v30 = vld [vmem:[%s0 + $0x3c] sm:$0xf]
  %v31 = vld [vmem:[%s0 + $0x40] sm:$0xf]
  %v32 = vld [vmem:[%s0 + $0x44] sm:$0xf]
  %v33 = vld [vmem:[%s0 + $0x48] sm:$0xf]
  %v34 = vld [vmem:[%s0 + $0x4c] sm:$0xf]
  %v35 = vld [vmem:[%s0 + $0x50] sm:$0xf]
  %v36 = vld [vmem:[%s0 + $0x54] sm:$0xf]
  %v37 = vld [vmem:[%s0 + $0x58] sm:$0xf]
  %v38 = vld [vmem:[%s0 + $0x5c] sm:$0xf]
  %v39 = vld [vmem:[%s0 + $0x60] sm:$0xf]
  %v40 = vld [vmem:[%s0 + $0x64] sm:$0xf]
  %v41 = vld [vmem:[%s0 + $0x68] sm:$0xf]
  %v42 = vld [vmem:[%s0 + $0x6c] sm:$0xf]
  %v43 = vld [vmem:[%s0 + $0x70] sm:$0xf]
  %v44 = vld [vmem:[%s0 + $0x74] sm:$0xf]
  %v45 = vld [vmem:[%s0 + $0x78] sm:$0xf]
  %v46 = vld [vmem:[%s0 + $0x7c] sm:$0xf]
  %v47 = vld [vmem:[%s0 + $0x80] sm:$0xf]
  %v48 = vld [vmem:[%s0 + $0x84] sm:$0xf]
  %v49 = vld [vmem:[%s0 + $0x88] sm:$0xf]
  %v50 = vld [vmem:[%s0 + $0x8c] sm:$0xf]
  %v51 = vld [vmem:[%s0 + $0x90] sm:$0xf]
  %v52 = vld [vmem:[%s0 + $0x94] sm:$0xf]
  %v53 = vld [vmem:[%s0 + $0x98] sm:$0xf]
  %v54 = vld [vmem:[%s0 + $0x9c] sm:$0xf]
  %v55 = vld [vmem:[%s0 + $0xa0] sm:$0xf]
  %v56 = vld [vmem:[%s0 + $0xa4] sm:$0xf]
  %v57 = vld [vmem:[%s0 + $0xa8] sm:$0xf]
  %v58 = vld [vmem:[%s0 + $0xac] sm:$0xf]
  %v59 = vld [vmem:[%s0 + $0xb0] sm:$0xf]
  %v60 = vld [vmem:[%s0 + $0xb4] sm:$0xf]
  %v61 = vld [vmem:[%s0 + $0xb8] sm:$0xf]
  %v62 = vld [vmem:[%s0 + $0xbc] sm:$0xf]
  %v63 = vld [vmem:[%s0 + $0xc0] sm:$0xf]
  %v64 = vld [vmem:[%s0 + $0xc4] sm:$0xf]
  %v65 = vld [vmem:[%s0 + $0xc8] sm:$0xf]
  %v66 = vld [vmem:[%s0 + $0xcc] sm:$0xf]
  %v67 = vld [vmem:[%s0 + $0xd0] sm:$0xf]
  %v68 = vld [vmem:[%s0 + $0xd4] sm:$0xf]
  %v69 = vld [vmem:[%s0 + $0xd8] sm:$0xf]
  %v70 = vld [vmem:[%s0 + $0xdc] sm:$0xf]
  %v71 = vld [vmem:[%s0 + $0xe0] sm:$0xf]
  %v72 = vld [vmem:[%s0 + $0xe4] sm:$0xf]
  %v73 = vld [vmem:[%s0 + $0xe8] sm:$0xf]
  %v74 = vld [vmem:[%s0 + $0xec] sm:$0xf]
  %v75 = vld [vmem:[%s0 + $0xf0] sm:$0xf]
  %v76 = vld [vmem:[%s0 + $0xf4] sm:$0xf]
  %v77 = vld [vmem:[%s0 + $0xf8] sm:$0xf]
  %v78 = vld [vmem:[%s0 + $0xfc] sm:$0xf]
  %v79 = vld [vmem:[%s0 + $0x100] sm:$0xf]
  %v80 = vld [vmem:[%s0 + $0x104] sm:$0xf]
  %v81 = vld [vmem:[%s0 + $0x108] sm:$0xf]
  %v82 = vld [vmem:[%s0 + $0x10c] sm:$0xf]
  %v83 = vld [vmem:[%s0 + $0x110] sm:$0xf]
  %v84 = vld [vmem:[%s0 + $0x114] sm:$0xf]
  %v85 = vld [vmem:[%s0 + $0x118] sm:$0xf]
  %v86 = vld [vmem:[%s0 + $0x11c] sm:$0xf]
  %v87 = vld [vmem:[%s0 + $0x120] sm:$0xf]
  %v88 = vld [vmem:[%s0 + $0x124] sm:$0xf]
  %v89 = vld [vmem:[%s0 + $0x128] sm:$0xf]
  %v90 = vld [vmem:[%s0 + $0x12c] sm:$0xf]
  %v91 = vld [vmem:[%s0 + $0x130] sm:$0xf]
  %v92 = vld [vmem:[%s0 + $0x134] sm:$0xf]
  %v93 = vld [vmem:[%s0 + $0x138] sm:$0xf]
  %v94 = vld [vmem:[%s0 + $0x13c] sm:$0xf]
  %v95 = vld [vmem:[%s0 + $0x140] sm:$0xf]
  %v96 = vld [vmem:[%s0 + $0x144] sm:$0xf]
  %v97 = vld [vmem:[%s0 + $0x148] sm:$0xf]
  %v98 = vld [vmem:[%s0 + $0x14c] sm:$0xf]
  %v99 = vld [vmem:[%s0 + $0x150] sm:$0xf]
  %v100 = vld [vmem:[%s0 + $0x154] sm:$0xf]
  %v101 = vld [vmem:[%s0 + $0x158] sm:$0xf]
  %v102 = vld [vmem:[%s0 + $0x15c] sm:$0xf]
  %v103 = vld [vmem:[%s0 + $0x160] sm:$0xf]
  %v104 = vld [vmem:[%s0 + $0x164] sm:$0xf]
  %v105 = vld [vmem:[%s0 + $0x168] sm:$0xf]
  %v106 = vld [vmem:[%s0 + $0x16c] sm:$0xf]
  %v107 = vld [vmem:[%s0 + $0x170] sm:$0xf]
  %v108 = vld [vmem:[%s0 + $0x174] sm:$0xf]
  %v109 = vld [vmem:[%s0 + $0x178] sm:$0xf]
  %v110 = vld [vmem:[%s0 + $0x17c] sm:$0xf]
  %v111 = vld [vmem:[%s0 + $0x180] sm:$0xf]
  %v112 = vld [vmem:[%s0 + $0x184] sm:$0xf]
  %v113 = vld [vmem:[%s0 + $0x188] sm:$0xf]
  %v114 = vld [vmem:[%s0 + $0x18c] sm:$0xf]
  %v115 = vld [vmem:[%s0 + $0x190] sm:$0xf]
  %v116 = vld [vmem:[%s0 + $0x194] sm:$0xf]
  %v117 = vld [vmem:[%s0 + $0x198] sm:$0xf]
  %v118 = vld [vmem:[%s0 + $0x19c] sm:$0xf]
  %v119 = vld [vmem:[%s0 + $0x1a0] sm:$0xf]
  %v120 = vld [vmem:[%s0 + $0x1a4] sm:$0xf]
  %v121 = vld [vmem:[%s0 + $0x1a8] sm:$0xf]
  %v122 = vld [vmem:[%s0 + $0x1ac] sm:$0xf]
  %v123 = vld [vmem:[%s0 + $0x1b0] sm:$0xf]
  %v124 = vld [vmem:[%s0 + $0x1b4] sm:$0xf]
  %v125 = vld [vmem:[%s0 + $0x1b8] sm:$0xf]
  %v126 = vld [vmem:[%s0 + $0x1bc] sm:$0xf]
  %v127 = vld [vmem:[%s0 + $0x1c0] sm:$0xf]
  %v128 = vld [vmem:[%s0 + $0x1c4] sm:$0xf]
  %v129 = vld [vmem:[%s0 + $0x1c8] sm:$0xf]
  %v130 = vld [vmem:[%s0 + $0x1cc] sm:$0xf]
  %v131 = vld [vmem:[%s0 + $0x1d0] sm:$0xf]
  %v132 = vld [vmem:[%s0 + $0x1d4] sm:$0xf]
  %v133 = vld [vmem:[%s0 + $0x1d8] sm:$0xf]
  %v134 = vld [vmem:[%s0 + $0x1dc] sm:$0xf]
  %v135 = vld [vmem:[%s0 + $0x1e0] sm:$0xf]
  %v136 = vld [vmem:[%s0 + $0x1e4] sm:$0xf]
  %v137 = vld [vmem:[%s0 + $0x1e8] sm:$0xf]
  %v138 = vld [vmem:[%s0 + $0x1ec] sm:$0xf]
  %v139 = vld [vmem:[%s0 + $0x1f0] sm:$0xf]
  %v140 = vld [vmem:[%s0 + $0x1f4] sm:$0xf]
  %v141 = vld [vmem:[%s0 + $0x1f8] sm:$0xf]
  %v142 = vld [vmem:[%s0 + $0x1fc] sm:$0xf]
  %v143 = vld [vmem:[%s0 + $0x200] sm:$0xf]
  %v144 = vld [vmem:[%s0 + $0x204] sm:$0xf]
  %v145 = vld [vmem:[%s0 + $0x208] sm:$0xf]
  %v146 = vld [vmem:[%s0 + $0x20c] sm:$0xf]
  %v147 = vld [vmem:[%s0 + $0x210] sm:$0xf]
  %v148 = vld [vmem:[%s0 + $0x214] sm:$0xf]
  %v149 = vld [vmem:[%s0 + $0x218] sm:$0xf]
  %v150 = vld [vmem:[%s0 + $0x21c] sm:$0xf]
  %v151 = vld [vmem:[%s0 + $0x220] sm:$0xf]
  %v152 = vld [vmem:[%s0 + $0x224] sm:$0xf]
  %v153 = vld [vmem:[%s0 + $0x228] sm:$0xf]
  %v154 = vld [vmem:[%s0 + $0x22c] sm:$0xf]
  %v155 = vld [vmem:[%s0 + $0x230] sm:$0xf]
  %v156 = vld [vmem:[%s0 + $0x234] sm:$0xf]
  %v157 = vld [vmem:[%s0 + $0x238] sm:$0xf]
  %v158 = vld [vmem:[%s0 + $0x23c] sm:$0xf]
  %v159 = vld [vmem:[%s0 + $0x240] sm:$0xf]
  %v160 = vld [vmem:[%s0 + $0x244] sm:$0xf]
  %v161 = vld [vmem:[%s0 + $0x248] sm:$0xf]
  %v162 = vld [vmem:[%s0 + $0x24c] sm:$0xf]
  %v163 = vld [vmem:[%s0 + $0x250] sm:$0xf]
  %v164 = vld [vmem:[%s0 + $0x254] sm:$0xf]
  %v165 = vld [vmem:[%s0 + $0x258] sm:$0xf]
  %v166 = vld [vmem:[%s0 + $0x25c] sm:$0xf]
  %v167 = vld [vmem:[%s0 + $0x260] sm:$0xf]
  %v168 = vld [vmem:[%s0 + $0x264] sm:$0xf]
  %v169 = vld [vmem:[%s0 + $0x268] sm:$0xf]
  %v170 = vld [vmem:[%s0 + $0x26c] sm:$0xf]
  %v171 = vld [vmem:[%s0 + $0x270] sm:$0xf]
  %v172 = vld [vmem:[%s0 + $0x274] sm:$0xf]
  %v173 = vld [vmem:[%s0 + $0x278] sm:$0xf]
  %v174 = vld [vmem:[%s0 + $0x27c] sm:$0xf]
  %v175 = vld [vmem:[%s0 + $0x280] sm:$0xf]
  %v176 = vld [vmem:[%s0 + $0x284] sm:$0xf]
  %v177 = vld [vmem:[%s0 + $0x288] sm:$0xf]
  %v178 = vld [vmem:[%s0 + $0x28c] sm:$0xf]
  %v179 = vld [vmem:[%s0 + $0x290] sm:$0xf]
  %v180 = vld [vmem:[%s0 + $0x294] sm:$0xf]
  %v181 = vld [vmem:[%s0 + $0x298] sm:$0xf]
  %v182 = vld [vmem:[%s0 + $0x29c] sm:$0xf]
  %v183 = vld [vmem:[%s0 + $0x2a0] sm:$0xf]
  %v184 = vld [vmem:[%s0 + $0x2a4] sm:$0xf]
  %v185 = vld [vmem:[%s0 + $0x2a8] sm:$0xf]
  %v186 = vld [vmem:[%s0 + $0x2ac] sm:$0xf]
  %v187 = vld [vmem:[%s0 + $0x2b0] sm:$0xf]
  %v188 = vld [vmem:[%s0 + $0x2b4] sm:$0xf]
  %v189 = vld [vmem:[%s0 + $0x2b8] sm:$0xf]
  %v190 = vld [vmem:[%s0 + $0x2bc] sm:$0xf]
  %v191 = vld [vmem:[%s0 + $0x2c0] sm:$0xf]
  %v192 = vld [vmem:[%s0 + $0x2c4] sm:$0xf]
  %v193 = vld [vmem:[%s0 + $0x2c8] sm:$0xf]
  %v194 = vld [vmem:[%s0 + $0x2cc] sm:$0xf]
  %v195 = vld [vmem:[%s0 + $0x2d0] sm:$0xf]
  %v196 = vld [vmem:[%s0 + $0x2d4] sm:$0xf]
  %v197 = vld [vmem:[%s0 + $0x2d8] sm:$0xf]
  %v198 = vld [vmem:[%s0 + $0x2dc] sm:$0xf]
  %v199 = vld [vmem:[%s0 + $0x2e0] sm:$0xf]
  %v200 = vld [vmem:[%s0 + $0x2e4] sm:$0xf]
  %v201 = vld [vmem:[%s0 + $0x2e8] sm:$0xf]
  %v202 = vld [vmem:[%s0 + $0x2ec] sm:$0xf]
  %v203 = vld [vmem:[%s0 + $0x2f0] sm:$0xf]
  %v204 = vld [vmem:[%s0 + $0x2f4] sm:$0xf]
  %v205 = vld [vmem:[%s0 + $0x2f8] sm:$0xf]
  %v206 = vld [vmem:[%s0 + $0x2fc] sm:$0xf]
  %v207 = vld [vmem:[%s0 + $0x300] sm:$0xf]
  %v208 = vld [vmem:[%s0 + $0x304] sm:$0xf]
  %v209 = vld [vmem:[%s0 + $0x308] sm:$0xf]
  %v210 = vld [vmem:[%s0 + $0x30c] sm:$0xf]
  %v211 = vld [vmem:[%s0 + $0x310] sm:$0xf]
  %v212 = vld [vmem:[%s0 + $0x314] sm:$0xf]
  %v213 = vld [vmem:[%s0 + $0x318] sm:$0xf]
  %v214 = vld [vmem:[%s0 + $0x31c] sm:$0xf]
  %v215 = vld [vmem:[%s0 + $0x320] sm:$0xf]
  %v216 = vld [vmem:[%s0 + $0x324] sm:$0xf]
  %v217 = vld [vmem:[%s0 + $0x328] sm:$0xf]
  %v218 = vld [vmem:[%s0 + $0x32c] sm:$0xf]
  %v219 = vld [vmem:[%s0 + $0x330] sm:$0xf]
  %v220 = vld [vmem:[%s0 + $0x334] sm:$0xf]
  %v221 = vld [vmem:[%s0 + $0x338] sm:$0xf]
  %v222 = vld [vmem:[%s0 + $0x33c] sm:$0xf]
  %v223 = vld [vmem:[%s0 + $0x340] sm:$0xf]
  %v224 = vld [vmem:[%s0 + $0x344] sm:$0xf]
  %v225 = vld [vmem:[%s0 + $0x348] sm:$0xf]
  %v226 = vld [vmem:[%s0 + $0x34c] sm:$0xf]
  %v227 = vld [vmem:[%s0 + $0x350] sm:$0xf]
  %v228 = vld [vmem:[%s0 + $0x354] sm:$0xf]
  %v229 = vld [vmem:[%s0 + $0x358] sm:$0xf]
  %v230 = vld [vmem:[%s0 + $0x35c] sm:$0xf]
  %v231 = vld [vmem:[%s0 + $0x360] sm:$0xf]
  %v232 = vld [vmem:[%s0 + $0x364] sm:$0xf]
  %v233 = vld [vmem:[%s0 + $0x368] sm:$0xf]
  %v234 = vld [vmem:[%s0 + $0x36c] sm:$0xf]
  %v235 = vld [vmem:[%s0 + $0x370] sm:$0xf]
  %v236 = vld [vmem:[%s0 + $0x374] sm:$0xf]
  %v237 = vld [vmem:[%s0 + $0x378] sm:$0xf]
  %v238 = vld [vmem:[%s0 + $0x37c] sm:$0xf]
  %v239 = vld [vmem:[%s0 + $0x380] sm:$0xf]
  %v240 = vld [vmem:[%s0 + $0x384] sm:$0xf]
  %v241 = vld [vmem:[%s0 + $0x388] sm:$0xf]
  %v242 = vld [vmem:[%s0 + $0x38c] sm:$0xf]
  %v243 = vld [vmem:[%s0 + $0x390] sm:$0xf]
  %v244 = vld [vmem:[%s0 + $0x394] sm:$0xf]
  %v245 = vld [vmem:[%s0 + $0x398] sm:$0xf]
  %v246 = vld [vmem:[%s0 + $0x39c] sm:$0xf]
  %v247 = vld [vmem:[%s0 + $0x3a0] sm:$0xf]
  %v248 = vld [vmem:[%s0 + $0x3a4] sm:$0xf]
  %v249 = vld [vmem:[%s0 + $0x3a8] sm:$0xf]
  %v250 = vld [vmem:[%s0 + $0x3ac] sm:$0xf]
  %v251 = vld [vmem:[%s0 + $0x3b0] sm:$0xf]
  %v252 = vld [vmem:[%s0 + $0x3b4] sm:$0xf]
  %v253 = vld [vmem:[%s0 + $0x3b8] sm:$0xf]
  %v254 = vld [vmem:[%s0 + $0x3bc] sm:$0xf]
  %v255 = vld [vmem:[%s0 + $0x3c0] sm:$0xf]
  %v256 = vld [vmem:[%s0 + $0x3c4] sm:$0xf]
  %v257 = vld [vmem:[%s0 + $0x3c8] sm:$0xf]
  %v258 = vld [vmem:[%s0 + $0x3cc] sm:$0xf]
  %v259 = vld [vmem:[%s0 + $0x3d0] sm:$0xf]
  %v260 = vld [vmem:[%s0 + $0x3d4] sm:$0xf]
  %v261 = vld [vmem:[%s0 + $0x3d8] sm:$0xf]
  %v262 = vld [vmem:[%s0 + $0x3dc] sm:$0xf]
  %v263 = vld [vmem:[%s0 + $0x3e0] sm:$0xf]
  %v264 = vld [vmem:[%s0 + $0x3e4] sm:$0xf]
  %v265 = vld [vmem:[%s0 + $0x3e8] sm:$0xf]
  %v266 = vld [vmem:[%s0 + $0x3ec] sm:$0xf]
  %v267 = vld [vmem:[%s0 + $0x3f0] sm:$0xf]
  %v268 = vld [vmem:[%s0 + $0x3f4] sm:$0xf]
  %v269 = vld [vmem:[%s0 + $0x3f8] sm:$0xf]
  %v270 = vld [vmem:[%s0 + $0x3fc] sm:$0xf]
  %v271 = vld [vmem:[%s0 + $0x400] sm:$0xf]
  %v272 = vld [vmem:[%s0 + $0x404] sm:$0xf]
  %v273 = vld [vmem:[%s0 + $0x408] sm:$0xf]
  %v274 = vld [vmem:[%s0 + $0x40c] sm:$0xf]
  %v275 = vld [vmem:[%s0 + $0x410] sm:$0xf]
  %v276 = vld [vmem:[%s0 + $0x414] sm:$0xf]
  %v277 = vld [vmem:[%s0 + $0x418] sm:$0xf]
  %v278 = vld [vmem:[%s0 + $0x41c] sm:$0xf]
  %v279 = vld [vmem:[%s0 + $0x420] sm:$0xf]
  %v280 = vld [vmem:[%s0 + $0x424] sm:$0xf]
  %v281 = vld [vmem:[%s0 + $0x428] sm:$0xf]
  %v282 = vld [vmem:[%s0 + $0x42c] sm:$0xf]
  %v283 = vld [vmem:[%s0 + $0x430] sm:$0xf]
  %v284 = vld [vmem:[%s0 + $0x434] sm:$0xf]
  %v285 = vld [vmem:[%s0 + $0x438] sm:$0xf]
  %v286 = vld [vmem:[%s0 + $0x43c] sm:$0xf]
  %v287 = vld [vmem:[%s0 + $0x440] sm:$0xf]
  %v288 = vld [vmem:[%s0 + $0x444] sm:$0xf]
  %v289 = vld [vmem:[%s0 + $0x448] sm:$0xf]
  %v290 = vld [vmem:[%s0 + $0x44c] sm:$0xf]
  %v291 = vld [vmem:[%s0 + $0x450] sm:$0xf]
  %v292 = vld [vmem:[%s0 + $0x454] sm:$0xf]
  %v293 = vld [vmem:[%s0 + $0x458] sm:$0xf]
  %v294 = vld [vmem:[%s0 + $0x45c] sm:$0xf]
  %v295 = vld [vmem:[%s0 + $0x460] sm:$0xf]
  %v296 = vld [vmem:[%s0 + $0x464] sm:$0xf]
  %v297 = vld [vmem:[%s0 + $0x468] sm:$0xf]
  %v298 = vld [vmem:[%s0 + $0x46c] sm:$0xf]
  %v299 = vld [vmem:[%s0 + $0x470] sm:$0xf]
  %v300 = vld [vmem:[%s0 + $0x474] sm:$0xf]
  %v301 = vld [vmem:[%s0 + $0x478] sm:$0xf]
  %v302 = vld [vmem:[%s0 + $0x47c] sm:$0xf]
  %v303 = vld [vmem:[%s0 + $0x480] sm:$0xf]
  %v304 = vld [vmem:[%s0 + $0x484] sm:$0xf]
  %v305 = vld [vmem:[%s0 + $0x488] sm:$0xf]
  %v306 = vld [vmem:[%s0 + $0x48c] sm:$0xf]
  %v307 = vld [vmem:[%s0 + $0x490] sm:$0xf]
  %v308 = vld [vmem:[%s0 + $0x494] sm:$0xf]
  %v309 = vld [vmem:[%s0 + $0x498] sm:$0xf]
  %v310 = vld [vmem:[%s0 + $0x49c] sm:$0xf]
  %v311 = vld [vmem:[%s0 + $0x4a0] sm:$0xf]
  %v312 = vld [vmem:[%s0 + $0x4a4] sm:$0xf]
  %v313 = vld [vmem:[%s0 + $0x4a8] sm:$0xf]
  %v314 = vld [vmem:[%s0 + $0x4ac] sm:$0xf]
  %v315 = vld [vmem:[%s0 + $0x4b0] sm:$0xf]
  %v316 = vld [vmem:[%s0 + $0x4b4] sm:$0xf]
  %v317 = vld [vmem:[%s0 + $0x4b8] sm:$0xf]
  %v318 = vld [vmem:[%s0 + $0x4bc] sm:$0xf]
  %v319 = vld [vmem:[%s0 + $0x4c0] sm:$0xf]
  %v320 = vld [vmem:[%s0 + $0x4c4] sm:$0xf]
  %v321 = vld [vmem:[%s0 + $0x4c8] sm:$0xf]
  %v322 = vld [vmem:[%s0 + $0x4cc] sm:$0xf]
  %v323 = vld [vmem:[%s0 + $0x4d0] sm:$0xf]
  %v324 = vld [vmem:[%s0 + $0x4d4] sm:$0xf]
  %v325 = vld [vmem:[%s0 + $0x4d8] sm:$0xf]
  %v326 = vld [vmem:[%s0 + $0x4dc] sm:$0xf]
  %v327 = vld [vmem:[%s0 + $0x4e0] sm:$0xf]
  %v328 = vld [vmem:[%s0 + $0x4e4] sm:$0xf]
  %v329 = vld [vmem:[%s0 + $0x4e8] sm:$0xf]
  %v330 = vld [vmem:[%s0 + $0x4ec] sm:$0xf]
  %v331 = vld [vmem:[%s0 + $0x4f0] sm:$0xf]
  %v332 = vld [vmem:[%s0 + $0x4f4] sm:$0xf]
  %v333 = vld [vmem:[%s0 + $0x4f8] sm:$0xf]
  %v334 = vld [vmem:[%s0 + $0x4fc] sm:$0xf]
  %v335 = vld [vmem:[%s0 + $0x500] sm:$0xf]
  %v336 = vld [vmem:[%s0 + $0x504] sm:$0xf]
  %v337 = vld [vmem:[%s0 + $0x508] sm:$0xf]
  %v338 = vld [vmem:[%s0 + $0x50c] sm:$0xf]
  %v339 = vld [vmem:[%s0 + $0x510] sm:$0xf]
  %v340 = vld [vmem:[%s0 + $0x514] sm:$0xf]
  %v341 = vld [vmem:[%s0 + $0x518] sm:$0xf]
  %v342 = vld [vmem:[%s0 + $0x51c] sm:$0xf]
  %v343 = vld [vmem:[%s0 + $0x520] sm:$0xf]
  %v344 = vld [vmem:[%s0 + $0x524] sm:$0xf]
  %v345 = vld [vmem:[%s0 + $0x528] sm:$0xf]
  %v346 = vld [vmem:[%s0 + $0x52c] sm:$0xf]
  %v347 = vld [vmem:[%s0 + $0x530] sm:$0xf]
  %v348 = vld [vmem:[%s0 + $0x534] sm:$0xf]
  %v349 = vld [vmem:[%s0 + $0x538] sm:$0xf]
  %v350 = vld [vmem:[%s0 + $0x53c] sm:$0xf]
  %v351 = vld [vmem:[%s0 + $0x540] sm:$0xf]
  %v352 = vld [vmem:[%s0 + $0x544] sm:$0xf]
  %v353 = vld [vmem:[%s0 + $0x548] sm:$0xf]
  %v354 = vld [vmem:[%s0 + $0x54c] sm:$0xf]
  %v355 = vld [vmem:[%s0 + $0x550] sm:$0xf]
  %v356 = vld [vmem:[%s0 + $0x554] sm:$0xf]
  %v357 = vld [vmem:[%s0 + $0x558] sm:$0xf]
  %v358 = vld [vmem:[%s0 + $0x55c] sm:$0xf]
  %v359 = vld [vmem:[%s0 + $0x560] sm:$0xf]
  %v360 = vld [vmem:[%s0 + $0x564] sm:$0xf]
  %v361 = vld [vmem:[%s0 + $0x568] sm:$0xf]
  %v362 = vld [vmem:[%s0 + $0x56c] sm:$0xf]
  %v363 = vld [vmem:[%s0 + $0x570] sm:$0xf]
  %v364 = vld [vmem:[%s0 + $0x574] sm:$0xf]
  %v365 = vld [vmem:[%s0 + $0x578] sm:$0xf]
  %v366 = vld [vmem:[%s0 + $0x57c] sm:$0xf]
  %v367 = vld [vmem:[%s0 + $0x580] sm:$0xf]
  %v368 = vld [vmem:[%s0 + $0x584] sm:$0xf]
  %v369 = vld [vmem:[%s0 + $0x588] sm:$0xf]
  %v370 = vld [vmem:[%s0 + $0x58c] sm:$0xf]
  %v371 = vld [vmem:[%s0 + $0x590] sm:$0xf]
  %v372 = vld [vmem:[%s0 + $0x594] sm:$0xf]
  %v373 = vld [vmem:[%s0 + $0x598] sm:$0xf]
  %v374 = vld [vmem:[%s0 + $0x59c] sm:$0xf]
  %v375 = vld [vmem:[%s0 + $0x5a0] sm:$0xf]
  %v376 = vld [vmem:[%s0 + $0x5a4] sm:$0xf]
  %v377 = vld [vmem:[%s0 + $0x5a8] sm:$0xf]
  %v378 = vld [vmem:[%s0 + $0x5ac] sm:$0xf]
  %v379 = vld [vmem:[%s0 + $0x5b0] sm:$0xf]
  %v380 = vld [vmem:[%s0 + $0x5b4] sm:$0xf]
  %v381 = vld [vmem:[%s0 + $0x5b8] sm:$0xf]
  %v382 = vld [vmem:[%s0 + $0x5bc] sm:$0xf]
  %v383 = vld [vmem:[%s0 + $0x5c0] sm:$0xf]
  %v384 = vld [vmem:[%s0 + $0x5c4] sm:$0xf]
  %v385 = vld [vmem:[%s0 + $0x5c8] sm:$0xf]
  %v386 = vld [vmem:[%s0 + $0x5cc] sm:$0xf]
  %v387 = vld [vmem:[%s0 + $0x5d0] sm:$0xf]
  %v388 = vld [vmem:[%s0 + $0x5d4] sm:$0xf]
  %v389 = vld [vmem:[%s0 + $0x5d8] sm:$0xf]
  %v390 = vld [vmem:[%s0 + $0x5dc] sm:$0xf]
  %v391 = vld [vmem:[%s0 + $0x5e0] sm:$0xf]
  %v392 = vld [vmem:[%s0 + $0x5e4] sm:$0xf]
  %v393 = vld [vmem:[%s0 + $0x5e8] sm:$0xf]
  %v394 = vld [vmem:[%s0 + $0x5ec] sm:$0xf]
  %v395 = vld [vmem:[%s0 + $0x5f0] sm:$0xf]
  %v396 = vld [vmem:[%s0 + $0x5f4] sm:$0xf]
  %v397 = vld [vmem:[%s0 + $0x5f8] sm:$0xf]
  %v398 = vld [vmem:[%s0 + $0x5fc] sm:$0xf]
  %v399 = vld [vmem:[%s0 + $0x600] sm:$0xf]
  %v400 = vld [vmem:[%s0 + $0x604] sm:$0xf]
  %v401 = vld [vmem:[%s0 + $0x608] sm:$0xf]
  %v402 = vld [vmem:[%s0 + $0x60c] sm:$0xf]
  %v403 = vld [vmem:[%s0 + $0x610] sm:$0xf]
  %v404 = vld [vmem:[%s0 + $0x614] sm:$0xf]
  %v405 = vld [vmem:[%s0 + $0x618] sm:$0xf]
  %v406 = vld [vmem:[%s0 + $0x61c] sm:$0xf]
  %v407 = vld [vmem:[%s0 + $0x620] sm:$0xf]
  %v408 = vld [vmem:[%s0 + $0x624] sm:$0xf]
  %v409 = vld [vmem:[%s0 + $0x628] sm:$0xf]
  %v410 = vld [vmem:[%s0 + $0x62c] sm:$0xf]
  %v411 = vld [vmem:[%s0 + $0x630] sm:$0xf]
  %v412 = vld [vmem:[%s0 + $0x634] sm:$0xf]
  %v413 = vld [vmem:[%s0 + $0x638] sm:$0xf]
  %v414 = vld [vmem:[%s0 + $0x63c] sm:$0xf]
  %v415 = vld [vmem:[%s0 + $0x640] sm:$0xf]
  %v416 = vld [vmem:[%s0 + $0x644] sm:$0xf]
  %v417 = vld [vmem:[%s0 + $0x648] sm:$0xf]
  %v418 = vld [vmem:[%s0 + $0x64c] sm:$0xf]
  %v419 = vld [vmem:[%s0 + $0x650] sm:$0xf]
  %v420 = vld [vmem:[%s0 + $0x654] sm:$0xf]
  %v421 = vld [vmem:[%s0 + $0x658] sm:$0xf]
  %v422 = vld [vmem:[%s0 + $0x65c] sm:$0xf]
  %v423 = vld [vmem:[%s0 + $0x660] sm:$0xf]
  %v424 = vld [vmem:[%s0 + $0x664] sm:$0xf]
  %v425 = vld [vmem:[%s0 + $0x668] sm:$0xf]
  %v426 = vld [vmem:[%s0 + $0x66c] sm:$0xf]
  %v427 = vld [vmem:[%s0 + $0x670] sm:$0xf]
  %v428 = vld [vmem:[%s0 + $0x674] sm:$0xf]
  %v429 = vld [vmem:[%s0 + $0x678] sm:$0xf]
  %v430 = vld [vmem:[%s0 + $0x67c] sm:$0xf]
  %v431 = vld [vmem:[%s0 + $0x680] sm:$0xf]
  %v432 = vld [vmem:[%s0 + $0x684] sm:$0xf]
  %v433 = vld [vmem:[%s0 + $0x688] sm:$0xf]
  %v434 = vld [vmem:[%s0 + $0x68c] sm:$0xf]
  %v435 = vld [vmem:[%s0 + $0x690] sm:$0xf]
  %v436 = vld [vmem:[%s0 + $0x694] sm:$0xf]
  %v437 = vld [vmem:[%s0 + $0x698] sm:$0xf]
  %v438 = vld [vmem:[%s0 + $0x69c] sm:$0xf]
  %v439 = vld [vmem:[%s0 + $0x6a0] sm:$0xf]
  %v440 = vld [vmem:[%s0 + $0x6a4] sm:$0xf]
  %v441 = vld [vmem:[%s0 + $0x6a8] sm:$0xf]
  %v442 = vld [vmem:[%s0 + $0x6ac] sm:$0xf]
  %v443 = vld [vmem:[%s0 + $0x6b0] sm:$0xf]
  %v444 = vld [vmem:[%s0 + $0x6b4] sm:$0xf]
  %v445 = vld [vmem:[%s0 + $0x6b8] sm:$0xf]
  %v446 = vld [vmem:[%s0 + $0x6bc] sm:$0xf]
  %v447 = vld [vmem:[%s0 + $0x6c0] sm:$0xf]
  %v448 = vld [vmem:[%s0 + $0x6c4] sm:$0xf]
  %v449 = vld [vmem:[%s0 + $0x6c8] sm:$0xf]
  %v450 = vld [vmem:[%s0 + $0x6cc] sm:$0xf]
  %v451 = vld [vmem:[%s0 + $0x6d0] sm:$0xf]
  %v452 = vld [vmem:[%s0 + $0x6d4] sm:$0xf]
  %v453 = vld [vmem:[%s0 + $0x6d8] sm:$0xf]
  %v454 = vld [vmem:[%s0 + $0x6dc] sm:$0xf]
  %v455 = vld [vmem:[%s0 + $0x6e0] sm:$0xf]
  %v456 = vld [vmem:[%s0 + $0x6e4] sm:$0xf]
  %v457 = vld [vmem:[%s0 + $0x6e8] sm:$0xf]
  %v458 = vld [vmem:[%s0 + $0x6ec] sm:$0xf]
  %v459 = vld [vmem:[%s0 + $0x6f0] sm:$0xf]
  %v460 = vld [vmem:[%s0 + $0x6f4] sm:$0xf]
  %v461 = vld [vmem:[%s0 + $0x6f8] sm:$0xf]
  %v462 = vld [vmem:[%s0 + $0x6fc] sm:$0xf]
  %v463 = vld [vmem:[%s0 + $0x700] sm:$0xf]
  %v464 = vld [vmem:[%s0 + $0x704] sm:$0xf]
  %v465 = vld [vmem:[%s0 + $0x708] sm:$0xf]
  %v466 = vld [vmem:[%s0 + $0x70c] sm:$0xf]
  %v467 = vld [vmem:[%s0 + $0x710] sm:$0xf]
  %v468 = vld [vmem:[%s0 + $0x714] sm:$0xf]
  %v469 = vld [vmem:[%s0 + $0x718] sm:$0xf]
  %v470 = vld [vmem:[%s0 + $0x71c] sm:$0xf]
  %v471 = vld [vmem:[%s0 + $0x720] sm:$0xf]
  %v472 = vld [vmem:[%s0 + $0x724] sm:$0xf]
  %v473 = vld [vmem:[%s0 + $0x728] sm:$0xf]
  %v474 = vld [vmem:[%s0 + $0x72c] sm:$0xf]
  %v475 = vld [vmem:[%s0 + $0x730] sm:$0xf]
  %v476 = vld [vmem:[%s0 + $0x734] sm:$0xf]
  %v477 = vld [vmem:[%s0 + $0x738] sm:$0xf]
  %v478 = vld [vmem:[%s0 + $0x73c] sm:$0xf]
  %v479 = vld [vmem:[%s0 + $0x740] sm:$0xf]
  %v480 = vld [vmem:[%s0 + $0x744] sm:$0xf]
  %v481 = vld [vmem:[%s0 + $0x748] sm:$0xf]
  %v482 = vld [vmem:[%s0 + $0x74c] sm:$0xf]
  %v483 = vld [vmem:[%s0 + $0x750] sm:$0xf]
  %v484 = vld [vmem:[%s0 + $0x754] sm:$0xf]
  %v485 = vld [vmem:[%s0 + $0x758] sm:$0xf]
  %v486 = vld [vmem:[%s0 + $0x75c] sm:$0xf]
  %v487 = vld [vmem:[%s0 + $0x760] sm:$0xf]
  %v488 = vld [vmem:[%s0 + $0x764] sm:$0xf]
  %v489 = vld [vmem:[%s0 + $0x768] sm:$0xf]
  %v490 = vld [vmem:[%s0 + $0x76c] sm:$0xf]
  %v491 = vld [vmem:[%s0 + $0x770] sm:$0xf]
  %v492 = vld [vmem:[%s0 + $0x774] sm:$0xf]
  %v493 = vld [vmem:[%s0 + $0x778] sm:$0xf]
  %v494 = vld [vmem:[%s0 + $0x77c] sm:$0xf]
  %v495 = vld [vmem:[%s0 + $0x780] sm:$0xf]
  %v496 = vld [vmem:[%s0 + $0x784] sm:$0xf]
  %v497 = vld [vmem:[%s0 + $0x788] sm:$0xf]
  %v498 = vld [vmem:[%s0 + $0x78c] sm:$0xf]
  %v499 = vld [vmem:[%s0 + $0x790] sm:$0xf]
  %v500 = vld [vmem:[%s0 + $0x794] sm:$0xf]
  %v501 = vld [vmem:[%s0 + $0x798] sm:$0xf]
  %v502 = vld [vmem:[%s0 + $0x79c] sm:$0xf]
  %v503 = vld [vmem:[%s0 + $0x7a0] sm:$0xf]
  %v504 = vld [vmem:[%s0 + $0x7a4] sm:$0xf]
  %v505 = vld [vmem:[%s0 + $0x7a8] sm:$0xf]
  %v506 = vld [vmem:[%s0 + $0x7ac] sm:$0xf]
  %v507 = vld [vmem:[%s0 + $0x7b0] sm:$0xf]
  %v508 = vld [vmem:[%s0 + $0x7b4] sm:$0xf]
  %v509 = vld [vmem:[%s0 + $0x7b8] sm:$0xf]
  %v510 = vld [vmem:[%s0 + $0x7bc] sm:$0xf]
  %v511 = vld [vmem:[%s0 + $0x7c0] sm:$0xf]
  %v512 = vld [vmem:[%s0 + $0x7c4] sm:$0xf]
  %v513 = vld [vmem:[%s0 + $0x7c8] sm:$0xf]
  %v514 = vld [vmem:[%s0 + $0x7cc] sm:$0xf]
  %v515 = vld [vmem:[%s0 + $0x7d0] sm:$0xf]
  %v516 = vld [vmem:[%s0 + $0x7d4] sm:$0xf]
  %v517 = vld [vmem:[%s0 + $0x7d8] sm:$0xf]
  %v518 = vld [vmem:[%s0 + $0x7dc] sm:$0xf]
  %v519 = vld [vmem:[%s0 + $0x7e0] sm:$0xf]
  %v520 = vld [vmem:[%s0 + $0x7e4] sm:$0xf]
  %v521 = vld [vmem:[%s0 + $0x7e8] sm:$0xf]
  %v522 = vld [vmem:[%s0 + $0x7ec] sm:$0xf]
  %v523 = vld [vmem:[%s0 + $0x7f0] sm:$0xf]
  %v524 = vld [vmem:[%s0 + $0x7f4] sm:$0xf]
  %v525 = vld [vmem:[%s0 + $0x7f8] sm:$0xf]
  %v526 = vld [vmem:[%s0 + $0x7fc] sm:$0xf]
  %v527 = vld [vmem:[%s0 + $0x800] sm:$0xf]
  %v528 = vld [vmem:[%s0 + $0x804] sm:$0xf]
  %v529 = vld [vmem:[%s0 + $0x808] sm:$0xf]
  %v530 = vld [vmem:[%s0 + $0x80c] sm:$0xf]
  %v531 = vld [vmem:[%s0 + $0x810] sm:$0xf]
  %v532 = vld [vmem:[%s0 + $0x814] sm:$0xf]
  %v533 = vld [vmem:[%s0 + $0x818] sm:$0xf]
  %v534 = vld [vmem:[%s0 + $0x81c] sm:$0xf]
  %v535 = vld [vmem:[%s0 + $0x820] sm:$0xf]
  %v536 = vld [vmem:[%s0 + $0x824] sm:$0xf]
  %v537 = vld [vmem:[%s0 + $0x828] sm:$0xf]
  %v538 = vld [vmem:[%s0 + $0x82c] sm:$0xf]
  %v539 = vld [vmem:[%s0 + $0x830] sm:$0xf]
  %v540 = vld [vmem:[%s0 + $0x834] sm:$0xf]
  %v541 = vld [vmem:[%s0 + $0x838] sm:$0xf]
  %v542 = vld [vmem:[%s0 + $0x83c] sm:$0xf]
  %v543 = vld [vmem:[%s0 + $0x840] sm:$0xf]
  %v544 = vld [vmem:[%s0 + $0x844] sm:$0xf]
  %v545 = vld [vmem:[%s0 + $0x848] sm:$0xf]
  %v546 = vld [vmem:[%s0 + $0x84c] sm:$0xf]
  %v547 = vld [vmem:[%s0 + $0x850] sm:$0xf]
  %v548 = vld [vmem:[%s0 + $0x854] sm:$0xf]
  %v549 = vld [vmem:[%s0 + $0x858] sm:$0xf]
  %v550 = vld [vmem:[%s0 + $0x85c] sm:$0xf]
  %v551 = vld [vmem:[%s0 + $0x860] sm:$0xf]
  %v552 = vld [vmem:[%s0 + $0x864] sm:$0xf]
  %v553 = vld [vmem:[%s0 + $0x868] sm:$0xf]
  %v554 = vld [vmem:[%s0 + $0x86c] sm:$0xf]
  %v555 = vld [vmem:[%s0 + $0x870] sm:$0xf]
  %v556 = vld [vmem:[%s0 + $0x874] sm:$0xf]
  %v557 = vld [vmem:[%s0 + $0x878] sm:$0xf]
  %v558 = vld [vmem:[%s0 + $0x87c] sm:$0xf]
  %v559 = vld [vmem:[%s0 + $0x880] sm:$0xf]
  %v560 = vld [vmem:[%s0 + $0x884] sm:$0xf]
  %v561 = vld [vmem:[%s0 + $0x888] sm:$0xf]
  %v562 = vld [vmem:[%s0 + $0x88c] sm:$0xf]
  %v563 = vld [vmem:[%s0 + $0x890] sm:$0xf]
  %v564 = vld [vmem:[%s0 + $0x894] sm:$0xf]
  %v565 = vld [vmem:[%s0 + $0x898] sm:$0xf]
  %v566 = vld [vmem:[%s0 + $0x89c] sm:$0xf]
  %v567 = vld [vmem:[%s0 + $0x8a0] sm:$0xf]
  %v568 = vld [vmem:[%s0 + $0x8a4] sm:$0xf]
  %v569 = vld [vmem:[%s0 + $0x8a8] sm:$0xf]
  %v570 = vld [vmem:[%s0 + $0x8ac] sm:$0xf]
  %v571 = vld [vmem:[%s0 + $0x8b0] sm:$0xf]
  %v572 = vld [vmem:[%s0 + $0x8b4] sm:$0xf]
  %v573 = vld [vmem:[%s0 + $0x8b8] sm:$0xf]
  %v574 = vld [vmem:[%s0 + $0x8bc] sm:$0xf]
  %v575 = vld [vmem:[%s0 + $0x8c0] sm:$0xf]
  %v576 = vld [vmem:[%s0 + $0x8c4] sm:$0xf]
  %v577 = vld [vmem:[%s0 + $0x8c8] sm:$0xf]
  %v578 = vld [vmem:[%s0 + $0x8cc] sm:$0xf]
  %v579 = vld [vmem:[%s0 + $0x8d0] sm:$0xf]
  %v580 = vld [vmem:[%s0 + $0x8d4] sm:$0xf]
  %v581 = vld [vmem:[%s0 + $0x8d8] sm:$0xf]
  %v582 = vld [vmem:[%s0 + $0x8dc] sm:$0xf]
  %v583 = vld [vmem:[%s0 + $0x8e0] sm:$0xf]
  %v584 = vld [vmem:[%s0 + $0x8e4] sm:$0xf]
  %v585 = vld [vmem:[%s0 + $0x8e8] sm:$0xf]
  %v586 = vld [vmem:[%s0 + $0x8ec] sm:$0xf]
  %v587 = vld [vmem:[%s0 + $0x8f0] sm:$0xf]
  %v588 = vld [vmem:[%s0 + $0x8f4] sm:$0xf]
  %v589 = vld [vmem:[%s0 + $0x8f8] sm:$0xf]
  %v590 = vld [vmem:[%s0 + $0x8fc] sm:$0xf]
  %v591 = vld [vmem:[%s0 + $0x900] sm:$0xf]
  %v592 = vld [vmem:[%s0 + $0x904] sm:$0xf]
  %v593 = vld [vmem:[%s0 + $0x908] sm:$0xf]
  %v594 = vld [vmem:[%s0 + $0x90c] sm:$0xf]
  %v595 = vld [vmem:[%s0 + $0x910] sm:$0xf]
  %v596 = vld [vmem:[%s0 + $0x914] sm:$0xf]
  %v597 = vld [vmem:[%s0 + $0x918] sm:$0xf]
  %v598 = vld [vmem:[%s0 + $0x91c] sm:$0xf]
  %v599 = vld [vmem:[%s0 + $0x920] sm:$0xf]
  %v600 = vld [vmem:[%s0 + $0x924] sm:$0xf]
  %v601 = vld [vmem:[%s0 + $0x928] sm:$0xf]
  %v602 = vld [vmem:[%s0 + $0x92c] sm:$0xf]
  %v603 = vld [vmem:[%s0 + $0x930] sm:$0xf]
  %v604 = vld [vmem:[%s0 + $0x934] sm:$0xf]
  %v605 = vld [vmem:[%s0 + $0x938] sm:$0xf]
  %v606 = vld [vmem:[%s0 + $0x93c] sm:$0xf]
  %v607 = vld [vmem:[%s0 + $0x940] sm:$0xf]
  %v608 = vld [vmem:[%s0 + $0x944] sm:$0xf]
  %v609 = vld [vmem:[%s0 + $0x948] sm:$0xf]
  %v610 = vld [vmem:[%s0 + $0x94c] sm:$0xf]
  %v611 = vld [vmem:[%s0 + $0x950] sm:$0xf]
  %v612 = vld [vmem:[%s0 + $0x954] sm:$0xf]
  %v613 = vld [vmem:[%s0 + $0x958] sm:$0xf]
  %v614 = vld [vmem:[%s0 + $0x95c] sm:$0xf]
  %v615 = vld [vmem:[%s0 + $0x960] sm:$0xf]
  %v616 = vld [vmem:[%s0 + $0x964] sm:$0xf]
  %v617 = vld [vmem:[%s0 + $0x968] sm:$0xf]
  %v618 = vld [vmem:[%s0 + $0x96c] sm:$0xf]
  %v619 = vld [vmem:[%s0 + $0x970] sm:$0xf]
  %v620 = vld [vmem:[%s0 + $0x974] sm:$0xf]
  %v621 = vld [vmem:[%s0 + $0x978] sm:$0xf]
  %v622 = vld [vmem:[%s0 + $0x97c] sm:$0xf]
  %v623 = vld [vmem:[%s0 + $0x980] sm:$0xf]
  %v624 = vld [vmem:[%s0 + $0x984] sm:$0xf]
  %v625 = vld [vmem:[%s0 + $0x988] sm:$0xf]
  %v626 = vld [vmem:[%s0 + $0x98c] sm:$0xf]
  %v627 = vld [vmem:[%s0 + $0x990] sm:$0xf]
  %v628 = vld [vmem:[%s0 + $0x994] sm:$0xf]
  %v629 = vld [vmem:[%s0 + $0x998] sm:$0xf]
  %v630 = vld [vmem:[%s0 + $0x99c] sm:$0xf]
  %v631 = vld [vmem:[%s0 + $0x9a0] sm:$0xf]
  %v632 = vld [vmem:[%s0 + $0x9a4] sm:$0xf]
  %v633 = vld [vmem:[%s0 + $0x9a8] sm:$0xf]
  %v634 = vld [vmem:[%s0 + $0x9ac] sm:$0xf]
  %v635 = vld [vmem:[%s0 + $0x9b0] sm:$0xf]
  %v636 = vld [vmem:[%s0 + $0x9b4] sm:$0xf]
  %v637 = vld [vmem:[%s0 + $0x9b8] sm:$0xf]
  %v638 = vld [vmem:[%s0 + $0x9bc] sm:$0xf]
  %v639 = vld [vmem:[%s0 + $0x9c0] sm:$0xf]
  %v640 = vld [vmem:[%s0 + $0x9c4] sm:$0xf]
  %v641 = vld [vmem:[%s0 + $0x9c8] sm:$0xf]
  %v642 = vld [vmem:[%s0 + $0x9cc] sm:$0xf]
  %v643 = vld [vmem:[%s0 + $0x9d0] sm:$0xf]
  %v644 = vld [vmem:[%s0 + $0x9d4] sm:$0xf]
  %v645 = vld [vmem:[%s0 + $0x9d8] sm:$0xf]
  %v646 = vld [vmem:[%s0 + $0x9dc] sm:$0xf]
  %v647 = vld [vmem:[%s0 + $0x9e0] sm:$0xf]
  %v648 = vld [vmem:[%s0 + $0x9e4] sm:$0xf]
  %v649 = vld [vmem:[%s0 + $0x9e8] sm:$0xf]
  %v650 = vld [vmem:[%s0 + $0x9ec] sm:$0xf]
  %v651 = vld [vmem:[%s0 + $0x9f0] sm:$0xf]
  %v652 = vld [vmem:[%s0 + $0x9f4] sm:$0xf]
  %v653 = vld [vmem:[%s0 + $0x9f8] sm:$0xf]
  %v654 = vld [vmem:[%s0 + $0x9fc] sm:$0xf]
  %v655 = vld [vmem:[%s0 + $0xa00] sm:$0xf]
  %v656 = vld [vmem:[%s0 + $0xa04] sm:$0xf]
  %v657 = vld [vmem:[%s0 + $0xa08] sm:$0xf]
  %v658 = vld [vmem:[%s0 + $0xa0c] sm:$0xf]
  %v659 = vld [vmem:[%s0 + $0xa10] sm:$0xf]
  %v660 = vld [vmem:[%s0 + $0xa14] sm:$0xf]
  %v661 = vld [vmem:[%s0 + $0xa18] sm:$0xf]
  %v662 = vld [vmem:[%s0 + $0xa1c] sm:$0xf]
  %v663 = vld [vmem:[%s0 + $0xa20] sm:$0xf]
  %v664 = vld [vmem:[%s0 + $0xa24] sm:$0xf]
  %v665 = vld [vmem:[%s0 + $0xa28] sm:$0xf]
  %v666 = vld [vmem:[%s0 + $0xa2c] sm:$0xf]
  %v667 = vld [vmem:[%s0 + $0xa30] sm:$0xf]
  %v668 = vld [vmem:[%s0 + $0xa34] sm:$0xf]
  %v669 = vld [vmem:[%s0 + $0xa38] sm:$0xf]
  %v670 = vld [vmem:[%s0 + $0xa3c] sm:$0xf]
  %v671 = vld [vmem:[%s0 + $0xa40] sm:$0xf]
  %v672 = vld [vmem:[%s0 + $0xa44] sm:$0xf]
  %v673 = vld [vmem:[%s0 + $0xa48] sm:$0xf]
  %v674 = vld [vmem:[%s0 + $0xa4c] sm:$0xf]
  %v675 = vld [vmem:[%s0 + $0xa50] sm:$0xf]
  %v676 = vld [vmem:[%s0 + $0xa54] sm:$0xf]
  %v677 = vld [vmem:[%s0 + $0xa58] sm:$0xf]
  %v678 = vld [vmem:[%s0 + $0xa5c] sm:$0xf]
  %v679 = vld [vmem:[%s0 + $0xa60] sm:$0xf]
  %v680 = vld [vmem:[%s0 + $0xa64] sm:$0xf]
  %v681 = vld [vmem:[%s0 + $0xa68] sm:$0xf]
  %v682 = vld [vmem:[%s0 + $0xa6c] sm:$0xf]
  %v683 = vld [vmem:[%s0 + $0xa70] sm:$0xf]
  %v684 = vld [vmem:[%s0 + $0xa74] sm:$0xf]
  %v685 = vld [vmem:[%s0 + $0xa78] sm:$0xf]
  %v686 = vld [vmem:[%s0 + $0xa7c] sm:$0xf]
  %v687 = vld [vmem:[%s0 + $0xa80] sm:$0xf]
  %v688 = vld [vmem:[%s0 + $0xa84] sm:$0xf]
  %v689 = vld [vmem:[%s0 + $0xa88] sm:$0xf]
  %v690 = vld [vmem:[%s0 + $0xa8c] sm:$0xf]
  %v691 = vld [vmem:[%s0 + $0xa90] sm:$0xf]
  %v692 = vld [vmem:[%s0 + $0xa94] sm:$0xf]
  %v693 = vld [vmem:[%s0 + $0xa98] sm:$0xf]
  %v694 = vld [vmem:[%s0 + $0xa9c] sm:$0xf]
  %v695 = vld [vmem:[%s0 + $0xaa0] sm:$0xf]
  %v696 = vld [vmem:[%s0 + $0xaa4] sm:$0xf]
  %v697 = vld [vmem:[%s0 + $0xaa8] sm:$0xf]
  %v698 = vld [vmem:[%s0 + $0xaac] sm:$0xf]
  %v699 = vld [vmem:[%s0 + $0xab0] sm:$0xf]
  %v700 = vld [vmem:[%s0 + $0xab4] sm:$0xf]
  %v701 = vld [vmem:[%s0 + $0xab8] sm:$0xf]
  %v702 = vld [vmem:[%s0 + $0xabc] sm:$0xf]
  %v703 = vld [vmem:[%s0 + $0xac0] sm:$0xf]
  %v704 = vld [vmem:[%s0 + $0xac4] sm:$0xf]
  %v705 = vld [vmem:[%s0 + $0xac8] sm:$0xf]
  %v706 = vld [vmem:[%s0 + $0xacc] sm:$0xf]
  %v707 = vld [vmem:[%s0 + $0xad0] sm:$0xf]
  %v708 = vld [vmem:[%s0 + $0xad4] sm:$0xf]
  %v709 = vld [vmem:[%s0 + $0xad8] sm:$0xf]
  %v710 = vld [vmem:[%s0 + $0xadc] sm:$0xf]
  %v711 = vld [vmem:[%s0 + $0xae0] sm:$0xf]
  %v712 = vld [vmem:[%s0 + $0xae4] sm:$0xf]
  %v713 = vld [vmem:[%s0 + $0xae8] sm:$0xf]
  %v714 = vld [vmem:[%s0 + $0xaec] sm:$0xf]
  %v715 = vld [vmem:[%s0 + $0xaf0] sm:$0xf]
  %v716 = vld [vmem:[%s0 + $0xaf4] sm:$0xf]
  %v717 = vld [vmem:[%s0 + $0xaf8] sm:$0xf]
  %v718 = vld [vmem:[%s0 + $0xafc] sm:$0xf]
  %v719 = vld [vmem:[%s0 + $0xb00] sm:$0xf]
  %v720 = vld [vmem:[%s0 + $0xb04] sm:$0xf]
  %v721 = vld [vmem:[%s0 + $0xb08] sm:$0xf]
  %v722 = vld [vmem:[%s0 + $0xb0c] sm:$0xf]
  %v723 = vld [vmem:[%s0 + $0xb10] sm:$0xf]
  %v724 = vld [vmem:[%s0 + $0xb14] sm:$0xf]
  %v725 = vld [vmem:[%s0 + $0xb18] sm:$0xf]
  %v726 = vld [vmem:[%s0 + $0xb1c] sm:$0xf]
  %v727 = vld [vmem:[%s0 + $0xb20] sm:$0xf]
  %v728 = vld [vmem:[%s0 + $0xb24] sm:$0xf]
  %v729 = vld [vmem:[%s0 + $0xb28] sm:$0xf]
  %v730 = vld [vmem:[%s0 + $0xb2c] sm:$0xf]
  %v731 = vld [vmem:[%s0 + $0xb30] sm:$0xf]
  %v732 = vld [vmem:[%s0 + $0xb34] sm:$0xf]
  %v733 = vld [vmem:[%s0 + $0xb38] sm:$0xf]
  %v734 = vld [vmem:[%s0 + $0xb3c] sm:$0xf]
  %v735 = vld [vmem:[%s0 + $0xb40] sm:$0xf]
  %v736 = vld [vmem:[%s0 + $0xb44] sm:$0xf]
  %v737 = vld [vmem:[%s0 + $0xb48] sm:$0xf]
  %v738 = vld [vmem:[%s0 + $0xb4c] sm:$0xf]
  %v739 = vld [vmem:[%s0 + $0xb50] sm:$0xf]
  %v740 = vld [vmem:[%s0 + $0xb54] sm:$0xf]
  %v741 = vld [vmem:[%s0 + $0xb58] sm:$0xf]
  %v742 = vld [vmem:[%s0 + $0xb5c] sm:$0xf]
  %v743 = vld [vmem:[%s0 + $0xb60] sm:$0xf]
  %v744 = vld [vmem:[%s0 + $0xb64] sm:$0xf]
  %v745 = vld [vmem:[%s0 + $0xb68] sm:$0xf]
  %v746 = vld [vmem:[%s0 + $0xb6c] sm:$0xf]
  %v747 = vld [vmem:[%s0 + $0xb70] sm:$0xf]
  %v748 = vld [vmem:[%s0 + $0xb74] sm:$0xf]
  %v749 = vld [vmem:[%s0 + $0xb78] sm:$0xf]
  %v750 = vld [vmem:[%s0 + $0xb7c] sm:$0xf]
  %v751 = vld [vmem:[%s0 + $0xb80] sm:$0xf]
  %v752 = vld [vmem:[%s0 + $0xb84] sm:$0xf]
  %v753 = vld [vmem:[%s0 + $0xb88] sm:$0xf]
  %v754 = vld [vmem:[%s0 + $0xb8c] sm:$0xf]
  %v755 = vld [vmem:[%s0 + $0xb90] sm:$0xf]
  %v756 = vld [vmem:[%s0 + $0xb94] sm:$0xf]
  %v757 = vld [vmem:[%s0 + $0xb98] sm:$0xf]
  %v758 = vld [vmem:[%s0 + $0xb9c] sm:$0xf]
  %v759 = vld [vmem:[%s0 + $0xba0] sm:$0xf]
  %v760 = vld [vmem:[%s0 + $0xba4] sm:$0xf]
  %v761 = vld [vmem:[%s0 + $0xba8] sm:$0xf]
  %v762 = vld [vmem:[%s0 + $0xbac] sm:$0xf]
  %v763 = vld [vmem:[%s0 + $0xbb0] sm:$0xf]
  %v764 = vld [vmem:[%s0 + $0xbb4] sm:$0xf]
  %v765 = vld [vmem:[%s0 + $0xbb8] sm:$0xf]
  %v766 = vld [vmem:[%s0 + $0xbbc] sm:$0xf]
  %v767 = vld [vmem:[%s0 + $0xbc0] sm:$0xf]
  %v768 = vld [vmem:[%s0 + $0xbc4] sm:$0xf]
  %v769 = vld [vmem:[%s0 + $0xbc8] sm:$0xf]
  %v770 = vld [vmem:[%s0 + $0xbcc] sm:$0xf]
  %v771 = vld [vmem:[%s0 + $0xbd0] sm:$0xf]
  %v772 = vld [vmem:[%s0 + $0xbd4] sm:$0xf]
  %v773 = vld [vmem:[%s0 + $0xbd8] sm:$0xf]
  %v774 = vld [vmem:[%s0 + $0xbdc] sm:$0xf]
  %v775 = vld [vmem:[%s0 + $0xbe0] sm:$0xf]
  %v776 = vld [vmem:[%s0 + $0xbe4] sm:$0xf]
  %v777 = vld [vmem:[%s0 + $0xbe8] sm:$0xf]
  %v778 = vld [vmem:[%s0 + $0xbec] sm:$0xf]
  %v779 = vld [vmem:[%s0 + $0xbf0] sm:$0xf]
  %v780 = vld [vmem:[%s0 + $0xbf4] sm:$0xf]
  %v781 = vld [vmem:[%s0 + $0xbf8] sm:$0xf]
  %v782 = vld [vmem:[%s0 + $0xbfc] sm:$0xf]
  %v783 = vld [vmem:[%s0 + $0xc00] sm:$0xf]
  %v784 = vld [vmem:[%s0 + $0xc04] sm:$0xf]
  %v785 = vld [vmem:[%s0 + $0xc08] sm:$0xf]
  %v786 = vld [vmem:[%s0 + $0xc0c] sm:$0xf]
  %v787 = vld [vmem:[%s0 + $0xc10] sm:$0xf]
  %v788 = vld [vmem:[%s0 + $0xc14] sm:$0xf]
  %v789 = vld [vmem:[%s0 + $0xc18] sm:$0xf]
  %v790 = vld [vmem:[%s0 + $0xc1c] sm:$0xf]
  %v791 = vld [vmem:[%s0 + $0xc20] sm:$0xf]
  %v792 = vld [vmem:[%s0 + $0xc24] sm:$0xf]
  %v793 = vld [vmem:[%s0 + $0xc28] sm:$0xf]
  %v794 = vld [vmem:[%s0 + $0xc2c] sm:$0xf]
  %v795 = vld [vmem:[%s0 + $0xc30] sm:$0xf]
  %v796 = vld [vmem:[%s0 + $0xc34] sm:$0xf]
  %v797 = vld [vmem:[%s0 + $0xc38] sm:$0xf]
  %v798 = vld [vmem:[%s0 + $0xc3c] sm:$0xf]
  %v799 = vld [vmem:[%s0 + $0xc40] sm:$0xf]
  %v800 = vld [vmem:[%s0 + $0xc44] sm:$0xf]
  %v801 = vld [vmem:[%s0 + $0xc48] sm:$0xf]
  %v802 = vld [vmem:[%s0 + $0xc4c] sm:$0xf]
  %v803 = vld [vmem:[%s0 + $0xc50] sm:$0xf]
  %v804 = vld [vmem:[%s0 + $0xc54] sm:$0xf]
  %v805 = vld [vmem:[%s0 + $0xc58] sm:$0xf]
  %v806 = vld [vmem:[%s0 + $0xc5c] sm:$0xf]
  %v807 = vld [vmem:[%s0 + $0xc60] sm:$0xf]
  %v808 = vld [vmem:[%s0 + $0xc64] sm:$0xf]
  %v809 = vld [vmem:[%s0 + $0xc68] sm:$0xf]
  %v810 = vld [vmem:[%s0 + $0xc6c] sm:$0xf]
  %v811 = vld [vmem:[%s0 + $0xc70] sm:$0xf]
  %v812 = vld [vmem:[%s0 + $0xc74] sm:$0xf]
  %v813 = vld [vmem:[%s0 + $0xc78] sm:$0xf]
  %v814 = vld [vmem:[%s0 + $0xc7c] sm:$0xf]
  %v815 = vld [vmem:[%s0 + $0xc80] sm:$0xf]
  %v816 = vld [vmem:[%s0 + $0xc84] sm:$0xf]
  %v817 = vld [vmem:[%s0 + $0xc88] sm:$0xf]
  %v818 = vld [vmem:[%s0 + $0xc8c] sm:$0xf]
  %v819 = vld [vmem:[%s0 + $0xc90] sm:$0xf]
  %v820 = vld [vmem:[%s0 + $0xc94] sm:$0xf]
  %v821 = vld [vmem:[%s0 + $0xc98] sm:$0xf]
  %v822 = vld [vmem:[%s0 + $0xc9c] sm:$0xf]
  %v823 = vld [vmem:[%s0 + $0xca0] sm:$0xf]
  %v824 = vld [vmem:[%s0 + $0xca4] sm:$0xf]
  %v825 = vld [vmem:[%s0 + $0xca8] sm:$0xf]
  %v826 = vld [vmem:[%s0 + $0xcac] sm:$0xf]
  %v827 = vld [vmem:[%s0 + $0xcb0] sm:$0xf]
  %v828 = vld [vmem:[%s0 + $0xcb4] sm:$0xf]
  %v829 = vld [vmem:[%s0 + $0xcb8] sm:$0xf]
  %v830 = vld [vmem:[%s0 + $0xcbc] sm:$0xf]
  %v831 = vld [vmem:[%s0 + $0xcc0] sm:$0xf]
  %v832 = vld [vmem:[%s0 + $0xcc4] sm:$0xf]
  %v833 = vld [vmem:[%s0 + $0xcc8] sm:$0xf]
  %v834 = vld [vmem:[%s0 + $0xccc] sm:$0xf]
  %v835 = vld [vmem:[%s0 + $0xcd0] sm:$0xf]
  %v836 = vld [vmem:[%s0 + $0xcd4] sm:$0xf]
  %v837 = vld [vmem:[%s0 + $0xcd8] sm:$0xf]
  %v838 = vld [vmem:[%s0 + $0xcdc] sm:$0xf]
  %v839 = vld [vmem:[%s0 + $0xce0] sm:$0xf]
  %v840 = vld [vmem:[%s0 + $0xce4] sm:$0xf]
  %v841 = vld [vmem:[%s0 + $0xce8] sm:$0xf]
  %v842 = vld [vmem:[%s0 + $0xcec] sm:$0xf]
  %v843 = vld [vmem:[%s0 + $0xcf0] sm:$0xf]
  %v844 = vld [vmem:[%s0 + $0xcf4] sm:$0xf]
  %v845 = vld [vmem:[%s0 + $0xcf8] sm:$0xf]
  %v846 = vld [vmem:[%s0 + $0xcfc] sm:$0xf]
  %v847 = vld [vmem:[%s0 + $0xd00] sm:$0xf]
  %v848 = vld [vmem:[%s0 + $0xd04] sm:$0xf]
  %v849 = vld [vmem:[%s0 + $0xd08] sm:$0xf]
  %v850 = vld [vmem:[%s0 + $0xd0c] sm:$0xf]
  %v851 = vld [vmem:[%s0 + $0xd10] sm:$0xf]
  %v852 = vld [vmem:[%s0 + $0xd14] sm:$0xf]
  %v853 = vld [vmem:[%s0 + $0xd18] sm:$0xf]
  %v854 = vld [vmem:[%s0 + $0xd1c] sm:$0xf]
  %v855 = vld [vmem:[%s0 + $0xd20] sm:$0xf]
  %v856 = vld [vmem:[%s0 + $0xd24] sm:$0xf]
  %v857 = vld [vmem:[%s0 + $0xd28] sm:$0xf]
  %v858 = vld [vmem:[%s0 + $0xd2c] sm:$0xf]
  %v859 = vld [vmem:[%s0 + $0xd30] sm:$0xf]
  %v860 = vld [vmem:[%s0 + $0xd34] sm:$0xf]
  %v861 = vld [vmem:[%s0 + $0xd38] sm:$0xf]
  %v862 = vld [vmem:[%s0 + $0xd3c] sm:$0xf]
  %v863 = vld [vmem:[%s0 + $0xd40] sm:$0xf]
  %v864 = vld [vmem:[%s0 + $0xd44] sm:$0xf]
  %v865 = vld [vmem:[%s0 + $0xd48] sm:$0xf]
  %v866 = vld [vmem:[%s0 + $0xd4c] sm:$0xf]
  %v867 = vld [vmem:[%s0 + $0xd50] sm:$0xf]
  %v868 = vld [vmem:[%s0 + $0xd54] sm:$0xf]
  %v869 = vld [vmem:[%s0 + $0xd58] sm:$0xf]
  %v870 = vld [vmem:[%s0 + $0xd5c] sm:$0xf]
  %v871 = vld [vmem:[%s0 + $0xd60] sm:$0xf]
  %v872 = vld [vmem:[%s0 + $0xd64] sm:$0xf]
  %v873 = vld [vmem:[%s0 + $0xd68] sm:$0xf]
  %v874 = vld [vmem:[%s0 + $0xd6c] sm:$0xf]
  %v875 = vld [vmem:[%s0 + $0xd70] sm:$0xf]
  %v876 = vld [vmem:[%s0 + $0xd74] sm:$0xf]
  %v877 = vld [vmem:[%s0 + $0xd78] sm:$0xf]
  %v878 = vld [vmem:[%s0 + $0xd7c] sm:$0xf]
  %v879 = vld [vmem:[%s0 + $0xd80] sm:$0xf]
  %v880 = vld [vmem:[%s0 + $0xd84] sm:$0xf]
  %v881 = vld [vmem:[%s0 + $0xd88] sm:$0xf]
  %v882 = vld [vmem:[%s0 + $0xd8c] sm:$0xf]
  %v883 = vld [vmem:[%s0 + $0xd90] sm:$0xf]
  %v884 = vld [vmem:[%s0 + $0xd94] sm:$0xf]
  %v885 = vld [vmem:[%s0 + $0xd98] sm:$0xf]
  %v886 = vld [vmem:[%s0 + $0xd9c] sm:$0xf]
  %v887 = vld [vmem:[%s0 + $0xda0] sm:$0xf]
  %v888 = vld [vmem:[%s0 + $0xda4] sm:$0xf]
  %v889 = vld [vmem:[%s0 + $0xda8] sm:$0xf]
  %v890 = vld [vmem:[%s0 + $0xdac] sm:$0xf]
  %v891 = vld [vmem:[%s0 + $0xdb0] sm:$0xf]
  %v892 = vld [vmem:[%s0 + $0xdb4] sm:$0xf]
  %v893 = vld [vmem:[%s0 + $0xdb8] sm:$0xf]
  %v894 = vld [vmem:[%s0 + $0xdbc] sm:$0xf]
  %v895 = vld [vmem:[%s0 + $0xdc0] sm:$0xf]
  %v896 = vld [vmem:[%s0 + $0xdc4] sm:$0xf]
  %v897 = vld [vmem:[%s0 + $0xdc8] sm:$0xf]
  %v898 = vld [vmem:[%s0 + $0xdcc] sm:$0xf]
  %v899 = vld [vmem:[%s0 + $0xdd0] sm:$0xf]
  %v900 = vld [vmem:[%s0 + $0xdd4] sm:$0xf]
  %v901 = vld [vmem:[%s0 + $0xdd8] sm:$0xf]
  %v902 = vld [vmem:[%s0 + $0xddc] sm:$0xf]
  %v903 = vld [vmem:[%s0 + $0xde0] sm:$0xf]
  %v904 = vld [vmem:[%s0 + $0xde4] sm:$0xf]
  %v905 = vld [vmem:[%s0 + $0xde8] sm:$0xf]
  %v906 = vld [vmem:[%s0 + $0xdec] sm:$0xf]
  %v907 = vld [vmem:[%s0 + $0xdf0] sm:$0xf]
  %v908 = vld [vmem:[%s0 + $0xdf4] sm:$0xf]
  %v909 = vld [vmem:[%s0 + $0xdf8] sm:$0xf]
  %v910 = vld [vmem:[%s0 + $0xdfc] sm:$0xf]
  %v911 = vld [vmem:[%s0 + $0xe00] sm:$0xf]
  %v912 = vld [vmem:[%s0 + $0xe04] sm:$0xf]
  %v913 = vld [vmem:[%s0 + $0xe08] sm:$0xf]
  %v914 = vld [vmem:[%s0 + $0xe0c] sm:$0xf]
  %v915 = vld [vmem:[%s0 + $0xe10] sm:$0xf]
  %v916 = vld [vmem:[%s0 + $0xe14] sm:$0xf]
  %v917 = vld [vmem:[%s0 + $0xe18] sm:$0xf]
  %v918 = vld [vmem:[%s0 + $0xe1c] sm:$0xf]
  %v919 = vld [vmem:[%s0 + $0xe20] sm:$0xf]
  %v920 = vld [vmem:[%s0 + $0xe24] sm:$0xf]
  %v921 = vld [vmem:[%s0 + $0xe28] sm:$0xf]
  %v922 = vld [vmem:[%s0 + $0xe2c] sm:$0xf]
  %v923 = vld [vmem:[%s0 + $0xe30] sm:$0xf]
  %v924 = vld [vmem:[%s0 + $0xe34] sm:$0xf]
  %v925 = vld [vmem:[%s0 + $0xe38] sm:$0xf]
  %v926 = vld [vmem:[%s0 + $0xe3c] sm:$0xf]
  %v927 = vld [vmem:[%s0 + $0xe40] sm:$0xf]
  %v928 = vld [vmem:[%s0 + $0xe44] sm:$0xf]
  %v929 = vld [vmem:[%s0 + $0xe48] sm:$0xf]
  %v930 = vld [vmem:[%s0 + $0xe4c] sm:$0xf]
  %v931 = vld [vmem:[%s0 + $0xe50] sm:$0xf]
  %v932 = vld [vmem:[%s0 + $0xe54] sm:$0xf]
  %v933 = vld [vmem:[%s0 + $0xe58] sm:$0xf]
  %v934 = vld [vmem:[%s0 + $0xe5c] sm:$0xf]
  %v935 = vld [vmem:[%s0 + $0xe60] sm:$0xf]
  %v936 = vld [vmem:[%s0 + $0xe64] sm:$0xf]
  %v937 = vld [vmem:[%s0 + $0xe68] sm:$0xf]
  %v938 = vld [vmem:[%s0 + $0xe6c] sm:$0xf]
  %v939 = vld [vmem:[%s0 + $0xe70] sm:$0xf]
  %v940 = vld [vmem:[%s0 + $0xe74] sm:$0xf]
  %v941 = vld [vmem:[%s0 + $0xe78] sm:$0xf]
  %v942 = vld [vmem:[%s0 + $0xe7c] sm:$0xf]
  %v943 = vld [vmem:[%s0 + $0xe80] sm:$0xf]
  %v944 = vld [vmem:[%s0 + $0xe84] sm:$0xf]
  %v945 = vld [vmem:[%s0 + $0xe88] sm:$0xf]
  %v946 = vld [vmem:[%s0 + $0xe8c] sm:$0xf]
  %v947 = vld [vmem:[%s0 + $0xe90] sm:$0xf]
  %v948 = vld [vmem:[%s0 + $0xe94] sm:$0xf]
  %v949 = vld [vmem:[%s0 + $0xe98] sm:$0xf]
  %v950 = vld [vmem:[%s0 + $0xe9c] sm:$0xf]
  %v951 = vld [vmem:[%s0 + $0xea0] sm:$0xf]
  %v952 = vld [vmem:[%s0 + $0xea4] sm:$0xf]
  %v953 = vld [vmem:[%s0 + $0xea8] sm:$0xf]
  %v954 = vld [vmem:[%s0 + $0xeac] sm:$0xf]
  %v955 = vld [vmem:[%s0 + $0xeb0] sm:$0xf]
  %v956 = vld [vmem:[%s0 + $0xeb4] sm:$0xf]
  %v957 = vld [vmem:[%s0 + $0xeb8] sm:$0xf]
  %v958 = vld [vmem:[%s0 + $0xebc] sm:$0xf]
  %v959 = vld [vmem:[%s0 + $0xec0] sm:$0xf]
  %v960 = vld [vmem:[%s0 + $0xec4] sm:$0xf]
  %v961 = vld [vmem:[%s0 + $0xec8] sm:$0xf]
  %v962 = vld [vmem:[%s0 + $0xecc] sm:$0xf]
  %v963 = vld [vmem:[%s0 + $0xed0] sm:$0xf]
  %v964 = vld [vmem:[%s0 + $0xed4] sm:$0xf]
  %v965 = vld [vmem:[%s0 + $0xed8] sm:$0xf]
  %v966 = vld [vmem:[%s0 + $0xedc] sm:$0xf]
  %v967 = vld [vmem:[%s0 + $0xee0] sm:$0xf]
  %v968 = vld [vmem:[%s0 + $0xee4] sm:$0xf]
  %v969 = vld [vmem:[%s0 + $0xee8] sm:$0xf]
  %v970 = vld [vmem:[%s0 + $0xeec] sm:$0xf]
  %v971 = vld [vmem:[%s0 + $0xef0] sm:$0xf]
  %v972 = vld [vmem:[%s0 + $0xef4] sm:$0xf]
  %v973 = vld [vmem:[%s0 + $0xef8] sm:$0xf]
  %v974 = vld [vmem:[%s0 + $0xefc] sm:$0xf]
  %v975 = vld [vmem:[%s0 + $0xf00] sm:$0xf]
  %v976 = vld [vmem:[%s0 + $0xf04] sm:$0xf]
  %v977 = vld [vmem:[%s0 + $0xf08] sm:$0xf]
  %v978 = vld [vmem:[%s0 + $0xf0c] sm:$0xf]
  %v979 = vld [vmem:[%s0 + $0xf10] sm:$0xf]
  %v980 = vld [vmem:[%s0 + $0xf14] sm:$0xf]
  %v981 = vld [vmem:[%s0 + $0xf18] sm:$0xf]
  %v982 = vld [vmem:[%s0 + $0xf1c] sm:$0xf]
  %v983 = vld [vmem:[%s1] sm:$0xf]
  %v984 = vld [vmem:[%s1 + $0x4] sm:$0x1]
  %v1953 = vunpack.c.l.b16 %v15
  %v1954 = vunpack.c.l.b16 %v16
  %v1955 = vunpack.c.l.b16 %v17
  %v1956 = vunpack.c.l.b16 %v18
  %v1957 = vunpack.c.l.b16 %v19
  %v1958 = vunpack.c.l.b16 %v20
  %v1959 = vunpack.c.l.b16 %v21
  %v1960 = vunpack.c.l.b16 %v22
  %v1961 = vunpack.c.l.b16 %v23
  %v1962 = vunpack.c.l.b16 %v24
  %v1963 = vunpack.c.l.b16 %v25
  %v1964 = vunpack.c.l.b16 %v26
  %v1965 = vunpack.c.l.b16 %v27
  %v1966 = vunpack.c.l.b16 %v28
  %v1967 = vunpack.c.l.b16 %v29
  %v1968 = vunpack.c.l.b16 %v30
  %v1969 = vunpack.c.l.b16 %v31
  %v1970 = vunpack.c.l.b16 %v32
  %v1971 = vunpack.c.l.b16 %v33
  %v1972 = vunpack.c.l.b16 %v34
  %v1973 = vunpack.c.l.b16 %v35
  %v1974 = vunpack.c.l.b16 %v36
  %v1975 = vunpack.c.l.b16 %v37
  %v1976 = vunpack.c.l.b16 %v38
  %v1977 = vunpack.c.l.b16 %v39
  %v1978 = vunpack.c.l.b16 %v40
  %v1979 = vunpack.c.l.b16 %v41
  %v1980 = vunpack.c.l.b16 %v42
  %v1981 = vunpack.c.l.b16 %v43
  %v1982 = vunpack.c.l.b16 %v44
  %v1983 = vunpack.c.l.b16 %v45
  %v1984 = vunpack.c.l.b16 %v46
  %v1985 = vunpack.c.l.b16 %v47
  %v1986 = vunpack.c.l.b16 %v48
  %v1987 = vunpack.c.l.b16 %v49
  %v1988 = vunpack.c.l.b16 %v50
  %v1989 = vunpack.c.l.b16 %v51
  %v1990 = vunpack.c.l.b16 %v52
  %v1991 = vunpack.c.l.b16 %v53
  %v1992 = vunpack.c.l.b16 %v54
  %v1993 = vunpack.c.l.b16 %v55
  %v1994 = vunpack.c.l.b16 %v56
  %v1995 = vunpack.c.l.b16 %v57
  %v1996 = vunpack.c.l.b16 %v58
  %v1997 = vunpack.c.l.b16 %v59
  %v1998 = vunpack.c.l.b16 %v60
  %v1999 = vunpack.c.l.b16 %v61
  %v2000 = vunpack.c.l.b16 %v62
  %v2001 = vunpack.c.l.b16 %v63
  %v2002 = vunpack.c.l.b16 %v64
  %v2003 = vunpack.c.l.b16 %v65
  %v2004 = vunpack.c.l.b16 %v66
  %v2005 = vunpack.c.l.b16 %v67
  %v2006 = vunpack.c.l.b16 %v68
  %v2007 = vunpack.c.l.b16 %v69
  %v2008 = vunpack.c.l.b16 %v70
  %v2009 = vunpack.c.l.b16 %v71
  %v2010 = vunpack.c.l.b16 %v72
  %v2011 = vunpack.c.l.b16 %v73
  %v2012 = vunpack.c.l.b16 %v74
  %v2013 = vunpack.c.l.b16 %v75
  %v2014 = vunpack.c.l.b16 %v76
  %v2015 = vunpack.c.l.b16 %v77
  %v2016 = vunpack.c.l.b16 %v78
  %v2017 = vunpack.c.l.b16 %v79
  %v2018 = vunpack.c.l.b16 %v80
  %v2019 = vunpack.c.l.b16 %v81
  %v2020 = vunpack.c.l.b16 %v82
  %v2021 = vunpack.c.l.b16 %v83
  %v2022 = vunpack.c.l.b16 %v84
  %v2023 = vunpack.c.l.b16 %v85
  %v2024 = vunpack.c.l.b16 %v86
  %v2025 = vunpack.c.l.b16 %v87
  %v2026 = vunpack.c.l.b16 %v88
  %v2027 = vunpack.c.l.b16 %v89
  %v2028 = vunpack.c.l.b16 %v90
  %v2029 = vunpack.c.l.b16 %v91
  %v2030 = vunpack.c.l.b16 %v92
  %v2031 = vunpack.c.l.b16 %v93
  %v2032 = vunpack.c.l.b16 %v94
  %v2033 = vunpack.c.l.b16 %v95
  %v2034 = vunpack.c.l.b16 %v96
  %v2035 = vunpack.c.l.b16 %v97
  %v2036 = vunpack.c.l.b16 %v98
  %v2037 = vunpack.c.l.b16 %v99
  %v2038 = vunpack.c.l.b16 %v100
  %v2039 = vunpack.c.l.b16 %v101
  %v2040 = vunpack.c.l.b16 %v102
  %v2041 = vunpack.c.l.b16 %v103
  %v2042 = vunpack.c.l.b16 %v104
  %v2043 = vunpack.c.l.b16 %v105
  %v2044 = vunpack.c.l.b16 %v106
  %v2045 = vunpack.c.l.b16 %v107
  %v2046 = vunpack.c.l.b16 %v108
  %v2047 = vunpack.c.l.b16 %v109
  %v2048 = vunpack.c.l.b16 %v110
  %v2049 = vunpack.c.l.b16 %v111
  %v2050 = vunpack.c.l.b16 %v112
  %v2051 = vunpack.c.l.b16 %v113
  %v2052 = vunpack.c.l.b16 %v114
  %v2053 = vunpack.c.l.b16 %v115
  %v2054 = vunpack.c.l.b16 %v116
  %v2055 = vunpack.c.l.b16 %v117
  %v2056 = vunpack.c.l.b16 %v118
  %v2057 = vunpack.c.l.b16 %v119
  %v2058 = vunpack.c.l.b16 %v120
  %v2059 = vunpack.c.l.b16 %v121
  %v2060 = vunpack.c.l.b16 %v122
  %v2061 = vunpack.c.l.b16 %v123
  %v2062 = vunpack.c.l.b16 %v124
  %v2063 = vunpack.c.l.b16 %v125
  %v2064 = vunpack.c.l.b16 %v126
  %v2065 = vunpack.c.l.b16 %v127
  %v2066 = vunpack.c.l.b16 %v128
  %v2067 = vunpack.c.l.b16 %v129
  %v2068 = vunpack.c.l.b16 %v130
  %v2069 = vunpack.c.l.b16 %v131
  %v2070 = vunpack.c.l.b16 %v132
  %v2071 = vunpack.c.l.b16 %v133
  %v2072 = vunpack.c.l.b16 %v134
  %v2073 = vunpack.c.l.b16 %v135
  %v2074 = vunpack.c.l.b16 %v136
  %v2075 = vunpack.c.l.b16 %v137
  %v2076 = vunpack.c.l.b16 %v138
  %v2077 = vunpack.c.l.b16 %v139
  %v2078 = vunpack.c.l.b16 %v140
  %v2079 = vunpack.c.l.b16 %v141
  %v2080 = vunpack.c.l.b16 %v142
  %v2081 = vunpack.c.l.b16 %v143
  %v2082 = vunpack.c.l.b16 %v144
  %v2083 = vunpack.c.l.b16 %v145
  %v2084 = vunpack.c.l.b16 %v146
  %v2085 = vunpack.c.l.b16 %v147
  %v2086 = vunpack.c.l.b16 %v148
  %v2087 = vunpack.c.l.b16 %v149
  %v2088 = vunpack.c.l.b16 %v150
  %v2089 = vunpack.c.l.b16 %v151
  %v2090 = vunpack.c.l.b16 %v152
  %v2091 = vunpack.c.l.b16 %v153
  %v2092 = vunpack.c.l.b16 %v154
  %v2093 = vunpack.c.l.b16 %v155
  %v2094 = vunpack.c.l.b16 %v156
  %v2095 = vunpack.c.l.b16 %v157
  %v2096 = vunpack.c.l.b16 %v158
  %v2097 = vunpack.c.l.b16 %v159
  %v2098 = vunpack.c.l.b16 %v160
  %v2099 = vunpack.c.l.b16 %v161
  %v2100 = vunpack.c.l.b16 %v162
  %v2101 = vunpack.c.l.b16 %v163
  %v2102 = vunpack.c.l.b16 %v164
  %v2103 = vunpack.c.l.b16 %v165
  %v2104 = vunpack.c.l.b16 %v166
  %v2105 = vunpack.c.l.b16 %v167
  %v2106 = vunpack.c.l.b16 %v168
  %v2107 = vunpack.c.l.b16 %v169
  %v2108 = vunpack.c.l.b16 %v170
  %v2109 = vunpack.c.l.b16 %v171
  %v2110 = vunpack.c.l.b16 %v172
  %v2111 = vunpack.c.l.b16 %v173
  %v2112 = vunpack.c.l.b16 %v174
  %v2113 = vunpack.c.l.b16 %v175
  %v2114 = vunpack.c.l.b16 %v176
  %v2115 = vunpack.c.l.b16 %v177
  %v2116 = vunpack.c.l.b16 %v178
  %v2117 = vunpack.c.l.b16 %v179
  %v2118 = vunpack.c.l.b16 %v180
  %v2119 = vunpack.c.l.b16 %v181
  %v2120 = vunpack.c.l.b16 %v182
  %v2121 = vunpack.c.l.b16 %v183
  %v2122 = vunpack.c.l.b16 %v184
  %v2123 = vunpack.c.l.b16 %v185
  %v2124 = vunpack.c.l.b16 %v186
  %v2125 = vunpack.c.l.b16 %v187
  %v2126 = vunpack.c.l.b16 %v188
  %v2127 = vunpack.c.l.b16 %v189
  %v2128 = vunpack.c.l.b16 %v190
  %v2129 = vunpack.c.l.b16 %v191
  %v2130 = vunpack.c.l.b16 %v192
  %v2131 = vunpack.c.l.b16 %v193
  %v2132 = vunpack.c.l.b16 %v194
  %v2133 = vunpack.c.l.b16 %v195
  %v2134 = vunpack.c.l.b16 %v196
  %v2135 = vunpack.c.l.b16 %v197
  %v2136 = vunpack.c.l.b16 %v198
  %v2137 = vunpack.c.l.b16 %v199
  %v2138 = vunpack.c.l.b16 %v200
  %v2139 = vunpack.c.l.b16 %v201
  %v2140 = vunpack.c.l.b16 %v202
  %v2141 = vunpack.c.l.b16 %v203
  %v2142 = vunpack.c.l.b16 %v204
  %v2143 = vunpack.c.l.b16 %v205
  %v2144 = vunpack.c.l.b16 %v206
  %v2145 = vunpack.c.l.b16 %v207
  %v2146 = vunpack.c.l.b16 %v208
  %v2147 = vunpack.c.l.b16 %v209
  %v2148 = vunpack.c.l.b16 %v210
  %v2149 = vunpack.c.l.b16 %v211
  %v2150 = vunpack.c.l.b16 %v212
  %v2151 = vunpack.c.l.b16 %v213
  %v2152 = vunpack.c.l.b16 %v214
  %v2153 = vunpack.c.l.b16 %v215
  %v2154 = vunpack.c.l.b16 %v216
  %v2155 = vunpack.c.l.b16 %v217
  %v2156 = vunpack.c.l.b16 %v218
  %v2157 = vunpack.c.l.b16 %v219
  %v2158 = vunpack.c.l.b16 %v220
  %v2159 = vunpack.c.l.b16 %v221
  %v2160 = vunpack.c.l.b16 %v222
  %v2161 = vunpack.c.l.b16 %v223
  %v2162 = vunpack.c.l.b16 %v224
  %v2163 = vunpack.c.l.b16 %v225
  %v2164 = vunpack.c.l.b16 %v226
  %v2165 = vunpack.c.l.b16 %v227
  %v2166 = vunpack.c.l.b16 %v228
  %v2167 = vunpack.c.l.b16 %v229
  %v2168 = vunpack.c.l.b16 %v230
  %v2169 = vunpack.c.l.b16 %v231
  %v2170 = vunpack.c.l.b16 %v232
  %v2171 = vunpack.c.l.b16 %v233
  %v2172 = vunpack.c.l.b16 %v234
  %v2173 = vunpack.c.l.b16 %v235
  %v2174 = vunpack.c.l.b16 %v236
  %v2175 = vunpack.c.l.b16 %v237
  %v2176 = vunpack.c.l.b16 %v238
  %v2177 = vunpack.c.l.b16 %v239
  %v2178 = vunpack.c.l.b16 %v240
  %v2179 = vunpack.c.l.b16 %v241
  %v2180 = vunpack.c.l.b16 %v242
  %v2181 = vunpack.c.l.b16 %v243
  %v2182 = vunpack.c.l.b16 %v244
  %v2183 = vunpack.c.l.b16 %v245
  %v2184 = vunpack.c.l.b16 %v246
  %v2185 = vunpack.c.l.b16 %v247
  %v2186 = vunpack.c.l.b16 %v248
  %v2187 = vunpack.c.l.b16 %v249
  %v2188 = vunpack.c.l.b16 %v250
  %v2189 = vunpack.c.l.b16 %v251
  %v2190 = vunpack.c.l.b16 %v252
  %v2191 = vunpack.c.l.b16 %v253
  %v2192 = vunpack.c.l.b16 %v254
  %v2193 = vunpack.c.l.b16 %v255
  %v2194 = vunpack.c.l.b16 %v256
  %v2195 = vunpack.c.l.b16 %v257
  %v2196 = vunpack.c.l.b16 %v258
  %v2197 = vunpack.c.l.b16 %v259
  %v2198 = vunpack.c.l.b16 %v260
  %v2199 = vunpack.c.l.b16 %v261
  %v2200 = vunpack.c.l.b16 %v262
  %v2201 = vunpack.c.l.b16 %v263
  %v2202 = vunpack.c.l.b16 %v264
  %v2203 = vunpack.c.l.b16 %v265
  %v2204 = vunpack.c.l.b16 %v266
  %v2205 = vunpack.c.l.b16 %v267
  %v2206 = vunpack.c.l.b16 %v268
  %v2207 = vunpack.c.l.b16 %v269
  %v2208 = vunpack.c.l.b16 %v270
  %v2209 = vunpack.c.l.b16 %v271
  %v2210 = vunpack.c.l.b16 %v272
  %v2211 = vunpack.c.l.b16 %v273
  %v2212 = vunpack.c.l.b16 %v274
  %v2213 = vunpack.c.l.b16 %v275
  %v2214 = vunpack.c.l.b16 %v276
  %v2215 = vunpack.c.l.b16 %v277
  %v2216 = vunpack.c.l.b16 %v278
  %v2217 = vunpack.c.l.b16 %v279
  %v2218 = vunpack.c.l.b16 %v280
  %v2219 = vunpack.c.l.b16 %v281
  %v2220 = vunpack.c.l.b16 %v282
  %v2221 = vunpack.c.l.b16 %v283
  %v2222 = vunpack.c.l.b16 %v284
  %v2223 = vunpack.c.l.b16 %v285
  %v2224 = vunpack.c.l.b16 %v286
  %v2225 = vunpack.c.l.b16 %v287
  %v2226 = vunpack.c.l.b16 %v288
  %v2227 = vunpack.c.l.b16 %v289
  %v2228 = vunpack.c.l.b16 %v290
  %v2229 = vunpack.c.l.b16 %v291
  %v2230 = vunpack.c.l.b16 %v292
  %v2231 = vunpack.c.l.b16 %v293
  %v2232 = vunpack.c.l.b16 %v294
  %v2233 = vunpack.c.l.b16 %v295
  %v2234 = vunpack.c.l.b16 %v296
  %v2235 = vunpack.c.l.b16 %v297
  %v2236 = vunpack.c.l.b16 %v298
  %v2237 = vunpack.c.l.b16 %v299
  %v2238 = vunpack.c.l.b16 %v300
  %v2239 = vunpack.c.l.b16 %v301
  %v2240 = vunpack.c.l.b16 %v302
  %v2241 = vunpack.c.l.b16 %v303
  %v2242 = vunpack.c.l.b16 %v304
  %v2243 = vunpack.c.l.b16 %v305
  %v2244 = vunpack.c.l.b16 %v306
  %v2245 = vunpack.c.l.b16 %v307
  %v2246 = vunpack.c.l.b16 %v308
  %v2247 = vunpack.c.l.b16 %v309
  %v2248 = vunpack.c.l.b16 %v310
  %v2249 = vunpack.c.l.b16 %v311
  %v2250 = vunpack.c.l.b16 %v312
  %v2251 = vunpack.c.l.b16 %v313
  %v2252 = vunpack.c.l.b16 %v314
  %v2253 = vunpack.c.l.b16 %v315
  %v2254 = vunpack.c.l.b16 %v316
  %v2255 = vunpack.c.l.b16 %v317
  %v2256 = vunpack.c.l.b16 %v318
  %v2257 = vunpack.c.l.b16 %v319
  %v2258 = vunpack.c.l.b16 %v320
  %v2259 = vunpack.c.l.b16 %v321
  %v2260 = vunpack.c.l.b16 %v322
  %v2261 = vunpack.c.l.b16 %v323
  %v2262 = vunpack.c.l.b16 %v324
  %v2263 = vunpack.c.l.b16 %v325
  %v2264 = vunpack.c.l.b16 %v326
  %v2265 = vunpack.c.l.b16 %v327
  %v2266 = vunpack.c.l.b16 %v328
  %v2267 = vunpack.c.l.b16 %v329
  %v2268 = vunpack.c.l.b16 %v330
  %v2269 = vunpack.c.l.b16 %v331
  %v2270 = vunpack.c.l.b16 %v332
  %v2271 = vunpack.c.l.b16 %v333
  %v2272 = vunpack.c.l.b16 %v334
  %v2273 = vunpack.c.l.b16 %v335
  %v2274 = vunpack.c.l.b16 %v336
  %v2275 = vunpack.c.l.b16 %v337
  %v2276 = vunpack.c.l.b16 %v338
  %v2277 = vunpack.c.l.b16 %v339
  %v2278 = vunpack.c.l.b16 %v340
  %v2279 = vunpack.c.l.b16 %v341
  %v2280 = vunpack.c.l.b16 %v342
  %v2281 = vunpack.c.l.b16 %v343
  %v2282 = vunpack.c.l.b16 %v344
  %v2283 = vunpack.c.l.b16 %v345
  %v2284 = vunpack.c.l.b16 %v346
  %v2285 = vunpack.c.l.b16 %v347
  %v2286 = vunpack.c.l.b16 %v348
  %v2287 = vunpack.c.l.b16 %v349
  %v2288 = vunpack.c.l.b16 %v350
  %v2289 = vunpack.c.l.b16 %v351
  %v2290 = vunpack.c.l.b16 %v352
  %v2291 = vunpack.c.l.b16 %v353
  %v2292 = vunpack.c.l.b16 %v354
  %v2293 = vunpack.c.l.b16 %v355
  %v2294 = vunpack.c.l.b16 %v356
  %v2295 = vunpack.c.l.b16 %v357
  %v2296 = vunpack.c.l.b16 %v358
  %v2297 = vunpack.c.l.b16 %v359
  %v2298 = vunpack.c.l.b16 %v360
  %v2299 = vunpack.c.l.b16 %v361
  %v2300 = vunpack.c.l.b16 %v362
  %v2301 = vunpack.c.l.b16 %v363
  %v2302 = vunpack.c.l.b16 %v364
  %v2303 = vunpack.c.l.b16 %v365
  %v2304 = vunpack.c.l.b16 %v366
  %v2305 = vunpack.c.l.b16 %v367
  %v2306 = vunpack.c.l.b16 %v368
  %v2307 = vunpack.c.l.b16 %v369
  %v2308 = vunpack.c.l.b16 %v370
  %v2309 = vunpack.c.l.b16 %v371
  %v2310 = vunpack.c.l.b16 %v372
  %v2311 = vunpack.c.l.b16 %v373
  %v2312 = vunpack.c.l.b16 %v374
  %v2313 = vunpack.c.l.b16 %v375
  %v2314 = vunpack.c.l.b16 %v376
  %v2315 = vunpack.c.l.b16 %v377
  %v2316 = vunpack.c.l.b16 %v378
  %v2317 = vunpack.c.l.b16 %v379
  %v2318 = vunpack.c.l.b16 %v380
  %v2319 = vunpack.c.l.b16 %v381
  %v2320 = vunpack.c.l.b16 %v382
  %v2321 = vunpack.c.l.b16 %v383
  %v2322 = vunpack.c.l.b16 %v384
  %v2323 = vunpack.c.l.b16 %v385
  %v2324 = vunpack.c.l.b16 %v386
  %v2325 = vunpack.c.l.b16 %v387
  %v2326 = vunpack.c.l.b16 %v388
  %v2327 = vunpack.c.l.b16 %v389
  %v2328 = vunpack.c.l.b16 %v390
  %v2329 = vunpack.c.l.b16 %v391
  %v2330 = vunpack.c.l.b16 %v392
  %v2331 = vunpack.c.l.b16 %v393
  %v2332 = vunpack.c.l.b16 %v394
  %v2333 = vunpack.c.l.b16 %v395
  %v2334 = vunpack.c.l.b16 %v396
  %v2335 = vunpack.c.l.b16 %v397
  %v2336 = vunpack.c.l.b16 %v398
  %v2337 = vunpack.c.l.b16 %v399
  %v2338 = vunpack.c.l.b16 %v400
  %v2339 = vunpack.c.l.b16 %v401
  %v2340 = vunpack.c.l.b16 %v402
  %v2341 = vunpack.c.l.b16 %v403
  %v2342 = vunpack.c.l.b16 %v404
  %v2343 = vunpack.c.l.b16 %v405
  %v2344 = vunpack.c.l.b16 %v406
  %v2345 = vunpack.c.l.b16 %v407
  %v2346 = vunpack.c.l.b16 %v408
  %v2347 = vunpack.c.l.b16 %v409
  %v2348 = vunpack.c.l.b16 %v410
  %v2349 = vunpack.c.l.b16 %v411
  %v2350 = vunpack.c.l.b16 %v412
  %v2351 = vunpack.c.l.b16 %v413
  %v2352 = vunpack.c.l.b16 %v414
  %v2353 = vunpack.c.l.b16 %v415
  %v2354 = vunpack.c.l.b16 %v416
  %v2355 = vunpack.c.l.b16 %v417
  %v2356 = vunpack.c.l.b16 %v418
  %v2357 = vunpack.c.l.b16 %v419
  %v2358 = vunpack.c.l.b16 %v420
  %v2359 = vunpack.c.l.b16 %v421
  %v2360 = vunpack.c.l.b16 %v422
  %v2361 = vunpack.c.l.b16 %v423
  %v2362 = vunpack.c.l.b16 %v424
  %v2363 = vunpack.c.l.b16 %v425
  %v2364 = vunpack.c.l.b16 %v426
  %v2365 = vunpack.c.l.b16 %v427
  %v2366 = vunpack.c.l.b16 %v428
  %v2367 = vunpack.c.l.b16 %v429
  %v2368 = vunpack.c.l.b16 %v430
  %v2369 = vunpack.c.l.b16 %v431
  %v2370 = vunpack.c.l.b16 %v432
  %v2371 = vunpack.c.l.b16 %v433
  %v2372 = vunpack.c.l.b16 %v434
  %v2373 = vunpack.c.l.b16 %v435
  %v2374 = vunpack.c.l.b16 %v436
  %v2375 = vunpack.c.l.b16 %v437
  %v2376 = vunpack.c.l.b16 %v438
  %v2377 = vunpack.c.l.b16 %v439
  %v2378 = vunpack.c.l.b16 %v440
  %v2379 = vunpack.c.l.b16 %v441
  %v2380 = vunpack.c.l.b16 %v442
  %v2381 = vunpack.c.l.b16 %v443
  %v2382 = vunpack.c.l.b16 %v444
  %v2383 = vunpack.c.l.b16 %v445
  %v2384 = vunpack.c.l.b16 %v446
  %v2385 = vunpack.c.l.b16 %v447
  %v2386 = vunpack.c.l.b16 %v448
  %v2387 = vunpack.c.l.b16 %v449
  %v2388 = vunpack.c.l.b16 %v450
  %v2389 = vunpack.c.l.b16 %v451
  %v2390 = vunpack.c.l.b16 %v452
  %v2391 = vunpack.c.l.b16 %v453
  %v2392 = vunpack.c.l.b16 %v454
  %v2393 = vunpack.c.l.b16 %v455
  %v2394 = vunpack.c.l.b16 %v456
  %v2395 = vunpack.c.l.b16 %v457
  %v2396 = vunpack.c.l.b16 %v458
  %v2397 = vunpack.c.l.b16 %v459
  %v2398 = vunpack.c.l.b16 %v460
  %v2399 = vunpack.c.l.b16 %v461
  %v2400 = vunpack.c.l.b16 %v462
  %v2401 = vunpack.c.l.b16 %v463
  %v2402 = vunpack.c.l.b16 %v464
  %v2403 = vunpack.c.l.b16 %v465
  %v2404 = vunpack.c.l.b16 %v466
  %v2405 = vunpack.c.l.b16 %v467
  %v2406 = vunpack.c.l.b16 %v468
  %v2407 = vunpack.c.l.b16 %v469
  %v2408 = vunpack.c.l.b16 %v470
  %v2409 = vunpack.c.l.b16 %v471
  %v2410 = vunpack.c.l.b16 %v472
  %v2411 = vunpack.c.l.b16 %v473
  %v2412 = vunpack.c.l.b16 %v474
  %v2413 = vunpack.c.l.b16 %v475
  %v2414 = vunpack.c.l.b16 %v476
  %v2415 = vunpack.c.l.b16 %v477
  %v2416 = vunpack.c.l.b16 %v478
  %v2417 = vunpack.c.l.b16 %v479
  %v2418 = vunpack.c.l.b16 %v480
  %v2419 = vunpack.c.l.b16 %v481
  %v2420 = vunpack.c.l.b16 %v482
  %v2421 = vunpack.c.l.b16 %v483
  %v2422 = vunpack.c.l.b16 %v484
  %v2423 = vunpack.c.l.b16 %v485
  %v2424 = vunpack.c.l.b16 %v486
  %v2425 = vunpack.c.l.b16 %v487
  %v2426 = vunpack.c.l.b16 %v488
  %v2427 = vunpack.c.l.b16 %v489
  %v2428 = vunpack.c.l.b16 %v490
  %v2429 = vunpack.c.l.b16 %v491
  %v2430 = vunpack.c.l.b16 %v492
  %v2431 = vunpack.c.l.b16 %v493
  %v2432 = vunpack.c.l.b16 %v494
  %v2433 = vunpack.c.l.b16 %v495
  %v2434 = vunpack.c.l.b16 %v496
  %v2435 = vunpack.c.l.b16 %v497
  %v2436 = vunpack.c.l.b16 %v498
  %v2437 = vunpack.c.l.b16 %v499
  %v2438 = vunpack.c.l.b16 %v500
  %v2439 = vunpack.c.l.b16 %v501
  %v2440 = vunpack.c.l.b16 %v502
  %v2441 = vunpack.c.l.b16 %v503
  %v2442 = vunpack.c.l.b16 %v504
  %v2443 = vunpack.c.l.b16 %v505
  %v2444 = vunpack.c.l.b16 %v506
  %v2445 = vunpack.c.l.b16 %v507
  %v2446 = vunpack.c.l.b16 %v508
  %v2447 = vunpack.c.l.b16 %v509
  %v2448 = vunpack.c.l.b16 %v510
  %v2449 = vunpack.c.l.b16 %v511
  %v2450 = vunpack.c.l.b16 %v512
  %v2451 = vunpack.c.l.b16 %v513
  %v2452 = vunpack.c.l.b16 %v514
  %v2453 = vunpack.c.l.b16 %v515
  %v2454 = vunpack.c.l.b16 %v516
  %v2455 = vunpack.c.l.b16 %v517
  %v2456 = vunpack.c.l.b16 %v518
  %v2457 = vunpack.c.l.b16 %v519
  %v2458 = vunpack.c.l.b16 %v520
  %v2459 = vunpack.c.l.b16 %v521
  %v2460 = vunpack.c.l.b16 %v522
  %v2461 = vunpack.c.l.b16 %v523
  %v2462 = vunpack.c.l.b16 %v524
  %v2463 = vunpack.c.l.b16 %v525
  %v2464 = vunpack.c.l.b16 %v526
  %v2465 = vunpack.c.l.b16 %v527
  %v2466 = vunpack.c.l.b16 %v528
  %v2467 = vunpack.c.l.b16 %v529
  %v2468 = vunpack.c.l.b16 %v530
  %v2469 = vunpack.c.l.b16 %v531
  %v2470 = vunpack.c.l.b16 %v532
  %v2471 = vunpack.c.l.b16 %v533
  %v2472 = vunpack.c.l.b16 %v534
  %v2473 = vunpack.c.l.b16 %v535
  %v2474 = vunpack.c.l.b16 %v536
  %v2475 = vunpack.c.l.b16 %v537
  %v2476 = vunpack.c.l.b16 %v538
  %v2477 = vunpack.c.l.b16 %v539
  %v2478 = vunpack.c.l.b16 %v540
  %v2479 = vunpack.c.l.b16 %v541
  %v2480 = vunpack.c.l.b16 %v542
  %v2481 = vunpack.c.l.b16 %v543
  %v2482 = vunpack.c.l.b16 %v544
  %v2483 = vunpack.c.l.b16 %v545
  %v2484 = vunpack.c.l.b16 %v546
  %v2485 = vunpack.c.l.b16 %v547
  %v2486 = vunpack.c.l.b16 %v548
  %v2487 = vunpack.c.l.b16 %v549
  %v2488 = vunpack.c.l.b16 %v550
  %v2489 = vunpack.c.l.b16 %v551
  %v2490 = vunpack.c.l.b16 %v552
  %v2491 = vunpack.c.l.b16 %v553
  %v2492 = vunpack.c.l.b16 %v554
  %v2493 = vunpack.c.l.b16 %v555
  %v2494 = vunpack.c.l.b16 %v556
  %v2495 = vunpack.c.l.b16 %v557
  %v2496 = vunpack.c.l.b16 %v558
  %v2497 = vunpack.c.l.b16 %v559
  %v2498 = vunpack.c.l.b16 %v560
  %v2499 = vunpack.c.l.b16 %v561
  %v2500 = vunpack.c.l.b16 %v562
  %v2501 = vunpack.c.l.b16 %v563
  %v2502 = vunpack.c.l.b16 %v564
  %v2503 = vunpack.c.l.b16 %v565
  %v2504 = vunpack.c.l.b16 %v566
  %v2505 = vunpack.c.l.b16 %v567
  %v2506 = vunpack.c.l.b16 %v568
  %v2507 = vunpack.c.l.b16 %v569
  %v2508 = vunpack.c.l.b16 %v570
  %v2509 = vunpack.c.l.b16 %v571
  %v2510 = vunpack.c.l.b16 %v572
  %v2511 = vunpack.c.l.b16 %v573
  %v2512 = vunpack.c.l.b16 %v574
  %v2513 = vunpack.c.l.b16 %v575
  %v2514 = vunpack.c.l.b16 %v576
  %v2515 = vunpack.c.l.b16 %v577
  %v2516 = vunpack.c.l.b16 %v578
  %v2517 = vunpack.c.l.b16 %v579
  %v2518 = vunpack.c.l.b16 %v580
  %v2519 = vunpack.c.l.b16 %v581
  %v2520 = vunpack.c.l.b16 %v582
  %v2521 = vunpack.c.l.b16 %v583
  %v2522 = vunpack.c.l.b16 %v584
  %v2523 = vunpack.c.l.b16 %v585
  %v2524 = vunpack.c.l.b16 %v586
  %v2525 = vunpack.c.l.b16 %v587
  %v2526 = vunpack.c.l.b16 %v588
  %v2527 = vunpack.c.l.b16 %v589
  %v2528 = vunpack.c.l.b16 %v590
  %v2529 = vunpack.c.l.b16 %v591
  %v2530 = vunpack.c.l.b16 %v592
  %v2531 = vunpack.c.l.b16 %v593
  %v2532 = vunpack.c.l.b16 %v594
  %v2533 = vunpack.c.l.b16 %v595
  %v2534 = vunpack.c.l.b16 %v596
  %v2535 = vunpack.c.l.b16 %v597
  %v2536 = vunpack.c.l.b16 %v598
  %v2537 = vunpack.c.l.b16 %v599
  %v2538 = vunpack.c.l.b16 %v600
  %v2539 = vunpack.c.l.b16 %v601
  %v2540 = vunpack.c.l.b16 %v602
  %v2541 = vunpack.c.l.b16 %v603
  %v2542 = vunpack.c.l.b16 %v604
  %v2543 = vunpack.c.l.b16 %v605
  %v2544 = vunpack.c.l.b16 %v606
  %v2545 = vunpack.c.l.b16 %v607
  %v2546 = vunpack.c.l.b16 %v608
  %v2547 = vunpack.c.l.b16 %v609
  %v2548 = vunpack.c.l.b16 %v610
  %v2549 = vunpack.c.l.b16 %v611
  %v2550 = vunpack.c.l.b16 %v612
  %v2551 = vunpack.c.l.b16 %v613
  %v2552 = vunpack.c.l.b16 %v614
  %v2553 = vunpack.c.l.b16 %v615
  %v2554 = vunpack.c.l.b16 %v616
  %v2555 = vunpack.c.l.b16 %v617
  %v2556 = vunpack.c.l.b16 %v618
  %v2557 = vunpack.c.l.b16 %v619
  %v2558 = vunpack.c.l.b16 %v620
  %v2559 = vunpack.c.l.b16 %v621
  %v2560 = vunpack.c.l.b16 %v622
  %v2561 = vunpack.c.l.b16 %v623
  %v2562 = vunpack.c.l.b16 %v624
  %v2563 = vunpack.c.l.b16 %v625
  %v2564 = vunpack.c.l.b16 %v626
  %v2565 = vunpack.c.l.b16 %v627
  %v2566 = vunpack.c.l.b16 %v628
  %v2567 = vunpack.c.l.b16 %v629
  %v2568 = vunpack.c.l.b16 %v630
  %v2569 = vunpack.c.l.b16 %v631
  %v2570 = vunpack.c.l.b16 %v632
  %v2571 = vunpack.c.l.b16 %v633
  %v2572 = vunpack.c.l.b16 %v634
  %v2573 = vunpack.c.l.b16 %v635
  %v2574 = vunpack.c.l.b16 %v636
  %v2575 = vunpack.c.l.b16 %v637
  %v2576 = vunpack.c.l.b16 %v638
  %v2577 = vunpack.c.l.b16 %v639
  %v2578 = vunpack.c.l.b16 %v640
  %v2579 = vunpack.c.l.b16 %v641
  %v2580 = vunpack.c.l.b16 %v642
  %v2581 = vunpack.c.l.b16 %v643
  %v2582 = vunpack.c.l.b16 %v644
  %v2583 = vunpack.c.l.b16 %v645
  %v2584 = vunpack.c.l.b16 %v646
  %v2585 = vunpack.c.l.b16 %v647
  %v2586 = vunpack.c.l.b16 %v648
  %v2587 = vunpack.c.l.b16 %v649
  %v2588 = vunpack.c.l.b16 %v650
  %v2589 = vunpack.c.l.b16 %v651
  %v2590 = vunpack.c.l.b16 %v652
  %v2591 = vunpack.c.l.b16 %v653
  %v2592 = vunpack.c.l.b16 %v654
  %v2593 = vunpack.c.l.b16 %v655
  %v2594 = vunpack.c.l.b16 %v656
  %v2595 = vunpack.c.l.b16 %v657
  %v2596 = vunpack.c.l.b16 %v658
  %v2597 = vunpack.c.l.b16 %v659
  %v2598 = vunpack.c.l.b16 %v660
  %v2599 = vunpack.c.l.b16 %v661
  %v2600 = vunpack.c.l.b16 %v662
  %v2601 = vunpack.c.l.b16 %v663
  %v2602 = vunpack.c.l.b16 %v664
  %v2603 = vunpack.c.l.b16 %v665
  %v2604 = vunpack.c.l.b16 %v666
  %v2605 = vunpack.c.l.b16 %v667
  %v2606 = vunpack.c.l.b16 %v668
  %v2607 = vunpack.c.l.b16 %v669
  %v2608 = vunpack.c.l.b16 %v670
  %v2609 = vunpack.c.l.b16 %v671
  %v2610 = vunpack.c.l.b16 %v672
  %v2611 = vunpack.c.l.b16 %v673
  %v2612 = vunpack.c.l.b16 %v674
  %v2613 = vunpack.c.l.b16 %v675
  %v2614 = vunpack.c.l.b16 %v676
  %v2615 = vunpack.c.l.b16 %v677
  %v2616 = vunpack.c.l.b16 %v678
  %v2617 = vunpack.c.l.b16 %v679
  %v2618 = vunpack.c.l.b16 %v680
  %v2619 = vunpack.c.l.b16 %v681
  %v2620 = vunpack.c.l.b16 %v682
  %v2621 = vunpack.c.l.b16 %v683
  %v2622 = vunpack.c.l.b16 %v684
  %v2623 = vunpack.c.l.b16 %v685
  %v2624 = vunpack.c.l.b16 %v686
  %v2625 = vunpack.c.l.b16 %v687
  %v2626 = vunpack.c.l.b16 %v688
  %v2627 = vunpack.c.l.b16 %v689
  %v2628 = vunpack.c.l.b16 %v690
  %v2629 = vunpack.c.l.b16 %v691
  %v2630 = vunpack.c.l.b16 %v692
  %v2631 = vunpack.c.l.b16 %v693
  %v2632 = vunpack.c.l.b16 %v694
  %v2633 = vunpack.c.l.b16 %v695
  %v2634 = vunpack.c.l.b16 %v696
  %v2635 = vunpack.c.l.b16 %v697
  %v2636 = vunpack.c.l.b16 %v698
  %v2637 = vunpack.c.l.b16 %v699
  %v2638 = vunpack.c.l.b16 %v700
  %v2639 = vunpack.c.l.b16 %v701
  %v2640 = vunpack.c.l.b16 %v702
  %v2641 = vunpack.c.l.b16 %v703
  %v2642 = vunpack.c.l.b16 %v704
  %v2643 = vunpack.c.l.b16 %v705
  %v2644 = vunpack.c.l.b16 %v706
  %v2645 = vunpack.c.l.b16 %v707
  %v2646 = vunpack.c.l.b16 %v708
  %v2647 = vunpack.c.l.b16 %v709
  %v2648 = vunpack.c.l.b16 %v710
  %v2649 = vunpack.c.l.b16 %v711
  %v2650 = vunpack.c.l.b16 %v712
  %v2651 = vunpack.c.l.b16 %v713
  %v2652 = vunpack.c.l.b16 %v714
  %v2653 = vunpack.c.l.b16 %v715
  %v2654 = vunpack.c.l.b16 %v716
  %v2655 = vunpack.c.l.b16 %v717
  %v2656 = vunpack.c.l.b16 %v718
  %v2657 = vunpack.c.l.b16 %v719
  %v2658 = vunpack.c.l.b16 %v720
  %v2659 = vunpack.c.l.b16 %v721
  %v2660 = vunpack.c.l.b16 %v722
  %v2661 = vunpack.c.l.b16 %v723
  %v2662 = vunpack.c.l.b16 %v724
  %v2663 = vunpack.c.l.b16 %v725
  %v2664 = vunpack.c.l.b16 %v726
  %v2665 = vunpack.c.l.b16 %v727
  %v2666 = vunpack.c.l.b16 %v728
  %v2667 = vunpack.c.l.b16 %v729
  %v2668 = vunpack.c.l.b16 %v730
  %v2669 = vunpack.c.l.b16 %v731
  %v2670 = vunpack.c.l.b16 %v732
  %v2671 = vunpack.c.l.b16 %v733
  %v2672 = vunpack.c.l.b16 %v734
  %v2673 = vunpack.c.l.b16 %v735
  %v2674 = vunpack.c.l.b16 %v736
  %v2675 = vunpack.c.l.b16 %v737
  %v2676 = vunpack.c.l.b16 %v738
  %v2677 = vunpack.c.l.b16 %v739
  %v2678 = vunpack.c.l.b16 %v740
  %v2679 = vunpack.c.l.b16 %v741
  %v2680 = vunpack.c.l.b16 %v742
  %v2681 = vunpack.c.l.b16 %v743
  %v2682 = vunpack.c.l.b16 %v744
  %v2683 = vunpack.c.l.b16 %v745
  %v2684 = vunpack.c.l.b16 %v746
  %v2685 = vunpack.c.l.b16 %v747
  %v2686 = vunpack.c.l.b16 %v748
  %v2687 = vunpack.c.l.b16 %v749
  %v2688 = vunpack.c.l.b16 %v750
  %v2689 = vunpack.c.l.b16 %v751
  %v2690 = vunpack.c.l.b16 %v752
  %v2691 = vunpack.c.l.b16 %v753
  %v2692 = vunpack.c.l.b16 %v754
  %v2693 = vunpack.c.l.b16 %v755
  %v2694 = vunpack.c.l.b16 %v756
  %v2695 = vunpack.c.l.b16 %v757
  %v2696 = vunpack.c.l.b16 %v758
  %v2697 = vunpack.c.l.b16 %v759
  %v2698 = vunpack.c.l.b16 %v760
  %v2699 = vunpack.c.l.b16 %v761
  %v2700 = vunpack.c.l.b16 %v762
  %v2701 = vunpack.c.l.b16 %v763
  %v2702 = vunpack.c.l.b16 %v764
  %v2703 = vunpack.c.l.b16 %v765
  %v2704 = vunpack.c.l.b16 %v766
  %v2705 = vunpack.c.l.b16 %v767
  %v2706 = vunpack.c.l.b16 %v768
  %v2707 = vunpack.c.l.b16 %v769
  %v2708 = vunpack.c.l.b16 %v770
  %v2709 = vunpack.c.l.b16 %v771
  %v2710 = vunpack.c.l.b16 %v772
  %v2711 = vunpack.c.l.b16 %v773
  %v2712 = vunpack.c.l.b16 %v774
  %v2713 = vunpack.c.l.b16 %v775
  %v2714 = vunpack.c.l.b16 %v776
  %v2715 = vunpack.c.l.b16 %v777
  %v2716 = vunpack.c.l.b16 %v778
  %v2717 = vunpack.c.l.b16 %v779
  %v2718 = vunpack.c.l.b16 %v780
  %v2719 = vunpack.c.l.b16 %v781
  %v2720 = vunpack.c.l.b16 %v782
  %v2721 = vunpack.c.l.b16 %v783
  %v2722 = vunpack.c.l.b16 %v784
  %v2723 = vunpack.c.l.b16 %v785
  %v2724 = vunpack.c.l.b16 %v786
  %v2725 = vunpack.c.l.b16 %v787
  %v2726 = vunpack.c.l.b16 %v788
  %v2727 = vunpack.c.l.b16 %v789
  %v2728 = vunpack.c.l.b16 %v790
  %v2729 = vunpack.c.l.b16 %v791
  %v2730 = vunpack.c.l.b16 %v792
  %v2731 = vunpack.c.l.b16 %v793
  %v2732 = vunpack.c.l.b16 %v794
  %v2733 = vunpack.c.l.b16 %v795
  %v2734 = vunpack.c.l.b16 %v796
  %v2735 = vunpack.c.l.b16 %v797
  %v2736 = vunpack.c.l.b16 %v798
  %v2737 = vunpack.c.l.b16 %v799
  %v2738 = vunpack.c.l.b16 %v800
  %v2739 = vunpack.c.l.b16 %v801
  %v2740 = vunpack.c.l.b16 %v802
  %v2741 = vunpack.c.l.b16 %v803
  %v2742 = vunpack.c.l.b16 %v804
  %v2743 = vunpack.c.l.b16 %v805
  %v2744 = vunpack.c.l.b16 %v806
  %v2745 = vunpack.c.l.b16 %v807
  %v2746 = vunpack.c.l.b16 %v808
  %v2747 = vunpack.c.l.b16 %v809
  %v2748 = vunpack.c.l.b16 %v810
  %v2749 = vunpack.c.l.b16 %v811
  %v2750 = vunpack.c.l.b16 %v812
  %v2751 = vunpack.c.l.b16 %v813
  %v2752 = vunpack.c.l.b16 %v814
  %v2753 = vunpack.c.l.b16 %v815
  %v2754 = vunpack.c.l.b16 %v816
  %v2755 = vunpack.c.l.b16 %v817
  %v2756 = vunpack.c.l.b16 %v818
  %v2757 = vunpack.c.l.b16 %v819
  %v2758 = vunpack.c.l.b16 %v820
  %v2759 = vunpack.c.l.b16 %v821
  %v2760 = vunpack.c.l.b16 %v822
  %v2761 = vunpack.c.l.b16 %v823
  %v2762 = vunpack.c.l.b16 %v824
  %v2763 = vunpack.c.l.b16 %v825
  %v2764 = vunpack.c.l.b16 %v826
  %v2765 = vunpack.c.l.b16 %v827
  %v2766 = vunpack.c.l.b16 %v828
  %v2767 = vunpack.c.l.b16 %v829
  %v2768 = vunpack.c.l.b16 %v830
  %v2769 = vunpack.c.l.b16 %v831
  %v2770 = vunpack.c.l.b16 %v832
  %v2771 = vunpack.c.l.b16 %v833
  %v2772 = vunpack.c.l.b16 %v834
  %v2773 = vunpack.c.l.b16 %v835
  %v2774 = vunpack.c.l.b16 %v836
  %v2775 = vunpack.c.l.b16 %v837
  %v2776 = vunpack.c.l.b16 %v838
  %v2777 = vunpack.c.l.b16 %v839
  %v2778 = vunpack.c.l.b16 %v840
  %v2779 = vunpack.c.l.b16 %v841
  %v2780 = vunpack.c.l.b16 %v842
  %v2781 = vunpack.c.l.b16 %v843
  %v2782 = vunpack.c.l.b16 %v844
  %v2783 = vunpack.c.l.b16 %v845
  %v2784 = vunpack.c.l.b16 %v846
  %v2785 = vunpack.c.l.b16 %v847
  %v2786 = vunpack.c.l.b16 %v848
  %v2787 = vunpack.c.l.b16 %v849
  %v2788 = vunpack.c.l.b16 %v850
  %v2789 = vunpack.c.l.b16 %v851
  %v2790 = vunpack.c.l.b16 %v852
  %v2791 = vunpack.c.l.b16 %v853
  %v2792 = vunpack.c.l.b16 %v854
  %v2793 = vunpack.c.l.b16 %v855
  %v2794 = vunpack.c.l.b16 %v856
  %v2795 = vunpack.c.l.b16 %v857
  %v2796 = vunpack.c.l.b16 %v858
  %v2797 = vunpack.c.l.b16 %v859
  %v2798 = vunpack.c.l.b16 %v860
  %v2799 = vunpack.c.l.b16 %v861
  %v2800 = vunpack.c.l.b16 %v862
  %v2801 = vunpack.c.l.b16 %v863
  %v2802 = vunpack.c.l.b16 %v864
  %v2803 = vunpack.c.l.b16 %v865
  %v2804 = vunpack.c.l.b16 %v866
  %v2805 = vunpack.c.l.b16 %v867
  %v2806 = vunpack.c.l.b16 %v868
  %v2807 = vunpack.c.l.b16 %v869
  %v2808 = vunpack.c.l.b16 %v870
  %v2809 = vunpack.c.l.b16 %v871
  %v2810 = vunpack.c.l.b16 %v872
  %v2811 = vunpack.c.l.b16 %v873
  %v2812 = vunpack.c.l.b16 %v874
  %v2813 = vunpack.c.l.b16 %v875
  %v2814 = vunpack.c.l.b16 %v876
  %v2815 = vunpack.c.l.b16 %v877
  %v2816 = vunpack.c.l.b16 %v878
  %v2817 = vunpack.c.l.b16 %v879
  %v2818 = vunpack.c.l.b16 %v880
  %v2819 = vunpack.c.l.b16 %v881
  %v2820 = vunpack.c.l.b16 %v882
  %v2821 = vunpack.c.l.b16 %v883
  %v2822 = vunpack.c.l.b16 %v884
  %v2823 = vunpack.c.l.b16 %v885
  %v2824 = vunpack.c.l.b16 %v886
  %v2825 = vunpack.c.l.b16 %v887
  %v2826 = vunpack.c.l.b16 %v888
  %v2827 = vunpack.c.l.b16 %v889
  %v2828 = vunpack.c.l.b16 %v890
  %v2829 = vunpack.c.l.b16 %v891
  %v2830 = vunpack.c.l.b16 %v892
  %v2831 = vunpack.c.l.b16 %v893
  %v2832 = vunpack.c.l.b16 %v894
  %v2833 = vunpack.c.l.b16 %v895
  %v2834 = vunpack.c.l.b16 %v896
  %v2835 = vunpack.c.l.b16 %v897
  %v2836 = vunpack.c.l.b16 %v898
  %v2837 = vunpack.c.l.b16 %v899
  %v2838 = vunpack.c.l.b16 %v900
  %v2839 = vunpack.c.l.b16 %v901
  %v2840 = vunpack.c.l.b16 %v902
  %v2841 = vunpack.c.l.b16 %v903
  %v2842 = vunpack.c.l.b16 %v904
  %v2843 = vunpack.c.l.b16 %v905
  %v2844 = vunpack.c.l.b16 %v906
  %v2845 = vunpack.c.l.b16 %v907
  %v2846 = vunpack.c.l.b16 %v908
  %v2847 = vunpack.c.l.b16 %v909
  %v2848 = vunpack.c.l.b16 %v910
  %v2849 = vunpack.c.l.b16 %v911
  %v2850 = vunpack.c.l.b16 %v912
  %v2851 = vunpack.c.l.b16 %v913
  %v2852 = vunpack.c.l.b16 %v914
  %v2853 = vunpack.c.l.b16 %v915
  %v2854 = vunpack.c.l.b16 %v916
  %v2855 = vunpack.c.l.b16 %v917
  %v2856 = vunpack.c.l.b16 %v918
  %v2857 = vunpack.c.l.b16 %v919
  %v2858 = vunpack.c.l.b16 %v920
  %v2859 = vunpack.c.l.b16 %v921
  %v2860 = vunpack.c.l.b16 %v922
  %v2861 = vunpack.c.l.b16 %v923
  %v2862 = vunpack.c.l.b16 %v924
  %v2863 = vunpack.c.l.b16 %v925
  %v2864 = vunpack.c.l.b16 %v926
  %v2865 = vunpack.c.l.b16 %v927
  %v2866 = vunpack.c.l.b16 %v928
  %v2867 = vunpack.c.l.b16 %v929
  %v2868 = vunpack.c.l.b16 %v930
  %v2869 = vunpack.c.l.b16 %v931
  %v2870 = vunpack.c.l.b16 %v932
  %v2871 = vunpack.c.l.b16 %v933
  %v2872 = vunpack.c.l.b16 %v934
  %v2873 = vunpack.c.l.b16 %v935
  %v2874 = vunpack.c.l.b16 %v936
  %v2875 = vunpack.c.l.b16 %v937
  %v2876 = vunpack.c.l.b16 %v938
  %v2877 = vunpack.c.l.b16 %v939
  %v2878 = vunpack.c.l.b16 %v940
  %v2879 = vunpack.c.l.b16 %v941
  %v2880 = vunpack.c.l.b16 %v942
  %v2881 = vunpack.c.l.b16 %v943
  %v2882 = vunpack.c.l.b16 %v944
  %v2883 = vunpack.c.l.b16 %v945
  %v2884 = vunpack.c.l.b16 %v946
  %v2885 = vunpack.c.l.b16 %v947
  %v2886 = vunpack.c.l.b16 %v948
  %v2887 = vunpack.c.l.b16 %v949
  %v2888 = vunpack.c.l.b16 %v950
  %v2889 = vunpack.c.l.b16 %v951
  %v2890 = vunpack.c.l.b16 %v952
  %v2891 = vunpack.c.l.b16 %v953
  %v2892 = vunpack.c.l.b16 %v954
  %v2893 = vunpack.c.l.b16 %v955
  %v2894 = vunpack.c.l.b16 %v956
  %v2895 = vunpack.c.l.b16 %v957
  %v2896 = vunpack.c.l.b16 %v958
  %v2897 = vunpack.c.l.b16 %v959
  %v2898 = vunpack.c.l.b16 %v960
  %v2899 = vunpack.c.l.b16 %v961
  %v2900 = vunpack.c.l.b16 %v962
  %v2901 = vunpack.c.l.b16 %v963
  %v2902 = vunpack.c.l.b16 %v964
  %v2903 = vunpack.c.l.b16 %v965
  %v2904 = vunpack.c.l.b16 %v966
  %v2905 = vunpack.c.l.b16 %v967
  %v2906 = vunpack.c.l.b16 %v968
  %v2907 = vunpack.c.l.b16 %v969
  %v2908 = vunpack.c.l.b16 %v970
  %v2909 = vunpack.c.l.b16 %v971
  %v2910 = vunpack.c.l.b16 %v972
  %v2911 = vunpack.c.l.b16 %v973
  %v2912 = vunpack.c.l.b16 %v974
  %v2913 = vunpack.c.l.b16 %v975
  %v2914 = vunpack.c.l.b16 %v976
  %v2915 = vunpack.c.l.b16 %v977
  %v2916 = vunpack.c.l.b16 %v978
  %v2917 = vunpack.c.l.b16 %v979
  %v2918 = vunpack.c.l.b16 %v980
  %v2919 = vunpack.c.l.b16 %v981
  %v2920 = vunpack.c.l.b16 %v982
  %v2921 = vpack.c.b16 %v1954, %v1953
  %v2922 = vpack.c.b16 %v1956, %v1955
  %v2923 = vpack.c.b16 %v1958, %v1957
  %v2924 = vpack.c.b16 %v1960, %v1959
  %v2925 = vpack.c.b16 %v1962, %v1961
  %v2926 = vpack.c.b16 %v1964, %v1963
  %v2927 = vpack.c.b16 %v1966, %v1965
  %v2928 = vpack.c.b16 %v1968, %v1967
  %v2929 = vpack.c.b16 %v1970, %v1969
  %v2930 = vpack.c.b16 %v1972, %v1971
  %v2931 = vpack.c.b16 %v1974, %v1973
  %v2932 = vpack.c.b16 %v1976, %v1975
  %v2933 = vpack.c.b16 %v1978, %v1977
  %v2934 = vpack.c.b16 %v1980, %v1979
  %v2935 = vpack.c.b16 %v1982, %v1981
  %v2936 = vpack.c.b16 %v1984, %v1983
  %v2937 = vpack.c.b16 %v1986, %v1985
  %v2938 = vpack.c.b16 %v1988, %v1987
  %v2939 = vpack.c.b16 %v1990, %v1989
  %v2940 = vpack.c.b16 %v1992, %v1991
  %v2941 = vpack.c.b16 %v1994, %v1993
  %v2942 = vpack.c.b16 %v1996, %v1995
  %v2943 = vpack.c.b16 %v1998, %v1997
  %v2944 = vpack.c.b16 %v2000, %v1999
  %v2945 = vpack.c.b16 %v2002, %v2001
  %v2946 = vpack.c.b16 %v2004, %v2003
  %v2947 = vpack.c.b16 %v2006, %v2005
  %v2948 = vpack.c.b16 %v2008, %v2007
  %v2949 = vpack.c.b16 %v2010, %v2009
  %v2950 = vpack.c.b16 %v2012, %v2011
  %v2951 = vpack.c.b16 %v2014, %v2013
  %v2952 = vpack.c.b16 %v2016, %v2015
  %v2953 = vpack.c.b16 %v2018, %v2017
  %v2954 = vpack.c.b16 %v2020, %v2019
  %v2955 = vpack.c.b16 %v2022, %v2021
  %v2956 = vpack.c.b16 %v2024, %v2023
  %v2957 = vpack.c.b16 %v2026, %v2025
  %v2958 = vpack.c.b16 %v2028, %v2027
  %v2959 = vpack.c.b16 %v2030, %v2029
  %v2960 = vpack.c.b16 %v2032, %v2031
  %v2961 = vpack.c.b16 %v2034, %v2033
  %v2962 = vpack.c.b16 %v2036, %v2035
  %v2963 = vpack.c.b16 %v2038, %v2037
  %v2964 = vpack.c.b16 %v2040, %v2039
  %v2965 = vpack.c.b16 %v2042, %v2041
  %v2966 = vpack.c.b16 %v2044, %v2043
  %v2967 = vpack.c.b16 %v2046, %v2045
  %v2968 = vpack.c.b16 %v2048, %v2047
  %v2969 = vpack.c.b16 %v2050, %v2049
  %v2970 = vpack.c.b16 %v2052, %v2051
  %v2971 = vpack.c.b16 %v2054, %v2053
  %v2972 = vpack.c.b16 %v2056, %v2055
  %v2973 = vpack.c.b16 %v2058, %v2057
  %v2974 = vpack.c.b16 %v2060, %v2059
  %v2975 = vpack.c.b16 %v2062, %v2061
  %v2976 = vpack.c.b16 %v2064, %v2063
  %v2977 = vpack.c.b16 %v2066, %v2065
  %v2978 = vpack.c.b16 %v2068, %v2067
  %v2979 = vpack.c.b16 %v2070, %v2069
  %v2980 = vpack.c.b16 %v2072, %v2071
  %v2981 = vpack.c.b16 %v2074, %v2073
  %v2982 = vpack.c.b16 %v2076, %v2075
  %v2983 = vpack.c.b16 %v2078, %v2077
  %v2984 = vpack.c.b16 %v2080, %v2079
  %v2985 = vpack.c.b16 %v2082, %v2081
  %v2986 = vpack.c.b16 %v2084, %v2083
  %v2987 = vpack.c.b16 %v2086, %v2085
  %v2988 = vpack.c.b16 %v2088, %v2087
  %v2989 = vpack.c.b16 %v2090, %v2089
  %v2990 = vpack.c.b16 %v2092, %v2091
  %v2991 = vpack.c.b16 %v2094, %v2093
  %v2992 = vpack.c.b16 %v2096, %v2095
  %v2993 = vpack.c.b16 %v2098, %v2097
  %v2994 = vpack.c.b16 %v2100, %v2099
  %v2995 = vpack.c.b16 %v2102, %v2101
  %v2996 = vpack.c.b16 %v2104, %v2103
  %v2997 = vpack.c.b16 %v2106, %v2105
  %v2998 = vpack.c.b16 %v2108, %v2107
  %v2999 = vpack.c.b16 %v2110, %v2109
  %v3000 = vpack.c.b16 %v2112, %v2111
  %v3001 = vpack.c.b16 %v2114, %v2113
  %v3002 = vpack.c.b16 %v2116, %v2115
  %v3003 = vpack.c.b16 %v2118, %v2117
  %v3004 = vpack.c.b16 %v2120, %v2119
  %v3005 = vpack.c.b16 %v2122, %v2121
  %v3006 = vpack.c.b16 %v2124, %v2123
  %v3007 = vpack.c.b16 %v2126, %v2125
  %v3008 = vpack.c.b16 %v2128, %v2127
  %v3009 = vpack.c.b16 %v2130, %v2129
  %v3010 = vpack.c.b16 %v2132, %v2131
  %v3011 = vpack.c.b16 %v2134, %v2133
  %v3012 = vpack.c.b16 %v2136, %v2135
  %v3013 = vpack.c.b16 %v2138, %v2137
  %v3014 = vpack.c.b16 %v2140, %v2139
  %v3015 = vpack.c.b16 %v2142, %v2141
  %v3016 = vpack.c.b16 %v2144, %v2143
  %v3017 = vpack.c.b16 %v2146, %v2145
  %v3018 = vpack.c.b16 %v2148, %v2147
  %v3019 = vpack.c.b16 %v2150, %v2149
  %v3020 = vpack.c.b16 %v2152, %v2151
  %v3021 = vpack.c.b16 %v2154, %v2153
  %v3022 = vpack.c.b16 %v2156, %v2155
  %v3023 = vpack.c.b16 %v2158, %v2157
  %v3024 = vpack.c.b16 %v2160, %v2159
  %v3025 = vpack.c.b16 %v2162, %v2161
  %v3026 = vpack.c.b16 %v2164, %v2163
  %v3027 = vpack.c.b16 %v2166, %v2165
  %v3028 = vpack.c.b16 %v2168, %v2167
  %v3029 = vpack.c.b16 %v2170, %v2169
  %v3030 = vpack.c.b16 %v2172, %v2171
  %v3031 = vpack.c.b16 %v2174, %v2173
  %v3032 = vpack.c.b16 %v2176, %v2175
  %v3033 = vpack.c.b16 %v2178, %v2177
  %v3034 = vpack.c.b16 %v2180, %v2179
  %v3035 = vpack.c.b16 %v2182, %v2181
  %v3036 = vpack.c.b16 %v2184, %v2183
  %v3037 = vpack.c.b16 %v2186, %v2185
  %v3038 = vpack.c.b16 %v2188, %v2187
  %v3039 = vpack.c.b16 %v2190, %v2189
  %v3040 = vpack.c.b16 %v2192, %v2191
  %v3041 = vpack.c.b16 %v2194, %v2193
  %v3042 = vpack.c.b16 %v2196, %v2195
  %v3043 = vpack.c.b16 %v2198, %v2197
  %v3044 = vpack.c.b16 %v2200, %v2199
  %v3045 = vpack.c.b16 %v2202, %v2201
  %v3046 = vpack.c.b16 %v2204, %v2203
  %v3047 = vpack.c.b16 %v2206, %v2205
  %v3048 = vpack.c.b16 %v2208, %v2207
  %v3049 = vpack.c.b16 %v2210, %v2209
  %v3050 = vpack.c.b16 %v2212, %v2211
  %v3051 = vpack.c.b16 %v2214, %v2213
  %v3052 = vpack.c.b16 %v2216, %v2215
  %v3053 = vpack.c.b16 %v2218, %v2217
  %v3054 = vpack.c.b16 %v2220, %v2219
  %v3055 = vpack.c.b16 %v2222, %v2221
  %v3056 = vpack.c.b16 %v2224, %v2223
  %v3057 = vpack.c.b16 %v2226, %v2225
  %v3058 = vpack.c.b16 %v2228, %v2227
  %v3059 = vpack.c.b16 %v2230, %v2229
  %v3060 = vpack.c.b16 %v2232, %v2231
  %v3061 = vpack.c.b16 %v2234, %v2233
  %v3062 = vpack.c.b16 %v2236, %v2235
  %v3063 = vpack.c.b16 %v2238, %v2237
  %v3064 = vpack.c.b16 %v2240, %v2239
  %v3065 = vpack.c.b16 %v2242, %v2241
  %v3066 = vpack.c.b16 %v2244, %v2243
  %v3067 = vpack.c.b16 %v2246, %v2245
  %v3068 = vpack.c.b16 %v2248, %v2247
  %v3069 = vpack.c.b16 %v2250, %v2249
  %v3070 = vpack.c.b16 %v2252, %v2251
  %v3071 = vpack.c.b16 %v2254, %v2253
  %v3072 = vpack.c.b16 %v2256, %v2255
  %v3073 = vpack.c.b16 %v2258, %v2257
  %v3074 = vpack.c.b16 %v2260, %v2259
  %v3075 = vpack.c.b16 %v2262, %v2261
  %v3076 = vpack.c.b16 %v2264, %v2263
  %v3077 = vpack.c.b16 %v2266, %v2265
  %v3078 = vpack.c.b16 %v2268, %v2267
  %v3079 = vpack.c.b16 %v2270, %v2269
  %v3080 = vpack.c.b16 %v2272, %v2271
  %v3081 = vpack.c.b16 %v2274, %v2273
  %v3082 = vpack.c.b16 %v2276, %v2275
  %v3083 = vpack.c.b16 %v2278, %v2277
  %v3084 = vpack.c.b16 %v2280, %v2279
  %v3085 = vpack.c.b16 %v2282, %v2281
  %v3086 = vpack.c.b16 %v2284, %v2283
  %v3087 = vpack.c.b16 %v2286, %v2285
  %v3088 = vpack.c.b16 %v2288, %v2287
  %v3089 = vpack.c.b16 %v2290, %v2289
  %v3090 = vpack.c.b16 %v2292, %v2291
  %v3091 = vpack.c.b16 %v2294, %v2293
  %v3092 = vpack.c.b16 %v2296, %v2295
  %v3093 = vpack.c.b16 %v2298, %v2297
  %v3094 = vpack.c.b16 %v2300, %v2299
  %v3095 = vpack.c.b16 %v2302, %v2301
  %v3096 = vpack.c.b16 %v2304, %v2303
  %v3097 = vpack.c.b16 %v2306, %v2305
  %v3098 = vpack.c.b16 %v2308, %v2307
  %v3099 = vpack.c.b16 %v2310, %v2309
  %v3100 = vpack.c.b16 %v2312, %v2311
  %v3101 = vpack.c.b16 %v2314, %v2313
  %v3102 = vpack.c.b16 %v2316, %v2315
  %v3103 = vpack.c.b16 %v2318, %v2317
  %v3104 = vpack.c.b16 %v2320, %v2319
  %v3105 = vpack.c.b16 %v2322, %v2321
  %v3106 = vpack.c.b16 %v2324, %v2323
  %v3107 = vpack.c.b16 %v2326, %v2325
  %v3108 = vpack.c.b16 %v2328, %v2327
  %v3109 = vpack.c.b16 %v2330, %v2329
  %v3110 = vpack.c.b16 %v2332, %v2331
  %v3111 = vpack.c.b16 %v2334, %v2333
  %v3112 = vpack.c.b16 %v2336, %v2335
  %v3113 = vpack.c.b16 %v2338, %v2337
  %v3114 = vpack.c.b16 %v2340, %v2339
  %v3115 = vpack.c.b16 %v2342, %v2341
  %v3116 = vpack.c.b16 %v2344, %v2343
  %v3117 = vpack.c.b16 %v2346, %v2345
  %v3118 = vpack.c.b16 %v2348, %v2347
  %v3119 = vpack.c.b16 %v2350, %v2349
  %v3120 = vpack.c.b16 %v2352, %v2351
  %v3121 = vpack.c.b16 %v2354, %v2353
  %v3122 = vpack.c.b16 %v2356, %v2355
  %v3123 = vpack.c.b16 %v2358, %v2357
  %v3124 = vpack.c.b16 %v2360, %v2359
  %v3125 = vpack.c.b16 %v2362, %v2361
  %v3126 = vpack.c.b16 %v2364, %v2363
  %v3127 = vpack.c.b16 %v2366, %v2365
  %v3128 = vpack.c.b16 %v2368, %v2367
  %v3129 = vpack.c.b16 %v2370, %v2369
  %v3130 = vpack.c.b16 %v2372, %v2371
  %v3131 = vpack.c.b16 %v2374, %v2373
  %v3132 = vpack.c.b16 %v2376, %v2375
  %v3133 = vpack.c.b16 %v2378, %v2377
  %v3134 = vpack.c.b16 %v2380, %v2379
  %v3135 = vpack.c.b16 %v2382, %v2381
  %v3136 = vpack.c.b16 %v2384, %v2383
  %v3137 = vpack.c.b16 %v2386, %v2385
  %v3138 = vpack.c.b16 %v2388, %v2387
  %v3139 = vpack.c.b16 %v2390, %v2389
  %v3140 = vpack.c.b16 %v2392, %v2391
  %v3141 = vpack.c.b16 %v2394, %v2393
  %v3142 = vpack.c.b16 %v2396, %v2395
  %v3143 = vpack.c.b16 %v2398, %v2397
  %v3144 = vpack.c.b16 %v2400, %v2399
  %v3145 = vpack.c.b16 %v2402, %v2401
  %v3146 = vpack.c.b16 %v2404, %v2403
  %v3147 = vpack.c.b16 %v2406, %v2405
  %v3148 = vpack.c.b16 %v2408, %v2407
  %v3149 = vpack.c.b16 %v2410, %v2409
  %v3150 = vpack.c.b16 %v2412, %v2411
  %v3151 = vpack.c.b16 %v2414, %v2413
  %v3152 = vpack.c.b16 %v2416, %v2415
  %v3153 = vpack.c.b16 %v2418, %v2417
  %v3154 = vpack.c.b16 %v2420, %v2419
  %v3155 = vpack.c.b16 %v2422, %v2421
  %v3156 = vpack.c.b16 %v2424, %v2423
  %v3157 = vpack.c.b16 %v2426, %v2425
  %v3158 = vpack.c.b16 %v2428, %v2427
  %v3159 = vpack.c.b16 %v2430, %v2429
  %v3160 = vpack.c.b16 %v2432, %v2431
  %v3161 = vpack.c.b16 %v2434, %v2433
  %v3162 = vpack.c.b16 %v2436, %v2435
  %v3163 = vpack.c.b16 %v2438, %v2437
  %v3164 = vpack.c.b16 %v2440, %v2439
  %v3165 = vpack.c.b16 %v2442, %v2441
  %v3166 = vpack.c.b16 %v2444, %v2443
  %v3167 = vpack.c.b16 %v2446, %v2445
  %v3168 = vpack.c.b16 %v2448, %v2447
  %v3169 = vpack.c.b16 %v2450, %v2449
  %v3170 = vpack.c.b16 %v2452, %v2451
  %v3171 = vpack.c.b16 %v2454, %v2453
  %v3172 = vpack.c.b16 %v2456, %v2455
  %v3173 = vpack.c.b16 %v2458, %v2457
  %v3174 = vpack.c.b16 %v2460, %v2459
  %v3175 = vpack.c.b16 %v2462, %v2461
  %v3176 = vpack.c.b16 %v2464, %v2463
  %v3177 = vpack.c.b16 %v2466, %v2465
  %v3178 = vpack.c.b16 %v2468, %v2467
  %v3179 = vpack.c.b16 %v2470, %v2469
  %v3180 = vpack.c.b16 %v2472, %v2471
  %v3181 = vpack.c.b16 %v2474, %v2473
  %v3182 = vpack.c.b16 %v2476, %v2475
  %v3183 = vpack.c.b16 %v2478, %v2477
  %v3184 = vpack.c.b16 %v2480, %v2479
  %v3185 = vpack.c.b16 %v2482, %v2481
  %v3186 = vpack.c.b16 %v2484, %v2483
  %v3187 = vpack.c.b16 %v2486, %v2485
  %v3188 = vpack.c.b16 %v2488, %v2487
  %v3189 = vpack.c.b16 %v2490, %v2489
  %v3190 = vpack.c.b16 %v2492, %v2491
  %v3191 = vpack.c.b16 %v2494, %v2493
  %v3192 = vpack.c.b16 %v2496, %v2495
  %v3193 = vpack.c.b16 %v2498, %v2497
  %v3194 = vpack.c.b16 %v2500, %v2499
  %v3195 = vpack.c.b16 %v2502, %v2501
  %v3196 = vpack.c.b16 %v2504, %v2503
  %v3197 = vpack.c.b16 %v2506, %v2505
  %v3198 = vpack.c.b16 %v2508, %v2507
  %v3199 = vpack.c.b16 %v2510, %v2509
  %v3200 = vpack.c.b16 %v2512, %v2511
  %v3201 = vpack.c.b16 %v2514, %v2513
  %v3202 = vpack.c.b16 %v2516, %v2515
  %v3203 = vpack.c.b16 %v2518, %v2517
  %v3204 = vpack.c.b16 %v2520, %v2519
  %v3205 = vpack.c.b16 %v2522, %v2521
  %v3206 = vpack.c.b16 %v2524, %v2523
  %v3207 = vpack.c.b16 %v2526, %v2525
  %v3208 = vpack.c.b16 %v2528, %v2527
  %v3209 = vpack.c.b16 %v2530, %v2529
  %v3210 = vpack.c.b16 %v2532, %v2531
  %v3211 = vpack.c.b16 %v2534, %v2533
  %v3212 = vpack.c.b16 %v2536, %v2535
  %v3213 = vpack.c.b16 %v2538, %v2537
  %v3214 = vpack.c.b16 %v2540, %v2539
  %v3215 = vpack.c.b16 %v2542, %v2541
  %v3216 = vpack.c.b16 %v2544, %v2543
  %v3217 = vpack.c.b16 %v2546, %v2545
  %v3218 = vpack.c.b16 %v2548, %v2547
  %v3219 = vpack.c.b16 %v2550, %v2549
  %v3220 = vpack.c.b16 %v2552, %v2551
  %v3221 = vpack.c.b16 %v2554, %v2553
  %v3222 = vpack.c.b16 %v2556, %v2555
  %v3223 = vpack.c.b16 %v2558, %v2557
  %v3224 = vpack.c.b16 %v2560, %v2559
  %v3225 = vpack.c.b16 %v2562, %v2561
  %v3226 = vpack.c.b16 %v2564, %v2563
  %v3227 = vpack.c.b16 %v2566, %v2565
  %v3228 = vpack.c.b16 %v2568, %v2567
  %v3229 = vpack.c.b16 %v2570, %v2569
  %v3230 = vpack.c.b16 %v2572, %v2571
  %v3231 = vpack.c.b16 %v2574, %v2573
  %v3232 = vpack.c.b16 %v2576, %v2575
  %v3233 = vpack.c.b16 %v2578, %v2577
  %v3234 = vpack.c.b16 %v2580, %v2579
  %v3235 = vpack.c.b16 %v2582, %v2581
  %v3236 = vpack.c.b16 %v2584, %v2583
  %v3237 = vpack.c.b16 %v2586, %v2585
  %v3238 = vpack.c.b16 %v2588, %v2587
  %v3239 = vpack.c.b16 %v2590, %v2589
  %v3240 = vpack.c.b16 %v2592, %v2591
  %v3241 = vpack.c.b16 %v2594, %v2593
  %v3242 = vpack.c.b16 %v2596, %v2595
  %v3243 = vpack.c.b16 %v2598, %v2597
  %v3244 = vpack.c.b16 %v2600, %v2599
  %v3245 = vpack.c.b16 %v2602, %v2601
  %v3246 = vpack.c.b16 %v2604, %v2603
  %v3247 = vpack.c.b16 %v2606, %v2605
  %v3248 = vpack.c.b16 %v2608, %v2607
  %v3249 = vpack.c.b16 %v2610, %v2609
  %v3250 = vpack.c.b16 %v2612, %v2611
  %v3251 = vpack.c.b16 %v2614, %v2613
  %v3252 = vpack.c.b16 %v2616, %v2615
  %v3253 = vpack.c.b16 %v2618, %v2617
  %v3254 = vpack.c.b16 %v2620, %v2619
  %v3255 = vpack.c.b16 %v2622, %v2621
  %v3256 = vpack.c.b16 %v2624, %v2623
  %v3257 = vpack.c.b16 %v2626, %v2625
  %v3258 = vpack.c.b16 %v2628, %v2627
  %v3259 = vpack.c.b16 %v2630, %v2629
  %v3260 = vpack.c.b16 %v2632, %v2631
  %v3261 = vpack.c.b16 %v2634, %v2633
  %v3262 = vpack.c.b16 %v2636, %v2635
  %v3263 = vpack.c.b16 %v2638, %v2637
  %v3264 = vpack.c.b16 %v2640, %v2639
  %v3265 = vpack.c.b16 %v2642, %v2641
  %v3266 = vpack.c.b16 %v2644, %v2643
  %v3267 = vpack.c.b16 %v2646, %v2645
  %v3268 = vpack.c.b16 %v2648, %v2647
  %v3269 = vpack.c.b16 %v2650, %v2649
  %v3270 = vpack.c.b16 %v2652, %v2651
  %v3271 = vpack.c.b16 %v2654, %v2653
  %v3272 = vpack.c.b16 %v2656, %v2655
  %v3273 = vpack.c.b16 %v2658, %v2657
  %v3274 = vpack.c.b16 %v2660, %v2659
  %v3275 = vpack.c.b16 %v2662, %v2661
  %v3276 = vpack.c.b16 %v2664, %v2663
  %v3277 = vpack.c.b16 %v2666, %v2665
  %v3278 = vpack.c.b16 %v2668, %v2667
  %v3279 = vpack.c.b16 %v2670, %v2669
  %v3280 = vpack.c.b16 %v2672, %v2671
  %v3281 = vpack.c.b16 %v2674, %v2673
  %v3282 = vpack.c.b16 %v2676, %v2675
  %v3283 = vpack.c.b16 %v2678, %v2677
  %v3284 = vpack.c.b16 %v2680, %v2679
  %v3285 = vpack.c.b16 %v2682, %v2681
  %v3286 = vpack.c.b16 %v2684, %v2683
  %v3287 = vpack.c.b16 %v2686, %v2685
  %v3288 = vpack.c.b16 %v2688, %v2687
  %v3289 = vpack.c.b16 %v2690, %v2689
  %v3290 = vpack.c.b16 %v2692, %v2691
  %v3291 = vpack.c.b16 %v2694, %v2693
  %v3292 = vpack.c.b16 %v2696, %v2695
  %v3293 = vpack.c.b16 %v2698, %v2697
  %v3294 = vpack.c.b16 %v2700, %v2699
  %v3295 = vpack.c.b16 %v2702, %v2701
  %v3296 = vpack.c.b16 %v2704, %v2703
  %v3297 = vpack.c.b16 %v2706, %v2705
  %v3298 = vpack.c.b16 %v2708, %v2707
  %v3299 = vpack.c.b16 %v2710, %v2709
  %v3300 = vpack.c.b16 %v2712, %v2711
  %v3301 = vpack.c.b16 %v2714, %v2713
  %v3302 = vpack.c.b16 %v2716, %v2715
  %v3303 = vpack.c.b16 %v2718, %v2717
  %v3304 = vpack.c.b16 %v2720, %v2719
  %v3305 = vpack.c.b16 %v2722, %v2721
  %v3306 = vpack.c.b16 %v2724, %v2723
  %v3307 = vpack.c.b16 %v2726, %v2725
  %v3308 = vpack.c.b16 %v2728, %v2727
  %v3309 = vpack.c.b16 %v2730, %v2729
  %v3310 = vpack.c.b16 %v2732, %v2731
  %v3311 = vpack.c.b16 %v2734, %v2733
  %v3312 = vpack.c.b16 %v2736, %v2735
  %v3313 = vpack.c.b16 %v2738, %v2737
  %v3314 = vpack.c.b16 %v2740, %v2739
  %v3315 = vpack.c.b16 %v2742, %v2741
  %v3316 = vpack.c.b16 %v2744, %v2743
  %v3317 = vpack.c.b16 %v2746, %v2745
  %v3318 = vpack.c.b16 %v2748, %v2747
  %v3319 = vpack.c.b16 %v2750, %v2749
  %v3320 = vpack.c.b16 %v2752, %v2751
  %v3321 = vpack.c.b16 %v2754, %v2753
  %v3322 = vpack.c.b16 %v2756, %v2755
  %v3323 = vpack.c.b16 %v2758, %v2757
  %v3324 = vpack.c.b16 %v2760, %v2759
  %v3325 = vpack.c.b16 %v2762, %v2761
  %v3326 = vpack.c.b16 %v2764, %v2763
  %v3327 = vpack.c.b16 %v2766, %v2765
  %v3328 = vpack.c.b16 %v2768, %v2767
  %v3329 = vpack.c.b16 %v2770, %v2769
  %v3330 = vpack.c.b16 %v2772, %v2771
  %v3331 = vpack.c.b16 %v2774, %v2773
  %v3332 = vpack.c.b16 %v2776, %v2775
  %v3333 = vpack.c.b16 %v2778, %v2777
  %v3334 = vpack.c.b16 %v2780, %v2779
  %v3335 = vpack.c.b16 %v2782, %v2781
  %v3336 = vpack.c.b16 %v2784, %v2783
  %v3337 = vpack.c.b16 %v2786, %v2785
  %v3338 = vpack.c.b16 %v2788, %v2787
  %v3339 = vpack.c.b16 %v2790, %v2789
  %v3340 = vpack.c.b16 %v2792, %v2791
  %v3341 = vpack.c.b16 %v2794, %v2793
  %v3342 = vpack.c.b16 %v2796, %v2795
  %v3343 = vpack.c.b16 %v2798, %v2797
  %v3344 = vpack.c.b16 %v2800, %v2799
  %v3345 = vpack.c.b16 %v2802, %v2801
  %v3346 = vpack.c.b16 %v2804, %v2803
  %v3347 = vpack.c.b16 %v2806, %v2805
  %v3348 = vpack.c.b16 %v2808, %v2807
  %v3349 = vpack.c.b16 %v2810, %v2809
  %v3350 = vpack.c.b16 %v2812, %v2811
  %v3351 = vpack.c.b16 %v2814, %v2813
  %v3352 = vpack.c.b16 %v2816, %v2815
  %v3353 = vpack.c.b16 %v2818, %v2817
  %v3354 = vpack.c.b16 %v2820, %v2819
  %v3355 = vpack.c.b16 %v2822, %v2821
  %v3356 = vpack.c.b16 %v2824, %v2823
  %v3357 = vpack.c.b16 %v2826, %v2825
  %v3358 = vpack.c.b16 %v2828, %v2827
  %v3359 = vpack.c.b16 %v2830, %v2829
  %v3360 = vpack.c.b16 %v2832, %v2831
  %v3361 = vpack.c.b16 %v2834, %v2833
  %v3362 = vpack.c.b16 %v2836, %v2835
  %v3363 = vpack.c.b16 %v2838, %v2837
  %v3364 = vpack.c.b16 %v2840, %v2839
  %v3365 = vpack.c.b16 %v2842, %v2841
  %v3366 = vpack.c.b16 %v2844, %v2843
  %v3367 = vpack.c.b16 %v2846, %v2845
  %v3368 = vpack.c.b16 %v2848, %v2847
  %v3369 = vpack.c.b16 %v2850, %v2849
  %v3370 = vpack.c.b16 %v2852, %v2851
  %v3371 = vpack.c.b16 %v2854, %v2853
  %v3372 = vpack.c.b16 %v2856, %v2855
  %v3373 = vpack.c.b16 %v2858, %v2857
  %v3374 = vpack.c.b16 %v2860, %v2859
  %v3375 = vpack.c.b16 %v2862, %v2861
  %v3376 = vpack.c.b16 %v2864, %v2863
  %v3377 = vpack.c.b16 %v2866, %v2865
  %v3378 = vpack.c.b16 %v2868, %v2867
  %v3379 = vpack.c.b16 %v2870, %v2869
  %v3380 = vpack.c.b16 %v2872, %v2871
  %v3381 = vpack.c.b16 %v2874, %v2873
  %v3382 = vpack.c.b16 %v2876, %v2875
  %v3383 = vpack.c.b16 %v2878, %v2877
  %v3384 = vpack.c.b16 %v2880, %v2879
  %v3385 = vpack.c.b16 %v2882, %v2881
  %v3386 = vpack.c.b16 %v2884, %v2883
  %v3387 = vpack.c.b16 %v2886, %v2885
  %v3388 = vpack.c.b16 %v2888, %v2887
  %v3389 = vpack.c.b16 %v2890, %v2889
  %v3390 = vpack.c.b16 %v2892, %v2891
  %v3391 = vpack.c.b16 %v2894, %v2893
  %v3392 = vpack.c.b16 %v2896, %v2895
  %v3393 = vpack.c.b16 %v2898, %v2897
  %v3394 = vpack.c.b16 %v2900, %v2899
  %v3395 = vpack.c.b16 %v2902, %v2901
  %v3396 = vpack.c.b16 %v2904, %v2903
  %v3397 = vpack.c.b16 %v2906, %v2905
  %v3398 = vpack.c.b16 %v2908, %v2907
  %v3399 = vpack.c.b16 %v2910, %v2909
  %v3400 = vpack.c.b16 %v2912, %v2911
  %v3401 = vpack.c.b16 %v2914, %v2913
  %v3402 = vpack.c.b16 %v2916, %v2915
  %v3403 = vpack.c.b16 %v2918, %v2917
  %v3404 = vpack.c.b16 %v2920, %v2919
  %v3407 = vunpack.c.l.b16 %v983
  %v3408 = vunpack.c.l.b16 %v984
  %v3409 = vpack.c.b16 %v3408, %v3407
  %vm3410 = vcmask 72704
  %v3412 = vsel %vm3410, %v2921, 0
  %v3415 = vsel %vm3410, %v2922, 0
  %v3418 = vsel %vm3410, %v2923, 0
  %v3421 = vsel %vm3410, %v2924, 0
  %v3424 = vsel %vm3410, %v2925, 0
  %v3427 = vsel %vm3410, %v2926, 0
  %v3430 = vsel %vm3410, %v2927, 0
  %v3433 = vsel %vm3410, %v2928, 0
  %v3436 = vsel %vm3410, %v2929, 0
  %v3439 = vsel %vm3410, %v2930, 0
  %v3442 = vsel %vm3410, %v2931, 0
  %v3445 = vsel %vm3410, %v2932, 0
  %v3448 = vsel %vm3410, %v2933, 0
  %v3451 = vsel %vm3410, %v2934, 0
  %v3454 = vsel %vm3410, %v2935, 0
  %v3457 = vsel %vm3410, %v2936, 0
  %v3460 = vsel %vm3410, %v2937, 0
  %v3463 = vsel %vm3410, %v2938, 0
  %v3466 = vsel %vm3410, %v2939, 0
  %v3469 = vsel %vm3410, %v2940, 0
  %v3472 = vsel %vm3410, %v2941, 0
  %v3475 = vsel %vm3410, %v2942, 0
  %v3478 = vsel %vm3410, %v2943, 0
  %v3481 = vsel %vm3410, %v2944, 0
  %v3484 = vsel %vm3410, %v2945, 0
  %v3487 = vsel %vm3410, %v2946, 0
  %v3490 = vsel %vm3410, %v2947, 0
  %v3493 = vsel %vm3410, %v2948, 0
  %v3496 = vsel %vm3410, %v2949, 0
  %v3499 = vsel %vm3410, %v2950, 0
  %v3502 = vsel %vm3410, %v2951, 0
  %v3505 = vsel %vm3410, %v2952, 0
  %v3508 = vsel %vm3410, %v2953, 0
  %v3511 = vsel %vm3410, %v2954, 0
  %v3514 = vsel %vm3410, %v2955, 0
  %v3517 = vsel %vm3410, %v2956, 0
  %v3520 = vsel %vm3410, %v2957, 0
  %v3523 = vsel %vm3410, %v2958, 0
  %v3526 = vsel %vm3410, %v2959, 0
  %v3529 = vsel %vm3410, %v2960, 0
  %v3532 = vsel %vm3410, %v2961, 0
  %v3535 = vsel %vm3410, %v2962, 0
  %v3538 = vsel %vm3410, %v2963, 0
  %v3541 = vsel %vm3410, %v2964, 0
  %v3544 = vsel %vm3410, %v2965, 0
  %v3547 = vsel %vm3410, %v2966, 0
  %v3550 = vsel %vm3410, %v2967, 0
  %v3553 = vsel %vm3410, %v2968, 0
  %v3556 = vsel %vm3410, %v2969, 0
  %v3559 = vsel %vm3410, %v2970, 0
  %v3562 = vsel %vm3410, %v2971, 0
  %v3565 = vsel %vm3410, %v2972, 0
  %v3568 = vsel %vm3410, %v2973, 0
  %v3571 = vsel %vm3410, %v2974, 0
  %v3574 = vsel %vm3410, %v2975, 0
  %v3577 = vsel %vm3410, %v2976, 0
  %v3580 = vsel %vm3410, %v2977, 0
  %v3583 = vsel %vm3410, %v2978, 0
  %v3586 = vsel %vm3410, %v2979, 0
  %v3589 = vsel %vm3410, %v2980, 0
  %v3592 = vsel %vm3410, %v2981, 0
  %v3595 = vsel %vm3410, %v2982, 0
  %v3598 = vsel %vm3410, %v2983, 0
  %v3601 = vsel %vm3410, %v2984, 0
  %v3604 = vsel %vm3410, %v2985, 0
  %v3607 = vsel %vm3410, %v2986, 0
  %v3610 = vsel %vm3410, %v2987, 0
  %v3613 = vsel %vm3410, %v2988, 0
  %v3616 = vsel %vm3410, %v2989, 0
  %v3619 = vsel %vm3410, %v2990, 0
  %v3622 = vsel %vm3410, %v2991, 0
  %v3625 = vsel %vm3410, %v2992, 0
  %v3628 = vsel %vm3410, %v2993, 0
  %v3631 = vsel %vm3410, %v2994, 0
  %v3634 = vsel %vm3410, %v2995, 0
  %v3637 = vsel %vm3410, %v2996, 0
  %v3640 = vsel %vm3410, %v2997, 0
  %v3643 = vsel %vm3410, %v2998, 0
  %v3646 = vsel %vm3410, %v2999, 0
  %v3649 = vsel %vm3410, %v3000, 0
  %v3652 = vsel %vm3410, %v3001, 0
  %v3655 = vsel %vm3410, %v3002, 0
  %v3658 = vsel %vm3410, %v3003, 0
  %v3661 = vsel %vm3410, %v3004, 0
  %v3664 = vsel %vm3410, %v3005, 0
  %v3667 = vsel %vm3410, %v3006, 0
  %v3670 = vsel %vm3410, %v3007, 0
  %v3673 = vsel %vm3410, %v3008, 0
  %v3676 = vsel %vm3410, %v3009, 0
  %v3679 = vsel %vm3410, %v3010, 0
  %v3682 = vsel %vm3410, %v3011, 0
  %v3685 = vsel %vm3410, %v3012, 0
  %v3688 = vsel %vm3410, %v3013, 0
  %v3691 = vsel %vm3410, %v3014, 0
  %v3694 = vsel %vm3410, %v3015, 0
  %v3697 = vsel %vm3410, %v3016, 0
  %v3700 = vsel %vm3410, %v3017, 0
  %v3703 = vsel %vm3410, %v3018, 0
  %v3706 = vsel %vm3410, %v3019, 0
  %v3709 = vsel %vm3410, %v3020, 0
  %v3712 = vsel %vm3410, %v3021, 0
  %v3715 = vsel %vm3410, %v3022, 0
  %v3718 = vsel %vm3410, %v3023, 0
  %v3721 = vsel %vm3410, %v3024, 0
  %v3724 = vsel %vm3410, %v3025, 0
  %v3727 = vsel %vm3410, %v3026, 0
  %v3730 = vsel %vm3410, %v3027, 0
  %v3733 = vsel %vm3410, %v3028, 0
  %v3736 = vsel %vm3410, %v3029, 0
  %v3739 = vsel %vm3410, %v3030, 0
  %v3742 = vsel %vm3410, %v3031, 0
  %v3745 = vsel %vm3410, %v3032, 0
  %v3748 = vsel %vm3410, %v3033, 0
  %v3751 = vsel %vm3410, %v3034, 0
  %v3754 = vsel %vm3410, %v3035, 0
  %v3757 = vsel %vm3410, %v3036, 0
  %v3760 = vsel %vm3410, %v3037, 0
  %v3763 = vsel %vm3410, %v3038, 0
  %v3766 = vsel %vm3410, %v3039, 0
  %v3769 = vsel %vm3410, %v3040, 0
  %v3772 = vsel %vm3410, %v3041, 0
  %v3775 = vsel %vm3410, %v3042, 0
  %v3778 = vsel %vm3410, %v3043, 0
  %v3781 = vsel %vm3410, %v3044, 0
  %v3784 = vsel %vm3410, %v3045, 0
  %v3787 = vsel %vm3410, %v3046, 0
  %v3790 = vsel %vm3410, %v3047, 0
  %v3793 = vsel %vm3410, %v3048, 0
  %v3796 = vsel %vm3410, %v3049, 0
  %v3799 = vsel %vm3410, %v3050, 0
  %v3802 = vsel %vm3410, %v3051, 0
  %v3805 = vsel %vm3410, %v3052, 0
  %v3808 = vsel %vm3410, %v3053, 0
  %v3811 = vsel %vm3410, %v3054, 0
  %v3814 = vsel %vm3410, %v3055, 0
  %v3817 = vsel %vm3410, %v3056, 0
  %v3820 = vsel %vm3410, %v3057, 0
  %v3823 = vsel %vm3410, %v3058, 0
  %v3826 = vsel %vm3410, %v3059, 0
  %v3829 = vsel %vm3410, %v3060, 0
  %v3832 = vsel %vm3410, %v3061, 0
  %v3835 = vsel %vm3410, %v3062, 0
  %v3838 = vsel %vm3410, %v3063, 0
  %v3841 = vsel %vm3410, %v3064, 0
  %v3844 = vsel %vm3410, %v3065, 0
  %v3847 = vsel %vm3410, %v3066, 0
  %v3850 = vsel %vm3410, %v3067, 0
  %v3853 = vsel %vm3410, %v3068, 0
  %v3856 = vsel %vm3410, %v3069, 0
  %v3859 = vsel %vm3410, %v3070, 0
  %v3862 = vsel %vm3410, %v3071, 0
  %v3865 = vsel %vm3410, %v3072, 0
  %v3868 = vsel %vm3410, %v3073, 0
  %v3871 = vsel %vm3410, %v3074, 0
  %v3874 = vsel %vm3410, %v3075, 0
  %v3877 = vsel %vm3410, %v3076, 0
  %v3880 = vsel %vm3410, %v3077, 0
  %v3883 = vsel %vm3410, %v3078, 0
  %v3886 = vsel %vm3410, %v3079, 0
  %v3889 = vsel %vm3410, %v3080, 0
  %v3892 = vsel %vm3410, %v3081, 0
  %v3895 = vsel %vm3410, %v3082, 0
  %v3898 = vsel %vm3410, %v3083, 0
  %v3901 = vsel %vm3410, %v3084, 0
  %v3904 = vsel %vm3410, %v3085, 0
  %v3907 = vsel %vm3410, %v3086, 0
  %v3910 = vsel %vm3410, %v3087, 0
  %v3913 = vsel %vm3410, %v3088, 0
  %v3916 = vsel %vm3410, %v3089, 0
  %v3919 = vsel %vm3410, %v3090, 0
  %v3922 = vsel %vm3410, %v3091, 0
  %v3925 = vsel %vm3410, %v3092, 0
  %v3928 = vsel %vm3410, %v3093, 0
  %v3931 = vsel %vm3410, %v3094, 0
  %v3934 = vsel %vm3410, %v3095, 0
  %v3937 = vsel %vm3410, %v3096, 0
  %v3940 = vsel %vm3410, %v3097, 0
  %v3943 = vsel %vm3410, %v3098, 0
  %v3946 = vsel %vm3410, %v3099, 0
  %v3949 = vsel %vm3410, %v3100, 0
  %v3952 = vsel %vm3410, %v3101, 0
  %v3955 = vsel %vm3410, %v3102, 0
  %v3958 = vsel %vm3410, %v3103, 0
  %v3961 = vsel %vm3410, %v3104, 0
  %v3964 = vsel %vm3410, %v3105, 0
  %v3967 = vsel %vm3410, %v3106, 0
  %v3970 = vsel %vm3410, %v3107, 0
  %v3973 = vsel %vm3410, %v3108, 0
  %v3976 = vsel %vm3410, %v3109, 0
  %v3979 = vsel %vm3410, %v3110, 0
  %v3982 = vsel %vm3410, %v3111, 0
  %v3985 = vsel %vm3410, %v3112, 0
  %v3988 = vsel %vm3410, %v3113, 0
  %v3991 = vsel %vm3410, %v3114, 0
  %v3994 = vsel %vm3410, %v3115, 0
  %v3997 = vsel %vm3410, %v3116, 0
  %v4000 = vsel %vm3410, %v3117, 0
  %v4003 = vsel %vm3410, %v3118, 0
  %v4006 = vsel %vm3410, %v3119, 0
  %v4009 = vsel %vm3410, %v3120, 0
  %v4012 = vsel %vm3410, %v3121, 0
  %v4015 = vsel %vm3410, %v3122, 0
  %v4018 = vsel %vm3410, %v3123, 0
  %v4021 = vsel %vm3410, %v3124, 0
  %v4024 = vsel %vm3410, %v3125, 0
  %v4027 = vsel %vm3410, %v3126, 0
  %v4030 = vsel %vm3410, %v3127, 0
  %v4033 = vsel %vm3410, %v3128, 0
  %v4036 = vsel %vm3410, %v3129, 0
  %v4039 = vsel %vm3410, %v3130, 0
  %v4042 = vsel %vm3410, %v3131, 0
  %v4045 = vsel %vm3410, %v3132, 0
  %v4048 = vsel %vm3410, %v3133, 0
  %v4051 = vsel %vm3410, %v3134, 0
  %v4054 = vsel %vm3410, %v3135, 0
  %v4057 = vsel %vm3410, %v3136, 0
  %v4060 = vsel %vm3410, %v3137, 0
  %v4063 = vsel %vm3410, %v3138, 0
  %v4066 = vsel %vm3410, %v3139, 0
  %v4069 = vsel %vm3410, %v3140, 0
  %v4072 = vsel %vm3410, %v3141, 0
  %v4075 = vsel %vm3410, %v3142, 0
  %v4078 = vsel %vm3410, %v3143, 0
  %v4081 = vsel %vm3410, %v3144, 0
  %v4084 = vsel %vm3410, %v3145, 0
  %v4087 = vsel %vm3410, %v3146, 0
  %v4090 = vsel %vm3410, %v3147, 0
  %v4093 = vsel %vm3410, %v3148, 0
  %v4096 = vsel %vm3410, %v3149, 0
  %v4099 = vsel %vm3410, %v3150, 0
  %v4102 = vsel %vm3410, %v3151, 0
  %v4105 = vsel %vm3410, %v3152, 0
  %v4108 = vsel %vm3410, %v3153, 0
  %v4111 = vsel %vm3410, %v3154, 0
  %v4114 = vsel %vm3410, %v3155, 0
  %v4117 = vsel %vm3410, %v3156, 0
  %v4120 = vsel %vm3410, %v3157, 0
  %v4123 = vsel %vm3410, %v3158, 0
  %v4126 = vsel %vm3410, %v3159, 0
  %v4129 = vsel %vm3410, %v3160, 0
  %v4132 = vsel %vm3410, %v3161, 0
  %v4135 = vsel %vm3410, %v3162, 0
  %v4138 = vsel %vm3410, %v3163, 0
  %v4141 = vsel %vm3410, %v3164, 0
  %v4144 = vsel %vm3410, %v3165, 0
  %v4147 = vsel %vm3410, %v3166, 0
  %v4150 = vsel %vm3410, %v3167, 0
  %v4153 = vsel %vm3410, %v3168, 0
  %v4156 = vsel %vm3410, %v3169, 0
  %v4159 = vsel %vm3410, %v3170, 0
  %v4162 = vsel %vm3410, %v3171, 0
  %v4165 = vsel %vm3410, %v3172, 0
  %v4168 = vsel %vm3410, %v3173, 0
  %v4171 = vsel %vm3410, %v3174, 0
  %v4174 = vsel %vm3410, %v3175, 0
  %v4177 = vsel %vm3410, %v3176, 0
  %v4180 = vsel %vm3410, %v3177, 0
  %v4183 = vsel %vm3410, %v3178, 0
  %v4186 = vsel %vm3410, %v3179, 0
  %v4189 = vsel %vm3410, %v3180, 0
  %v4192 = vsel %vm3410, %v3181, 0
  %v4195 = vsel %vm3410, %v3182, 0
  %v4198 = vsel %vm3410, %v3183, 0
  %v4201 = vsel %vm3410, %v3184, 0
  %v4204 = vsel %vm3410, %v3185, 0
  %v4207 = vsel %vm3410, %v3186, 0
  %v4210 = vsel %vm3410, %v3187, 0
  %v4213 = vsel %vm3410, %v3188, 0
  %v4216 = vsel %vm3410, %v3189, 0
  %v4219 = vsel %vm3410, %v3190, 0
  %v4222 = vsel %vm3410, %v3191, 0
  %v4225 = vsel %vm3410, %v3192, 0
  %v4228 = vsel %vm3410, %v3193, 0
  %v4231 = vsel %vm3410, %v3194, 0
  %v4234 = vsel %vm3410, %v3195, 0
  %v4237 = vsel %vm3410, %v3196, 0
  %v4240 = vsel %vm3410, %v3197, 0
  %v4243 = vsel %vm3410, %v3198, 0
  %v4246 = vsel %vm3410, %v3199, 0
  %v4249 = vsel %vm3410, %v3200, 0
  %v4252 = vsel %vm3410, %v3201, 0
  %v4255 = vsel %vm3410, %v3202, 0
  %v4258 = vsel %vm3410, %v3203, 0
  %v4261 = vsel %vm3410, %v3204, 0
  %v4264 = vsel %vm3410, %v3205, 0
  %v4267 = vsel %vm3410, %v3206, 0
  %v4270 = vsel %vm3410, %v3207, 0
  %v4273 = vsel %vm3410, %v3208, 0
  %v4276 = vsel %vm3410, %v3209, 0
  %v4279 = vsel %vm3410, %v3210, 0
  %v4282 = vsel %vm3410, %v3211, 0
  %v4285 = vsel %vm3410, %v3212, 0
  %v4288 = vsel %vm3410, %v3213, 0
  %v4291 = vsel %vm3410, %v3214, 0
  %v4294 = vsel %vm3410, %v3215, 0
  %v4297 = vsel %vm3410, %v3216, 0
  %v4300 = vsel %vm3410, %v3217, 0
  %v4303 = vsel %vm3410, %v3218, 0
  %v4306 = vsel %vm3410, %v3219, 0
  %v4309 = vsel %vm3410, %v3220, 0
  %v4312 = vsel %vm3410, %v3221, 0
  %v4315 = vsel %vm3410, %v3222, 0
  %v4318 = vsel %vm3410, %v3223, 0
  %v4321 = vsel %vm3410, %v3224, 0
  %v4324 = vsel %vm3410, %v3225, 0
  %v4327 = vsel %vm3410, %v3226, 0
  %v4330 = vsel %vm3410, %v3227, 0
  %v4333 = vsel %vm3410, %v3228, 0
  %v4336 = vsel %vm3410, %v3229, 0
  %v4339 = vsel %vm3410, %v3230, 0
  %v4342 = vsel %vm3410, %v3231, 0
  %v4345 = vsel %vm3410, %v3232, 0
  %v4348 = vsel %vm3410, %v3233, 0
  %v4351 = vsel %vm3410, %v3234, 0
  %v4354 = vsel %vm3410, %v3235, 0
  %v4357 = vsel %vm3410, %v3236, 0
  %v4360 = vsel %vm3410, %v3237, 0
  %v4363 = vsel %vm3410, %v3238, 0
  %v4366 = vsel %vm3410, %v3239, 0
  %v4369 = vsel %vm3410, %v3240, 0
  %v4372 = vsel %vm3410, %v3241, 0
  %v4375 = vsel %vm3410, %v3242, 0
  %v4378 = vsel %vm3410, %v3243, 0
  %v4381 = vsel %vm3410, %v3244, 0
  %v4384 = vsel %vm3410, %v3245, 0
  %v4387 = vsel %vm3410, %v3246, 0
  %v4390 = vsel %vm3410, %v3247, 0
  %v4393 = vsel %vm3410, %v3248, 0
  %v4396 = vsel %vm3410, %v3249, 0
  %v4399 = vsel %vm3410, %v3250, 0
  %v4402 = vsel %vm3410, %v3251, 0
  %v4405 = vsel %vm3410, %v3252, 0
  %v4408 = vsel %vm3410, %v3253, 0
  %v4411 = vsel %vm3410, %v3254, 0
  %v4414 = vsel %vm3410, %v3255, 0
  %v4417 = vsel %vm3410, %v3256, 0
  %v4420 = vsel %vm3410, %v3257, 0
  %v4423 = vsel %vm3410, %v3258, 0
  %v4426 = vsel %vm3410, %v3259, 0
  %v4429 = vsel %vm3410, %v3260, 0
  %v4432 = vsel %vm3410, %v3261, 0
  %v4435 = vsel %vm3410, %v3262, 0
  %v4438 = vsel %vm3410, %v3263, 0
  %v4441 = vsel %vm3410, %v3264, 0
  %v4444 = vsel %vm3410, %v3265, 0
  %v4447 = vsel %vm3410, %v3266, 0
  %v4450 = vsel %vm3410, %v3267, 0
  %v4453 = vsel %vm3410, %v3268, 0
  %v4456 = vsel %vm3410, %v3269, 0
  %v4459 = vsel %vm3410, %v3270, 0
  %v4462 = vsel %vm3410, %v3271, 0
  %v4465 = vsel %vm3410, %v3272, 0
  %v4468 = vsel %vm3410, %v3273, 0
  %v4471 = vsel %vm3410, %v3274, 0
  %v4474 = vsel %vm3410, %v3275, 0
  %v4477 = vsel %vm3410, %v3276, 0
  %v4480 = vsel %vm3410, %v3277, 0
  %v4483 = vsel %vm3410, %v3278, 0
  %v4486 = vsel %vm3410, %v3279, 0
  %v4489 = vsel %vm3410, %v3280, 0
  %v4492 = vsel %vm3410, %v3281, 0
  %v4495 = vsel %vm3410, %v3282, 0
  %v4498 = vsel %vm3410, %v3283, 0
  %v4501 = vsel %vm3410, %v3284, 0
  %v4504 = vsel %vm3410, %v3285, 0
  %v4507 = vsel %vm3410, %v3286, 0
  %v4510 = vsel %vm3410, %v3287, 0
  %v4513 = vsel %vm3410, %v3288, 0
  %v4516 = vsel %vm3410, %v3289, 0
  %v4519 = vsel %vm3410, %v3290, 0
  %v4522 = vsel %vm3410, %v3291, 0
  %v4525 = vsel %vm3410, %v3292, 0
  %v4528 = vsel %vm3410, %v3293, 0
  %v4531 = vsel %vm3410, %v3294, 0
  %v4534 = vsel %vm3410, %v3295, 0
  %v4537 = vsel %vm3410, %v3296, 0
  %v4540 = vsel %vm3410, %v3297, 0
  %v4543 = vsel %vm3410, %v3298, 0
  %v4546 = vsel %vm3410, %v3299, 0
  %v4549 = vsel %vm3410, %v3300, 0
  %v4552 = vsel %vm3410, %v3301, 0
  %v4555 = vsel %vm3410, %v3302, 0
  %v4558 = vsel %vm3410, %v3303, 0
  %v4561 = vsel %vm3410, %v3304, 0
  %v4564 = vsel %vm3410, %v3305, 0
  %v4567 = vsel %vm3410, %v3306, 0
  %v4570 = vsel %vm3410, %v3307, 0
  %v4573 = vsel %vm3410, %v3308, 0
  %v4576 = vsel %vm3410, %v3309, 0
  %v4579 = vsel %vm3410, %v3310, 0
  %v4582 = vsel %vm3410, %v3311, 0
  %v4585 = vsel %vm3410, %v3312, 0
  %v4588 = vsel %vm3410, %v3313, 0
  %v4591 = vsel %vm3410, %v3314, 0
  %v4594 = vsel %vm3410, %v3315, 0
  %v4597 = vsel %vm3410, %v3316, 0
  %v4600 = vsel %vm3410, %v3317, 0
  %v4603 = vsel %vm3410, %v3318, 0
  %v4606 = vsel %vm3410, %v3319, 0
  %v4609 = vsel %vm3410, %v3320, 0
  %v4612 = vsel %vm3410, %v3321, 0
  %v4615 = vsel %vm3410, %v3322, 0
  %v4618 = vsel %vm3410, %v3323, 0
  %v4621 = vsel %vm3410, %v3324, 0
  %v4624 = vsel %vm3410, %v3325, 0
  %v4627 = vsel %vm3410, %v3326, 0
  %v4630 = vsel %vm3410, %v3327, 0
  %v4633 = vsel %vm3410, %v3328, 0
  %v4636 = vsel %vm3410, %v3329, 0
  %v4639 = vsel %vm3410, %v3330, 0
  %v4642 = vsel %vm3410, %v3331, 0
  %v4645 = vsel %vm3410, %v3332, 0
  %v4648 = vsel %vm3410, %v3333, 0
  %v4651 = vsel %vm3410, %v3334, 0
  %v4654 = vsel %vm3410, %v3335, 0
  %v4657 = vsel %vm3410, %v3336, 0
  %v4660 = vsel %vm3410, %v3337, 0
  %v4663 = vsel %vm3410, %v3338, 0
  %v4666 = vsel %vm3410, %v3339, 0
  %v4669 = vsel %vm3410, %v3340, 0
  %v4672 = vsel %vm3410, %v3341, 0
  %v4675 = vsel %vm3410, %v3342, 0
  %v4678 = vsel %vm3410, %v3343, 0
  %v4681 = vsel %vm3410, %v3344, 0
  %v4684 = vsel %vm3410, %v3345, 0
  %v4687 = vsel %vm3410, %v3346, 0
  %v4690 = vsel %vm3410, %v3347, 0
  %v4693 = vsel %vm3410, %v3348, 0
  %v4696 = vsel %vm3410, %v3349, 0
  %v4699 = vsel %vm3410, %v3350, 0
  %v4702 = vsel %vm3410, %v3351, 0
  %v4705 = vsel %vm3410, %v3352, 0
  %v4708 = vsel %vm3410, %v3353, 0
  %v4711 = vsel %vm3410, %v3354, 0
  %v4714 = vsel %vm3410, %v3355, 0
  %v4717 = vsel %vm3410, %v3356, 0
  %v4720 = vsel %vm3410, %v3357, 0
  %v4723 = vsel %vm3410, %v3358, 0
  %v4726 = vsel %vm3410, %v3359, 0
  %v4729 = vsel %vm3410, %v3360, 0
  %v4732 = vsel %vm3410, %v3361, 0
  %v4735 = vsel %vm3410, %v3362, 0
  %v4738 = vsel %vm3410, %v3363, 0
  %v4741 = vsel %vm3410, %v3364, 0
  %v4744 = vsel %vm3410, %v3365, 0
  %v4747 = vsel %vm3410, %v3366, 0
  %v4750 = vsel %vm3410, %v3367, 0
  %v4753 = vsel %vm3410, %v3368, 0
  %v4756 = vsel %vm3410, %v3369, 0
  %v4759 = vsel %vm3410, %v3370, 0
  %v4762 = vsel %vm3410, %v3371, 0
  %v4765 = vsel %vm3410, %v3372, 0
  %v4768 = vsel %vm3410, %v3373, 0
  %v4771 = vsel %vm3410, %v3374, 0
  %v4774 = vsel %vm3410, %v3375, 0
  %v4777 = vsel %vm3410, %v3376, 0
  %v4780 = vsel %vm3410, %v3377, 0
  %v4783 = vsel %vm3410, %v3378, 0
  %v4786 = vsel %vm3410, %v3379, 0
  %v4789 = vsel %vm3410, %v3380, 0
  %v4792 = vsel %vm3410, %v3381, 0
  %v4795 = vsel %vm3410, %v3382, 0
  %v4798 = vsel %vm3410, %v3383, 0
  %v4801 = vsel %vm3410, %v3384, 0
  %v4804 = vsel %vm3410, %v3385, 0
  %v4807 = vsel %vm3410, %v3386, 0
  %v4810 = vsel %vm3410, %v3387, 0
  %v4813 = vsel %vm3410, %v3388, 0
  %v4816 = vsel %vm3410, %v3389, 0
  %v4819 = vsel %vm3410, %v3390, 0
  %v4822 = vsel %vm3410, %v3391, 0
  %v4825 = vsel %vm3410, %v3392, 0
  %v4828 = vsel %vm3410, %v3393, 0
  %v4831 = vsel %vm3410, %v3394, 0
  %v4834 = vsel %vm3410, %v3395, 0
  %v4837 = vsel %vm3410, %v3396, 0
  %v4840 = vsel %vm3410, %v3397, 0
  %v4843 = vsel %vm3410, %v3398, 0
  %v4846 = vsel %vm3410, %v3399, 0
  %v4849 = vsel %vm3410, %v3400, 0
  %v4852 = vsel %vm3410, %v3401, 0
  %v4855 = vsel %vm3410, %v3402, 0
  %v4858 = vsel %vm3410, %v3403, 0
  %v4861 = vsel %vm3410, %v3404, 0
  %vm4863 = vcmask 1043456
  %vm4864 = vcmask 1044480
  %v4865 = vsel %vm4863, 4294967295, 65535
  %v4866 = vsel %vm4864, %v4865, 0
  %v4868 = vand.u32 %v3409, %v4866
  %4870 = vmatpush.bf16.msra.mxu0 0
  %4871 = vmatpush.bf16.msra.mxu0 0
  %4872 = vmatpush.bf16.msra.mxu0 0
  %4873 = vmatpush.bf16.msra.mxu0 0
  %4874 = vmatpush.bf16.msra.mxu0 0
  %4875 = vmatpush.bf16.msra.mxu0 0
  %4876 = vmatpush.bf16.msra.mxu0 0
  %4877 = vmatpush.bf16.msra.mxu0 %v4868
  %4878 = vmatmul.bf16.gmra.mxu0 %v3412
  %v4879 = vpop.f32.mrf.mxu0
  %v4880 = vadd.f32 0.0, %v4879
  %v4881 = vpop.f32.mrf.mxu0
  %v4882 = vadd.f32 0.0, %v4881
  %4883 = vmatmul.bf16.gmra.mxu0 %v3415
  %v4884 = vpop.f32.mrf.mxu0
  %v4885 = vadd.f32 0.0, %v4884
  %v4886 = vpop.f32.mrf.mxu0
  %v4887 = vadd.f32 0.0, %v4886
  %4888 = vmatmul.bf16.gmra.mxu0 %v3418
  %v4889 = vpop.f32.mrf.mxu0
  %v4890 = vadd.f32 0.0, %v4889
  %v4891 = vpop.f32.mrf.mxu0
  %v4892 = vadd.f32 0.0, %v4891
  %4893 = vmatmul.bf16.gmra.mxu0 %v3421
  %v4894 = vpop.f32.mrf.mxu0
  %v4895 = vadd.f32 0.0, %v4894
  %v4896 = vpop.f32.mrf.mxu0
  %v4897 = vadd.f32 0.0, %v4896
  %4898 = vmatmul.bf16.gmra.mxu0 %v3424
  %v4899 = vpop.f32.mrf.mxu0
  %v4900 = vadd.f32 0.0, %v4899
  %v4901 = vpop.f32.mrf.mxu0
  %v4902 = vadd.f32 0.0, %v4901
  %4903 = vmatmul.bf16.gmra.mxu0 %v3427
  %v4904 = vpop.f32.mrf.mxu0
  %v4905 = vadd.f32 0.0, %v4904
  %v4906 = vpop.f32.mrf.mxu0
  %v4907 = vadd.f32 0.0, %v4906
  %4908 = vmatmul.bf16.gmra.mxu0 %v3430
  %v4909 = vpop.f32.mrf.mxu0
  %v4910 = vadd.f32 0.0, %v4909
  %v4911 = vpop.f32.mrf.mxu0
  %v4912 = vadd.f32 0.0, %v4911
  %4913 = vmatmul.bf16.gmra.mxu0 %v3433
  %v4914 = vpop.f32.mrf.mxu0
  %v4915 = vadd.f32 0.0, %v4914
  %v4916 = vpop.f32.mrf.mxu0
  %v4917 = vadd.f32 0.0, %v4916
  %4918 = vmatmul.bf16.gmra.mxu0 %v3436
  %v4919 = vpop.f32.mrf.mxu0
  %v4920 = vadd.f32 0.0, %v4919
  %v4921 = vpop.f32.mrf.mxu0
  %v4922 = vadd.f32 0.0, %v4921
  %4923 = vmatmul.bf16.gmra.mxu0 %v3439
  %v4924 = vpop.f32.mrf.mxu0
  %v4925 = vadd.f32 0.0, %v4924
  %v4926 = vpop.f32.mrf.mxu0
  %v4927 = vadd.f32 0.0, %v4926
  %4928 = vmatmul.bf16.gmra.mxu0 %v3442
  %v4929 = vpop.f32.mrf.mxu0
  %v4930 = vadd.f32 0.0, %v4929
  %v4931 = vpop.f32.mrf.mxu0
  %v4932 = vadd.f32 0.0, %v4931
  %4933 = vmatmul.bf16.gmra.mxu0 %v3445
  %v4934 = vpop.f32.mrf.mxu0
  %v4935 = vadd.f32 0.0, %v4934
  %v4936 = vpop.f32.mrf.mxu0
  %v4937 = vadd.f32 0.0, %v4936
  %4938 = vmatmul.bf16.gmra.mxu0 %v3448
  %v4939 = vpop.f32.mrf.mxu0
  %v4940 = vadd.f32 0.0, %v4939
  %v4941 = vpop.f32.mrf.mxu0
  %v4942 = vadd.f32 0.0, %v4941
  %4943 = vmatmul.bf16.gmra.mxu0 %v3451
  %v4944 = vpop.f32.mrf.mxu0
  %v4945 = vadd.f32 0.0, %v4944
  %v4946 = vpop.f32.mrf.mxu0
  %v4947 = vadd.f32 0.0, %v4946
  %4948 = vmatmul.bf16.gmra.mxu0 %v3454
  %v4949 = vpop.f32.mrf.mxu0
  %v4950 = vadd.f32 0.0, %v4949
  %v4951 = vpop.f32.mrf.mxu0
  %v4952 = vadd.f32 0.0, %v4951
  %4953 = vmatmul.bf16.gmra.mxu0 %v3457
  %v4954 = vpop.f32.mrf.mxu0
  %v4955 = vadd.f32 0.0, %v4954
  %v4956 = vpop.f32.mrf.mxu0
  %v4957 = vadd.f32 0.0, %v4956
  %4958 = vmatmul.bf16.gmra.mxu0 %v3460
  %v4959 = vpop.f32.mrf.mxu0
  %v4960 = vadd.f32 0.0, %v4959
  %v4961 = vpop.f32.mrf.mxu0
  %v4962 = vadd.f32 0.0, %v4961
  %4963 = vmatmul.bf16.gmra.mxu0 %v3463
  %v4964 = vpop.f32.mrf.mxu0
  %v4965 = vadd.f32 0.0, %v4964
  %v4966 = vpop.f32.mrf.mxu0
  %v4967 = vadd.f32 0.0, %v4966
  %4968 = vmatmul.bf16.gmra.mxu0 %v3466
  %v4969 = vpop.f32.mrf.mxu0
  %v4970 = vadd.f32 0.0, %v4969
  %v4971 = vpop.f32.mrf.mxu0
  %v4972 = vadd.f32 0.0, %v4971
  %4973 = vmatmul.bf16.gmra.mxu0 %v3469
  %v4974 = vpop.f32.mrf.mxu0
  %v4975 = vadd.f32 0.0, %v4974
  %v4976 = vpop.f32.mrf.mxu0
  %v4977 = vadd.f32 0.0, %v4976
  %4978 = vmatmul.bf16.gmra.mxu0 %v3472
  %v4979 = vpop.f32.mrf.mxu0
  %v4980 = vadd.f32 0.0, %v4979
  %v4981 = vpop.f32.mrf.mxu0
  %v4982 = vadd.f32 0.0, %v4981
  %4983 = vmatmul.bf16.gmra.mxu0 %v3475
  %v4984 = vpop.f32.mrf.mxu0
  %v4985 = vadd.f32 0.0, %v4984
  %v4986 = vpop.f32.mrf.mxu0
  %v4987 = vadd.f32 0.0, %v4986
  %4988 = vmatmul.bf16.gmra.mxu0 %v3478
  %v4989 = vpop.f32.mrf.mxu0
  %v4990 = vadd.f32 0.0, %v4989
  %v4991 = vpop.f32.mrf.mxu0
  %v4992 = vadd.f32 0.0, %v4991
  %4993 = vmatmul.bf16.gmra.mxu0 %v3481
  %v4994 = vpop.f32.mrf.mxu0
  %v4995 = vadd.f32 0.0, %v4994
  %v4996 = vpop.f32.mrf.mxu0
  %v4997 = vadd.f32 0.0, %v4996
  %4998 = vmatmul.bf16.gmra.mxu0 %v3484
  %v4999 = vpop.f32.mrf.mxu0
  %v5000 = vadd.f32 0.0, %v4999
  %v5001 = vpop.f32.mrf.mxu0
  %v5002 = vadd.f32 0.0, %v5001
  %5003 = vmatmul.bf16.gmra.mxu0 %v3487
  %v5004 = vpop.f32.mrf.mxu0
  %v5005 = vadd.f32 0.0, %v5004
  %v5006 = vpop.f32.mrf.mxu0
  %v5007 = vadd.f32 0.0, %v5006
  %5008 = vmatmul.bf16.gmra.mxu0 %v3490
  %v5009 = vpop.f32.mrf.mxu0
  %v5010 = vadd.f32 0.0, %v5009
  %v5011 = vpop.f32.mrf.mxu0
  %v5012 = vadd.f32 0.0, %v5011
  %5013 = vmatmul.bf16.gmra.mxu0 %v3493
  %v5014 = vpop.f32.mrf.mxu0
  %v5015 = vadd.f32 0.0, %v5014
  %v5016 = vpop.f32.mrf.mxu0
  %v5017 = vadd.f32 0.0, %v5016
  %5018 = vmatmul.bf16.gmra.mxu0 %v3496
  %v5019 = vpop.f32.mrf.mxu0
  %v5020 = vadd.f32 0.0, %v5019
  %v5021 = vpop.f32.mrf.mxu0
  %v5022 = vadd.f32 0.0, %v5021
  %5023 = vmatmul.bf16.gmra.mxu0 %v3499
  %v5024 = vpop.f32.mrf.mxu0
  %v5025 = vadd.f32 0.0, %v5024
  %v5026 = vpop.f32.mrf.mxu0
  %v5027 = vadd.f32 0.0, %v5026
  %5028 = vmatmul.bf16.gmra.mxu0 %v3502
  %v5029 = vpop.f32.mrf.mxu0
  %v5030 = vadd.f32 0.0, %v5029
  %v5031 = vpop.f32.mrf.mxu0
  %v5032 = vadd.f32 0.0, %v5031
  %5033 = vmatmul.bf16.gmra.mxu0 %v3505
  %v5034 = vpop.f32.mrf.mxu0
  %v5035 = vadd.f32 0.0, %v5034
  %v5036 = vpop.f32.mrf.mxu0
  %v5037 = vadd.f32 0.0, %v5036
  %5038 = vmatmul.bf16.gmra.mxu0 %v3508
  %v5039 = vpop.f32.mrf.mxu0
  %v5040 = vadd.f32 0.0, %v5039
  %v5041 = vpop.f32.mrf.mxu0
  %v5042 = vadd.f32 0.0, %v5041
  %5043 = vmatmul.bf16.gmra.mxu0 %v3511
  %v5044 = vpop.f32.mrf.mxu0
  %v5045 = vadd.f32 0.0, %v5044
  %v5046 = vpop.f32.mrf.mxu0
  %v5047 = vadd.f32 0.0, %v5046
  %5048 = vmatmul.bf16.gmra.mxu0 %v3514
  %v5049 = vpop.f32.mrf.mxu0
  %v5050 = vadd.f32 0.0, %v5049
  %v5051 = vpop.f32.mrf.mxu0
  %v5052 = vadd.f32 0.0, %v5051
  %5053 = vmatmul.bf16.gmra.mxu0 %v3517
  %v5054 = vpop.f32.mrf.mxu0
  %v5055 = vadd.f32 0.0, %v5054
  %v5056 = vpop.f32.mrf.mxu0
  %v5057 = vadd.f32 0.0, %v5056
  %5058 = vmatmul.bf16.gmra.mxu0 %v3520
  %v5059 = vpop.f32.mrf.mxu0
  %v5060 = vadd.f32 0.0, %v5059
  %v5061 = vpop.f32.mrf.mxu0
  %v5062 = vadd.f32 0.0, %v5061
  %5063 = vmatmul.bf16.gmra.mxu0 %v3523
  %v5064 = vpop.f32.mrf.mxu0
  %v5065 = vadd.f32 0.0, %v5064
  %v5066 = vpop.f32.mrf.mxu0
  %v5067 = vadd.f32 0.0, %v5066
  %5068 = vmatmul.bf16.gmra.mxu0 %v3526
  %v5069 = vpop.f32.mrf.mxu0
  %v5070 = vadd.f32 0.0, %v5069
  %v5071 = vpop.f32.mrf.mxu0
  %v5072 = vadd.f32 0.0, %v5071
  %5073 = vmatmul.bf16.gmra.mxu0 %v3529
  %v5074 = vpop.f32.mrf.mxu0
  %v5075 = vadd.f32 0.0, %v5074
  %v5076 = vpop.f32.mrf.mxu0
  %v5077 = vadd.f32 0.0, %v5076
  %5078 = vmatmul.bf16.gmra.mxu0 %v3532
  %v5079 = vpop.f32.mrf.mxu0
  %v5080 = vadd.f32 0.0, %v5079
  %v5081 = vpop.f32.mrf.mxu0
  %v5082 = vadd.f32 0.0, %v5081
  %5083 = vmatmul.bf16.gmra.mxu0 %v3535
  %v5084 = vpop.f32.mrf.mxu0
  %v5085 = vadd.f32 0.0, %v5084
  %v5086 = vpop.f32.mrf.mxu0
  %v5087 = vadd.f32 0.0, %v5086
  %5088 = vmatmul.bf16.gmra.mxu0 %v3538
  %v5089 = vpop.f32.mrf.mxu0
  %v5090 = vadd.f32 0.0, %v5089
  %v5091 = vpop.f32.mrf.mxu0
  %v5092 = vadd.f32 0.0, %v5091
  %5093 = vmatmul.bf16.gmra.mxu0 %v3541
  %v5094 = vpop.f32.mrf.mxu0
  %v5095 = vadd.f32 0.0, %v5094
  %v5096 = vpop.f32.mrf.mxu0
  %v5097 = vadd.f32 0.0, %v5096
  %5098 = vmatmul.bf16.gmra.mxu0 %v3544
  %v5099 = vpop.f32.mrf.mxu0
  %v5100 = vadd.f32 0.0, %v5099
  %v5101 = vpop.f32.mrf.mxu0
  %v5102 = vadd.f32 0.0, %v5101
  %5103 = vmatmul.bf16.gmra.mxu0 %v3547
  %v5104 = vpop.f32.mrf.mxu0
  %v5105 = vadd.f32 0.0, %v5104
  %v5106 = vpop.f32.mrf.mxu0
  %v5107 = vadd.f32 0.0, %v5106
  %5108 = vmatmul.bf16.gmra.mxu0 %v3550
  %v5109 = vpop.f32.mrf.mxu0
  %v5110 = vadd.f32 0.0, %v5109
  %v5111 = vpop.f32.mrf.mxu0
  %v5112 = vadd.f32 0.0, %v5111
  %5113 = vmatmul.bf16.gmra.mxu0 %v3553
  %v5114 = vpop.f32.mrf.mxu0
  %v5115 = vadd.f32 0.0, %v5114
  %v5116 = vpop.f32.mrf.mxu0
  %v5117 = vadd.f32 0.0, %v5116
  %5118 = vmatmul.bf16.gmra.mxu0 %v3556
  %v5119 = vpop.f32.mrf.mxu0
  %v5120 = vadd.f32 0.0, %v5119
  %v5121 = vpop.f32.mrf.mxu0
  %v5122 = vadd.f32 0.0, %v5121
  %5123 = vmatmul.bf16.gmra.mxu0 %v3559
  %v5124 = vpop.f32.mrf.mxu0
  %v5125 = vadd.f32 0.0, %v5124
  %v5126 = vpop.f32.mrf.mxu0
  %v5127 = vadd.f32 0.0, %v5126
  %5128 = vmatmul.bf16.gmra.mxu0 %v3562
  %v5129 = vpop.f32.mrf.mxu0
  %v5130 = vadd.f32 0.0, %v5129
  %v5131 = vpop.f32.mrf.mxu0
  %v5132 = vadd.f32 0.0, %v5131
  %5133 = vmatmul.bf16.gmra.mxu0 %v3565
  %v5134 = vpop.f32.mrf.mxu0
  %v5135 = vadd.f32 0.0, %v5134
  %v5136 = vpop.f32.mrf.mxu0
  %v5137 = vadd.f32 0.0, %v5136
  %5138 = vmatmul.bf16.gmra.mxu0 %v3568
  %v5139 = vpop.f32.mrf.mxu0
  %v5140 = vadd.f32 0.0, %v5139
  %v5141 = vpop.f32.mrf.mxu0
  %v5142 = vadd.f32 0.0, %v5141
  %5143 = vmatmul.bf16.gmra.mxu0 %v3571
  %v5144 = vpop.f32.mrf.mxu0
  %v5145 = vadd.f32 0.0, %v5144
  %v5146 = vpop.f32.mrf.mxu0
  %v5147 = vadd.f32 0.0, %v5146
  %5148 = vmatmul.bf16.gmra.mxu0 %v3574
  %v5149 = vpop.f32.mrf.mxu0
  %v5150 = vadd.f32 0.0, %v5149
  %v5151 = vpop.f32.mrf.mxu0
  %v5152 = vadd.f32 0.0, %v5151
  %5153 = vmatmul.bf16.gmra.mxu0 %v3577
  %v5154 = vpop.f32.mrf.mxu0
  %v5155 = vadd.f32 0.0, %v5154
  %v5156 = vpop.f32.mrf.mxu0
  %v5157 = vadd.f32 0.0, %v5156
  %5158 = vmatmul.bf16.gmra.mxu0 %v3580
  %v5159 = vpop.f32.mrf.mxu0
  %v5160 = vadd.f32 0.0, %v5159
  %v5161 = vpop.f32.mrf.mxu0
  %v5162 = vadd.f32 0.0, %v5161
  %5163 = vmatmul.bf16.gmra.mxu0 %v3583
  %v5164 = vpop.f32.mrf.mxu0
  %v5165 = vadd.f32 0.0, %v5164
  %v5166 = vpop.f32.mrf.mxu0
  %v5167 = vadd.f32 0.0, %v5166
  %5168 = vmatmul.bf16.gmra.mxu0 %v3586
  %v5169 = vpop.f32.mrf.mxu0
  %v5170 = vadd.f32 0.0, %v5169
  %v5171 = vpop.f32.mrf.mxu0
  %v5172 = vadd.f32 0.0, %v5171
  %5173 = vmatmul.bf16.gmra.mxu0 %v3589
  %v5174 = vpop.f32.mrf.mxu0
  %v5175 = vadd.f32 0.0, %v5174
  %v5176 = vpop.f32.mrf.mxu0
  %v5177 = vadd.f32 0.0, %v5176
  %5178 = vmatmul.bf16.gmra.mxu0 %v3592
  %v5179 = vpop.f32.mrf.mxu0
  %v5180 = vadd.f32 0.0, %v5179
  %v5181 = vpop.f32.mrf.mxu0
  %v5182 = vadd.f32 0.0, %v5181
  %5183 = vmatmul.bf16.gmra.mxu0 %v3595
  %v5184 = vpop.f32.mrf.mxu0
  %v5185 = vadd.f32 0.0, %v5184
  %v5186 = vpop.f32.mrf.mxu0
  %v5187 = vadd.f32 0.0, %v5186
  %5188 = vmatmul.bf16.gmra.mxu0 %v3598
  %v5189 = vpop.f32.mrf.mxu0
  %v5190 = vadd.f32 0.0, %v5189
  %v5191 = vpop.f32.mrf.mxu0
  %v5192 = vadd.f32 0.0, %v5191
  %5193 = vmatmul.bf16.gmra.mxu0 %v3601
  %v5194 = vpop.f32.mrf.mxu0
  %v5195 = vadd.f32 0.0, %v5194
  %v5196 = vpop.f32.mrf.mxu0
  %v5197 = vadd.f32 0.0, %v5196
  %5198 = vmatmul.bf16.gmra.mxu0 %v3604
  %v5199 = vpop.f32.mrf.mxu0
  %v5200 = vadd.f32 0.0, %v5199
  %v5201 = vpop.f32.mrf.mxu0
  %v5202 = vadd.f32 0.0, %v5201
  %5203 = vmatmul.bf16.gmra.mxu0 %v3607
  %v5204 = vpop.f32.mrf.mxu0
  %v5205 = vadd.f32 0.0, %v5204
  %v5206 = vpop.f32.mrf.mxu0
  %v5207 = vadd.f32 0.0, %v5206
  %5208 = vmatmul.bf16.gmra.mxu0 %v3610
  %v5209 = vpop.f32.mrf.mxu0
  %v5210 = vadd.f32 0.0, %v5209
  %v5211 = vpop.f32.mrf.mxu0
  %v5212 = vadd.f32 0.0, %v5211
  %5213 = vmatmul.bf16.gmra.mxu0 %v3613
  %v5214 = vpop.f32.mrf.mxu0
  %v5215 = vadd.f32 0.0, %v5214
  %v5216 = vpop.f32.mrf.mxu0
  %v5217 = vadd.f32 0.0, %v5216
  %5218 = vmatmul.bf16.gmra.mxu0 %v3616
  %v5219 = vpop.f32.mrf.mxu0
  %v5220 = vadd.f32 0.0, %v5219
  %v5221 = vpop.f32.mrf.mxu0
  %v5222 = vadd.f32 0.0, %v5221
  %5223 = vmatmul.bf16.gmra.mxu0 %v3619
  %v5224 = vpop.f32.mrf.mxu0
  %v5225 = vadd.f32 0.0, %v5224
  %v5226 = vpop.f32.mrf.mxu0
  %v5227 = vadd.f32 0.0, %v5226
  %5228 = vmatmul.bf16.gmra.mxu0 %v3622
  %v5229 = vpop.f32.mrf.mxu0
  %v5230 = vadd.f32 0.0, %v5229
  %v5231 = vpop.f32.mrf.mxu0
  %v5232 = vadd.f32 0.0, %v5231
  %5233 = vmatmul.bf16.gmra.mxu0 %v3625
  %v5234 = vpop.f32.mrf.mxu0
  %v5235 = vadd.f32 0.0, %v5234
  %v5236 = vpop.f32.mrf.mxu0
  %v5237 = vadd.f32 0.0, %v5236
  %5238 = vmatmul.bf16.gmra.mxu0 %v3628
  %v5239 = vpop.f32.mrf.mxu0
  %v5240 = vadd.f32 0.0, %v5239
  %v5241 = vpop.f32.mrf.mxu0
  %v5242 = vadd.f32 0.0, %v5241
  %5243 = vmatmul.bf16.gmra.mxu0 %v3631
  %v5244 = vpop.f32.mrf.mxu0
  %v5245 = vadd.f32 0.0, %v5244
  %v5246 = vpop.f32.mrf.mxu0
  %v5247 = vadd.f32 0.0, %v5246
  %5248 = vmatmul.bf16.gmra.mxu0 %v3634
  %v5249 = vpop.f32.mrf.mxu0
  %v5250 = vadd.f32 0.0, %v5249
  %v5251 = vpop.f32.mrf.mxu0
  %v5252 = vadd.f32 0.0, %v5251
  %5253 = vmatmul.bf16.gmra.mxu0 %v3637
  %v5254 = vpop.f32.mrf.mxu0
  %v5255 = vadd.f32 0.0, %v5254
  %v5256 = vpop.f32.mrf.mxu0
  %v5257 = vadd.f32 0.0, %v5256
  %5258 = vmatmul.bf16.gmra.mxu0 %v3640
  %v5259 = vpop.f32.mrf.mxu0
  %v5260 = vadd.f32 0.0, %v5259
  %v5261 = vpop.f32.mrf.mxu0
  %v5262 = vadd.f32 0.0, %v5261
  %5263 = vmatmul.bf16.gmra.mxu0 %v3643
  %v5264 = vpop.f32.mrf.mxu0
  %v5265 = vadd.f32 0.0, %v5264
  %v5266 = vpop.f32.mrf.mxu0
  %v5267 = vadd.f32 0.0, %v5266
  %5268 = vmatmul.bf16.gmra.mxu0 %v3646
  %v5269 = vpop.f32.mrf.mxu0
  %v5270 = vadd.f32 0.0, %v5269
  %v5271 = vpop.f32.mrf.mxu0
  %v5272 = vadd.f32 0.0, %v5271
  %5273 = vmatmul.bf16.gmra.mxu0 %v3649
  %v5274 = vpop.f32.mrf.mxu0
  %v5275 = vadd.f32 0.0, %v5274
  %v5276 = vpop.f32.mrf.mxu0
  %v5277 = vadd.f32 0.0, %v5276
  %5278 = vmatmul.bf16.gmra.mxu0 %v3652
  %v5279 = vpop.f32.mrf.mxu0
  %v5280 = vadd.f32 0.0, %v5279
  %v5281 = vpop.f32.mrf.mxu0
  %v5282 = vadd.f32 0.0, %v5281
  %5283 = vmatmul.bf16.gmra.mxu0 %v3655
  %v5284 = vpop.f32.mrf.mxu0
  %v5285 = vadd.f32 0.0, %v5284
  %v5286 = vpop.f32.mrf.mxu0
  %v5287 = vadd.f32 0.0, %v5286
  %5288 = vmatmul.bf16.gmra.mxu0 %v3658
  %v5289 = vpop.f32.mrf.mxu0
  %v5290 = vadd.f32 0.0, %v5289
  %v5291 = vpop.f32.mrf.mxu0
  %v5292 = vadd.f32 0.0, %v5291
  %5293 = vmatmul.bf16.gmra.mxu0 %v3661
  %v5294 = vpop.f32.mrf.mxu0
  %v5295 = vadd.f32 0.0, %v5294
  %v5296 = vpop.f32.mrf.mxu0
  %v5297 = vadd.f32 0.0, %v5296
  %5298 = vmatmul.bf16.gmra.mxu0 %v3664
  %v5299 = vpop.f32.mrf.mxu0
  %v5300 = vadd.f32 0.0, %v5299
  %v5301 = vpop.f32.mrf.mxu0
  %v5302 = vadd.f32 0.0, %v5301
  %5303 = vmatmul.bf16.gmra.mxu0 %v3667
  %v5304 = vpop.f32.mrf.mxu0
  %v5305 = vadd.f32 0.0, %v5304
  %v5306 = vpop.f32.mrf.mxu0
  %v5307 = vadd.f32 0.0, %v5306
  %5308 = vmatmul.bf16.gmra.mxu0 %v3670
  %v5309 = vpop.f32.mrf.mxu0
  %v5310 = vadd.f32 0.0, %v5309
  %v5311 = vpop.f32.mrf.mxu0
  %v5312 = vadd.f32 0.0, %v5311
  %5313 = vmatmul.bf16.gmra.mxu0 %v3673
  %v5314 = vpop.f32.mrf.mxu0
  %v5315 = vadd.f32 0.0, %v5314
  %v5316 = vpop.f32.mrf.mxu0
  %v5317 = vadd.f32 0.0, %v5316
  %5318 = vmatmul.bf16.gmra.mxu0 %v3676
  %v5319 = vpop.f32.mrf.mxu0
  %v5320 = vadd.f32 0.0, %v5319
  %v5321 = vpop.f32.mrf.mxu0
  %v5322 = vadd.f32 0.0, %v5321
  %5323 = vmatmul.bf16.gmra.mxu0 %v3679
  %v5324 = vpop.f32.mrf.mxu0
  %v5325 = vadd.f32 0.0, %v5324
  %v5326 = vpop.f32.mrf.mxu0
  %v5327 = vadd.f32 0.0, %v5326
  %5328 = vmatmul.bf16.gmra.mxu0 %v3682
  %v5329 = vpop.f32.mrf.mxu0
  %v5330 = vadd.f32 0.0, %v5329
  %v5331 = vpop.f32.mrf.mxu0
  %v5332 = vadd.f32 0.0, %v5331
  %5333 = vmatmul.bf16.gmra.mxu0 %v3685
  %v5334 = vpop.f32.mrf.mxu0
  %v5335 = vadd.f32 0.0, %v5334
  %v5336 = vpop.f32.mrf.mxu0
  %v5337 = vadd.f32 0.0, %v5336
  %5338 = vmatmul.bf16.gmra.mxu0 %v3688
  %v5339 = vpop.f32.mrf.mxu0
  %v5340 = vadd.f32 0.0, %v5339
  %v5341 = vpop.f32.mrf.mxu0
  %v5342 = vadd.f32 0.0, %v5341
  %5343 = vmatmul.bf16.gmra.mxu0 %v3691
  %v5344 = vpop.f32.mrf.mxu0
  %v5345 = vadd.f32 0.0, %v5344
  %v5346 = vpop.f32.mrf.mxu0
  %v5347 = vadd.f32 0.0, %v5346
  %5348 = vmatmul.bf16.gmra.mxu0 %v3694
  %v5349 = vpop.f32.mrf.mxu0
  %v5350 = vadd.f32 0.0, %v5349
  %v5351 = vpop.f32.mrf.mxu0
  %v5352 = vadd.f32 0.0, %v5351
  %5353 = vmatmul.bf16.gmra.mxu0 %v3697
  %v5354 = vpop.f32.mrf.mxu0
  %v5355 = vadd.f32 0.0, %v5354
  %v5356 = vpop.f32.mrf.mxu0
  %v5357 = vadd.f32 0.0, %v5356
  %5358 = vmatmul.bf16.gmra.mxu0 %v3700
  %v5359 = vpop.f32.mrf.mxu0
  %v5360 = vadd.f32 0.0, %v5359
  %v5361 = vpop.f32.mrf.mxu0
  %v5362 = vadd.f32 0.0, %v5361
  %5363 = vmatmul.bf16.gmra.mxu0 %v3703
  %v5364 = vpop.f32.mrf.mxu0
  %v5365 = vadd.f32 0.0, %v5364
  %v5366 = vpop.f32.mrf.mxu0
  %v5367 = vadd.f32 0.0, %v5366
  %5368 = vmatmul.bf16.gmra.mxu0 %v3706
  %v5369 = vpop.f32.mrf.mxu0
  %v5370 = vadd.f32 0.0, %v5369
  %v5371 = vpop.f32.mrf.mxu0
  %v5372 = vadd.f32 0.0, %v5371
  %5373 = vmatmul.bf16.gmra.mxu0 %v3709
  %v5374 = vpop.f32.mrf.mxu0
  %v5375 = vadd.f32 0.0, %v5374
  %v5376 = vpop.f32.mrf.mxu0
  %v5377 = vadd.f32 0.0, %v5376
  %5378 = vmatmul.bf16.gmra.mxu0 %v3712
  %v5379 = vpop.f32.mrf.mxu0
  %v5380 = vadd.f32 0.0, %v5379
  %v5381 = vpop.f32.mrf.mxu0
  %v5382 = vadd.f32 0.0, %v5381
  %5383 = vmatmul.bf16.gmra.mxu0 %v3715
  %v5384 = vpop.f32.mrf.mxu0
  %v5385 = vadd.f32 0.0, %v5384
  %v5386 = vpop.f32.mrf.mxu0
  %v5387 = vadd.f32 0.0, %v5386
  %5388 = vmatmul.bf16.gmra.mxu0 %v3718
  %v5389 = vpop.f32.mrf.mxu0
  %v5390 = vadd.f32 0.0, %v5389
  %v5391 = vpop.f32.mrf.mxu0
  %v5392 = vadd.f32 0.0, %v5391
  %5393 = vmatmul.bf16.gmra.mxu0 %v3721
  %v5394 = vpop.f32.mrf.mxu0
  %v5395 = vadd.f32 0.0, %v5394
  %v5396 = vpop.f32.mrf.mxu0
  %v5397 = vadd.f32 0.0, %v5396
  %5398 = vmatmul.bf16.gmra.mxu0 %v3724
  %v5399 = vpop.f32.mrf.mxu0
  %v5400 = vadd.f32 0.0, %v5399
  %v5401 = vpop.f32.mrf.mxu0
  %v5402 = vadd.f32 0.0, %v5401
  %5403 = vmatmul.bf16.gmra.mxu0 %v3727
  %v5404 = vpop.f32.mrf.mxu0
  %v5405 = vadd.f32 0.0, %v5404
  %v5406 = vpop.f32.mrf.mxu0
  %v5407 = vadd.f32 0.0, %v5406
  %5408 = vmatmul.bf16.gmra.mxu0 %v3730
  %v5409 = vpop.f32.mrf.mxu0
  %v5410 = vadd.f32 0.0, %v5409
  %v5411 = vpop.f32.mrf.mxu0
  %v5412 = vadd.f32 0.0, %v5411
  %5413 = vmatmul.bf16.gmra.mxu0 %v3733
  %v5414 = vpop.f32.mrf.mxu0
  %v5415 = vadd.f32 0.0, %v5414
  %v5416 = vpop.f32.mrf.mxu0
  %v5417 = vadd.f32 0.0, %v5416
  %5418 = vmatmul.bf16.gmra.mxu0 %v3736
  %v5419 = vpop.f32.mrf.mxu0
  %v5420 = vadd.f32 0.0, %v5419
  %v5421 = vpop.f32.mrf.mxu0
  %v5422 = vadd.f32 0.0, %v5421
  %5423 = vmatmul.bf16.gmra.mxu0 %v3739
  %v5424 = vpop.f32.mrf.mxu0
  %v5425 = vadd.f32 0.0, %v5424
  %v5426 = vpop.f32.mrf.mxu0
  %v5427 = vadd.f32 0.0, %v5426
  %5428 = vmatmul.bf16.gmra.mxu0 %v3742
  %v5429 = vpop.f32.mrf.mxu0
  %v5430 = vadd.f32 0.0, %v5429
  %v5431 = vpop.f32.mrf.mxu0
  %v5432 = vadd.f32 0.0, %v5431
  %5433 = vmatmul.bf16.gmra.mxu0 %v3745
  %v5434 = vpop.f32.mrf.mxu0
  %v5435 = vadd.f32 0.0, %v5434
  %v5436 = vpop.f32.mrf.mxu0
  %v5437 = vadd.f32 0.0, %v5436
  %5438 = vmatmul.bf16.gmra.mxu0 %v3748
  %v5439 = vpop.f32.mrf.mxu0
  %v5440 = vadd.f32 0.0, %v5439
  %v5441 = vpop.f32.mrf.mxu0
  %v5442 = vadd.f32 0.0, %v5441
  %5443 = vmatmul.bf16.gmra.mxu0 %v3751
  %v5444 = vpop.f32.mrf.mxu0
  %v5445 = vadd.f32 0.0, %v5444
  %v5446 = vpop.f32.mrf.mxu0
  %v5447 = vadd.f32 0.0, %v5446
  %5448 = vmatmul.bf16.gmra.mxu0 %v3754
  %v5449 = vpop.f32.mrf.mxu0
  %v5450 = vadd.f32 0.0, %v5449
  %v5451 = vpop.f32.mrf.mxu0
  %v5452 = vadd.f32 0.0, %v5451
  %5453 = vmatmul.bf16.gmra.mxu0 %v3757
  %v5454 = vpop.f32.mrf.mxu0
  %v5455 = vadd.f32 0.0, %v5454
  %v5456 = vpop.f32.mrf.mxu0
  %v5457 = vadd.f32 0.0, %v5456
  %5458 = vmatmul.bf16.gmra.mxu0 %v3760
  %v5459 = vpop.f32.mrf.mxu0
  %v5460 = vadd.f32 0.0, %v5459
  %v5461 = vpop.f32.mrf.mxu0
  %v5462 = vadd.f32 0.0, %v5461
  %5463 = vmatmul.bf16.gmra.mxu0 %v3763
  %v5464 = vpop.f32.mrf.mxu0
  %v5465 = vadd.f32 0.0, %v5464
  %v5466 = vpop.f32.mrf.mxu0
  %v5467 = vadd.f32 0.0, %v5466
  %5468 = vmatmul.bf16.gmra.mxu0 %v3766
  %v5469 = vpop.f32.mrf.mxu0
  %v5470 = vadd.f32 0.0, %v5469
  %v5471 = vpop.f32.mrf.mxu0
  %v5472 = vadd.f32 0.0, %v5471
  %5473 = vmatmul.bf16.gmra.mxu0 %v3769
  %v5474 = vpop.f32.mrf.mxu0
  %v5475 = vadd.f32 0.0, %v5474
  %v5476 = vpop.f32.mrf.mxu0
  %v5477 = vadd.f32 0.0, %v5476
  %5478 = vmatmul.bf16.gmra.mxu0 %v3772
  %v5479 = vpop.f32.mrf.mxu0
  %v5480 = vadd.f32 0.0, %v5479
  %v5481 = vpop.f32.mrf.mxu0
  %v5482 = vadd.f32 0.0, %v5481
  %5483 = vmatmul.bf16.gmra.mxu0 %v3775
  %v5484 = vpop.f32.mrf.mxu0
  %v5485 = vadd.f32 0.0, %v5484
  %v5486 = vpop.f32.mrf.mxu0
  %v5487 = vadd.f32 0.0, %v5486
  %5488 = vmatmul.bf16.gmra.mxu0 %v3778
  %v5489 = vpop.f32.mrf.mxu0
  %v5490 = vadd.f32 0.0, %v5489
  %v5491 = vpop.f32.mrf.mxu0
  %v5492 = vadd.f32 0.0, %v5491
  %5493 = vmatmul.bf16.gmra.mxu0 %v3781
  %v5494 = vpop.f32.mrf.mxu0
  %v5495 = vadd.f32 0.0, %v5494
  %v5496 = vpop.f32.mrf.mxu0
  %v5497 = vadd.f32 0.0, %v5496
  %5498 = vmatmul.bf16.gmra.mxu0 %v3784
  %v5499 = vpop.f32.mrf.mxu0
  %v5500 = vadd.f32 0.0, %v5499
  %v5501 = vpop.f32.mrf.mxu0
  %v5502 = vadd.f32 0.0, %v5501
  %5503 = vmatmul.bf16.gmra.mxu0 %v3787
  %v5504 = vpop.f32.mrf.mxu0
  %v5505 = vadd.f32 0.0, %v5504
  %v5506 = vpop.f32.mrf.mxu0
  %v5507 = vadd.f32 0.0, %v5506
  %5508 = vmatmul.bf16.gmra.mxu0 %v3790
  %v5509 = vpop.f32.mrf.mxu0
  %v5510 = vadd.f32 0.0, %v5509
  %v5511 = vpop.f32.mrf.mxu0
  %v5512 = vadd.f32 0.0, %v5511
  %5513 = vmatmul.bf16.gmra.mxu0 %v3793
  %v5514 = vpop.f32.mrf.mxu0
  %v5515 = vadd.f32 0.0, %v5514
  %v5516 = vpop.f32.mrf.mxu0
  %v5517 = vadd.f32 0.0, %v5516
  %5518 = vmatmul.bf16.gmra.mxu0 %v3796
  %v5519 = vpop.f32.mrf.mxu0
  %v5520 = vadd.f32 0.0, %v5519
  %v5521 = vpop.f32.mrf.mxu0
  %v5522 = vadd.f32 0.0, %v5521
  %5523 = vmatmul.bf16.gmra.mxu0 %v3799
  %v5524 = vpop.f32.mrf.mxu0
  %v5525 = vadd.f32 0.0, %v5524
  %v5526 = vpop.f32.mrf.mxu0
  %v5527 = vadd.f32 0.0, %v5526
  %5528 = vmatmul.bf16.gmra.mxu0 %v3802
  %v5529 = vpop.f32.mrf.mxu0
  %v5530 = vadd.f32 0.0, %v5529
  %v5531 = vpop.f32.mrf.mxu0
  %v5532 = vadd.f32 0.0, %v5531
  %5533 = vmatmul.bf16.gmra.mxu0 %v3805
  %v5534 = vpop.f32.mrf.mxu0
  %v5535 = vadd.f32 0.0, %v5534
  %v5536 = vpop.f32.mrf.mxu0
  %v5537 = vadd.f32 0.0, %v5536
  %5538 = vmatmul.bf16.gmra.mxu0 %v3808
  %v5539 = vpop.f32.mrf.mxu0
  %v5540 = vadd.f32 0.0, %v5539
  %v5541 = vpop.f32.mrf.mxu0
  %v5542 = vadd.f32 0.0, %v5541
  %5543 = vmatmul.bf16.gmra.mxu0 %v3811
  %v5544 = vpop.f32.mrf.mxu0
  %v5545 = vadd.f32 0.0, %v5544
  %v5546 = vpop.f32.mrf.mxu0
  %v5547 = vadd.f32 0.0, %v5546
  %5548 = vmatmul.bf16.gmra.mxu0 %v3814
  %v5549 = vpop.f32.mrf.mxu0
  %v5550 = vadd.f32 0.0, %v5549
  %v5551 = vpop.f32.mrf.mxu0
  %v5552 = vadd.f32 0.0, %v5551
  %5553 = vmatmul.bf16.gmra.mxu0 %v3817
  %v5554 = vpop.f32.mrf.mxu0
  %v5555 = vadd.f32 0.0, %v5554
  %v5556 = vpop.f32.mrf.mxu0
  %v5557 = vadd.f32 0.0, %v5556
  %5558 = vmatmul.bf16.gmra.mxu0 %v3820
  %v5559 = vpop.f32.mrf.mxu0
  %v5560 = vadd.f32 0.0, %v5559
  %v5561 = vpop.f32.mrf.mxu0
  %v5562 = vadd.f32 0.0, %v5561
  %5563 = vmatmul.bf16.gmra.mxu0 %v3823
  %v5564 = vpop.f32.mrf.mxu0
  %v5565 = vadd.f32 0.0, %v5564
  %v5566 = vpop.f32.mrf.mxu0
  %v5567 = vadd.f32 0.0, %v5566
  %5568 = vmatmul.bf16.gmra.mxu0 %v3826
  %v5569 = vpop.f32.mrf.mxu0
  %v5570 = vadd.f32 0.0, %v5569
  %v5571 = vpop.f32.mrf.mxu0
  %v5572 = vadd.f32 0.0, %v5571
  %5573 = vmatmul.bf16.gmra.mxu0 %v3829
  %v5574 = vpop.f32.mrf.mxu0
  %v5575 = vadd.f32 0.0, %v5574
  %v5576 = vpop.f32.mrf.mxu0
  %v5577 = vadd.f32 0.0, %v5576
  %5578 = vmatmul.bf16.gmra.mxu0 %v3832
  %v5579 = vpop.f32.mrf.mxu0
  %v5580 = vadd.f32 0.0, %v5579
  %v5581 = vpop.f32.mrf.mxu0
  %v5582 = vadd.f32 0.0, %v5581
  %5583 = vmatmul.bf16.gmra.mxu0 %v3835
  %v5584 = vpop.f32.mrf.mxu0
  %v5585 = vadd.f32 0.0, %v5584
  %v5586 = vpop.f32.mrf.mxu0
  %v5587 = vadd.f32 0.0, %v5586
  %5588 = vmatmul.bf16.gmra.mxu0 %v3838
  %v5589 = vpop.f32.mrf.mxu0
  %v5590 = vadd.f32 0.0, %v5589
  %v5591 = vpop.f32.mrf.mxu0
  %v5592 = vadd.f32 0.0, %v5591
  %5593 = vmatmul.bf16.gmra.mxu0 %v3841
  %v5594 = vpop.f32.mrf.mxu0
  %v5595 = vadd.f32 0.0, %v5594
  %v5596 = vpop.f32.mrf.mxu0
  %v5597 = vadd.f32 0.0, %v5596
  %5598 = vmatmul.bf16.gmra.mxu0 %v3844
  %v5599 = vpop.f32.mrf.mxu0
  %v5600 = vadd.f32 0.0, %v5599
  %v5601 = vpop.f32.mrf.mxu0
  %v5602 = vadd.f32 0.0, %v5601
  %5603 = vmatmul.bf16.gmra.mxu0 %v3847
  %v5604 = vpop.f32.mrf.mxu0
  %v5605 = vadd.f32 0.0, %v5604
  %v5606 = vpop.f32.mrf.mxu0
  %v5607 = vadd.f32 0.0, %v5606
  %5608 = vmatmul.bf16.gmra.mxu0 %v3850
  %v5609 = vpop.f32.mrf.mxu0
  %v5610 = vadd.f32 0.0, %v5609
  %v5611 = vpop.f32.mrf.mxu0
  %v5612 = vadd.f32 0.0, %v5611
  %5613 = vmatmul.bf16.gmra.mxu0 %v3853
  %v5614 = vpop.f32.mrf.mxu0
  %v5615 = vadd.f32 0.0, %v5614
  %v5616 = vpop.f32.mrf.mxu0
  %v5617 = vadd.f32 0.0, %v5616
  %5618 = vmatmul.bf16.gmra.mxu0 %v3856
  %v5619 = vpop.f32.mrf.mxu0
  %v5620 = vadd.f32 0.0, %v5619
  %v5621 = vpop.f32.mrf.mxu0
  %v5622 = vadd.f32 0.0, %v5621
  %5623 = vmatmul.bf16.gmra.mxu0 %v3859
  %v5624 = vpop.f32.mrf.mxu0
  %v5625 = vadd.f32 0.0, %v5624
  %v5626 = vpop.f32.mrf.mxu0
  %v5627 = vadd.f32 0.0, %v5626
  %5628 = vmatmul.bf16.gmra.mxu0 %v3862
  %v5629 = vpop.f32.mrf.mxu0
  %v5630 = vadd.f32 0.0, %v5629
  %v5631 = vpop.f32.mrf.mxu0
  %v5632 = vadd.f32 0.0, %v5631
  %5633 = vmatmul.bf16.gmra.mxu0 %v3865
  %v5634 = vpop.f32.mrf.mxu0
  %v5635 = vadd.f32 0.0, %v5634
  %v5636 = vpop.f32.mrf.mxu0
  %v5637 = vadd.f32 0.0, %v5636
  %5638 = vmatmul.bf16.gmra.mxu0 %v3868
  %v5639 = vpop.f32.mrf.mxu0
  %v5640 = vadd.f32 0.0, %v5639
  %v5641 = vpop.f32.mrf.mxu0
  %v5642 = vadd.f32 0.0, %v5641
  %5643 = vmatmul.bf16.gmra.mxu0 %v3871
  %v5644 = vpop.f32.mrf.mxu0
  %v5645 = vadd.f32 0.0, %v5644
  %v5646 = vpop.f32.mrf.mxu0
  %v5647 = vadd.f32 0.0, %v5646
  %5648 = vmatmul.bf16.gmra.mxu0 %v3874
  %v5649 = vpop.f32.mrf.mxu0
  %v5650 = vadd.f32 0.0, %v5649
  %v5651 = vpop.f32.mrf.mxu0
  %v5652 = vadd.f32 0.0, %v5651
  %5653 = vmatmul.bf16.gmra.mxu0 %v3877
  %v5654 = vpop.f32.mrf.mxu0
  %v5655 = vadd.f32 0.0, %v5654
  %v5656 = vpop.f32.mrf.mxu0
  %v5657 = vadd.f32 0.0, %v5656
  %5658 = vmatmul.bf16.gmra.mxu0 %v3880
  %v5659 = vpop.f32.mrf.mxu0
  %v5660 = vadd.f32 0.0, %v5659
  %v5661 = vpop.f32.mrf.mxu0
  %v5662 = vadd.f32 0.0, %v5661
  %5663 = vmatmul.bf16.gmra.mxu0 %v3883
  %v5664 = vpop.f32.mrf.mxu0
  %v5665 = vadd.f32 0.0, %v5664
  %v5666 = vpop.f32.mrf.mxu0
  %v5667 = vadd.f32 0.0, %v5666
  %5668 = vmatmul.bf16.gmra.mxu0 %v3886
  %v5669 = vpop.f32.mrf.mxu0
  %v5670 = vadd.f32 0.0, %v5669
  %v5671 = vpop.f32.mrf.mxu0
  %v5672 = vadd.f32 0.0, %v5671
  %5673 = vmatmul.bf16.gmra.mxu0 %v3889
  %v5674 = vpop.f32.mrf.mxu0
  %v5675 = vadd.f32 0.0, %v5674
  %v5676 = vpop.f32.mrf.mxu0
  %v5677 = vadd.f32 0.0, %v5676
  %5678 = vmatmul.bf16.gmra.mxu0 %v3892
  %v5679 = vpop.f32.mrf.mxu0
  %v5680 = vadd.f32 0.0, %v5679
  %v5681 = vpop.f32.mrf.mxu0
  %v5682 = vadd.f32 0.0, %v5681
  %5683 = vmatmul.bf16.gmra.mxu0 %v3895
  %v5684 = vpop.f32.mrf.mxu0
  %v5685 = vadd.f32 0.0, %v5684
  %v5686 = vpop.f32.mrf.mxu0
  %v5687 = vadd.f32 0.0, %v5686
  %5688 = vmatmul.bf16.gmra.mxu0 %v3898
  %v5689 = vpop.f32.mrf.mxu0
  %v5690 = vadd.f32 0.0, %v5689
  %v5691 = vpop.f32.mrf.mxu0
  %v5692 = vadd.f32 0.0, %v5691
  %5693 = vmatmul.bf16.gmra.mxu0 %v3901
  %v5694 = vpop.f32.mrf.mxu0
  %v5695 = vadd.f32 0.0, %v5694
  %v5696 = vpop.f32.mrf.mxu0
  %v5697 = vadd.f32 0.0, %v5696
  %5698 = vmatmul.bf16.gmra.mxu0 %v3904
  %v5699 = vpop.f32.mrf.mxu0
  %v5700 = vadd.f32 0.0, %v5699
  %v5701 = vpop.f32.mrf.mxu0
  %v5702 = vadd.f32 0.0, %v5701
  %5703 = vmatmul.bf16.gmra.mxu0 %v3907
  %v5704 = vpop.f32.mrf.mxu0
  %v5705 = vadd.f32 0.0, %v5704
  %v5706 = vpop.f32.mrf.mxu0
  %v5707 = vadd.f32 0.0, %v5706
  %5708 = vmatmul.bf16.gmra.mxu0 %v3910
  %v5709 = vpop.f32.mrf.mxu0
  %v5710 = vadd.f32 0.0, %v5709
  %v5711 = vpop.f32.mrf.mxu0
  %v5712 = vadd.f32 0.0, %v5711
  %5713 = vmatmul.bf16.gmra.mxu0 %v3913
  %v5714 = vpop.f32.mrf.mxu0
  %v5715 = vadd.f32 0.0, %v5714
  %v5716 = vpop.f32.mrf.mxu0
  %v5717 = vadd.f32 0.0, %v5716
  %5718 = vmatmul.bf16.gmra.mxu0 %v3916
  %v5719 = vpop.f32.mrf.mxu0
  %v5720 = vadd.f32 0.0, %v5719
  %v5721 = vpop.f32.mrf.mxu0
  %v5722 = vadd.f32 0.0, %v5721
  %5723 = vmatmul.bf16.gmra.mxu0 %v3919
  %v5724 = vpop.f32.mrf.mxu0
  %v5725 = vadd.f32 0.0, %v5724
  %v5726 = vpop.f32.mrf.mxu0
  %v5727 = vadd.f32 0.0, %v5726
  %5728 = vmatmul.bf16.gmra.mxu0 %v3922
  %v5729 = vpop.f32.mrf.mxu0
  %v5730 = vadd.f32 0.0, %v5729
  %v5731 = vpop.f32.mrf.mxu0
  %v5732 = vadd.f32 0.0, %v5731
  %5733 = vmatmul.bf16.gmra.mxu0 %v3925
  %v5734 = vpop.f32.mrf.mxu0
  %v5735 = vadd.f32 0.0, %v5734
  %v5736 = vpop.f32.mrf.mxu0
  %v5737 = vadd.f32 0.0, %v5736
  %5738 = vmatmul.bf16.gmra.mxu0 %v3928
  %v5739 = vpop.f32.mrf.mxu0
  %v5740 = vadd.f32 0.0, %v5739
  %v5741 = vpop.f32.mrf.mxu0
  %v5742 = vadd.f32 0.0, %v5741
  %5743 = vmatmul.bf16.gmra.mxu0 %v3931
  %v5744 = vpop.f32.mrf.mxu0
  %v5745 = vadd.f32 0.0, %v5744
  %v5746 = vpop.f32.mrf.mxu0
  %v5747 = vadd.f32 0.0, %v5746
  %5748 = vmatmul.bf16.gmra.mxu0 %v3934
  %v5749 = vpop.f32.mrf.mxu0
  %v5750 = vadd.f32 0.0, %v5749
  %v5751 = vpop.f32.mrf.mxu0
  %v5752 = vadd.f32 0.0, %v5751
  %5753 = vmatmul.bf16.gmra.mxu0 %v3937
  %v5754 = vpop.f32.mrf.mxu0
  %v5755 = vadd.f32 0.0, %v5754
  %v5756 = vpop.f32.mrf.mxu0
  %v5757 = vadd.f32 0.0, %v5756
  %5758 = vmatmul.bf16.gmra.mxu0 %v3940
  %v5759 = vpop.f32.mrf.mxu0
  %v5760 = vadd.f32 0.0, %v5759
  %v5761 = vpop.f32.mrf.mxu0
  %v5762 = vadd.f32 0.0, %v5761
  %5763 = vmatmul.bf16.gmra.mxu0 %v3943
  %v5764 = vpop.f32.mrf.mxu0
  %v5765 = vadd.f32 0.0, %v5764
  %v5766 = vpop.f32.mrf.mxu0
  %v5767 = vadd.f32 0.0, %v5766
  %5768 = vmatmul.bf16.gmra.mxu0 %v3946
  %v5769 = vpop.f32.mrf.mxu0
  %v5770 = vadd.f32 0.0, %v5769
  %v5771 = vpop.f32.mrf.mxu0
  %v5772 = vadd.f32 0.0, %v5771
  %5773 = vmatmul.bf16.gmra.mxu0 %v3949
  %v5774 = vpop.f32.mrf.mxu0
  %v5775 = vadd.f32 0.0, %v5774
  %v5776 = vpop.f32.mrf.mxu0
  %v5777 = vadd.f32 0.0, %v5776
  %5778 = vmatmul.bf16.gmra.mxu0 %v3952
  %v5779 = vpop.f32.mrf.mxu0
  %v5780 = vadd.f32 0.0, %v5779
  %v5781 = vpop.f32.mrf.mxu0
  %v5782 = vadd.f32 0.0, %v5781
  %5783 = vmatmul.bf16.gmra.mxu0 %v3955
  %v5784 = vpop.f32.mrf.mxu0
  %v5785 = vadd.f32 0.0, %v5784
  %v5786 = vpop.f32.mrf.mxu0
  %v5787 = vadd.f32 0.0, %v5786
  %5788 = vmatmul.bf16.gmra.mxu0 %v3958
  %v5789 = vpop.f32.mrf.mxu0
  %v5790 = vadd.f32 0.0, %v5789
  %v5791 = vpop.f32.mrf.mxu0
  %v5792 = vadd.f32 0.0, %v5791
  %5793 = vmatmul.bf16.gmra.mxu0 %v3961
  %v5794 = vpop.f32.mrf.mxu0
  %v5795 = vadd.f32 0.0, %v5794
  %v5796 = vpop.f32.mrf.mxu0
  %v5797 = vadd.f32 0.0, %v5796
  %5798 = vmatmul.bf16.gmra.mxu0 %v3964
  %v5799 = vpop.f32.mrf.mxu0
  %v5800 = vadd.f32 0.0, %v5799
  %v5801 = vpop.f32.mrf.mxu0
  %v5802 = vadd.f32 0.0, %v5801
  %5803 = vmatmul.bf16.gmra.mxu0 %v3967
  %v5804 = vpop.f32.mrf.mxu0
  %v5805 = vadd.f32 0.0, %v5804
  %v5806 = vpop.f32.mrf.mxu0
  %v5807 = vadd.f32 0.0, %v5806
  %5808 = vmatmul.bf16.gmra.mxu0 %v3970
  %v5809 = vpop.f32.mrf.mxu0
  %v5810 = vadd.f32 0.0, %v5809
  %v5811 = vpop.f32.mrf.mxu0
  %v5812 = vadd.f32 0.0, %v5811
  %5813 = vmatmul.bf16.gmra.mxu0 %v3973
  %v5814 = vpop.f32.mrf.mxu0
  %v5815 = vadd.f32 0.0, %v5814
  %v5816 = vpop.f32.mrf.mxu0
  %v5817 = vadd.f32 0.0, %v5816
  %5818 = vmatmul.bf16.gmra.mxu0 %v3976
  %v5819 = vpop.f32.mrf.mxu0
  %v5820 = vadd.f32 0.0, %v5819
  %v5821 = vpop.f32.mrf.mxu0
  %v5822 = vadd.f32 0.0, %v5821
  %5823 = vmatmul.bf16.gmra.mxu0 %v3979
  %v5824 = vpop.f32.mrf.mxu0
  %v5825 = vadd.f32 0.0, %v5824
  %v5826 = vpop.f32.mrf.mxu0
  %v5827 = vadd.f32 0.0, %v5826
  %5828 = vmatmul.bf16.gmra.mxu0 %v3982
  %v5829 = vpop.f32.mrf.mxu0
  %v5830 = vadd.f32 0.0, %v5829
  %v5831 = vpop.f32.mrf.mxu0
  %v5832 = vadd.f32 0.0, %v5831
  %5833 = vmatmul.bf16.gmra.mxu0 %v3985
  %v5834 = vpop.f32.mrf.mxu0
  %v5835 = vadd.f32 0.0, %v5834
  %v5836 = vpop.f32.mrf.mxu0
  %v5837 = vadd.f32 0.0, %v5836
  %5838 = vmatmul.bf16.gmra.mxu0 %v3988
  %v5839 = vpop.f32.mrf.mxu0
  %v5840 = vadd.f32 0.0, %v5839
  %v5841 = vpop.f32.mrf.mxu0
  %v5842 = vadd.f32 0.0, %v5841
  %5843 = vmatmul.bf16.gmra.mxu0 %v3991
  %v5844 = vpop.f32.mrf.mxu0
  %v5845 = vadd.f32 0.0, %v5844
  %v5846 = vpop.f32.mrf.mxu0
  %v5847 = vadd.f32 0.0, %v5846
  %5848 = vmatmul.bf16.gmra.mxu0 %v3994
  %v5849 = vpop.f32.mrf.mxu0
  %v5850 = vadd.f32 0.0, %v5849
  %v5851 = vpop.f32.mrf.mxu0
  %v5852 = vadd.f32 0.0, %v5851
  %5853 = vmatmul.bf16.gmra.mxu0 %v3997
  %v5854 = vpop.f32.mrf.mxu0
  %v5855 = vadd.f32 0.0, %v5854
  %v5856 = vpop.f32.mrf.mxu0
  %v5857 = vadd.f32 0.0, %v5856
  %5858 = vmatmul.bf16.gmra.mxu0 %v4000
  %v5859 = vpop.f32.mrf.mxu0
  %v5860 = vadd.f32 0.0, %v5859
  %v5861 = vpop.f32.mrf.mxu0
  %v5862 = vadd.f32 0.0, %v5861
  %5863 = vmatmul.bf16.gmra.mxu0 %v4003
  %v5864 = vpop.f32.mrf.mxu0
  %v5865 = vadd.f32 0.0, %v5864
  %v5866 = vpop.f32.mrf.mxu0
  %v5867 = vadd.f32 0.0, %v5866
  %5868 = vmatmul.bf16.gmra.mxu0 %v4006
  %v5869 = vpop.f32.mrf.mxu0
  %v5870 = vadd.f32 0.0, %v5869
  %v5871 = vpop.f32.mrf.mxu0
  %v5872 = vadd.f32 0.0, %v5871
  %5873 = vmatmul.bf16.gmra.mxu0 %v4009
  %v5874 = vpop.f32.mrf.mxu0
  %v5875 = vadd.f32 0.0, %v5874
  %v5876 = vpop.f32.mrf.mxu0
  %v5877 = vadd.f32 0.0, %v5876
  %5878 = vmatmul.bf16.gmra.mxu0 %v4012
  %v5879 = vpop.f32.mrf.mxu0
  %v5880 = vadd.f32 0.0, %v5879
  %v5881 = vpop.f32.mrf.mxu0
  %v5882 = vadd.f32 0.0, %v5881
  %5883 = vmatmul.bf16.gmra.mxu0 %v4015
  %v5884 = vpop.f32.mrf.mxu0
  %v5885 = vadd.f32 0.0, %v5884
  %v5886 = vpop.f32.mrf.mxu0
  %v5887 = vadd.f32 0.0, %v5886
  %5888 = vmatmul.bf16.gmra.mxu0 %v4018
  %v5889 = vpop.f32.mrf.mxu0
  %v5890 = vadd.f32 0.0, %v5889
  %v5891 = vpop.f32.mrf.mxu0
  %v5892 = vadd.f32 0.0, %v5891
  %5893 = vmatmul.bf16.gmra.mxu0 %v4021
  %v5894 = vpop.f32.mrf.mxu0
  %v5895 = vadd.f32 0.0, %v5894
  %v5896 = vpop.f32.mrf.mxu0
  %v5897 = vadd.f32 0.0, %v5896
  %5898 = vmatmul.bf16.gmra.mxu0 %v4024
  %v5899 = vpop.f32.mrf.mxu0
  %v5900 = vadd.f32 0.0, %v5899
  %v5901 = vpop.f32.mrf.mxu0
  %v5902 = vadd.f32 0.0, %v5901
  %5903 = vmatmul.bf16.gmra.mxu0 %v4027
  %v5904 = vpop.f32.mrf.mxu0
  %v5905 = vadd.f32 0.0, %v5904
  %v5906 = vpop.f32.mrf.mxu0
  %v5907 = vadd.f32 0.0, %v5906
  %5908 = vmatmul.bf16.gmra.mxu0 %v4030
  %v5909 = vpop.f32.mrf.mxu0
  %v5910 = vadd.f32 0.0, %v5909
  %v5911 = vpop.f32.mrf.mxu0
  %v5912 = vadd.f32 0.0, %v5911
  %5913 = vmatmul.bf16.gmra.mxu0 %v4033
  %v5914 = vpop.f32.mrf.mxu0
  %v5915 = vadd.f32 0.0, %v5914
  %v5916 = vpop.f32.mrf.mxu0
  %v5917 = vadd.f32 0.0, %v5916
  %5918 = vmatmul.bf16.gmra.mxu0 %v4036
  %v5919 = vpop.f32.mrf.mxu0
  %v5920 = vadd.f32 0.0, %v5919
  %v5921 = vpop.f32.mrf.mxu0
  %v5922 = vadd.f32 0.0, %v5921
  %5923 = vmatmul.bf16.gmra.mxu0 %v4039
  %v5924 = vpop.f32.mrf.mxu0
  %v5925 = vadd.f32 0.0, %v5924
  %v5926 = vpop.f32.mrf.mxu0
  %v5927 = vadd.f32 0.0, %v5926
  %5928 = vmatmul.bf16.gmra.mxu0 %v4042
  %v5929 = vpop.f32.mrf.mxu0
  %v5930 = vadd.f32 0.0, %v5929
  %v5931 = vpop.f32.mrf.mxu0
  %v5932 = vadd.f32 0.0, %v5931
  %5933 = vmatmul.bf16.gmra.mxu0 %v4045
  %v5934 = vpop.f32.mrf.mxu0
  %v5935 = vadd.f32 0.0, %v5934
  %v5936 = vpop.f32.mrf.mxu0
  %v5937 = vadd.f32 0.0, %v5936
  %5938 = vmatmul.bf16.gmra.mxu0 %v4048
  %v5939 = vpop.f32.mrf.mxu0
  %v5940 = vadd.f32 0.0, %v5939
  %v5941 = vpop.f32.mrf.mxu0
  %v5942 = vadd.f32 0.0, %v5941
  %5943 = vmatmul.bf16.gmra.mxu0 %v4051
  %v5944 = vpop.f32.mrf.mxu0
  %v5945 = vadd.f32 0.0, %v5944
  %v5946 = vpop.f32.mrf.mxu0
  %v5947 = vadd.f32 0.0, %v5946
  %5948 = vmatmul.bf16.gmra.mxu0 %v4054
  %v5949 = vpop.f32.mrf.mxu0
  %v5950 = vadd.f32 0.0, %v5949
  %v5951 = vpop.f32.mrf.mxu0
  %v5952 = vadd.f32 0.0, %v5951
  %5953 = vmatmul.bf16.gmra.mxu0 %v4057
  %v5954 = vpop.f32.mrf.mxu0
  %v5955 = vadd.f32 0.0, %v5954
  %v5956 = vpop.f32.mrf.mxu0
  %v5957 = vadd.f32 0.0, %v5956
  %5958 = vmatmul.bf16.gmra.mxu0 %v4060
  %v5959 = vpop.f32.mrf.mxu0
  %v5960 = vadd.f32 0.0, %v5959
  %v5961 = vpop.f32.mrf.mxu0
  %v5962 = vadd.f32 0.0, %v5961
  %5963 = vmatmul.bf16.gmra.mxu0 %v4063
  %v5964 = vpop.f32.mrf.mxu0
  %v5965 = vadd.f32 0.0, %v5964
  %v5966 = vpop.f32.mrf.mxu0
  %v5967 = vadd.f32 0.0, %v5966
  %5968 = vmatmul.bf16.gmra.mxu0 %v4066
  %v5969 = vpop.f32.mrf.mxu0
  %v5970 = vadd.f32 0.0, %v5969
  %v5971 = vpop.f32.mrf.mxu0
  %v5972 = vadd.f32 0.0, %v5971
  %5973 = vmatmul.bf16.gmra.mxu0 %v4069
  %v5974 = vpop.f32.mrf.mxu0
  %v5975 = vadd.f32 0.0, %v5974
  %v5976 = vpop.f32.mrf.mxu0
  %v5977 = vadd.f32 0.0, %v5976
  %5978 = vmatmul.bf16.gmra.mxu0 %v4072
  %v5979 = vpop.f32.mrf.mxu0
  %v5980 = vadd.f32 0.0, %v5979
  %v5981 = vpop.f32.mrf.mxu0
  %v5982 = vadd.f32 0.0, %v5981
  %5983 = vmatmul.bf16.gmra.mxu0 %v4075
  %v5984 = vpop.f32.mrf.mxu0
  %v5985 = vadd.f32 0.0, %v5984
  %v5986 = vpop.f32.mrf.mxu0
  %v5987 = vadd.f32 0.0, %v5986
  %5988 = vmatmul.bf16.gmra.mxu0 %v4078
  %v5989 = vpop.f32.mrf.mxu0
  %v5990 = vadd.f32 0.0, %v5989
  %v5991 = vpop.f32.mrf.mxu0
  %v5992 = vadd.f32 0.0, %v5991
  %5993 = vmatmul.bf16.gmra.mxu0 %v4081
  %v5994 = vpop.f32.mrf.mxu0
  %v5995 = vadd.f32 0.0, %v5994
  %v5996 = vpop.f32.mrf.mxu0
  %v5997 = vadd.f32 0.0, %v5996
  %5998 = vmatmul.bf16.gmra.mxu0 %v4084
  %v5999 = vpop.f32.mrf.mxu0
  %v6000 = vadd.f32 0.0, %v5999
  %v6001 = vpop.f32.mrf.mxu0
  %v6002 = vadd.f32 0.0, %v6001
  %6003 = vmatmul.bf16.gmra.mxu0 %v4087
  %v6004 = vpop.f32.mrf.mxu0
  %v6005 = vadd.f32 0.0, %v6004
  %v6006 = vpop.f32.mrf.mxu0
  %v6007 = vadd.f32 0.0, %v6006
  %6008 = vmatmul.bf16.gmra.mxu0 %v4090
  %v6009 = vpop.f32.mrf.mxu0
  %v6010 = vadd.f32 0.0, %v6009
  %v6011 = vpop.f32.mrf.mxu0
  %v6012 = vadd.f32 0.0, %v6011
  %6013 = vmatmul.bf16.gmra.mxu0 %v4093
  %v6014 = vpop.f32.mrf.mxu0
  %v6015 = vadd.f32 0.0, %v6014
  %v6016 = vpop.f32.mrf.mxu0
  %v6017 = vadd.f32 0.0, %v6016
  %6018 = vmatmul.bf16.gmra.mxu0 %v4096
  %v6019 = vpop.f32.mrf.mxu0
  %v6020 = vadd.f32 0.0, %v6019
  %v6021 = vpop.f32.mrf.mxu0
  %v6022 = vadd.f32 0.0, %v6021
  %6023 = vmatmul.bf16.gmra.mxu0 %v4099
  %v6024 = vpop.f32.mrf.mxu0
  %v6025 = vadd.f32 0.0, %v6024
  %v6026 = vpop.f32.mrf.mxu0
  %v6027 = vadd.f32 0.0, %v6026
  %6028 = vmatmul.bf16.gmra.mxu0 %v4102
  %v6029 = vpop.f32.mrf.mxu0
  %v6030 = vadd.f32 0.0, %v6029
  %v6031 = vpop.f32.mrf.mxu0
  %v6032 = vadd.f32 0.0, %v6031
  %6033 = vmatmul.bf16.gmra.mxu0 %v4105
  %v6034 = vpop.f32.mrf.mxu0
  %v6035 = vadd.f32 0.0, %v6034
  %v6036 = vpop.f32.mrf.mxu0
  %v6037 = vadd.f32 0.0, %v6036
  %6038 = vmatmul.bf16.gmra.mxu0 %v4108
  %v6039 = vpop.f32.mrf.mxu0
  %v6040 = vadd.f32 0.0, %v6039
  %v6041 = vpop.f32.mrf.mxu0
  %v6042 = vadd.f32 0.0, %v6041
  %6043 = vmatmul.bf16.gmra.mxu0 %v4111
  %v6044 = vpop.f32.mrf.mxu0
  %v6045 = vadd.f32 0.0, %v6044
  %v6046 = vpop.f32.mrf.mxu0
  %v6047 = vadd.f32 0.0, %v6046
  %6048 = vmatmul.bf16.gmra.mxu0 %v4114
  %v6049 = vpop.f32.mrf.mxu0
  %v6050 = vadd.f32 0.0, %v6049
  %v6051 = vpop.f32.mrf.mxu0
  %v6052 = vadd.f32 0.0, %v6051
  %6053 = vmatmul.bf16.gmra.mxu0 %v4117
  %v6054 = vpop.f32.mrf.mxu0
  %v6055 = vadd.f32 0.0, %v6054
  %v6056 = vpop.f32.mrf.mxu0
  %v6057 = vadd.f32 0.0, %v6056
  %6058 = vmatmul.bf16.gmra.mxu0 %v4120
  %v6059 = vpop.f32.mrf.mxu0
  %v6060 = vadd.f32 0.0, %v6059
  %v6061 = vpop.f32.mrf.mxu0
  %v6062 = vadd.f32 0.0, %v6061
  %6063 = vmatmul.bf16.gmra.mxu0 %v4123
  %v6064 = vpop.f32.mrf.mxu0
  %v6065 = vadd.f32 0.0, %v6064
  %v6066 = vpop.f32.mrf.mxu0
  %v6067 = vadd.f32 0.0, %v6066
  %6068 = vmatmul.bf16.gmra.mxu0 %v4126
  %v6069 = vpop.f32.mrf.mxu0
  %v6070 = vadd.f32 0.0, %v6069
  %v6071 = vpop.f32.mrf.mxu0
  %v6072 = vadd.f32 0.0, %v6071
  %6073 = vmatmul.bf16.gmra.mxu0 %v4129
  %v6074 = vpop.f32.mrf.mxu0
  %v6075 = vadd.f32 0.0, %v6074
  %v6076 = vpop.f32.mrf.mxu0
  %v6077 = vadd.f32 0.0, %v6076
  %6078 = vmatmul.bf16.gmra.mxu0 %v4132
  %v6079 = vpop.f32.mrf.mxu0
  %v6080 = vadd.f32 0.0, %v6079
  %v6081 = vpop.f32.mrf.mxu0
  %v6082 = vadd.f32 0.0, %v6081
  %6083 = vmatmul.bf16.gmra.mxu0 %v4135
  %v6084 = vpop.f32.mrf.mxu0
  %v6085 = vadd.f32 0.0, %v6084
  %v6086 = vpop.f32.mrf.mxu0
  %v6087 = vadd.f32 0.0, %v6086
  %6088 = vmatmul.bf16.gmra.mxu0 %v4138
  %v6089 = vpop.f32.mrf.mxu0
  %v6090 = vadd.f32 0.0, %v6089
  %v6091 = vpop.f32.mrf.mxu0
  %v6092 = vadd.f32 0.0, %v6091
  %6093 = vmatmul.bf16.gmra.mxu0 %v4141
  %v6094 = vpop.f32.mrf.mxu0
  %v6095 = vadd.f32 0.0, %v6094
  %v6096 = vpop.f32.mrf.mxu0
  %v6097 = vadd.f32 0.0, %v6096
  %6098 = vmatmul.bf16.gmra.mxu0 %v4144
  %v6099 = vpop.f32.mrf.mxu0
  %v6100 = vadd.f32 0.0, %v6099
  %v6101 = vpop.f32.mrf.mxu0
  %v6102 = vadd.f32 0.0, %v6101
  %6103 = vmatmul.bf16.gmra.mxu0 %v4147
  %v6104 = vpop.f32.mrf.mxu0
  %v6105 = vadd.f32 0.0, %v6104
  %v6106 = vpop.f32.mrf.mxu0
  %v6107 = vadd.f32 0.0, %v6106
  %6108 = vmatmul.bf16.gmra.mxu0 %v4150
  %v6109 = vpop.f32.mrf.mxu0
  %v6110 = vadd.f32 0.0, %v6109
  %v6111 = vpop.f32.mrf.mxu0
  %v6112 = vadd.f32 0.0, %v6111
  %6113 = vmatmul.bf16.gmra.mxu0 %v4153
  %v6114 = vpop.f32.mrf.mxu0
  %v6115 = vadd.f32 0.0, %v6114
  %v6116 = vpop.f32.mrf.mxu0
  %v6117 = vadd.f32 0.0, %v6116
  %6118 = vmatmul.bf16.gmra.mxu0 %v4156
  %v6119 = vpop.f32.mrf.mxu0
  %v6120 = vadd.f32 0.0, %v6119
  %v6121 = vpop.f32.mrf.mxu0
  %v6122 = vadd.f32 0.0, %v6121
  %6123 = vmatmul.bf16.gmra.mxu0 %v4159
  %v6124 = vpop.f32.mrf.mxu0
  %v6125 = vadd.f32 0.0, %v6124
  %v6126 = vpop.f32.mrf.mxu0
  %v6127 = vadd.f32 0.0, %v6126
  %6128 = vmatmul.bf16.gmra.mxu0 %v4162
  %v6129 = vpop.f32.mrf.mxu0
  %v6130 = vadd.f32 0.0, %v6129
  %v6131 = vpop.f32.mrf.mxu0
  %v6132 = vadd.f32 0.0, %v6131
  %6133 = vmatmul.bf16.gmra.mxu0 %v4165
  %v6134 = vpop.f32.mrf.mxu0
  %v6135 = vadd.f32 0.0, %v6134
  %v6136 = vpop.f32.mrf.mxu0
  %v6137 = vadd.f32 0.0, %v6136
  %6138 = vmatmul.bf16.gmra.mxu0 %v4168
  %v6139 = vpop.f32.mrf.mxu0
  %v6140 = vadd.f32 0.0, %v6139
  %v6141 = vpop.f32.mrf.mxu0
  %v6142 = vadd.f32 0.0, %v6141
  %6143 = vmatmul.bf16.gmra.mxu0 %v4171
  %v6144 = vpop.f32.mrf.mxu0
  %v6145 = vadd.f32 0.0, %v6144
  %v6146 = vpop.f32.mrf.mxu0
  %v6147 = vadd.f32 0.0, %v6146
  %6148 = vmatmul.bf16.gmra.mxu0 %v4174
  %v6149 = vpop.f32.mrf.mxu0
  %v6150 = vadd.f32 0.0, %v6149
  %v6151 = vpop.f32.mrf.mxu0
  %v6152 = vadd.f32 0.0, %v6151
  %6153 = vmatmul.bf16.gmra.mxu0 %v4177
  %v6154 = vpop.f32.mrf.mxu0
  %v6155 = vadd.f32 0.0, %v6154
  %v6156 = vpop.f32.mrf.mxu0
  %v6157 = vadd.f32 0.0, %v6156
  %6158 = vmatmul.bf16.gmra.mxu0 %v4180
  %v6159 = vpop.f32.mrf.mxu0
  %v6160 = vadd.f32 0.0, %v6159
  %v6161 = vpop.f32.mrf.mxu0
  %v6162 = vadd.f32 0.0, %v6161
  %6163 = vmatmul.bf16.gmra.mxu0 %v4183
  %v6164 = vpop.f32.mrf.mxu0
  %v6165 = vadd.f32 0.0, %v6164
  %v6166 = vpop.f32.mrf.mxu0
  %v6167 = vadd.f32 0.0, %v6166
  %6168 = vmatmul.bf16.gmra.mxu0 %v4186
  %v6169 = vpop.f32.mrf.mxu0
  %v6170 = vadd.f32 0.0, %v6169
  %v6171 = vpop.f32.mrf.mxu0
  %v6172 = vadd.f32 0.0, %v6171
  %6173 = vmatmul.bf16.gmra.mxu0 %v4189
  %v6174 = vpop.f32.mrf.mxu0
  %v6175 = vadd.f32 0.0, %v6174
  %v6176 = vpop.f32.mrf.mxu0
  %v6177 = vadd.f32 0.0, %v6176
  %6178 = vmatmul.bf16.gmra.mxu0 %v4192
  %v6179 = vpop.f32.mrf.mxu0
  %v6180 = vadd.f32 0.0, %v6179
  %v6181 = vpop.f32.mrf.mxu0
  %v6182 = vadd.f32 0.0, %v6181
  %6183 = vmatmul.bf16.gmra.mxu0 %v4195
  %v6184 = vpop.f32.mrf.mxu0
  %v6185 = vadd.f32 0.0, %v6184
  %v6186 = vpop.f32.mrf.mxu0
  %v6187 = vadd.f32 0.0, %v6186
  %6188 = vmatmul.bf16.gmra.mxu0 %v4198
  %v6189 = vpop.f32.mrf.mxu0
  %v6190 = vadd.f32 0.0, %v6189
  %v6191 = vpop.f32.mrf.mxu0
  %v6192 = vadd.f32 0.0, %v6191
  %6193 = vmatmul.bf16.gmra.mxu0 %v4201
  %v6194 = vpop.f32.mrf.mxu0
  %v6195 = vadd.f32 0.0, %v6194
  %v6196 = vpop.f32.mrf.mxu0
  %v6197 = vadd.f32 0.0, %v6196
  %6198 = vmatmul.bf16.gmra.mxu0 %v4204
  %v6199 = vpop.f32.mrf.mxu0
  %v6200 = vadd.f32 0.0, %v6199
  %v6201 = vpop.f32.mrf.mxu0
  %v6202 = vadd.f32 0.0, %v6201
  %6203 = vmatmul.bf16.gmra.mxu0 %v4207
  %v6204 = vpop.f32.mrf.mxu0
  %v6205 = vadd.f32 0.0, %v6204
  %v6206 = vpop.f32.mrf.mxu0
  %v6207 = vadd.f32 0.0, %v6206
  %6208 = vmatmul.bf16.gmra.mxu0 %v4210
  %v6209 = vpop.f32.mrf.mxu0
  %v6210 = vadd.f32 0.0, %v6209
  %v6211 = vpop.f32.mrf.mxu0
  %v6212 = vadd.f32 0.0, %v6211
  %6213 = vmatmul.bf16.gmra.mxu0 %v4213
  %v6214 = vpop.f32.mrf.mxu0
  %v6215 = vadd.f32 0.0, %v6214
  %v6216 = vpop.f32.mrf.mxu0
  %v6217 = vadd.f32 0.0, %v6216
  %6218 = vmatmul.bf16.gmra.mxu0 %v4216
  %v6219 = vpop.f32.mrf.mxu0
  %v6220 = vadd.f32 0.0, %v6219
  %v6221 = vpop.f32.mrf.mxu0
  %v6222 = vadd.f32 0.0, %v6221
  %6223 = vmatmul.bf16.gmra.mxu0 %v4219
  %v6224 = vpop.f32.mrf.mxu0
  %v6225 = vadd.f32 0.0, %v6224
  %v6226 = vpop.f32.mrf.mxu0
  %v6227 = vadd.f32 0.0, %v6226
  %6228 = vmatmul.bf16.gmra.mxu0 %v4222
  %v6229 = vpop.f32.mrf.mxu0
  %v6230 = vadd.f32 0.0, %v6229
  %v6231 = vpop.f32.mrf.mxu0
  %v6232 = vadd.f32 0.0, %v6231
  %6233 = vmatmul.bf16.gmra.mxu0 %v4225
  %v6234 = vpop.f32.mrf.mxu0
  %v6235 = vadd.f32 0.0, %v6234
  %v6236 = vpop.f32.mrf.mxu0
  %v6237 = vadd.f32 0.0, %v6236
  %6238 = vmatmul.bf16.gmra.mxu0 %v4228
  %v6239 = vpop.f32.mrf.mxu0
  %v6240 = vadd.f32 0.0, %v6239
  %v6241 = vpop.f32.mrf.mxu0
  %v6242 = vadd.f32 0.0, %v6241
  %6243 = vmatmul.bf16.gmra.mxu0 %v4231
  %v6244 = vpop.f32.mrf.mxu0
  %v6245 = vadd.f32 0.0, %v6244
  %v6246 = vpop.f32.mrf.mxu0
  %v6247 = vadd.f32 0.0, %v6246
  %6248 = vmatmul.bf16.gmra.mxu0 %v4234
  %v6249 = vpop.f32.mrf.mxu0
  %v6250 = vadd.f32 0.0, %v6249
  %v6251 = vpop.f32.mrf.mxu0
  %v6252 = vadd.f32 0.0, %v6251
  %6253 = vmatmul.bf16.gmra.mxu0 %v4237
  %v6254 = vpop.f32.mrf.mxu0
  %v6255 = vadd.f32 0.0, %v6254
  %v6256 = vpop.f32.mrf.mxu0
  %v6257 = vadd.f32 0.0, %v6256
  %6258 = vmatmul.bf16.gmra.mxu0 %v4240
  %v6259 = vpop.f32.mrf.mxu0
  %v6260 = vadd.f32 0.0, %v6259
  %v6261 = vpop.f32.mrf.mxu0
  %v6262 = vadd.f32 0.0, %v6261
  %6263 = vmatmul.bf16.gmra.mxu0 %v4243
  %v6264 = vpop.f32.mrf.mxu0
  %v6265 = vadd.f32 0.0, %v6264
  %v6266 = vpop.f32.mrf.mxu0
  %v6267 = vadd.f32 0.0, %v6266
  %6268 = vmatmul.bf16.gmra.mxu0 %v4246
  %v6269 = vpop.f32.mrf.mxu0
  %v6270 = vadd.f32 0.0, %v6269
  %v6271 = vpop.f32.mrf.mxu0
  %v6272 = vadd.f32 0.0, %v6271
  %6273 = vmatmul.bf16.gmra.mxu0 %v4249
  %v6274 = vpop.f32.mrf.mxu0
  %v6275 = vadd.f32 0.0, %v6274
  %v6276 = vpop.f32.mrf.mxu0
  %v6277 = vadd.f32 0.0, %v6276
  %6278 = vmatmul.bf16.gmra.mxu0 %v4252
  %v6279 = vpop.f32.mrf.mxu0
  %v6280 = vadd.f32 0.0, %v6279
  %v6281 = vpop.f32.mrf.mxu0
  %v6282 = vadd.f32 0.0, %v6281
  %6283 = vmatmul.bf16.gmra.mxu0 %v4255
  %v6284 = vpop.f32.mrf.mxu0
  %v6285 = vadd.f32 0.0, %v6284
  %v6286 = vpop.f32.mrf.mxu0
  %v6287 = vadd.f32 0.0, %v6286
  %6288 = vmatmul.bf16.gmra.mxu0 %v4258
  %v6289 = vpop.f32.mrf.mxu0
  %v6290 = vadd.f32 0.0, %v6289
  %v6291 = vpop.f32.mrf.mxu0
  %v6292 = vadd.f32 0.0, %v6291
  %6293 = vmatmul.bf16.gmra.mxu0 %v4261
  %v6294 = vpop.f32.mrf.mxu0
  %v6295 = vadd.f32 0.0, %v6294
  %v6296 = vpop.f32.mrf.mxu0
  %v6297 = vadd.f32 0.0, %v6296
  %6298 = vmatmul.bf16.gmra.mxu0 %v4264
  %v6299 = vpop.f32.mrf.mxu0
  %v6300 = vadd.f32 0.0, %v6299
  %v6301 = vpop.f32.mrf.mxu0
  %v6302 = vadd.f32 0.0, %v6301
  %6303 = vmatmul.bf16.gmra.mxu0 %v4267
  %v6304 = vpop.f32.mrf.mxu0
  %v6305 = vadd.f32 0.0, %v6304
  %v6306 = vpop.f32.mrf.mxu0
  %v6307 = vadd.f32 0.0, %v6306
  %6308 = vmatmul.bf16.gmra.mxu0 %v4270
  %v6309 = vpop.f32.mrf.mxu0
  %v6310 = vadd.f32 0.0, %v6309
  %v6311 = vpop.f32.mrf.mxu0
  %v6312 = vadd.f32 0.0, %v6311
  %6313 = vmatmul.bf16.gmra.mxu0 %v4273
  %v6314 = vpop.f32.mrf.mxu0
  %v6315 = vadd.f32 0.0, %v6314
  %v6316 = vpop.f32.mrf.mxu0
  %v6317 = vadd.f32 0.0, %v6316
  %6318 = vmatmul.bf16.gmra.mxu0 %v4276
  %v6319 = vpop.f32.mrf.mxu0
  %v6320 = vadd.f32 0.0, %v6319
  %v6321 = vpop.f32.mrf.mxu0
  %v6322 = vadd.f32 0.0, %v6321
  %6323 = vmatmul.bf16.gmra.mxu0 %v4279
  %v6324 = vpop.f32.mrf.mxu0
  %v6325 = vadd.f32 0.0, %v6324
  %v6326 = vpop.f32.mrf.mxu0
  %v6327 = vadd.f32 0.0, %v6326
  %6328 = vmatmul.bf16.gmra.mxu0 %v4282
  %v6329 = vpop.f32.mrf.mxu0
  %v6330 = vadd.f32 0.0, %v6329
  %v6331 = vpop.f32.mrf.mxu0
  %v6332 = vadd.f32 0.0, %v6331
  %6333 = vmatmul.bf16.gmra.mxu0 %v4285
  %v6334 = vpop.f32.mrf.mxu0
  %v6335 = vadd.f32 0.0, %v6334
  %v6336 = vpop.f32.mrf.mxu0
  %v6337 = vadd.f32 0.0, %v6336
  %6338 = vmatmul.bf16.gmra.mxu0 %v4288
  %v6339 = vpop.f32.mrf.mxu0
  %v6340 = vadd.f32 0.0, %v6339
  %v6341 = vpop.f32.mrf.mxu0
  %v6342 = vadd.f32 0.0, %v6341
  %6343 = vmatmul.bf16.gmra.mxu0 %v4291
  %v6344 = vpop.f32.mrf.mxu0
  %v6345 = vadd.f32 0.0, %v6344
  %v6346 = vpop.f32.mrf.mxu0
  %v6347 = vadd.f32 0.0, %v6346
  %6348 = vmatmul.bf16.gmra.mxu0 %v4294
  %v6349 = vpop.f32.mrf.mxu0
  %v6350 = vadd.f32 0.0, %v6349
  %v6351 = vpop.f32.mrf.mxu0
  %v6352 = vadd.f32 0.0, %v6351
  %6353 = vmatmul.bf16.gmra.mxu0 %v4297
  %v6354 = vpop.f32.mrf.mxu0
  %v6355 = vadd.f32 0.0, %v6354
  %v6356 = vpop.f32.mrf.mxu0
  %v6357 = vadd.f32 0.0, %v6356
  %6358 = vmatmul.bf16.gmra.mxu0 %v4300
  %v6359 = vpop.f32.mrf.mxu0
  %v6360 = vadd.f32 0.0, %v6359
  %v6361 = vpop.f32.mrf.mxu0
  %v6362 = vadd.f32 0.0, %v6361
  %6363 = vmatmul.bf16.gmra.mxu0 %v4303
  %v6364 = vpop.f32.mrf.mxu0
  %v6365 = vadd.f32 0.0, %v6364
  %v6366 = vpop.f32.mrf.mxu0
  %v6367 = vadd.f32 0.0, %v6366
  %6368 = vmatmul.bf16.gmra.mxu0 %v4306
  %v6369 = vpop.f32.mrf.mxu0
  %v6370 = vadd.f32 0.0, %v6369
  %v6371 = vpop.f32.mrf.mxu0
  %v6372 = vadd.f32 0.0, %v6371
  %6373 = vmatmul.bf16.gmra.mxu0 %v4309
  %v6374 = vpop.f32.mrf.mxu0
  %v6375 = vadd.f32 0.0, %v6374
  %v6376 = vpop.f32.mrf.mxu0
  %v6377 = vadd.f32 0.0, %v6376
  %6378 = vmatmul.bf16.gmra.mxu0 %v4312
  %v6379 = vpop.f32.mrf.mxu0
  %v6380 = vadd.f32 0.0, %v6379
  %v6381 = vpop.f32.mrf.mxu0
  %v6382 = vadd.f32 0.0, %v6381
  %6383 = vmatmul.bf16.gmra.mxu0 %v4315
  %v6384 = vpop.f32.mrf.mxu0
  %v6385 = vadd.f32 0.0, %v6384
  %v6386 = vpop.f32.mrf.mxu0
  %v6387 = vadd.f32 0.0, %v6386
  %6388 = vmatmul.bf16.gmra.mxu0 %v4318
  %v6389 = vpop.f32.mrf.mxu0
  %v6390 = vadd.f32 0.0, %v6389
  %v6391 = vpop.f32.mrf.mxu0
  %v6392 = vadd.f32 0.0, %v6391
  %6393 = vmatmul.bf16.gmra.mxu0 %v4321
  %v6394 = vpop.f32.mrf.mxu0
  %v6395 = vadd.f32 0.0, %v6394
  %v6396 = vpop.f32.mrf.mxu0
  %v6397 = vadd.f32 0.0, %v6396
  %6398 = vmatmul.bf16.gmra.mxu0 %v4324
  %v6399 = vpop.f32.mrf.mxu0
  %v6400 = vadd.f32 0.0, %v6399
  %v6401 = vpop.f32.mrf.mxu0
  %v6402 = vadd.f32 0.0, %v6401
  %6403 = vmatmul.bf16.gmra.mxu0 %v4327
  %v6404 = vpop.f32.mrf.mxu0
  %v6405 = vadd.f32 0.0, %v6404
  %v6406 = vpop.f32.mrf.mxu0
  %v6407 = vadd.f32 0.0, %v6406
  %6408 = vmatmul.bf16.gmra.mxu0 %v4330
  %v6409 = vpop.f32.mrf.mxu0
  %v6410 = vadd.f32 0.0, %v6409
  %v6411 = vpop.f32.mrf.mxu0
  %v6412 = vadd.f32 0.0, %v6411
  %6413 = vmatmul.bf16.gmra.mxu0 %v4333
  %v6414 = vpop.f32.mrf.mxu0
  %v6415 = vadd.f32 0.0, %v6414
  %v6416 = vpop.f32.mrf.mxu0
  %v6417 = vadd.f32 0.0, %v6416
  %6418 = vmatmul.bf16.gmra.mxu0 %v4336
  %v6419 = vpop.f32.mrf.mxu0
  %v6420 = vadd.f32 0.0, %v6419
  %v6421 = vpop.f32.mrf.mxu0
  %v6422 = vadd.f32 0.0, %v6421
  %6423 = vmatmul.bf16.gmra.mxu0 %v4339
  %v6424 = vpop.f32.mrf.mxu0
  %v6425 = vadd.f32 0.0, %v6424
  %v6426 = vpop.f32.mrf.mxu0
  %v6427 = vadd.f32 0.0, %v6426
  %6428 = vmatmul.bf16.gmra.mxu0 %v4342
  %v6429 = vpop.f32.mrf.mxu0
  %v6430 = vadd.f32 0.0, %v6429
  %v6431 = vpop.f32.mrf.mxu0
  %v6432 = vadd.f32 0.0, %v6431
  %6433 = vmatmul.bf16.gmra.mxu0 %v4345
  %v6434 = vpop.f32.mrf.mxu0
  %v6435 = vadd.f32 0.0, %v6434
  %v6436 = vpop.f32.mrf.mxu0
  %v6437 = vadd.f32 0.0, %v6436
  %6438 = vmatmul.bf16.gmra.mxu0 %v4348
  %v6439 = vpop.f32.mrf.mxu0
  %v6440 = vadd.f32 0.0, %v6439
  %v6441 = vpop.f32.mrf.mxu0
  %v6442 = vadd.f32 0.0, %v6441
  %6443 = vmatmul.bf16.gmra.mxu0 %v4351
  %v6444 = vpop.f32.mrf.mxu0
  %v6445 = vadd.f32 0.0, %v6444
  %v6446 = vpop.f32.mrf.mxu0
  %v6447 = vadd.f32 0.0, %v6446
  %6448 = vmatmul.bf16.gmra.mxu0 %v4354
  %v6449 = vpop.f32.mrf.mxu0
  %v6450 = vadd.f32 0.0, %v6449
  %v6451 = vpop.f32.mrf.mxu0
  %v6452 = vadd.f32 0.0, %v6451
  %6453 = vmatmul.bf16.gmra.mxu0 %v4357
  %v6454 = vpop.f32.mrf.mxu0
  %v6455 = vadd.f32 0.0, %v6454
  %v6456 = vpop.f32.mrf.mxu0
  %v6457 = vadd.f32 0.0, %v6456
  %6458 = vmatmul.bf16.gmra.mxu0 %v4360
  %v6459 = vpop.f32.mrf.mxu0
  %v6460 = vadd.f32 0.0, %v6459
  %v6461 = vpop.f32.mrf.mxu0
  %v6462 = vadd.f32 0.0, %v6461
  %6463 = vmatmul.bf16.gmra.mxu0 %v4363
  %v6464 = vpop.f32.mrf.mxu0
  %v6465 = vadd.f32 0.0, %v6464
  %v6466 = vpop.f32.mrf.mxu0
  %v6467 = vadd.f32 0.0, %v6466
  %6468 = vmatmul.bf16.gmra.mxu0 %v4366
  %v6469 = vpop.f32.mrf.mxu0
  %v6470 = vadd.f32 0.0, %v6469
  %v6471 = vpop.f32.mrf.mxu0
  %v6472 = vadd.f32 0.0, %v6471
  %6473 = vmatmul.bf16.gmra.mxu0 %v4369
  %v6474 = vpop.f32.mrf.mxu0
  %v6475 = vadd.f32 0.0, %v6474
  %v6476 = vpop.f32.mrf.mxu0
  %v6477 = vadd.f32 0.0, %v6476
  %6478 = vmatmul.bf16.gmra.mxu0 %v4372
  %v6479 = vpop.f32.mrf.mxu0
  %v6480 = vadd.f32 0.0, %v6479
  %v6481 = vpop.f32.mrf.mxu0
  %v6482 = vadd.f32 0.0, %v6481
  %6483 = vmatmul.bf16.gmra.mxu0 %v4375
  %v6484 = vpop.f32.mrf.mxu0
  %v6485 = vadd.f32 0.0, %v6484
  %v6486 = vpop.f32.mrf.mxu0
  %v6487 = vadd.f32 0.0, %v6486
  %6488 = vmatmul.bf16.gmra.mxu0 %v4378
  %v6489 = vpop.f32.mrf.mxu0
  %v6490 = vadd.f32 0.0, %v6489
  %v6491 = vpop.f32.mrf.mxu0
  %v6492 = vadd.f32 0.0, %v6491
  %6493 = vmatmul.bf16.gmra.mxu0 %v4381
  %v6494 = vpop.f32.mrf.mxu0
  %v6495 = vadd.f32 0.0, %v6494
  %v6496 = vpop.f32.mrf.mxu0
  %v6497 = vadd.f32 0.0, %v6496
  %6498 = vmatmul.bf16.gmra.mxu0 %v4384
  %v6499 = vpop.f32.mrf.mxu0
  %v6500 = vadd.f32 0.0, %v6499
  %v6501 = vpop.f32.mrf.mxu0
  %v6502 = vadd.f32 0.0, %v6501
  %6503 = vmatmul.bf16.gmra.mxu0 %v4387
  %v6504 = vpop.f32.mrf.mxu0
  %v6505 = vadd.f32 0.0, %v6504
  %v6506 = vpop.f32.mrf.mxu0
  %v6507 = vadd.f32 0.0, %v6506
  %6508 = vmatmul.bf16.gmra.mxu0 %v4390
  %v6509 = vpop.f32.mrf.mxu0
  %v6510 = vadd.f32 0.0, %v6509
  %v6511 = vpop.f32.mrf.mxu0
  %v6512 = vadd.f32 0.0, %v6511
  %6513 = vmatmul.bf16.gmra.mxu0 %v4393
  %v6514 = vpop.f32.mrf.mxu0
  %v6515 = vadd.f32 0.0, %v6514
  %v6516 = vpop.f32.mrf.mxu0
  %v6517 = vadd.f32 0.0, %v6516
  %6518 = vmatmul.bf16.gmra.mxu0 %v4396
  %v6519 = vpop.f32.mrf.mxu0
  %v6520 = vadd.f32 0.0, %v6519
  %v6521 = vpop.f32.mrf.mxu0
  %v6522 = vadd.f32 0.0, %v6521
  %6523 = vmatmul.bf16.gmra.mxu0 %v4399
  %v6524 = vpop.f32.mrf.mxu0
  %v6525 = vadd.f32 0.0, %v6524
  %v6526 = vpop.f32.mrf.mxu0
  %v6527 = vadd.f32 0.0, %v6526
  %6528 = vmatmul.bf16.gmra.mxu0 %v4402
  %v6529 = vpop.f32.mrf.mxu0
  %v6530 = vadd.f32 0.0, %v6529
  %v6531 = vpop.f32.mrf.mxu0
  %v6532 = vadd.f32 0.0, %v6531
  %6533 = vmatmul.bf16.gmra.mxu0 %v4405
  %v6534 = vpop.f32.mrf.mxu0
  %v6535 = vadd.f32 0.0, %v6534
  %v6536 = vpop.f32.mrf.mxu0
  %v6537 = vadd.f32 0.0, %v6536
  %6538 = vmatmul.bf16.gmra.mxu0 %v4408
  %v6539 = vpop.f32.mrf.mxu0
  %v6540 = vadd.f32 0.0, %v6539
  %v6541 = vpop.f32.mrf.mxu0
  %v6542 = vadd.f32 0.0, %v6541
  %6543 = vmatmul.bf16.gmra.mxu0 %v4411
  %v6544 = vpop.f32.mrf.mxu0
  %v6545 = vadd.f32 0.0, %v6544
  %v6546 = vpop.f32.mrf.mxu0
  %v6547 = vadd.f32 0.0, %v6546
  %6548 = vmatmul.bf16.gmra.mxu0 %v4414
  %v6549 = vpop.f32.mrf.mxu0
  %v6550 = vadd.f32 0.0, %v6549
  %v6551 = vpop.f32.mrf.mxu0
  %v6552 = vadd.f32 0.0, %v6551
  %6553 = vmatmul.bf16.gmra.mxu0 %v4417
  %v6554 = vpop.f32.mrf.mxu0
  %v6555 = vadd.f32 0.0, %v6554
  %v6556 = vpop.f32.mrf.mxu0
  %v6557 = vadd.f32 0.0, %v6556
  %6558 = vmatmul.bf16.gmra.mxu0 %v4420
  %v6559 = vpop.f32.mrf.mxu0
  %v6560 = vadd.f32 0.0, %v6559
  %v6561 = vpop.f32.mrf.mxu0
  %v6562 = vadd.f32 0.0, %v6561
  %6563 = vmatmul.bf16.gmra.mxu0 %v4423
  %v6564 = vpop.f32.mrf.mxu0
  %v6565 = vadd.f32 0.0, %v6564
  %v6566 = vpop.f32.mrf.mxu0
  %v6567 = vadd.f32 0.0, %v6566
  %6568 = vmatmul.bf16.gmra.mxu0 %v4426
  %v6569 = vpop.f32.mrf.mxu0
  %v6570 = vadd.f32 0.0, %v6569
  %v6571 = vpop.f32.mrf.mxu0
  %v6572 = vadd.f32 0.0, %v6571
  %6573 = vmatmul.bf16.gmra.mxu0 %v4429
  %v6574 = vpop.f32.mrf.mxu0
  %v6575 = vadd.f32 0.0, %v6574
  %v6576 = vpop.f32.mrf.mxu0
  %v6577 = vadd.f32 0.0, %v6576
  %6578 = vmatmul.bf16.gmra.mxu0 %v4432
  %v6579 = vpop.f32.mrf.mxu0
  %v6580 = vadd.f32 0.0, %v6579
  %v6581 = vpop.f32.mrf.mxu0
  %v6582 = vadd.f32 0.0, %v6581
  %6583 = vmatmul.bf16.gmra.mxu0 %v4435
  %v6584 = vpop.f32.mrf.mxu0
  %v6585 = vadd.f32 0.0, %v6584
  %v6586 = vpop.f32.mrf.mxu0
  %v6587 = vadd.f32 0.0, %v6586
  %6588 = vmatmul.bf16.gmra.mxu0 %v4438
  %v6589 = vpop.f32.mrf.mxu0
  %v6590 = vadd.f32 0.0, %v6589
  %v6591 = vpop.f32.mrf.mxu0
  %v6592 = vadd.f32 0.0, %v6591
  %6593 = vmatmul.bf16.gmra.mxu0 %v4441
  %v6594 = vpop.f32.mrf.mxu0
  %v6595 = vadd.f32 0.0, %v6594
  %v6596 = vpop.f32.mrf.mxu0
  %v6597 = vadd.f32 0.0, %v6596
  %6598 = vmatmul.bf16.gmra.mxu0 %v4444
  %v6599 = vpop.f32.mrf.mxu0
  %v6600 = vadd.f32 0.0, %v6599
  %v6601 = vpop.f32.mrf.mxu0
  %v6602 = vadd.f32 0.0, %v6601
  %6603 = vmatmul.bf16.gmra.mxu0 %v4447
  %v6604 = vpop.f32.mrf.mxu0
  %v6605 = vadd.f32 0.0, %v6604
  %v6606 = vpop.f32.mrf.mxu0
  %v6607 = vadd.f32 0.0, %v6606
  %6608 = vmatmul.bf16.gmra.mxu0 %v4450
  %v6609 = vpop.f32.mrf.mxu0
  %v6610 = vadd.f32 0.0, %v6609
  %v6611 = vpop.f32.mrf.mxu0
  %v6612 = vadd.f32 0.0, %v6611
  %6613 = vmatmul.bf16.gmra.mxu0 %v4453
  %v6614 = vpop.f32.mrf.mxu0
  %v6615 = vadd.f32 0.0, %v6614
  %v6616 = vpop.f32.mrf.mxu0
  %v6617 = vadd.f32 0.0, %v6616
  %6618 = vmatmul.bf16.gmra.mxu0 %v4456
  %v6619 = vpop.f32.mrf.mxu0
  %v6620 = vadd.f32 0.0, %v6619
  %v6621 = vpop.f32.mrf.mxu0
  %v6622 = vadd.f32 0.0, %v6621
  %6623 = vmatmul.bf16.gmra.mxu0 %v4459
  %v6624 = vpop.f32.mrf.mxu0
  %v6625 = vadd.f32 0.0, %v6624
  %v6626 = vpop.f32.mrf.mxu0
  %v6627 = vadd.f32 0.0, %v6626
  %6628 = vmatmul.bf16.gmra.mxu0 %v4462
  %v6629 = vpop.f32.mrf.mxu0
  %v6630 = vadd.f32 0.0, %v6629
  %v6631 = vpop.f32.mrf.mxu0
  %v6632 = vadd.f32 0.0, %v6631
  %6633 = vmatmul.bf16.gmra.mxu0 %v4465
  %v6634 = vpop.f32.mrf.mxu0
  %v6635 = vadd.f32 0.0, %v6634
  %v6636 = vpop.f32.mrf.mxu0
  %v6637 = vadd.f32 0.0, %v6636
  %6638 = vmatmul.bf16.gmra.mxu0 %v4468
  %v6639 = vpop.f32.mrf.mxu0
  %v6640 = vadd.f32 0.0, %v6639
  %v6641 = vpop.f32.mrf.mxu0
  %v6642 = vadd.f32 0.0, %v6641
  %6643 = vmatmul.bf16.gmra.mxu0 %v4471
  %v6644 = vpop.f32.mrf.mxu0
  %v6645 = vadd.f32 0.0, %v6644
  %v6646 = vpop.f32.mrf.mxu0
  %v6647 = vadd.f32 0.0, %v6646
  %6648 = vmatmul.bf16.gmra.mxu0 %v4474
  %v6649 = vpop.f32.mrf.mxu0
  %v6650 = vadd.f32 0.0, %v6649
  %v6651 = vpop.f32.mrf.mxu0
  %v6652 = vadd.f32 0.0, %v6651
  %6653 = vmatmul.bf16.gmra.mxu0 %v4477
  %v6654 = vpop.f32.mrf.mxu0
  %v6655 = vadd.f32 0.0, %v6654
  %v6656 = vpop.f32.mrf.mxu0
  %v6657 = vadd.f32 0.0, %v6656
  %6658 = vmatmul.bf16.gmra.mxu0 %v4480
  %v6659 = vpop.f32.mrf.mxu0
  %v6660 = vadd.f32 0.0, %v6659
  %v6661 = vpop.f32.mrf.mxu0
  %v6662 = vadd.f32 0.0, %v6661
  %6663 = vmatmul.bf16.gmra.mxu0 %v4483
  %v6664 = vpop.f32.mrf.mxu0
  %v6665 = vadd.f32 0.0, %v6664
  %v6666 = vpop.f32.mrf.mxu0
  %v6667 = vadd.f32 0.0, %v6666
  %6668 = vmatmul.bf16.gmra.mxu0 %v4486
  %v6669 = vpop.f32.mrf.mxu0
  %v6670 = vadd.f32 0.0, %v6669
  %v6671 = vpop.f32.mrf.mxu0
  %v6672 = vadd.f32 0.0, %v6671
  %6673 = vmatmul.bf16.gmra.mxu0 %v4489
  %v6674 = vpop.f32.mrf.mxu0
  %v6675 = vadd.f32 0.0, %v6674
  %v6676 = vpop.f32.mrf.mxu0
  %v6677 = vadd.f32 0.0, %v6676
  %6678 = vmatmul.bf16.gmra.mxu0 %v4492
  %v6679 = vpop.f32.mrf.mxu0
  %v6680 = vadd.f32 0.0, %v6679
  %v6681 = vpop.f32.mrf.mxu0
  %v6682 = vadd.f32 0.0, %v6681
  %6683 = vmatmul.bf16.gmra.mxu0 %v4495
  %v6684 = vpop.f32.mrf.mxu0
  %v6685 = vadd.f32 0.0, %v6684
  %v6686 = vpop.f32.mrf.mxu0
  %v6687 = vadd.f32 0.0, %v6686
  %6688 = vmatmul.bf16.gmra.mxu0 %v4498
  %v6689 = vpop.f32.mrf.mxu0
  %v6690 = vadd.f32 0.0, %v6689
  %v6691 = vpop.f32.mrf.mxu0
  %v6692 = vadd.f32 0.0, %v6691
  %6693 = vmatmul.bf16.gmra.mxu0 %v4501
  %v6694 = vpop.f32.mrf.mxu0
  %v6695 = vadd.f32 0.0, %v6694
  %v6696 = vpop.f32.mrf.mxu0
  %v6697 = vadd.f32 0.0, %v6696
  %6698 = vmatmul.bf16.gmra.mxu0 %v4504
  %v6699 = vpop.f32.mrf.mxu0
  %v6700 = vadd.f32 0.0, %v6699
  %v6701 = vpop.f32.mrf.mxu0
  %v6702 = vadd.f32 0.0, %v6701
  %6703 = vmatmul.bf16.gmra.mxu0 %v4507
  %v6704 = vpop.f32.mrf.mxu0
  %v6705 = vadd.f32 0.0, %v6704
  %v6706 = vpop.f32.mrf.mxu0
  %v6707 = vadd.f32 0.0, %v6706
  %6708 = vmatmul.bf16.gmra.mxu0 %v4510
  %v6709 = vpop.f32.mrf.mxu0
  %v6710 = vadd.f32 0.0, %v6709
  %v6711 = vpop.f32.mrf.mxu0
  %v6712 = vadd.f32 0.0, %v6711
  %6713 = vmatmul.bf16.gmra.mxu0 %v4513
  %v6714 = vpop.f32.mrf.mxu0
  %v6715 = vadd.f32 0.0, %v6714
  %v6716 = vpop.f32.mrf.mxu0
  %v6717 = vadd.f32 0.0, %v6716
  %6718 = vmatmul.bf16.gmra.mxu0 %v4516
  %v6719 = vpop.f32.mrf.mxu0
  %v6720 = vadd.f32 0.0, %v6719
  %v6721 = vpop.f32.mrf.mxu0
  %v6722 = vadd.f32 0.0, %v6721
  %6723 = vmatmul.bf16.gmra.mxu0 %v4519
  %v6724 = vpop.f32.mrf.mxu0
  %v6725 = vadd.f32 0.0, %v6724
  %v6726 = vpop.f32.mrf.mxu0
  %v6727 = vadd.f32 0.0, %v6726
  %6728 = vmatmul.bf16.gmra.mxu0 %v4522
  %v6729 = vpop.f32.mrf.mxu0
  %v6730 = vadd.f32 0.0, %v6729
  %v6731 = vpop.f32.mrf.mxu0
  %v6732 = vadd.f32 0.0, %v6731
  %6733 = vmatmul.bf16.gmra.mxu0 %v4525
  %v6734 = vpop.f32.mrf.mxu0
  %v6735 = vadd.f32 0.0, %v6734
  %v6736 = vpop.f32.mrf.mxu0
  %v6737 = vadd.f32 0.0, %v6736
  %6738 = vmatmul.bf16.gmra.mxu0 %v4528
  %v6739 = vpop.f32.mrf.mxu0
  %v6740 = vadd.f32 0.0, %v6739
  %v6741 = vpop.f32.mrf.mxu0
  %v6742 = vadd.f32 0.0, %v6741
  %6743 = vmatmul.bf16.gmra.mxu0 %v4531
  %v6744 = vpop.f32.mrf.mxu0
  %v6745 = vadd.f32 0.0, %v6744
  %v6746 = vpop.f32.mrf.mxu0
  %v6747 = vadd.f32 0.0, %v6746
  %6748 = vmatmul.bf16.gmra.mxu0 %v4534
  %v6749 = vpop.f32.mrf.mxu0
  %v6750 = vadd.f32 0.0, %v6749
  %v6751 = vpop.f32.mrf.mxu0
  %v6752 = vadd.f32 0.0, %v6751
  %6753 = vmatmul.bf16.gmra.mxu0 %v4537
  %v6754 = vpop.f32.mrf.mxu0
  %v6755 = vadd.f32 0.0, %v6754
  %v6756 = vpop.f32.mrf.mxu0
  %v6757 = vadd.f32 0.0, %v6756
  %6758 = vmatmul.bf16.gmra.mxu0 %v4540
  %v6759 = vpop.f32.mrf.mxu0
  %v6760 = vadd.f32 0.0, %v6759
  %v6761 = vpop.f32.mrf.mxu0
  %v6762 = vadd.f32 0.0, %v6761
  %6763 = vmatmul.bf16.gmra.mxu0 %v4543
  %v6764 = vpop.f32.mrf.mxu0
  %v6765 = vadd.f32 0.0, %v6764
  %v6766 = vpop.f32.mrf.mxu0
  %v6767 = vadd.f32 0.0, %v6766
  %6768 = vmatmul.bf16.gmra.mxu0 %v4546
  %v6769 = vpop.f32.mrf.mxu0
  %v6770 = vadd.f32 0.0, %v6769
  %v6771 = vpop.f32.mrf.mxu0
  %v6772 = vadd.f32 0.0, %v6771
  %6773 = vmatmul.bf16.gmra.mxu0 %v4549
  %v6774 = vpop.f32.mrf.mxu0
  %v6775 = vadd.f32 0.0, %v6774
  %v6776 = vpop.f32.mrf.mxu0
  %v6777 = vadd.f32 0.0, %v6776
  %6778 = vmatmul.bf16.gmra.mxu0 %v4552
  %v6779 = vpop.f32.mrf.mxu0
  %v6780 = vadd.f32 0.0, %v6779
  %v6781 = vpop.f32.mrf.mxu0
  %v6782 = vadd.f32 0.0, %v6781
  %6783 = vmatmul.bf16.gmra.mxu0 %v4555
  %v6784 = vpop.f32.mrf.mxu0
  %v6785 = vadd.f32 0.0, %v6784
  %v6786 = vpop.f32.mrf.mxu0
  %v6787 = vadd.f32 0.0, %v6786
  %6788 = vmatmul.bf16.gmra.mxu0 %v4558
  %v6789 = vpop.f32.mrf.mxu0
  %v6790 = vadd.f32 0.0, %v6789
  %v6791 = vpop.f32.mrf.mxu0
  %v6792 = vadd.f32 0.0, %v6791
  %6793 = vmatmul.bf16.gmra.mxu0 %v4561
  %v6794 = vpop.f32.mrf.mxu0
  %v6795 = vadd.f32 0.0, %v6794
  %v6796 = vpop.f32.mrf.mxu0
  %v6797 = vadd.f32 0.0, %v6796
  %6798 = vmatmul.bf16.gmra.mxu0 %v4564
  %v6799 = vpop.f32.mrf.mxu0
  %v6800 = vadd.f32 0.0, %v6799
  %v6801 = vpop.f32.mrf.mxu0
  %v6802 = vadd.f32 0.0, %v6801
  %6803 = vmatmul.bf16.gmra.mxu0 %v4567
  %v6804 = vpop.f32.mrf.mxu0
  %v6805 = vadd.f32 0.0, %v6804
  %v6806 = vpop.f32.mrf.mxu0
  %v6807 = vadd.f32 0.0, %v6806
  %6808 = vmatmul.bf16.gmra.mxu0 %v4570
  %v6809 = vpop.f32.mrf.mxu0
  %v6810 = vadd.f32 0.0, %v6809
  %v6811 = vpop.f32.mrf.mxu0
  %v6812 = vadd.f32 0.0, %v6811
  %6813 = vmatmul.bf16.gmra.mxu0 %v4573
  %v6814 = vpop.f32.mrf.mxu0
  %v6815 = vadd.f32 0.0, %v6814
  %v6816 = vpop.f32.mrf.mxu0
  %v6817 = vadd.f32 0.0, %v6816
  %6818 = vmatmul.bf16.gmra.mxu0 %v4576
  %v6819 = vpop.f32.mrf.mxu0
  %v6820 = vadd.f32 0.0, %v6819
  %v6821 = vpop.f32.mrf.mxu0
  %v6822 = vadd.f32 0.0, %v6821
  %6823 = vmatmul.bf16.gmra.mxu0 %v4579
  %v6824 = vpop.f32.mrf.mxu0
  %v6825 = vadd.f32 0.0, %v6824
  %v6826 = vpop.f32.mrf.mxu0
  %v6827 = vadd.f32 0.0, %v6826
  %6828 = vmatmul.bf16.gmra.mxu0 %v4582
  %v6829 = vpop.f32.mrf.mxu0
  %v6830 = vadd.f32 0.0, %v6829
  %v6831 = vpop.f32.mrf.mxu0
  %v6832 = vadd.f32 0.0, %v6831
  %6833 = vmatmul.bf16.gmra.mxu0 %v4585
  %v6834 = vpop.f32.mrf.mxu0
  %v6835 = vadd.f32 0.0, %v6834
  %v6836 = vpop.f32.mrf.mxu0
  %v6837 = vadd.f32 0.0, %v6836
  %6838 = vmatmul.bf16.gmra.mxu0 %v4588
  %v6839 = vpop.f32.mrf.mxu0
  %v6840 = vadd.f32 0.0, %v6839
  %v6841 = vpop.f32.mrf.mxu0
  %v6842 = vadd.f32 0.0, %v6841
  %6843 = vmatmul.bf16.gmra.mxu0 %v4591
  %v6844 = vpop.f32.mrf.mxu0
  %v6845 = vadd.f32 0.0, %v6844
  %v6846 = vpop.f32.mrf.mxu0
  %v6847 = vadd.f32 0.0, %v6846
  %6848 = vmatmul.bf16.gmra.mxu0 %v4594
  %v6849 = vpop.f32.mrf.mxu0
  %v6850 = vadd.f32 0.0, %v6849
  %v6851 = vpop.f32.mrf.mxu0
  %v6852 = vadd.f32 0.0, %v6851
  %6853 = vmatmul.bf16.gmra.mxu0 %v4597
  %v6854 = vpop.f32.mrf.mxu0
  %v6855 = vadd.f32 0.0, %v6854
  %v6856 = vpop.f32.mrf.mxu0
  %v6857 = vadd.f32 0.0, %v6856
  %6858 = vmatmul.bf16.gmra.mxu0 %v4600
  %v6859 = vpop.f32.mrf.mxu0
  %v6860 = vadd.f32 0.0, %v6859
  %v6861 = vpop.f32.mrf.mxu0
  %v6862 = vadd.f32 0.0, %v6861
  %6863 = vmatmul.bf16.gmra.mxu0 %v4603
  %v6864 = vpop.f32.mrf.mxu0
  %v6865 = vadd.f32 0.0, %v6864
  %v6866 = vpop.f32.mrf.mxu0
  %v6867 = vadd.f32 0.0, %v6866
  %6868 = vmatmul.bf16.gmra.mxu0 %v4606
  %v6869 = vpop.f32.mrf.mxu0
  %v6870 = vadd.f32 0.0, %v6869
  %v6871 = vpop.f32.mrf.mxu0
  %v6872 = vadd.f32 0.0, %v6871
  %6873 = vmatmul.bf16.gmra.mxu0 %v4609
  %v6874 = vpop.f32.mrf.mxu0
  %v6875 = vadd.f32 0.0, %v6874
  %v6876 = vpop.f32.mrf.mxu0
  %v6877 = vadd.f32 0.0, %v6876
  %6878 = vmatmul.bf16.gmra.mxu0 %v4612
  %v6879 = vpop.f32.mrf.mxu0
  %v6880 = vadd.f32 0.0, %v6879
  %v6881 = vpop.f32.mrf.mxu0
  %v6882 = vadd.f32 0.0, %v6881
  %6883 = vmatmul.bf16.gmra.mxu0 %v4615
  %v6884 = vpop.f32.mrf.mxu0
  %v6885 = vadd.f32 0.0, %v6884
  %v6886 = vpop.f32.mrf.mxu0
  %v6887 = vadd.f32 0.0, %v6886
  %6888 = vmatmul.bf16.gmra.mxu0 %v4618
  %v6889 = vpop.f32.mrf.mxu0
  %v6890 = vadd.f32 0.0, %v6889
  %v6891 = vpop.f32.mrf.mxu0
  %v6892 = vadd.f32 0.0, %v6891
  %6893 = vmatmul.bf16.gmra.mxu0 %v4621
  %v6894 = vpop.f32.mrf.mxu0
  %v6895 = vadd.f32 0.0, %v6894
  %v6896 = vpop.f32.mrf.mxu0
  %v6897 = vadd.f32 0.0, %v6896
  %6898 = vmatmul.bf16.gmra.mxu0 %v4624
  %v6899 = vpop.f32.mrf.mxu0
  %v6900 = vadd.f32 0.0, %v6899
  %v6901 = vpop.f32.mrf.mxu0
  %v6902 = vadd.f32 0.0, %v6901
  %6903 = vmatmul.bf16.gmra.mxu0 %v4627
  %v6904 = vpop.f32.mrf.mxu0
  %v6905 = vadd.f32 0.0, %v6904
  %v6906 = vpop.f32.mrf.mxu0
  %v6907 = vadd.f32 0.0, %v6906
  %6908 = vmatmul.bf16.gmra.mxu0 %v4630
  %v6909 = vpop.f32.mrf.mxu0
  %v6910 = vadd.f32 0.0, %v6909
  %v6911 = vpop.f32.mrf.mxu0
  %v6912 = vadd.f32 0.0, %v6911
  %6913 = vmatmul.bf16.gmra.mxu0 %v4633
  %v6914 = vpop.f32.mrf.mxu0
  %v6915 = vadd.f32 0.0, %v6914
  %v6916 = vpop.f32.mrf.mxu0
  %v6917 = vadd.f32 0.0, %v6916
  %6918 = vmatmul.bf16.gmra.mxu0 %v4636
  %v6919 = vpop.f32.mrf.mxu0
  %v6920 = vadd.f32 0.0, %v6919
  %v6921 = vpop.f32.mrf.mxu0
  %v6922 = vadd.f32 0.0, %v6921
  %6923 = vmatmul.bf16.gmra.mxu0 %v4639
  %v6924 = vpop.f32.mrf.mxu0
  %v6925 = vadd.f32 0.0, %v6924
  %v6926 = vpop.f32.mrf.mxu0
  %v6927 = vadd.f32 0.0, %v6926
  %6928 = vmatmul.bf16.gmra.mxu0 %v4642
  %v6929 = vpop.f32.mrf.mxu0
  %v6930 = vadd.f32 0.0, %v6929
  %v6931 = vpop.f32.mrf.mxu0
  %v6932 = vadd.f32 0.0, %v6931
  %6933 = vmatmul.bf16.gmra.mxu0 %v4645
  %v6934 = vpop.f32.mrf.mxu0
  %v6935 = vadd.f32 0.0, %v6934
  %v6936 = vpop.f32.mrf.mxu0
  %v6937 = vadd.f32 0.0, %v6936
  %6938 = vmatmul.bf16.gmra.mxu0 %v4648
  %v6939 = vpop.f32.mrf.mxu0
  %v6940 = vadd.f32 0.0, %v6939
  %v6941 = vpop.f32.mrf.mxu0
  %v6942 = vadd.f32 0.0, %v6941
  %6943 = vmatmul.bf16.gmra.mxu0 %v4651
  %v6944 = vpop.f32.mrf.mxu0
  %v6945 = vadd.f32 0.0, %v6944
  %v6946 = vpop.f32.mrf.mxu0
  %v6947 = vadd.f32 0.0, %v6946
  %6948 = vmatmul.bf16.gmra.mxu0 %v4654
  %v6949 = vpop.f32.mrf.mxu0
  %v6950 = vadd.f32 0.0, %v6949
  %v6951 = vpop.f32.mrf.mxu0
  %v6952 = vadd.f32 0.0, %v6951
  %6953 = vmatmul.bf16.gmra.mxu0 %v4657
  %v6954 = vpop.f32.mrf.mxu0
  %v6955 = vadd.f32 0.0, %v6954
  %v6956 = vpop.f32.mrf.mxu0
  %v6957 = vadd.f32 0.0, %v6956
  %6958 = vmatmul.bf16.gmra.mxu0 %v4660
  %v6959 = vpop.f32.mrf.mxu0
  %v6960 = vadd.f32 0.0, %v6959
  %v6961 = vpop.f32.mrf.mxu0
  %v6962 = vadd.f32 0.0, %v6961
  %6963 = vmatmul.bf16.gmra.mxu0 %v4663
  %v6964 = vpop.f32.mrf.mxu0
  %v6965 = vadd.f32 0.0, %v6964
  %v6966 = vpop.f32.mrf.mxu0
  %v6967 = vadd.f32 0.0, %v6966
  %6968 = vmatmul.bf16.gmra.mxu0 %v4666
  %v6969 = vpop.f32.mrf.mxu0
  %v6970 = vadd.f32 0.0, %v6969
  %v6971 = vpop.f32.mrf.mxu0
  %v6972 = vadd.f32 0.0, %v6971
  %6973 = vmatmul.bf16.gmra.mxu0 %v4669
  %v6974 = vpop.f32.mrf.mxu0
  %v6975 = vadd.f32 0.0, %v6974
  %v6976 = vpop.f32.mrf.mxu0
  %v6977 = vadd.f32 0.0, %v6976
  %6978 = vmatmul.bf16.gmra.mxu0 %v4672
  %v6979 = vpop.f32.mrf.mxu0
  %v6980 = vadd.f32 0.0, %v6979
  %v6981 = vpop.f32.mrf.mxu0
  %v6982 = vadd.f32 0.0, %v6981
  %6983 = vmatmul.bf16.gmra.mxu0 %v4675
  %v6984 = vpop.f32.mrf.mxu0
  %v6985 = vadd.f32 0.0, %v6984
  %v6986 = vpop.f32.mrf.mxu0
  %v6987 = vadd.f32 0.0, %v6986
  %6988 = vmatmul.bf16.gmra.mxu0 %v4678
  %v6989 = vpop.f32.mrf.mxu0
  %v6990 = vadd.f32 0.0, %v6989
  %v6991 = vpop.f32.mrf.mxu0
  %v6992 = vadd.f32 0.0, %v6991
  %6993 = vmatmul.bf16.gmra.mxu0 %v4681
  %v6994 = vpop.f32.mrf.mxu0
  %v6995 = vadd.f32 0.0, %v6994
  %v6996 = vpop.f32.mrf.mxu0
  %v6997 = vadd.f32 0.0, %v6996
  %6998 = vmatmul.bf16.gmra.mxu0 %v4684
  %v6999 = vpop.f32.mrf.mxu0
  %v7000 = vadd.f32 0.0, %v6999
  %v7001 = vpop.f32.mrf.mxu0
  %v7002 = vadd.f32 0.0, %v7001
  %7003 = vmatmul.bf16.gmra.mxu0 %v4687
  %v7004 = vpop.f32.mrf.mxu0
  %v7005 = vadd.f32 0.0, %v7004
  %v7006 = vpop.f32.mrf.mxu0
  %v7007 = vadd.f32 0.0, %v7006
  %7008 = vmatmul.bf16.gmra.mxu0 %v4690
  %v7009 = vpop.f32.mrf.mxu0
  %v7010 = vadd.f32 0.0, %v7009
  %v7011 = vpop.f32.mrf.mxu0
  %v7012 = vadd.f32 0.0, %v7011
  %7013 = vmatmul.bf16.gmra.mxu0 %v4693
  %v7014 = vpop.f32.mrf.mxu0
  %v7015 = vadd.f32 0.0, %v7014
  %v7016 = vpop.f32.mrf.mxu0
  %v7017 = vadd.f32 0.0, %v7016
  %7018 = vmatmul.bf16.gmra.mxu0 %v4696
  %v7019 = vpop.f32.mrf.mxu0
  %v7020 = vadd.f32 0.0, %v7019
  %v7021 = vpop.f32.mrf.mxu0
  %v7022 = vadd.f32 0.0, %v7021
  %7023 = vmatmul.bf16.gmra.mxu0 %v4699
  %v7024 = vpop.f32.mrf.mxu0
  %v7025 = vadd.f32 0.0, %v7024
  %v7026 = vpop.f32.mrf.mxu0
  %v7027 = vadd.f32 0.0, %v7026
  %7028 = vmatmul.bf16.gmra.mxu0 %v4702
  %v7029 = vpop.f32.mrf.mxu0
  %v7030 = vadd.f32 0.0, %v7029
  %v7031 = vpop.f32.mrf.mxu0
  %v7032 = vadd.f32 0.0, %v7031
  %7033 = vmatmul.bf16.gmra.mxu0 %v4705
  %v7034 = vpop.f32.mrf.mxu0
  %v7035 = vadd.f32 0.0, %v7034
  %v7036 = vpop.f32.mrf.mxu0
  %v7037 = vadd.f32 0.0, %v7036
  %7038 = vmatmul.bf16.gmra.mxu0 %v4708
  %v7039 = vpop.f32.mrf.mxu0
  %v7040 = vadd.f32 0.0, %v7039
  %v7041 = vpop.f32.mrf.mxu0
  %v7042 = vadd.f32 0.0, %v7041
  %7043 = vmatmul.bf16.gmra.mxu0 %v4711
  %v7044 = vpop.f32.mrf.mxu0
  %v7045 = vadd.f32 0.0, %v7044
  %v7046 = vpop.f32.mrf.mxu0
  %v7047 = vadd.f32 0.0, %v7046
  %7048 = vmatmul.bf16.gmra.mxu0 %v4714
  %v7049 = vpop.f32.mrf.mxu0
  %v7050 = vadd.f32 0.0, %v7049
  %v7051 = vpop.f32.mrf.mxu0
  %v7052 = vadd.f32 0.0, %v7051
  %7053 = vmatmul.bf16.gmra.mxu0 %v4717
  %v7054 = vpop.f32.mrf.mxu0
  %v7055 = vadd.f32 0.0, %v7054
  %v7056 = vpop.f32.mrf.mxu0
  %v7057 = vadd.f32 0.0, %v7056
  %7058 = vmatmul.bf16.gmra.mxu0 %v4720
  %v7059 = vpop.f32.mrf.mxu0
  %v7060 = vadd.f32 0.0, %v7059
  %v7061 = vpop.f32.mrf.mxu0
  %v7062 = vadd.f32 0.0, %v7061
  %7063 = vmatmul.bf16.gmra.mxu0 %v4723
  %v7064 = vpop.f32.mrf.mxu0
  %v7065 = vadd.f32 0.0, %v7064
  %v7066 = vpop.f32.mrf.mxu0
  %v7067 = vadd.f32 0.0, %v7066
  %7068 = vmatmul.bf16.gmra.mxu0 %v4726
  %v7069 = vpop.f32.mrf.mxu0
  %v7070 = vadd.f32 0.0, %v7069
  %v7071 = vpop.f32.mrf.mxu0
  %v7072 = vadd.f32 0.0, %v7071
  %7073 = vmatmul.bf16.gmra.mxu0 %v4729
  %v7074 = vpop.f32.mrf.mxu0
  %v7075 = vadd.f32 0.0, %v7074
  %v7076 = vpop.f32.mrf.mxu0
  %v7077 = vadd.f32 0.0, %v7076
  %7078 = vmatmul.bf16.gmra.mxu0 %v4732
  %v7079 = vpop.f32.mrf.mxu0
  %v7080 = vadd.f32 0.0, %v7079
  %v7081 = vpop.f32.mrf.mxu0
  %v7082 = vadd.f32 0.0, %v7081
  %7083 = vmatmul.bf16.gmra.mxu0 %v4735
  %v7084 = vpop.f32.mrf.mxu0
  %v7085 = vadd.f32 0.0, %v7084
  %v7086 = vpop.f32.mrf.mxu0
  %v7087 = vadd.f32 0.0, %v7086
  %7088 = vmatmul.bf16.gmra.mxu0 %v4738
  %v7089 = vpop.f32.mrf.mxu0
  %v7090 = vadd.f32 0.0, %v7089
  %v7091 = vpop.f32.mrf.mxu0
  %v7092 = vadd.f32 0.0, %v7091
  %7093 = vmatmul.bf16.gmra.mxu0 %v4741
  %v7094 = vpop.f32.mrf.mxu0
  %v7095 = vadd.f32 0.0, %v7094
  %v7096 = vpop.f32.mrf.mxu0
  %v7097 = vadd.f32 0.0, %v7096
  %7098 = vmatmul.bf16.gmra.mxu0 %v4744
  %v7099 = vpop.f32.mrf.mxu0
  %v7100 = vadd.f32 0.0, %v7099
  %v7101 = vpop.f32.mrf.mxu0
  %v7102 = vadd.f32 0.0, %v7101
  %7103 = vmatmul.bf16.gmra.mxu0 %v4747
  %v7104 = vpop.f32.mrf.mxu0
  %v7105 = vadd.f32 0.0, %v7104
  %v7106 = vpop.f32.mrf.mxu0
  %v7107 = vadd.f32 0.0, %v7106
  %7108 = vmatmul.bf16.gmra.mxu0 %v4750
  %v7109 = vpop.f32.mrf.mxu0
  %v7110 = vadd.f32 0.0, %v7109
  %v7111 = vpop.f32.mrf.mxu0
  %v7112 = vadd.f32 0.0, %v7111
  %7113 = vmatmul.bf16.gmra.mxu0 %v4753
  %v7114 = vpop.f32.mrf.mxu0
  %v7115 = vadd.f32 0.0, %v7114
  %v7116 = vpop.f32.mrf.mxu0
  %v7117 = vadd.f32 0.0, %v7116
  %7118 = vmatmul.bf16.gmra.mxu0 %v4756
  %v7119 = vpop.f32.mrf.mxu0
  %v7120 = vadd.f32 0.0, %v7119
  %v7121 = vpop.f32.mrf.mxu0
  %v7122 = vadd.f32 0.0, %v7121
  %7123 = vmatmul.bf16.gmra.mxu0 %v4759
  %v7124 = vpop.f32.mrf.mxu0
  %v7125 = vadd.f32 0.0, %v7124
  %v7126 = vpop.f32.mrf.mxu0
  %v7127 = vadd.f32 0.0, %v7126
  %7128 = vmatmul.bf16.gmra.mxu0 %v4762
  %v7129 = vpop.f32.mrf.mxu0
  %v7130 = vadd.f32 0.0, %v7129
  %v7131 = vpop.f32.mrf.mxu0
  %v7132 = vadd.f32 0.0, %v7131
  %7133 = vmatmul.bf16.gmra.mxu0 %v4765
  %v7134 = vpop.f32.mrf.mxu0
  %v7135 = vadd.f32 0.0, %v7134
  %v7136 = vpop.f32.mrf.mxu0
  %v7137 = vadd.f32 0.0, %v7136
  %7138 = vmatmul.bf16.gmra.mxu0 %v4768
  %v7139 = vpop.f32.mrf.mxu0
  %v7140 = vadd.f32 0.0, %v7139
  %v7141 = vpop.f32.mrf.mxu0
  %v7142 = vadd.f32 0.0, %v7141
  %7143 = vmatmul.bf16.gmra.mxu0 %v4771
  %v7144 = vpop.f32.mrf.mxu0
  %v7145 = vadd.f32 0.0, %v7144
  %v7146 = vpop.f32.mrf.mxu0
  %v7147 = vadd.f32 0.0, %v7146
  %7148 = vmatmul.bf16.gmra.mxu0 %v4774
  %v7149 = vpop.f32.mrf.mxu0
  %v7150 = vadd.f32 0.0, %v7149
  %v7151 = vpop.f32.mrf.mxu0
  %v7152 = vadd.f32 0.0, %v7151
  %7153 = vmatmul.bf16.gmra.mxu0 %v4777
  %v7154 = vpop.f32.mrf.mxu0
  %v7155 = vadd.f32 0.0, %v7154
  %v7156 = vpop.f32.mrf.mxu0
  %v7157 = vadd.f32 0.0, %v7156
  %7158 = vmatmul.bf16.gmra.mxu0 %v4780
  %v7159 = vpop.f32.mrf.mxu0
  %v7160 = vadd.f32 0.0, %v7159
  %v7161 = vpop.f32.mrf.mxu0
  %v7162 = vadd.f32 0.0, %v7161
  %7163 = vmatmul.bf16.gmra.mxu0 %v4783
  %v7164 = vpop.f32.mrf.mxu0
  %v7165 = vadd.f32 0.0, %v7164
  %v7166 = vpop.f32.mrf.mxu0
  %v7167 = vadd.f32 0.0, %v7166
  %7168 = vmatmul.bf16.gmra.mxu0 %v4786
  %v7169 = vpop.f32.mrf.mxu0
  %v7170 = vadd.f32 0.0, %v7169
  %v7171 = vpop.f32.mrf.mxu0
  %v7172 = vadd.f32 0.0, %v7171
  %7173 = vmatmul.bf16.gmra.mxu0 %v4789
  %v7174 = vpop.f32.mrf.mxu0
  %v7175 = vadd.f32 0.0, %v7174
  %v7176 = vpop.f32.mrf.mxu0
  %v7177 = vadd.f32 0.0, %v7176
  %7178 = vmatmul.bf16.gmra.mxu0 %v4792
  %v7179 = vpop.f32.mrf.mxu0
  %v7180 = vadd.f32 0.0, %v7179
  %v7181 = vpop.f32.mrf.mxu0
  %v7182 = vadd.f32 0.0, %v7181
  %7183 = vmatmul.bf16.gmra.mxu0 %v4795
  %v7184 = vpop.f32.mrf.mxu0
  %v7185 = vadd.f32 0.0, %v7184
  %v7186 = vpop.f32.mrf.mxu0
  %v7187 = vadd.f32 0.0, %v7186
  %7188 = vmatmul.bf16.gmra.mxu0 %v4798
  %v7189 = vpop.f32.mrf.mxu0
  %v7190 = vadd.f32 0.0, %v7189
  %v7191 = vpop.f32.mrf.mxu0
  %v7192 = vadd.f32 0.0, %v7191
  %7193 = vmatmul.bf16.gmra.mxu0 %v4801
  %v7194 = vpop.f32.mrf.mxu0
  %v7195 = vadd.f32 0.0, %v7194
  %v7196 = vpop.f32.mrf.mxu0
  %v7197 = vadd.f32 0.0, %v7196
  %7198 = vmatmul.bf16.gmra.mxu0 %v4804
  %v7199 = vpop.f32.mrf.mxu0
  %v7200 = vadd.f32 0.0, %v7199
  %v7201 = vpop.f32.mrf.mxu0
  %v7202 = vadd.f32 0.0, %v7201
  %7203 = vmatmul.bf16.gmra.mxu0 %v4807
  %v7204 = vpop.f32.mrf.mxu0
  %v7205 = vadd.f32 0.0, %v7204
  %v7206 = vpop.f32.mrf.mxu0
  %v7207 = vadd.f32 0.0, %v7206
  %7208 = vmatmul.bf16.gmra.mxu0 %v4810
  %v7209 = vpop.f32.mrf.mxu0
  %v7210 = vadd.f32 0.0, %v7209
  %v7211 = vpop.f32.mrf.mxu0
  %v7212 = vadd.f32 0.0, %v7211
  %7213 = vmatmul.bf16.gmra.mxu0 %v4813
  %v7214 = vpop.f32.mrf.mxu0
  %v7215 = vadd.f32 0.0, %v7214
  %v7216 = vpop.f32.mrf.mxu0
  %v7217 = vadd.f32 0.0, %v7216
  %7218 = vmatmul.bf16.gmra.mxu0 %v4816
  %v7219 = vpop.f32.mrf.mxu0
  %v7220 = vadd.f32 0.0, %v7219
  %v7221 = vpop.f32.mrf.mxu0
  %v7222 = vadd.f32 0.0, %v7221
  %7223 = vmatmul.bf16.gmra.mxu0 %v4819
  %v7224 = vpop.f32.mrf.mxu0
  %v7225 = vadd.f32 0.0, %v7224
  %v7226 = vpop.f32.mrf.mxu0
  %v7227 = vadd.f32 0.0, %v7226
  %7228 = vmatmul.bf16.gmra.mxu0 %v4822
  %v7229 = vpop.f32.mrf.mxu0
  %v7230 = vadd.f32 0.0, %v7229
  %v7231 = vpop.f32.mrf.mxu0
  %v7232 = vadd.f32 0.0, %v7231
  %7233 = vmatmul.bf16.gmra.mxu0 %v4825
  %v7234 = vpop.f32.mrf.mxu0
  %v7235 = vadd.f32 0.0, %v7234
  %v7236 = vpop.f32.mrf.mxu0
  %v7237 = vadd.f32 0.0, %v7236
  %7238 = vmatmul.bf16.gmra.mxu0 %v4828
  %v7239 = vpop.f32.mrf.mxu0
  %v7240 = vadd.f32 0.0, %v7239
  %v7241 = vpop.f32.mrf.mxu0
  %v7242 = vadd.f32 0.0, %v7241
  %7243 = vmatmul.bf16.gmra.mxu0 %v4831
  %v7244 = vpop.f32.mrf.mxu0
  %v7245 = vadd.f32 0.0, %v7244
  %v7246 = vpop.f32.mrf.mxu0
  %v7247 = vadd.f32 0.0, %v7246
  %7248 = vmatmul.bf16.gmra.mxu0 %v4834
  %v7249 = vpop.f32.mrf.mxu0
  %v7250 = vadd.f32 0.0, %v7249
  %v7251 = vpop.f32.mrf.mxu0
  %v7252 = vadd.f32 0.0, %v7251
  %7253 = vmatmul.bf16.gmra.mxu0 %v4837
  %v7254 = vpop.f32.mrf.mxu0
  %v7255 = vadd.f32 0.0, %v7254
  %v7256 = vpop.f32.mrf.mxu0
  %v7257 = vadd.f32 0.0, %v7256
  %7258 = vmatmul.bf16.gmra.mxu0 %v4840
  %v7259 = vpop.f32.mrf.mxu0
  %v7260 = vadd.f32 0.0, %v7259
  %v7261 = vpop.f32.mrf.mxu0
  %v7262 = vadd.f32 0.0, %v7261
  %7263 = vmatmul.bf16.gmra.mxu0 %v4843
  %v7264 = vpop.f32.mrf.mxu0
  %v7265 = vadd.f32 0.0, %v7264
  %v7266 = vpop.f32.mrf.mxu0
  %v7267 = vadd.f32 0.0, %v7266
  %7268 = vmatmul.bf16.gmra.mxu0 %v4846
  %v7269 = vpop.f32.mrf.mxu0
  %v7270 = vadd.f32 0.0, %v7269
  %v7271 = vpop.f32.mrf.mxu0
  %v7272 = vadd.f32 0.0, %v7271
  %7273 = vmatmul.bf16.gmra.mxu0 %v4849
  %v7274 = vpop.f32.mrf.mxu0
  %v7275 = vadd.f32 0.0, %v7274
  %v7276 = vpop.f32.mrf.mxu0
  %v7277 = vadd.f32 0.0, %v7276
  %7278 = vmatmul.bf16.gmra.mxu0 %v4852
  %v7279 = vpop.f32.mrf.mxu0
  %v7280 = vadd.f32 0.0, %v7279
  %v7281 = vpop.f32.mrf.mxu0
  %v7282 = vadd.f32 0.0, %v7281
  %7283 = vmatmul.bf16.gmra.mxu0 %v4855
  %v7284 = vpop.f32.mrf.mxu0
  %v7285 = vadd.f32 0.0, %v7284
  %v7286 = vpop.f32.mrf.mxu0
  %v7287 = vadd.f32 0.0, %v7286
  %7288 = vmatmul.bf16.gmra.mxu0 %v4858
  %v7289 = vpop.f32.mrf.mxu0
  %v7290 = vadd.f32 0.0, %v7289
  %v7291 = vpop.f32.mrf.mxu0
  %v7292 = vadd.f32 0.0, %v7291
  %7293 = vmatmul.bf16.gmra.mxu0 %v4861
  %v7294 = vpop.f32.mrf.mxu0
  %v7295 = vadd.f32 0.0, %v7294
  %v7296 = vpop.f32.mrf.mxu0
  %v7297 = vadd.f32 0.0, %v7296
  %7298 = vdwg.mxu0
  %v7299 = vmax.f32 %v4880, %v5485
  %v7300 = vmax.f32 %v4882, %v5487
  %v7301 = vmax.f32 %v4885, %v5490
  %v7302 = vmax.f32 %v4887, %v5492
  %v7303 = vmax.f32 %v4890, %v5495
  %v7304 = vmax.f32 %v4892, %v5497
  %v7305 = vmax.f32 %v4895, %v5500
  %v7306 = vmax.f32 %v4897, %v5502
  %v7307 = vmax.f32 %v4900, %v5505
  %v7308 = vmax.f32 %v4902, %v5507
  %v7309 = vmax.f32 %v4905, %v5510
  %v7310 = vmax.f32 %v4907, %v5512
  %v7311 = vmax.f32 %v4910, %v5515
  %v7312 = vmax.f32 %v4912, %v5517
  %v7313 = vmax.f32 %v4915, %v5520
  %v7314 = vmax.f32 %v4917, %v5522
  %v7315 = vmax.f32 %v4920, %v5525
  %v7316 = vmax.f32 %v4922, %v5527
  %v7317 = vmax.f32 %v4925, %v5530
  %v7318 = vmax.f32 %v4927, %v5532
  %v7319 = vmax.f32 %v4930, %v5535
  %v7320 = vmax.f32 %v4932, %v5537
  %v7321 = vmax.f32 %v4935, %v5540
  %v7322 = vmax.f32 %v4937, %v5542
  %v7323 = vmax.f32 %v4940, %v5545
  %v7324 = vmax.f32 %v4942, %v5547
  %v7325 = vmax.f32 %v4945, %v5550
  %v7326 = vmax.f32 %v4947, %v5552
  %v7327 = vmax.f32 %v4950, %v5555
  %v7328 = vmax.f32 %v4952, %v5557
  %v7329 = vmax.f32 %v4955, %v5560
  %v7330 = vmax.f32 %v4957, %v5562
  %v7331 = vmax.f32 %v4960, %v5565
  %v7332 = vmax.f32 %v4962, %v5567
  %v7333 = vmax.f32 %v4965, %v5570
  %v7334 = vmax.f32 %v4967, %v5572
  %v7335 = vmax.f32 %v4970, %v5575
  %v7336 = vmax.f32 %v4972, %v5577
  %v7337 = vmax.f32 %v4975, %v5580
  %v7338 = vmax.f32 %v4977, %v5582
  %v7339 = vmax.f32 %v4980, %v5585
  %v7340 = vmax.f32 %v4982, %v5587
  %v7341 = vmax.f32 %v4985, %v5590
  %v7342 = vmax.f32 %v4987, %v5592
  %v7343 = vmax.f32 %v4990, %v5595
  %v7344 = vmax.f32 %v4992, %v5597
  %v7345 = vmax.f32 %v4995, %v5600
  %v7346 = vmax.f32 %v4997, %v5602
  %v7347 = vmax.f32 %v5000, %v5605
  %v7348 = vmax.f32 %v5002, %v5607
  %v7349 = vmax.f32 %v5005, %v5610
  %v7350 = vmax.f32 %v5007, %v5612
  %v7351 = vmax.f32 %v5010, %v5615
  %v7352 = vmax.f32 %v5012, %v5617
  %v7353 = vmax.f32 %v5015, %v5620
  %v7354 = vmax.f32 %v5017, %v5622
  %v7355 = vmax.f32 %v5020, %v5625
  %v7356 = vmax.f32 %v5022, %v5627
  %v7357 = vmax.f32 %v5025, %v5630
  %v7358 = vmax.f32 %v5027, %v5632
  %v7359 = vmax.f32 %v5030, %v5635
  %v7360 = vmax.f32 %v5032, %v5637
  %v7361 = vmax.f32 %v5035, %v5640
  %v7362 = vmax.f32 %v5037, %v5642
  %v7363 = vmax.f32 %v5040, %v5645
  %v7364 = vmax.f32 %v5042, %v5647
  %v7365 = vmax.f32 %v5045, %v5650
  %v7366 = vmax.f32 %v5047, %v5652
  %v7367 = vmax.f32 %v5050, %v5655
  %v7368 = vmax.f32 %v5052, %v5657
  %v7369 = vmax.f32 %v5055, %v5660
  %v7370 = vmax.f32 %v5057, %v5662
  %v7371 = vmax.f32 %v5060, %v5665
  %v7372 = vmax.f32 %v5062, %v5667
  %v7373 = vmax.f32 %v5065, %v5670
  %v7374 = vmax.f32 %v5067, %v5672
  %v7375 = vmax.f32 %v5070, %v5675
  %v7376 = vmax.f32 %v5072, %v5677
  %v7377 = vmax.f32 %v5075, %v5680
  %v7378 = vmax.f32 %v5077, %v5682
  %v7379 = vmax.f32 %v5080, %v5685
  %v7380 = vmax.f32 %v5082, %v5687
  %v7381 = vmax.f32 %v5085, %v5690
  %v7382 = vmax.f32 %v5087, %v5692
  %v7383 = vmax.f32 %v5090, %v5695
  %v7384 = vmax.f32 %v5092, %v5697
  %v7385 = vmax.f32 %v5095, %v5700
  %v7386 = vmax.f32 %v5097, %v5702
  %v7387 = vmax.f32 %v5100, %v5705
  %v7388 = vmax.f32 %v5102, %v5707
  %v7389 = vmax.f32 %v5105, %v5710
  %v7390 = vmax.f32 %v5107, %v5712
  %v7391 = vmax.f32 %v5110, %v5715
  %v7392 = vmax.f32 %v5112, %v5717
  %v7393 = vmax.f32 %v5115, %v5720
  %v7394 = vmax.f32 %v5117, %v5722
  %v7395 = vmax.f32 %v5120, %v5725
  %v7396 = vmax.f32 %v5122, %v5727
  %v7397 = vmax.f32 %v5125, %v5730
  %v7398 = vmax.f32 %v5127, %v5732
  %v7399 = vmax.f32 %v5130, %v5735
  %v7400 = vmax.f32 %v5132, %v5737
  %v7401 = vmax.f32 %v5135, %v5740
  %v7402 = vmax.f32 %v5137, %v5742
  %v7403 = vmax.f32 %v5140, %v5745
  %v7404 = vmax.f32 %v5142, %v5747
  %v7405 = vmax.f32 %v5145, %v5750
  %v7406 = vmax.f32 %v5147, %v5752
  %v7407 = vmax.f32 %v5150, %v5755
  %v7408 = vmax.f32 %v5152, %v5757
  %v7409 = vmax.f32 %v5155, %v5760
  %v7410 = vmax.f32 %v5157, %v5762
  %v7411 = vmax.f32 %v5160, %v5765
  %v7412 = vmax.f32 %v5162, %v5767
  %v7413 = vmax.f32 %v5165, %v5770
  %v7414 = vmax.f32 %v5167, %v5772
  %v7415 = vmax.f32 %v5170, %v5775
  %v7416 = vmax.f32 %v5172, %v5777
  %v7417 = vmax.f32 %v5175, %v5780
  %v7418 = vmax.f32 %v5177, %v5782
  %v7419 = vmax.f32 %v5180, %v5785
  %v7420 = vmax.f32 %v5182, %v5787
  %v7421 = vmax.f32 %v5185, %v5790
  %v7422 = vmax.f32 %v5187, %v5792
  %v7423 = vmax.f32 %v5190, %v5795
  %v7424 = vmax.f32 %v5192, %v5797
  %v7425 = vmax.f32 %v5195, %v5800
  %v7426 = vmax.f32 %v5197, %v5802
  %v7427 = vmax.f32 %v5200, %v5805
  %v7428 = vmax.f32 %v5202, %v5807
  %v7429 = vmax.f32 %v5205, %v5810
  %v7430 = vmax.f32 %v5207, %v5812
  %v7431 = vmax.f32 %v5210, %v5815
  %v7432 = vmax.f32 %v5212, %v5817
  %v7433 = vmax.f32 %v5215, %v5820
  %v7434 = vmax.f32 %v5217, %v5822
  %v7435 = vmax.f32 %v5220, %v5825
  %v7436 = vmax.f32 %v5222, %v5827
  %v7437 = vmax.f32 %v5225, %v5830
  %v7438 = vmax.f32 %v5227, %v5832
  %v7439 = vmax.f32 %v5230, %v5835
  %v7440 = vmax.f32 %v5232, %v5837
  %v7441 = vmax.f32 %v5235, %v5840
  %v7442 = vmax.f32 %v5237, %v5842
  %v7443 = vmax.f32 %v5240, %v5845
  %v7444 = vmax.f32 %v5242, %v5847
  %v7445 = vmax.f32 %v5245, %v5850
  %v7446 = vmax.f32 %v5247, %v5852
  %v7447 = vmax.f32 %v5250, %v5855
  %v7448 = vmax.f32 %v5252, %v5857
  %v7449 = vmax.f32 %v5255, %v5860
  %v7450 = vmax.f32 %v5257, %v5862
  %v7451 = vmax.f32 %v5260, %v5865
  %v7452 = vmax.f32 %v5262, %v5867
  %v7453 = vmax.f32 %v5265, %v5870
  %v7454 = vmax.f32 %v5267, %v5872
  %v7455 = vmax.f32 %v5270, %v5875
  %v7456 = vmax.f32 %v5272, %v5877
  %v7457 = vmax.f32 %v5275, %v5880
  %v7458 = vmax.f32 %v5277, %v5882
  %v7459 = vmax.f32 %v5280, %v5885
  %v7460 = vmax.f32 %v5282, %v5887
  %v7461 = vmax.f32 %v5285, %v5890
  %v7462 = vmax.f32 %v5287, %v5892
  %v7463 = vmax.f32 %v5290, %v5895
  %v7464 = vmax.f32 %v5292, %v5897
  %v7465 = vmax.f32 %v5295, %v5900
  %v7466 = vmax.f32 %v5297, %v5902
  %v7467 = vmax.f32 %v5300, %v5905
  %v7468 = vmax.f32 %v5302, %v5907
  %v7469 = vmax.f32 %v5305, %v5910
  %v7470 = vmax.f32 %v5307, %v5912
  %v7471 = vmax.f32 %v5310, %v5915
  %v7472 = vmax.f32 %v5312, %v5917
  %v7473 = vmax.f32 %v5315, %v5920
  %v7474 = vmax.f32 %v5317, %v5922
  %v7475 = vmax.f32 %v5320, %v5925
  %v7476 = vmax.f32 %v5322, %v5927
  %v7477 = vmax.f32 %v5325, %v5930
  %v7478 = vmax.f32 %v5327, %v5932
  %v7479 = vmax.f32 %v5330, %v5935
  %v7480 = vmax.f32 %v5332, %v5937
  %v7481 = vmax.f32 %v5335, %v5940
  %v7482 = vmax.f32 %v5337, %v5942
  %v7483 = vmax.f32 %v5340, %v5945
  %v7484 = vmax.f32 %v5342, %v5947
  %v7485 = vmax.f32 %v5345, %v5950
  %v7486 = vmax.f32 %v5347, %v5952
  %v7487 = vmax.f32 %v5350, %v5955
  %v7488 = vmax.f32 %v5352, %v5957
  %v7489 = vmax.f32 %v5355, %v5960
  %v7490 = vmax.f32 %v5357, %v5962
  %v7491 = vmax.f32 %v5360, %v5965
  %v7492 = vmax.f32 %v5362, %v5967
  %v7493 = vmax.f32 %v5365, %v5970
  %v7494 = vmax.f32 %v5367, %v5972
  %v7495 = vmax.f32 %v5370, %v5975
  %v7496 = vmax.f32 %v5372, %v5977
  %v7497 = vmax.f32 %v5375, %v5980
  %v7498 = vmax.f32 %v5377, %v5982
  %v7499 = vmax.f32 %v5380, %v5985
  %v7500 = vmax.f32 %v5382, %v5987
  %v7501 = vmax.f32 %v5385, %v5990
  %v7502 = vmax.f32 %v5387, %v5992
  %v7503 = vmax.f32 %v5390, %v5995
  %v7504 = vmax.f32 %v5392, %v5997
  %v7505 = vmax.f32 %v5395, %v6000
  %v7506 = vmax.f32 %v5397, %v6002
  %v7507 = vmax.f32 %v5400, %v6005
  %v7508 = vmax.f32 %v5402, %v6007
  %v7509 = vmax.f32 %v5405, %v6010
  %v7510 = vmax.f32 %v5407, %v6012
  %v7511 = vmax.f32 %v5410, %v6015
  %v7512 = vmax.f32 %v5412, %v6017
  %v7513 = vmax.f32 %v5415, %v6020
  %v7514 = vmax.f32 %v5417, %v6022
  %v7515 = vmax.f32 %v5420, %v6025
  %v7516 = vmax.f32 %v5422, %v6027
  %v7517 = vmax.f32 %v5425, %v6030
  %v7518 = vmax.f32 %v5427, %v6032
  %v7519 = vmax.f32 %v5430, %v6035
  %v7520 = vmax.f32 %v5432, %v6037
  %v7521 = vmax.f32 %v5435, %v6040
  %v7522 = vmax.f32 %v5437, %v6042
  %v7523 = vmax.f32 %v5440, %v6045
  %v7524 = vmax.f32 %v5442, %v6047
  %v7525 = vmax.f32 %v5445, %v6050
  %v7526 = vmax.f32 %v5447, %v6052
  %v7527 = vmax.f32 %v5450, %v6055
  %v7528 = vmax.f32 %v5452, %v6057
  %v7529 = vmax.f32 %v5455, %v6060
  %v7530 = vmax.f32 %v5457, %v6062
  %v7531 = vmax.f32 %v5460, %v6065
  %v7532 = vmax.f32 %v5462, %v6067
  %v7533 = vmax.f32 %v5465, %v6070
  %v7534 = vmax.f32 %v5467, %v6072
  %v7535 = vmax.f32 %v5470, %v6075
  %v7536 = vmax.f32 %v5472, %v6077
  %v7537 = vmax.f32 %v5475, %v6080
  %v7538 = vmax.f32 %v5477, %v6082
  %v7539 = vmax.f32 %v5480, %v6085
  %v7540 = vmax.f32 %v5482, %v6087
  %v7541 = vmax.f32 %v6090, %v6695
  %v7542 = vmax.f32 %v6092, %v6697
  %v7543 = vmax.f32 %v6095, %v6700
  %v7544 = vmax.f32 %v6097, %v6702
  %v7545 = vmax.f32 %v6100, %v6705
  %v7546 = vmax.f32 %v6102, %v6707
  %v7547 = vmax.f32 %v6105, %v6710
  %v7548 = vmax.f32 %v6107, %v6712
  %v7549 = vmax.f32 %v6110, %v6715
  %v7550 = vmax.f32 %v6112, %v6717
  %v7551 = vmax.f32 %v6115, %v6720
  %v7552 = vmax.f32 %v6117, %v6722
  %v7553 = vmax.f32 %v6120, %v6725
  %v7554 = vmax.f32 %v6122, %v6727
  %v7555 = vmax.f32 %v6125, %v6730
  %v7556 = vmax.f32 %v6127, %v6732
  %v7557 = vmax.f32 %v6130, %v6735
  %v7558 = vmax.f32 %v6132, %v6737
  %v7559 = vmax.f32 %v6135, %v6740
  %v7560 = vmax.f32 %v6137, %v6742
  %v7561 = vmax.f32 %v6140, %v6745
  %v7562 = vmax.f32 %v6142, %v6747
  %v7563 = vmax.f32 %v6145, %v6750
  %v7564 = vmax.f32 %v6147, %v6752
  %v7565 = vmax.f32 %v6150, %v6755
  %v7566 = vmax.f32 %v6152, %v6757
  %v7567 = vmax.f32 %v6155, %v6760
  %v7568 = vmax.f32 %v6157, %v6762
  %v7569 = vmax.f32 %v6160, %v6765
  %v7570 = vmax.f32 %v6162, %v6767
  %v7571 = vmax.f32 %v6165, %v6770
  %v7572 = vmax.f32 %v6167, %v6772
  %v7573 = vmax.f32 %v6170, %v6775
  %v7574 = vmax.f32 %v6172, %v6777
  %v7575 = vmax.f32 %v6175, %v6780
  %v7576 = vmax.f32 %v6177, %v6782
  %v7577 = vmax.f32 %v6180, %v6785
  %v7578 = vmax.f32 %v6182, %v6787
  %v7579 = vmax.f32 %v6185, %v6790
  %v7580 = vmax.f32 %v6187, %v6792
  %v7581 = vmax.f32 %v6190, %v6795
  %v7582 = vmax.f32 %v6192, %v6797
  %v7583 = vmax.f32 %v6195, %v6800
  %v7584 = vmax.f32 %v6197, %v6802
  %v7585 = vmax.f32 %v6200, %v6805
  %v7586 = vmax.f32 %v6202, %v6807
  %v7587 = vmax.f32 %v6205, %v6810
  %v7588 = vmax.f32 %v6207, %v6812
  %v7589 = vmax.f32 %v6210, %v6815
  %v7590 = vmax.f32 %v6212, %v6817
  %v7591 = vmax.f32 %v6215, %v6820
  %v7592 = vmax.f32 %v6217, %v6822
  %v7593 = vmax.f32 %v6220, %v6825
  %v7594 = vmax.f32 %v6222, %v6827
  %v7595 = vmax.f32 %v6225, %v6830
  %v7596 = vmax.f32 %v6227, %v6832
  %v7597 = vmax.f32 %v6230, %v6835
  %v7598 = vmax.f32 %v6232, %v6837
  %v7599 = vmax.f32 %v6235, %v6840
  %v7600 = vmax.f32 %v6237, %v6842
  %v7601 = vmax.f32 %v6240, %v6845
  %v7602 = vmax.f32 %v6242, %v6847
  %v7603 = vmax.f32 %v6245, %v6850
  %v7604 = vmax.f32 %v6247, %v6852
  %v7605 = vmax.f32 %v6250, %v6855
  %v7606 = vmax.f32 %v6252, %v6857
  %v7607 = vmax.f32 %v6255, %v6860
  %v7608 = vmax.f32 %v6257, %v6862
  %v7609 = vmax.f32 %v6260, %v6865
  %v7610 = vmax.f32 %v6262, %v6867
  %v7611 = vmax.f32 %v6265, %v6870
  %v7612 = vmax.f32 %v6267, %v6872
  %v7613 = vmax.f32 %v6270, %v6875
  %v7614 = vmax.f32 %v6272, %v6877
  %v7615 = vmax.f32 %v6275, %v6880
  %v7616 = vmax.f32 %v6277, %v6882
  %v7617 = vmax.f32 %v6280, %v6885
  %v7618 = vmax.f32 %v6282, %v6887
  %v7619 = vmax.f32 %v6285, %v6890
  %v7620 = vmax.f32 %v6287, %v6892
  %v7621 = vmax.f32 %v6290, %v6895
  %v7622 = vmax.f32 %v6292, %v6897
  %v7623 = vmax.f32 %v6295, %v6900
  %v7624 = vmax.f32 %v6297, %v6902
  %v7625 = vmax.f32 %v6300, %v6905
  %v7626 = vmax.f32 %v6302, %v6907
  %v7627 = vmax.f32 %v6305, %v6910
  %v7628 = vmax.f32 %v6307, %v6912
  %v7629 = vmax.f32 %v6310, %v6915
  %v7630 = vmax.f32 %v6312, %v6917
  %v7631 = vmax.f32 %v6315, %v6920
  %v7632 = vmax.f32 %v6317, %v6922
  %v7633 = vmax.f32 %v6320, %v6925
  %v7634 = vmax.f32 %v6322, %v6927
  %v7635 = vmax.f32 %v6325, %v6930
  %v7636 = vmax.f32 %v6327, %v6932
  %v7637 = vmax.f32 %v6330, %v6935
  %v7638 = vmax.f32 %v6332, %v6937
  %v7639 = vmax.f32 %v6335, %v6940
  %v7640 = vmax.f32 %v6337, %v6942
  %v7641 = vmax.f32 %v6340, %v6945
  %v7642 = vmax.f32 %v6342, %v6947
  %v7643 = vmax.f32 %v6345, %v6950
  %v7644 = vmax.f32 %v6347, %v6952
  %v7645 = vmax.f32 %v6350, %v6955
  %v7646 = vmax.f32 %v6352, %v6957
  %v7647 = vmax.f32 %v6355, %v6960
  %v7648 = vmax.f32 %v6357, %v6962
  %v7649 = vmax.f32 %v6360, %v6965
  %v7650 = vmax.f32 %v6362, %v6967
  %v7651 = vmax.f32 %v6365, %v6970
  %v7652 = vmax.f32 %v6367, %v6972
  %v7653 = vmax.f32 %v6370, %v6975
  %v7654 = vmax.f32 %v6372, %v6977
  %v7655 = vmax.f32 %v6375, %v6980
  %v7656 = vmax.f32 %v6377, %v6982
  %v7657 = vmax.f32 %v6380, %v6985
  %v7658 = vmax.f32 %v6382, %v6987
  %v7659 = vmax.f32 %v6385, %v6990
  %v7660 = vmax.f32 %v6387, %v6992
  %v7661 = vmax.f32 %v6390, %v6995
  %v7662 = vmax.f32 %v6392, %v6997
  %v7663 = vmax.f32 %v6395, %v7000
  %v7664 = vmax.f32 %v6397, %v7002
  %v7665 = vmax.f32 %v6400, %v7005
  %v7666 = vmax.f32 %v6402, %v7007
  %v7667 = vmax.f32 %v6405, %v7010
  %v7668 = vmax.f32 %v6407, %v7012
  %v7669 = vmax.f32 %v6410, %v7015
  %v7670 = vmax.f32 %v6412, %v7017
  %v7671 = vmax.f32 %v6415, %v7020
  %v7672 = vmax.f32 %v6417, %v7022
  %v7673 = vmax.f32 %v6420, %v7025
  %v7674 = vmax.f32 %v6422, %v7027
  %v7675 = vmax.f32 %v6425, %v7030
  %v7676 = vmax.f32 %v6427, %v7032
  %v7677 = vmax.f32 %v6430, %v7035
  %v7678 = vmax.f32 %v6432, %v7037
  %v7679 = vmax.f32 %v6435, %v7040
  %v7680 = vmax.f32 %v6437, %v7042
  %v7681 = vmax.f32 %v6440, %v7045
  %v7682 = vmax.f32 %v6442, %v7047
  %v7683 = vmax.f32 %v6445, %v7050
  %v7684 = vmax.f32 %v6447, %v7052
  %v7685 = vmax.f32 %v6450, %v7055
  %v7686 = vmax.f32 %v6452, %v7057
  %v7687 = vmax.f32 %v6455, %v7060
  %v7688 = vmax.f32 %v6457, %v7062
  %v7689 = vmax.f32 %v6460, %v7065
  %v7690 = vmax.f32 %v6462, %v7067
  %v7691 = vmax.f32 %v6465, %v7070
  %v7692 = vmax.f32 %v6467, %v7072
  %v7693 = vmax.f32 %v6470, %v7075
  %v7694 = vmax.f32 %v6472, %v7077
  %v7695 = vmax.f32 %v6475, %v7080
  %v7696 = vmax.f32 %v6477, %v7082
  %v7697 = vmax.f32 %v6480, %v7085
  %v7698 = vmax.f32 %v6482, %v7087
  %v7699 = vmax.f32 %v6485, %v7090
  %v7700 = vmax.f32 %v6487, %v7092
  %v7701 = vmax.f32 %v6490, %v7095
  %v7702 = vmax.f32 %v6492, %v7097
  %v7703 = vmax.f32 %v6495, %v7100
  %v7704 = vmax.f32 %v6497, %v7102
  %v7705 = vmax.f32 %v6500, %v7105
  %v7706 = vmax.f32 %v6502, %v7107
  %v7707 = vmax.f32 %v6505, %v7110
  %v7708 = vmax.f32 %v6507, %v7112
  %v7709 = vmax.f32 %v6510, %v7115
  %v7710 = vmax.f32 %v6512, %v7117
  %v7711 = vmax.f32 %v6515, %v7120
  %v7712 = vmax.f32 %v6517, %v7122
  %v7713 = vmax.f32 %v6520, %v7125
  %v7714 = vmax.f32 %v6522, %v7127
  %v7715 = vmax.f32 %v6525, %v7130
  %v7716 = vmax.f32 %v6527, %v7132
  %v7717 = vmax.f32 %v6530, %v7135
  %v7718 = vmax.f32 %v6532, %v7137
  %v7719 = vmax.f32 %v6535, %v7140
  %v7720 = vmax.f32 %v6537, %v7142
  %v7721 = vmax.f32 %v6540, %v7145
  %v7722 = vmax.f32 %v6542, %v7147
  %v7723 = vmax.f32 %v6545, %v7150
  %v7724 = vmax.f32 %v6547, %v7152
  %v7725 = vmax.f32 %v6550, %v7155
  %v7726 = vmax.f32 %v6552, %v7157
  %v7727 = vmax.f32 %v6555, %v7160
  %v7728 = vmax.f32 %v6557, %v7162
  %v7729 = vmax.f32 %v6560, %v7165
  %v7730 = vmax.f32 %v6562, %v7167
  %v7731 = vmax.f32 %v6565, %v7170
  %v7732 = vmax.f32 %v6567, %v7172
  %v7733 = vmax.f32 %v6570, %v7175
  %v7734 = vmax.f32 %v6572, %v7177
  %v7735 = vmax.f32 %v6575, %v7180
  %v7736 = vmax.f32 %v6577, %v7182
  %v7737 = vmax.f32 %v6580, %v7185
  %v7738 = vmax.f32 %v6582, %v7187
  %v7739 = vmax.f32 %v6585, %v7190
  %v7740 = vmax.f32 %v6587, %v7192
  %v7741 = vmax.f32 %v6590, %v7195
  %v7742 = vmax.f32 %v6592, %v7197
  %v7743 = vmax.f32 %v6595, %v7200
  %v7744 = vmax.f32 %v6597, %v7202
  %v7745 = vmax.f32 %v6600, %v7205
  %v7746 = vmax.f32 %v6602, %v7207
  %v7747 = vmax.f32 %v6605, %v7210
  %v7748 = vmax.f32 %v6607, %v7212
  %v7749 = vmax.f32 %v6610, %v7215
  %v7750 = vmax.f32 %v6612, %v7217
  %v7751 = vmax.f32 %v6615, %v7220
  %v7752 = vmax.f32 %v6617, %v7222
  %v7753 = vmax.f32 %v6620, %v7225
  %v7754 = vmax.f32 %v6622, %v7227
  %v7755 = vmax.f32 %v6625, %v7230
  %v7756 = vmax.f32 %v6627, %v7232
  %v7757 = vmax.f32 %v6630, %v7235
  %v7758 = vmax.f32 %v6632, %v7237
  %v7759 = vmax.f32 %v6635, %v7240
  %v7760 = vmax.f32 %v6637, %v7242
  %v7761 = vmax.f32 %v6640, %v7245
  %v7762 = vmax.f32 %v6642, %v7247
  %v7763 = vmax.f32 %v6645, %v7250
  %v7764 = vmax.f32 %v6647, %v7252
  %v7765 = vmax.f32 %v6650, %v7255
  %v7766 = vmax.f32 %v6652, %v7257
  %v7767 = vmax.f32 %v6655, %v7260
  %v7768 = vmax.f32 %v6657, %v7262
  %v7769 = vmax.f32 %v6660, %v7265
  %v7770 = vmax.f32 %v6662, %v7267
  %v7771 = vmax.f32 %v6665, %v7270
  %v7772 = vmax.f32 %v6667, %v7272
  %v7773 = vmax.f32 %v6670, %v7275
  %v7774 = vmax.f32 %v6672, %v7277
  %v7775 = vmax.f32 %v6675, %v7280
  %v7776 = vmax.f32 %v6677, %v7282
  %v7777 = vmax.f32 %v6680, %v7285
  %v7778 = vmax.f32 %v6682, %v7287
  %v7779 = vmax.f32 %v6685, %v7290
  %v7780 = vmax.f32 %v6687, %v7292
  %v7781 = vmax.f32 %v6690, %v7295
  %v7782 = vmax.f32 %v6692, %v7297
  %v7783 = vmax.f32 %v7299, %v7541
  %v7784 = vmax.f32 %v7300, %v7542
  %v7785 = vmax.f32 %v7301, %v7543
  %v7786 = vmax.f32 %v7302, %v7544
  %v7787 = vmax.f32 %v7303, %v7545
  %v7788 = vmax.f32 %v7304, %v7546
  %v7789 = vmax.f32 %v7305, %v7547
  %v7790 = vmax.f32 %v7306, %v7548
  %v7791 = vmax.f32 %v7307, %v7549
  %v7792 = vmax.f32 %v7308, %v7550
  %v7793 = vmax.f32 %v7309, %v7551
  %v7794 = vmax.f32 %v7310, %v7552
  %v7795 = vmax.f32 %v7311, %v7553
  %v7796 = vmax.f32 %v7312, %v7554
  %v7797 = vmax.f32 %v7313, %v7555
  %v7798 = vmax.f32 %v7314, %v7556
  %v7799 = vmax.f32 %v7315, %v7557
  %v7800 = vmax.f32 %v7316, %v7558
  %v7801 = vmax.f32 %v7317, %v7559
  %v7802 = vmax.f32 %v7318, %v7560
  %v7803 = vmax.f32 %v7319, %v7561
  %v7804 = vmax.f32 %v7320, %v7562
  %v7805 = vmax.f32 %v7321, %v7563
  %v7806 = vmax.f32 %v7322, %v7564
  %v7807 = vmax.f32 %v7323, %v7565
  %v7808 = vmax.f32 %v7324, %v7566
  %v7809 = vmax.f32 %v7325, %v7567
  %v7810 = vmax.f32 %v7326, %v7568
  %v7811 = vmax.f32 %v7327, %v7569
  %v7812 = vmax.f32 %v7328, %v7570
  %v7813 = vmax.f32 %v7329, %v7571
  %v7814 = vmax.f32 %v7330, %v7572
  %v7815 = vmax.f32 %v7331, %v7573
  %v7816 = vmax.f32 %v7332, %v7574
  %v7817 = vmax.f32 %v7333, %v7575
  %v7818 = vmax.f32 %v7334, %v7576
  %v7819 = vmax.f32 %v7335, %v7577
  %v7820 = vmax.f32 %v7336, %v7578
  %v7821 = vmax.f32 %v7337, %v7579
  %v7822 = vmax.f32 %v7338, %v7580
  %v7823 = vmax.f32 %v7339, %v7581
  %v7824 = vmax.f32 %v7340, %v7582
  %v7825 = vmax.f32 %v7341, %v7583
  %v7826 = vmax.f32 %v7342, %v7584
  %v7827 = vmax.f32 %v7343, %v7585
  %v7828 = vmax.f32 %v7344, %v7586
  %v7829 = vmax.f32 %v7345, %v7587
  %v7830 = vmax.f32 %v7346, %v7588
  %v7831 = vmax.f32 %v7347, %v7589
  %v7832 = vmax.f32 %v7348, %v7590
  %v7833 = vmax.f32 %v7349, %v7591
  %v7834 = vmax.f32 %v7350, %v7592
  %v7835 = vmax.f32 %v7351, %v7593
  %v7836 = vmax.f32 %v7352, %v7594
  %v7837 = vmax.f32 %v7353, %v7595
  %v7838 = vmax.f32 %v7354, %v7596
  %v7839 = vmax.f32 %v7355, %v7597
  %v7840 = vmax.f32 %v7356, %v7598
  %v7841 = vmax.f32 %v7357, %v7599
  %v7842 = vmax.f32 %v7358, %v7600
  %v7843 = vmax.f32 %v7359, %v7601
  %v7844 = vmax.f32 %v7360, %v7602
  %v7845 = vmax.f32 %v7361, %v7603
  %v7846 = vmax.f32 %v7362, %v7604
  %v7847 = vmax.f32 %v7363, %v7605
  %v7848 = vmax.f32 %v7364, %v7606
  %v7849 = vmax.f32 %v7365, %v7607
  %v7850 = vmax.f32 %v7366, %v7608
  %v7851 = vmax.f32 %v7367, %v7609
  %v7852 = vmax.f32 %v7368, %v7610
  %v7853 = vmax.f32 %v7369, %v7611
  %v7854 = vmax.f32 %v7370, %v7612
  %v7855 = vmax.f32 %v7371, %v7613
  %v7856 = vmax.f32 %v7372, %v7614
  %v7857 = vmax.f32 %v7373, %v7615
  %v7858 = vmax.f32 %v7374, %v7616
  %v7859 = vmax.f32 %v7375, %v7617
  %v7860 = vmax.f32 %v7376, %v7618
  %v7861 = vmax.f32 %v7377, %v7619
  %v7862 = vmax.f32 %v7378, %v7620
  %v7863 = vmax.f32 %v7379, %v7621
  %v7864 = vmax.f32 %v7380, %v7622
  %v7865 = vmax.f32 %v7381, %v7623
  %v7866 = vmax.f32 %v7382, %v7624
  %v7867 = vmax.f32 %v7383, %v7625
  %v7868 = vmax.f32 %v7384, %v7626
  %v7869 = vmax.f32 %v7385, %v7627
  %v7870 = vmax.f32 %v7386, %v7628
  %v7871 = vmax.f32 %v7387, %v7629
  %v7872 = vmax.f32 %v7388, %v7630
  %v7873 = vmax.f32 %v7389, %v7631
  %v7874 = vmax.f32 %v7390, %v7632
  %v7875 = vmax.f32 %v7391, %v7633
  %v7876 = vmax.f32 %v7392, %v7634
  %v7877 = vmax.f32 %v7393, %v7635
  %v7878 = vmax.f32 %v7394, %v7636
  %v7879 = vmax.f32 %v7395, %v7637
  %v7880 = vmax.f32 %v7396, %v7638
  %v7881 = vmax.f32 %v7397, %v7639
  %v7882 = vmax.f32 %v7398, %v7640
  %v7883 = vmax.f32 %v7399, %v7641
  %v7884 = vmax.f32 %v7400, %v7642
  %v7885 = vmax.f32 %v7401, %v7643
  %v7886 = vmax.f32 %v7402, %v7644
  %v7887 = vmax.f32 %v7403, %v7645
  %v7888 = vmax.f32 %v7404, %v7646
  %v7889 = vmax.f32 %v7405, %v7647
  %v7890 = vmax.f32 %v7406, %v7648
  %v7891 = vmax.f32 %v7407, %v7649
  %v7892 = vmax.f32 %v7408, %v7650
  %v7893 = vmax.f32 %v7409, %v7651
  %v7894 = vmax.f32 %v7410, %v7652
  %v7895 = vmax.f32 %v7411, %v7653
  %v7896 = vmax.f32 %v7412, %v7654
  %v7897 = vmax.f32 %v7413, %v7655
  %v7898 = vmax.f32 %v7414, %v7656
  %v7899 = vmax.f32 %v7415, %v7657
  %v7900 = vmax.f32 %v7416, %v7658
  %v7901 = vmax.f32 %v7417, %v7659
  %v7902 = vmax.f32 %v7418, %v7660
  %v7903 = vmax.f32 %v7419, %v7661
  %v7904 = vmax.f32 %v7420, %v7662
  %v7905 = vmax.f32 %v7421, %v7663
  %v7906 = vmax.f32 %v7422, %v7664
  %v7907 = vmax.f32 %v7423, %v7665
  %v7908 = vmax.f32 %v7424, %v7666
  %v7909 = vmax.f32 %v7425, %v7667
  %v7910 = vmax.f32 %v7426, %v7668
  %v7911 = vmax.f32 %v7427, %v7669
  %v7912 = vmax.f32 %v7428, %v7670
  %v7913 = vmax.f32 %v7429, %v7671
  %v7914 = vmax.f32 %v7430, %v7672
  %v7915 = vmax.f32 %v7431, %v7673
  %v7916 = vmax.f32 %v7432, %v7674
  %v7917 = vmax.f32 %v7433, %v7675
  %v7918 = vmax.f32 %v7434, %v7676
  %v7919 = vmax.f32 %v7435, %v7677
  %v7920 = vmax.f32 %v7436, %v7678
  %v7921 = vmax.f32 %v7437, %v7679
  %v7922 = vmax.f32 %v7438, %v7680
  %v7923 = vmax.f32 %v7439, %v7681
  %v7924 = vmax.f32 %v7440, %v7682
  %v7925 = vmax.f32 %v7441, %v7683
  %v7926 = vmax.f32 %v7442, %v7684
  %v7927 = vmax.f32 %v7443, %v7685
  %v7928 = vmax.f32 %v7444, %v7686
  %v7929 = vmax.f32 %v7445, %v7687
  %v7930 = vmax.f32 %v7446, %v7688
  %v7931 = vmax.f32 %v7447, %v7689
  %v7932 = vmax.f32 %v7448, %v7690
  %v7933 = vmax.f32 %v7449, %v7691
  %v7934 = vmax.f32 %v7450, %v7692
  %v7935 = vmax.f32 %v7451, %v7693
  %v7936 = vmax.f32 %v7452, %v7694
  %v7937 = vmax.f32 %v7453, %v7695
  %v7938 = vmax.f32 %v7454, %v7696
  %v7939 = vmax.f32 %v7455, %v7697
  %v7940 = vmax.f32 %v7456, %v7698
  %v7941 = vmax.f32 %v7457, %v7699
  %v7942 = vmax.f32 %v7458, %v7700
  %v7943 = vmax.f32 %v7459, %v7701
  %v7944 = vmax.f32 %v7460, %v7702
  %v7945 = vmax.f32 %v7461, %v7703
  %v7946 = vmax.f32 %v7462, %v7704
  %v7947 = vmax.f32 %v7463, %v7705
  %v7948 = vmax.f32 %v7464, %v7706
  %v7949 = vmax.f32 %v7465, %v7707
  %v7950 = vmax.f32 %v7466, %v7708
  %v7951 = vmax.f32 %v7467, %v7709
  %v7952 = vmax.f32 %v7468, %v7710
  %v7953 = vmax.f32 %v7469, %v7711
  %v7954 = vmax.f32 %v7470, %v7712
  %v7955 = vmax.f32 %v7471, %v7713
  %v7956 = vmax.f32 %v7472, %v7714
  %v7957 = vmax.f32 %v7473, %v7715
  %v7958 = vmax.f32 %v7474, %v7716
  %v7959 = vmax.f32 %v7475, %v7717
  %v7960 = vmax.f32 %v7476, %v7718
  %v7961 = vmax.f32 %v7477, %v7719
  %v7962 = vmax.f32 %v7478, %v7720
  %v7963 = vmax.f32 %v7479, %v7721
  %v7964 = vmax.f32 %v7480, %v7722
  %v7965 = vmax.f32 %v7481, %v7723
  %v7966 = vmax.f32 %v7482, %v7724
  %v7967 = vmax.f32 %v7483, %v7725
  %v7968 = vmax.f32 %v7484, %v7726
  %v7969 = vmax.f32 %v7485, %v7727
  %v7970 = vmax.f32 %v7486, %v7728
  %v7971 = vmax.f32 %v7487, %v7729
  %v7972 = vmax.f32 %v7488, %v7730
  %v7973 = vmax.f32 %v7489, %v7731
  %v7974 = vmax.f32 %v7490, %v7732
  %v7975 = vmax.f32 %v7491, %v7733
  %v7976 = vmax.f32 %v7492, %v7734
  %v7977 = vmax.f32 %v7493, %v7735
  %v7978 = vmax.f32 %v7494, %v7736
  %v7979 = vmax.f32 %v7495, %v7737
  %v7980 = vmax.f32 %v7496, %v7738
  %v7981 = vmax.f32 %v7497, %v7739
  %v7982 = vmax.f32 %v7498, %v7740
  %v7983 = vmax.f32 %v7499, %v7741
  %v7984 = vmax.f32 %v7500, %v7742
  %v7985 = vmax.f32 %v7501, %v7743
  %v7986 = vmax.f32 %v7502, %v7744
  %v7987 = vmax.f32 %v7503, %v7745
  %v7988 = vmax.f32 %v7504, %v7746
  %v7989 = vmax.f32 %v7505, %v7747
  %v7990 = vmax.f32 %v7506, %v7748
  %v7991 = vmax.f32 %v7507, %v7749
  %v7992 = vmax.f32 %v7508, %v7750
  %v7993 = vmax.f32 %v7509, %v7751
  %v7994 = vmax.f32 %v7510, %v7752
  %v7995 = vmax.f32 %v7511, %v7753
  %v7996 = vmax.f32 %v7512, %v7754
  %v7997 = vmax.f32 %v7513, %v7755
  %v7998 = vmax.f32 %v7514, %v7756
  %v7999 = vmax.f32 %v7515, %v7757
  %v8000 = vmax.f32 %v7516, %v7758
  %v8001 = vmax.f32 %v7517, %v7759
  %v8002 = vmax.f32 %v7518, %v7760
  %v8003 = vmax.f32 %v7519, %v7761
  %v8004 = vmax.f32 %v7520, %v7762
  %v8005 = vmax.f32 %v7521, %v7763
  %v8006 = vmax.f32 %v7522, %v7764
  %v8007 = vmax.f32 %v7523, %v7765
  %v8008 = vmax.f32 %v7524, %v7766
  %v8009 = vmax.f32 %v7525, %v7767
  %v8010 = vmax.f32 %v7526, %v7768
  %v8011 = vmax.f32 %v7527, %v7769
  %v8012 = vmax.f32 %v7528, %v7770
  %v8013 = vmax.f32 %v7529, %v7771
  %v8014 = vmax.f32 %v7530, %v7772
  %v8015 = vmax.f32 %v7531, %v7773
  %v8016 = vmax.f32 %v7532, %v7774
  %v8017 = vmax.f32 %v7533, %v7775
  %v8018 = vmax.f32 %v7534, %v7776
  %v8019 = vmax.f32 %v7535, %v7777
  %v8020 = vmax.f32 %v7536, %v7778
  %v8021 = vmax.f32 %v7537, %v7779
  %v8022 = vmax.f32 %v7538, %v7780
  %v8023 = vmax.f32 %v7539, %v7781
  %v8024 = vmax.f32 %v7540, %v7782
  %v8025 = vld [vmem:[%s2] sm:$0x1]
  %v8027 = vperm.slane %v8025, 0
  %v8029 = vadd.f32 %v7783, %v8027
  %v8030 = vadd.f32 %v7784, %v8027
  %v8031 = vadd.f32 %v7785, %v8027
  %v8032 = vadd.f32 %v7786, %v8027
  %v8033 = vadd.f32 %v7787, %v8027
  %v8034 = vadd.f32 %v7788, %v8027
  %v8035 = vadd.f32 %v7789, %v8027
  %v8036 = vadd.f32 %v7790, %v8027
  %v8037 = vadd.f32 %v7791, %v8027
  %v8038 = vadd.f32 %v7792, %v8027
  %v8039 = vadd.f32 %v7793, %v8027
  %v8040 = vadd.f32 %v7794, %v8027
  %v8041 = vadd.f32 %v7795, %v8027
  %v8042 = vadd.f32 %v7796, %v8027
  %v8043 = vadd.f32 %v7797, %v8027
  %v8044 = vadd.f32 %v7798, %v8027
  %v8045 = vadd.f32 %v7799, %v8027
  %v8046 = vadd.f32 %v7800, %v8027
  %v8047 = vadd.f32 %v7801, %v8027
  %v8048 = vadd.f32 %v7802, %v8027
  %v8049 = vadd.f32 %v7803, %v8027
  %v8050 = vadd.f32 %v7804, %v8027
  %v8051 = vadd.f32 %v7805, %v8027
  %v8052 = vadd.f32 %v7806, %v8027
  %v8053 = vadd.f32 %v7807, %v8027
  %v8054 = vadd.f32 %v7808, %v8027
  %v8055 = vadd.f32 %v7809, %v8027
  %v8056 = vadd.f32 %v7810, %v8027
  %v8057 = vadd.f32 %v7811, %v8027
  %v8058 = vadd.f32 %v7812, %v8027
  %v8059 = vadd.f32 %v7813, %v8027
  %v8060 = vadd.f32 %v7814, %v8027
  %v8061 = vadd.f32 %v7815, %v8027
  %v8062 = vadd.f32 %v7816, %v8027
  %v8063 = vadd.f32 %v7817, %v8027
  %v8064 = vadd.f32 %v7818, %v8027
  %v8065 = vadd.f32 %v7819, %v8027
  %v8066 = vadd.f32 %v7820, %v8027
  %v8067 = vadd.f32 %v7821, %v8027
  %v8068 = vadd.f32 %v7822, %v8027
  %v8069 = vadd.f32 %v7823, %v8027
  %v8070 = vadd.f32 %v7824, %v8027
  %v8071 = vadd.f32 %v7825, %v8027
  %v8072 = vadd.f32 %v7826, %v8027
  %v8073 = vadd.f32 %v7827, %v8027
  %v8074 = vadd.f32 %v7828, %v8027
  %v8075 = vadd.f32 %v7829, %v8027
  %v8076 = vadd.f32 %v7830, %v8027
  %v8077 = vadd.f32 %v7831, %v8027
  %v8078 = vadd.f32 %v7832, %v8027
  %v8079 = vadd.f32 %v7833, %v8027
  %v8080 = vadd.f32 %v7834, %v8027
  %v8081 = vadd.f32 %v7835, %v8027
  %v8082 = vadd.f32 %v7836, %v8027
  %v8083 = vadd.f32 %v7837, %v8027
  %v8084 = vadd.f32 %v7838, %v8027
  %v8085 = vadd.f32 %v7839, %v8027
  %v8086 = vadd.f32 %v7840, %v8027
  %v8087 = vadd.f32 %v7841, %v8027
  %v8088 = vadd.f32 %v7842, %v8027
  %v8089 = vadd.f32 %v7843, %v8027
  %v8090 = vadd.f32 %v7844, %v8027
  %v8091 = vadd.f32 %v7845, %v8027
  %v8092 = vadd.f32 %v7846, %v8027
  %v8093 = vadd.f32 %v7847, %v8027
  %v8094 = vadd.f32 %v7848, %v8027
  %v8095 = vadd.f32 %v7849, %v8027
  %v8096 = vadd.f32 %v7850, %v8027
  %v8097 = vadd.f32 %v7851, %v8027
  %v8098 = vadd.f32 %v7852, %v8027
  %v8099 = vadd.f32 %v7853, %v8027
  %v8100 = vadd.f32 %v7854, %v8027
  %v8101 = vadd.f32 %v7855, %v8027
  %v8102 = vadd.f32 %v7856, %v8027
  %v8103 = vadd.f32 %v7857, %v8027
  %v8104 = vadd.f32 %v7858, %v8027
  %v8105 = vadd.f32 %v7859, %v8027
  %v8106 = vadd.f32 %v7860, %v8027
  %v8107 = vadd.f32 %v7861, %v8027
  %v8108 = vadd.f32 %v7862, %v8027
  %v8109 = vadd.f32 %v7863, %v8027
  %v8110 = vadd.f32 %v7864, %v8027
  %v8111 = vadd.f32 %v7865, %v8027
  %v8112 = vadd.f32 %v7866, %v8027
  %v8113 = vadd.f32 %v7867, %v8027
  %v8114 = vadd.f32 %v7868, %v8027
  %v8115 = vadd.f32 %v7869, %v8027
  %v8116 = vadd.f32 %v7870, %v8027
  %v8117 = vadd.f32 %v7871, %v8027
  %v8118 = vadd.f32 %v7872, %v8027
  %v8119 = vadd.f32 %v7873, %v8027
  %v8120 = vadd.f32 %v7874, %v8027
  %v8121 = vadd.f32 %v7875, %v8027
  %v8122 = vadd.f32 %v7876, %v8027
  %v8123 = vadd.f32 %v7877, %v8027
  %v8124 = vadd.f32 %v7878, %v8027
  %v8125 = vadd.f32 %v7879, %v8027
  %v8126 = vadd.f32 %v7880, %v8027
  %v8127 = vadd.f32 %v7881, %v8027
  %v8128 = vadd.f32 %v7882, %v8027
  %v8129 = vadd.f32 %v7883, %v8027
  %v8130 = vadd.f32 %v7884, %v8027
  %v8131 = vadd.f32 %v7885, %v8027
  %v8132 = vadd.f32 %v7886, %v8027
  %v8133 = vadd.f32 %v7887, %v8027
  %v8134 = vadd.f32 %v7888, %v8027
  %v8135 = vadd.f32 %v7889, %v8027
  %v8136 = vadd.f32 %v7890, %v8027
  %v8137 = vadd.f32 %v7891, %v8027
  %v8138 = vadd.f32 %v7892, %v8027
  %v8139 = vadd.f32 %v7893, %v8027
  %v8140 = vadd.f32 %v7894, %v8027
  %v8141 = vadd.f32 %v7895, %v8027
  %v8142 = vadd.f32 %v7896, %v8027
  %v8143 = vadd.f32 %v7897, %v8027
  %v8144 = vadd.f32 %v7898, %v8027
  %v8145 = vadd.f32 %v7899, %v8027
  %v8146 = vadd.f32 %v7900, %v8027
  %v8147 = vadd.f32 %v7901, %v8027
  %v8148 = vadd.f32 %v7902, %v8027
  %v8149 = vadd.f32 %v7903, %v8027
  %v8150 = vadd.f32 %v7904, %v8027
  %v8151 = vadd.f32 %v7905, %v8027
  %v8152 = vadd.f32 %v7906, %v8027
  %v8153 = vadd.f32 %v7907, %v8027
  %v8154 = vadd.f32 %v7908, %v8027
  %v8155 = vadd.f32 %v7909, %v8027
  %v8156 = vadd.f32 %v7910, %v8027
  %v8157 = vadd.f32 %v7911, %v8027
  %v8158 = vadd.f32 %v7912, %v8027
  %v8159 = vadd.f32 %v7913, %v8027
  %v8160 = vadd.f32 %v7914, %v8027
  %v8161 = vadd.f32 %v7915, %v8027
  %v8162 = vadd.f32 %v7916, %v8027
  %v8163 = vadd.f32 %v7917, %v8027
  %v8164 = vadd.f32 %v7918, %v8027
  %v8165 = vadd.f32 %v7919, %v8027
  %v8166 = vadd.f32 %v7920, %v8027
  %v8167 = vadd.f32 %v7921, %v8027
  %v8168 = vadd.f32 %v7922, %v8027
  %v8169 = vadd.f32 %v7923, %v8027
  %v8170 = vadd.f32 %v7924, %v8027
  %v8171 = vadd.f32 %v7925, %v8027
  %v8172 = vadd.f32 %v7926, %v8027
  %v8173 = vadd.f32 %v7927, %v8027
  %v8174 = vadd.f32 %v7928, %v8027
  %v8175 = vadd.f32 %v7929, %v8027
  %v8176 = vadd.f32 %v7930, %v8027
  %v8177 = vadd.f32 %v7931, %v8027
  %v8178 = vadd.f32 %v7932, %v8027
  %v8179 = vadd.f32 %v7933, %v8027
  %v8180 = vadd.f32 %v7934, %v8027
  %v8181 = vadd.f32 %v7935, %v8027
  %v8182 = vadd.f32 %v7936, %v8027
  %v8183 = vadd.f32 %v7937, %v8027
  %v8184 = vadd.f32 %v7938, %v8027
  %v8185 = vadd.f32 %v7939, %v8027
  %v8186 = vadd.f32 %v7940, %v8027
  %v8187 = vadd.f32 %v7941, %v8027
  %v8188 = vadd.f32 %v7942, %v8027
  %v8189 = vadd.f32 %v7943, %v8027
  %v8190 = vadd.f32 %v7944, %v8027
  %v8191 = vadd.f32 %v7945, %v8027
  %v8192 = vadd.f32 %v7946, %v8027
  %v8193 = vadd.f32 %v7947, %v8027
  %v8194 = vadd.f32 %v7948, %v8027
  %v8195 = vadd.f32 %v7949, %v8027
  %v8196 = vadd.f32 %v7950, %v8027
  %v8197 = vadd.f32 %v7951, %v8027
  %v8198 = vadd.f32 %v7952, %v8027
  %v8199 = vadd.f32 %v7953, %v8027
  %v8200 = vadd.f32 %v7954, %v8027
  %v8201 = vadd.f32 %v7955, %v8027
  %v8202 = vadd.f32 %v7956, %v8027
  %v8203 = vadd.f32 %v7957, %v8027
  %v8204 = vadd.f32 %v7958, %v8027
  %v8205 = vadd.f32 %v7959, %v8027
  %v8206 = vadd.f32 %v7960, %v8027
  %v8207 = vadd.f32 %v7961, %v8027
  %v8208 = vadd.f32 %v7962, %v8027
  %v8209 = vadd.f32 %v7963, %v8027
  %v8210 = vadd.f32 %v7964, %v8027
  %v8211 = vadd.f32 %v7965, %v8027
  %v8212 = vadd.f32 %v7966, %v8027
  %v8213 = vadd.f32 %v7967, %v8027
  %v8214 = vadd.f32 %v7968, %v8027
  %v8215 = vadd.f32 %v7969, %v8027
  %v8216 = vadd.f32 %v7970, %v8027
  %v8217 = vadd.f32 %v7971, %v8027
  %v8218 = vadd.f32 %v7972, %v8027
  %v8219 = vadd.f32 %v7973, %v8027
  %v8220 = vadd.f32 %v7974, %v8027
  %v8221 = vadd.f32 %v7975, %v8027
  %v8222 = vadd.f32 %v7976, %v8027
  %v8223 = vadd.f32 %v7977, %v8027
  %v8224 = vadd.f32 %v7978, %v8027
  %v8225 = vadd.f32 %v7979, %v8027
  %v8226 = vadd.f32 %v7980, %v8027
  %v8227 = vadd.f32 %v7981, %v8027
  %v8228 = vadd.f32 %v7982, %v8027
  %v8229 = vadd.f32 %v7983, %v8027
  %v8230 = vadd.f32 %v7984, %v8027
  %v8231 = vadd.f32 %v7985, %v8027
  %v8232 = vadd.f32 %v7986, %v8027
  %v8233 = vadd.f32 %v7987, %v8027
  %v8234 = vadd.f32 %v7988, %v8027
  %v8235 = vadd.f32 %v7989, %v8027
  %v8236 = vadd.f32 %v7990, %v8027
  %v8237 = vadd.f32 %v7991, %v8027
  %v8238 = vadd.f32 %v7992, %v8027
  %v8239 = vadd.f32 %v7993, %v8027
  %v8240 = vadd.f32 %v7994, %v8027
  %v8241 = vadd.f32 %v7995, %v8027
  %v8242 = vadd.f32 %v7996, %v8027
  %v8243 = vadd.f32 %v7997, %v8027
  %v8244 = vadd.f32 %v7998, %v8027
  %v8245 = vadd.f32 %v7999, %v8027
  %v8246 = vadd.f32 %v8000, %v8027
  %v8247 = vadd.f32 %v8001, %v8027
  %v8248 = vadd.f32 %v8002, %v8027
  %v8249 = vadd.f32 %v8003, %v8027
  %v8250 = vadd.f32 %v8004, %v8027
  %v8251 = vadd.f32 %v8005, %v8027
  %v8252 = vadd.f32 %v8006, %v8027
  %v8253 = vadd.f32 %v8007, %v8027
  %v8254 = vadd.f32 %v8008, %v8027
  %v8255 = vadd.f32 %v8009, %v8027
  %v8256 = vadd.f32 %v8010, %v8027
  %v8257 = vadd.f32 %v8011, %v8027
  %v8258 = vadd.f32 %v8012, %v8027
  %v8259 = vadd.f32 %v8013, %v8027
  %v8260 = vadd.f32 %v8014, %v8027
  %v8261 = vadd.f32 %v8015, %v8027
  %v8262 = vadd.f32 %v8016, %v8027
  %v8263 = vadd.f32 %v8017, %v8027
  %v8264 = vadd.f32 %v8018, %v8027
  %v8265 = vadd.f32 %v8019, %v8027
  %v8266 = vadd.f32 %v8020, %v8027
  %v8267 = vadd.f32 %v8021, %v8027
  %v8268 = vadd.f32 %v8022, %v8027
  %v8269 = vadd.f32 %v8023, %v8027
  %v8270 = vadd.f32 %v8024, %v8027
  %v8271 = vmax.f32 %v8029, 0.0
  %v8272 = vmax.f32 %v8030, 0.0
  %v8273 = vmax.f32 %v8031, 0.0
  %v8274 = vmax.f32 %v8032, 0.0
  %v8275 = vmax.f32 %v8033, 0.0
  %v8276 = vmax.f32 %v8034, 0.0
  %v8277 = vmax.f32 %v8035, 0.0
  %v8278 = vmax.f32 %v8036, 0.0
  %v8279 = vmax.f32 %v8037, 0.0
  %v8280 = vmax.f32 %v8038, 0.0
  %v8281 = vmax.f32 %v8039, 0.0
  %v8282 = vmax.f32 %v8040, 0.0
  %v8283 = vmax.f32 %v8041, 0.0
  %v8284 = vmax.f32 %v8042, 0.0
  %v8285 = vmax.f32 %v8043, 0.0
  %v8286 = vmax.f32 %v8044, 0.0
  %v8287 = vmax.f32 %v8045, 0.0
  %v8288 = vmax.f32 %v8046, 0.0
  %v8289 = vmax.f32 %v8047, 0.0
  %v8290 = vmax.f32 %v8048, 0.0
  %v8291 = vmax.f32 %v8049, 0.0
  %v8292 = vmax.f32 %v8050, 0.0
  %v8293 = vmax.f32 %v8051, 0.0
  %v8294 = vmax.f32 %v8052, 0.0
  %v8295 = vmax.f32 %v8053, 0.0
  %v8296 = vmax.f32 %v8054, 0.0
  %v8297 = vmax.f32 %v8055, 0.0
  %v8298 = vmax.f32 %v8056, 0.0
  %v8299 = vmax.f32 %v8057, 0.0
  %v8300 = vmax.f32 %v8058, 0.0
  %v8301 = vmax.f32 %v8059, 0.0
  %v8302 = vmax.f32 %v8060, 0.0
  %v8303 = vmax.f32 %v8061, 0.0
  %v8304 = vmax.f32 %v8062, 0.0
  %v8305 = vmax.f32 %v8063, 0.0
  %v8306 = vmax.f32 %v8064, 0.0
  %v8307 = vmax.f32 %v8065, 0.0
  %v8308 = vmax.f32 %v8066, 0.0
  %v8309 = vmax.f32 %v8067, 0.0
  %v8310 = vmax.f32 %v8068, 0.0
  %v8311 = vmax.f32 %v8069, 0.0
  %v8312 = vmax.f32 %v8070, 0.0
  %v8313 = vmax.f32 %v8071, 0.0
  %v8314 = vmax.f32 %v8072, 0.0
  %v8315 = vmax.f32 %v8073, 0.0
  %v8316 = vmax.f32 %v8074, 0.0
  %v8317 = vmax.f32 %v8075, 0.0
  %v8318 = vmax.f32 %v8076, 0.0
  %v8319 = vmax.f32 %v8077, 0.0
  %v8320 = vmax.f32 %v8078, 0.0
  %v8321 = vmax.f32 %v8079, 0.0
  %v8322 = vmax.f32 %v8080, 0.0
  %v8323 = vmax.f32 %v8081, 0.0
  %v8324 = vmax.f32 %v8082, 0.0
  %v8325 = vmax.f32 %v8083, 0.0
  %v8326 = vmax.f32 %v8084, 0.0
  %v8327 = vmax.f32 %v8085, 0.0
  %v8328 = vmax.f32 %v8086, 0.0
  %v8329 = vmax.f32 %v8087, 0.0
  %v8330 = vmax.f32 %v8088, 0.0
  %v8331 = vmax.f32 %v8089, 0.0
  %v8332 = vmax.f32 %v8090, 0.0
  %v8333 = vmax.f32 %v8091, 0.0
  %v8334 = vmax.f32 %v8092, 0.0
  %v8335 = vmax.f32 %v8093, 0.0
  %v8336 = vmax.f32 %v8094, 0.0
  %v8337 = vmax.f32 %v8095, 0.0
  %v8338 = vmax.f32 %v8096, 0.0
  %v8339 = vmax.f32 %v8097, 0.0
  %v8340 = vmax.f32 %v8098, 0.0
  %v8341 = vmax.f32 %v8099, 0.0
  %v8342 = vmax.f32 %v8100, 0.0
  %v8343 = vmax.f32 %v8101, 0.0
  %v8344 = vmax.f32 %v8102, 0.0
  %v8345 = vmax.f32 %v8103, 0.0
  %v8346 = vmax.f32 %v8104, 0.0
  %v8347 = vmax.f32 %v8105, 0.0
  %v8348 = vmax.f32 %v8106, 0.0
  %v8349 = vmax.f32 %v8107, 0.0
  %v8350 = vmax.f32 %v8108, 0.0
  %v8351 = vmax.f32 %v8109, 0.0
  %v8352 = vmax.f32 %v8110, 0.0
  %v8353 = vmax.f32 %v8111, 0.0
  %v8354 = vmax.f32 %v8112, 0.0
  %v8355 = vmax.f32 %v8113, 0.0
  %v8356 = vmax.f32 %v8114, 0.0
  %v8357 = vmax.f32 %v8115, 0.0
  %v8358 = vmax.f32 %v8116, 0.0
  %v8359 = vmax.f32 %v8117, 0.0
  %v8360 = vmax.f32 %v8118, 0.0
  %v8361 = vmax.f32 %v8119, 0.0
  %v8362 = vmax.f32 %v8120, 0.0
  %v8363 = vmax.f32 %v8121, 0.0
  %v8364 = vmax.f32 %v8122, 0.0
  %v8365 = vmax.f32 %v8123, 0.0
  %v8366 = vmax.f32 %v8124, 0.0
  %v8367 = vmax.f32 %v8125, 0.0
  %v8368 = vmax.f32 %v8126, 0.0
  %v8369 = vmax.f32 %v8127, 0.0
  %v8370 = vmax.f32 %v8128, 0.0
  %v8371 = vmax.f32 %v8129, 0.0
  %v8372 = vmax.f32 %v8130, 0.0
  %v8373 = vmax.f32 %v8131, 0.0
  %v8374 = vmax.f32 %v8132, 0.0
  %v8375 = vmax.f32 %v8133, 0.0
  %v8376 = vmax.f32 %v8134, 0.0
  %v8377 = vmax.f32 %v8135, 0.0
  %v8378 = vmax.f32 %v8136, 0.0
  %v8379 = vmax.f32 %v8137, 0.0
  %v8380 = vmax.f32 %v8138, 0.0
  %v8381 = vmax.f32 %v8139, 0.0
  %v8382 = vmax.f32 %v8140, 0.0
  %v8383 = vmax.f32 %v8141, 0.0
  %v8384 = vmax.f32 %v8142, 0.0
  %v8385 = vmax.f32 %v8143, 0.0
  %v8386 = vmax.f32 %v8144, 0.0
  %v8387 = vmax.f32 %v8145, 0.0
  %v8388 = vmax.f32 %v8146, 0.0
  %v8389 = vmax.f32 %v8147, 0.0
  %v8390 = vmax.f32 %v8148, 0.0
  %v8391 = vmax.f32 %v8149, 0.0
  %v8392 = vmax.f32 %v8150, 0.0
  %v8393 = vmax.f32 %v8151, 0.0
  %v8394 = vmax.f32 %v8152, 0.0
  %v8395 = vmax.f32 %v8153, 0.0
  %v8396 = vmax.f32 %v8154, 0.0
  %v8397 = vmax.f32 %v8155, 0.0
  %v8398 = vmax.f32 %v8156, 0.0
  %v8399 = vmax.f32 %v8157, 0.0
  %v8400 = vmax.f32 %v8158, 0.0
  %v8401 = vmax.f32 %v8159, 0.0
  %v8402 = vmax.f32 %v8160, 0.0
  %v8403 = vmax.f32 %v8161, 0.0
  %v8404 = vmax.f32 %v8162, 0.0
  %v8405 = vmax.f32 %v8163, 0.0
  %v8406 = vmax.f32 %v8164, 0.0
  %v8407 = vmax.f32 %v8165, 0.0
  %v8408 = vmax.f32 %v8166, 0.0
  %v8409 = vmax.f32 %v8167, 0.0
  %v8410 = vmax.f32 %v8168, 0.0
  %v8411 = vmax.f32 %v8169, 0.0
  %v8412 = vmax.f32 %v8170, 0.0
  %v8413 = vmax.f32 %v8171, 0.0
  %v8414 = vmax.f32 %v8172, 0.0
  %v8415 = vmax.f32 %v8173, 0.0
  %v8416 = vmax.f32 %v8174, 0.0
  %v8417 = vmax.f32 %v8175, 0.0
  %v8418 = vmax.f32 %v8176, 0.0
  %v8419 = vmax.f32 %v8177, 0.0
  %v8420 = vmax.f32 %v8178, 0.0
  %v8421 = vmax.f32 %v8179, 0.0
  %v8422 = vmax.f32 %v8180, 0.0
  %v8423 = vmax.f32 %v8181, 0.0
  %v8424 = vmax.f32 %v8182, 0.0
  %v8425 = vmax.f32 %v8183, 0.0
  %v8426 = vmax.f32 %v8184, 0.0
  %v8427 = vmax.f32 %v8185, 0.0
  %v8428 = vmax.f32 %v8186, 0.0
  %v8429 = vmax.f32 %v8187, 0.0
  %v8430 = vmax.f32 %v8188, 0.0
  %v8431 = vmax.f32 %v8189, 0.0
  %v8432 = vmax.f32 %v8190, 0.0
  %v8433 = vmax.f32 %v8191, 0.0
  %v8434 = vmax.f32 %v8192, 0.0
  %v8435 = vmax.f32 %v8193, 0.0
  %v8436 = vmax.f32 %v8194, 0.0
  %v8437 = vmax.f32 %v8195, 0.0
  %v8438 = vmax.f32 %v8196, 0.0
  %v8439 = vmax.f32 %v8197, 0.0
  %v8440 = vmax.f32 %v8198, 0.0
  %v8441 = vmax.f32 %v8199, 0.0
  %v8442 = vmax.f32 %v8200, 0.0
  %v8443 = vmax.f32 %v8201, 0.0
  %v8444 = vmax.f32 %v8202, 0.0
  %v8445 = vmax.f32 %v8203, 0.0
  %v8446 = vmax.f32 %v8204, 0.0
  %v8447 = vmax.f32 %v8205, 0.0
  %v8448 = vmax.f32 %v8206, 0.0
  %v8449 = vmax.f32 %v8207, 0.0
  %v8450 = vmax.f32 %v8208, 0.0
  %v8451 = vmax.f32 %v8209, 0.0
  %v8452 = vmax.f32 %v8210, 0.0
  %v8453 = vmax.f32 %v8211, 0.0
  %v8454 = vmax.f32 %v8212, 0.0
  %v8455 = vmax.f32 %v8213, 0.0
  %v8456 = vmax.f32 %v8214, 0.0
  %v8457 = vmax.f32 %v8215, 0.0
  %v8458 = vmax.f32 %v8216, 0.0
  %v8459 = vmax.f32 %v8217, 0.0
  %v8460 = vmax.f32 %v8218, 0.0
  %v8461 = vmax.f32 %v8219, 0.0
  %v8462 = vmax.f32 %v8220, 0.0
  %v8463 = vmax.f32 %v8221, 0.0
  %v8464 = vmax.f32 %v8222, 0.0
  %v8465 = vmax.f32 %v8223, 0.0
  %v8466 = vmax.f32 %v8224, 0.0
  %v8467 = vmax.f32 %v8225, 0.0
  %v8468 = vmax.f32 %v8226, 0.0
  %v8469 = vmax.f32 %v8227, 0.0
  %v8470 = vmax.f32 %v8228, 0.0
  %v8471 = vmax.f32 %v8229, 0.0
  %v8472 = vmax.f32 %v8230, 0.0
  %v8473 = vmax.f32 %v8231, 0.0
  %v8474 = vmax.f32 %v8232, 0.0
  %v8475 = vmax.f32 %v8233, 0.0
  %v8476 = vmax.f32 %v8234, 0.0
  %v8477 = vmax.f32 %v8235, 0.0
  %v8478 = vmax.f32 %v8236, 0.0
  %v8479 = vmax.f32 %v8237, 0.0
  %v8480 = vmax.f32 %v8238, 0.0
  %v8481 = vmax.f32 %v8239, 0.0
  %v8482 = vmax.f32 %v8240, 0.0
  %v8483 = vmax.f32 %v8241, 0.0
  %v8484 = vmax.f32 %v8242, 0.0
  %v8485 = vmax.f32 %v8243, 0.0
  %v8486 = vmax.f32 %v8244, 0.0
  %v8487 = vmax.f32 %v8245, 0.0
  %v8488 = vmax.f32 %v8246, 0.0
  %v8489 = vmax.f32 %v8247, 0.0
  %v8490 = vmax.f32 %v8248, 0.0
  %v8491 = vmax.f32 %v8249, 0.0
  %v8492 = vmax.f32 %v8250, 0.0
  %v8493 = vmax.f32 %v8251, 0.0
  %v8494 = vmax.f32 %v8252, 0.0
  %v8495 = vmax.f32 %v8253, 0.0
  %v8496 = vmax.f32 %v8254, 0.0
  %v8497 = vmax.f32 %v8255, 0.0
  %v8498 = vmax.f32 %v8256, 0.0
  %v8499 = vmax.f32 %v8257, 0.0
  %v8500 = vmax.f32 %v8258, 0.0
  %v8501 = vmax.f32 %v8259, 0.0
  %v8502 = vmax.f32 %v8260, 0.0
  %v8503 = vmax.f32 %v8261, 0.0
  %v8504 = vmax.f32 %v8262, 0.0
  %v8505 = vmax.f32 %v8263, 0.0
  %v8506 = vmax.f32 %v8264, 0.0
  %v8507 = vmax.f32 %v8265, 0.0
  %v8508 = vmax.f32 %v8266, 0.0
  %v8509 = vmax.f32 %v8267, 0.0
  %v8510 = vmax.f32 %v8268, 0.0
  %v8511 = vmax.f32 %v8269, 0.0
  %v8512 = vmax.f32 %v8270, 0.0
  %v8513 = vpack.c.bf16 %v8271, %v8271
  %v8514 = vpack.c.bf16 %v8272, %v8272
  %v8515 = vpack.c.bf16 %v8273, %v8273
  %v8516 = vpack.c.bf16 %v8274, %v8274
  %v8517 = vpack.c.bf16 %v8275, %v8275
  %v8518 = vpack.c.bf16 %v8276, %v8276
  %v8519 = vpack.c.bf16 %v8277, %v8277
  %v8520 = vpack.c.bf16 %v8278, %v8278
  %v8521 = vpack.c.bf16 %v8279, %v8279
  %v8522 = vpack.c.bf16 %v8280, %v8280
  %v8523 = vpack.c.bf16 %v8281, %v8281
  %v8524 = vpack.c.bf16 %v8282, %v8282
  %v8525 = vpack.c.bf16 %v8283, %v8283
  %v8526 = vpack.c.bf16 %v8284, %v8284
  %v8527 = vpack.c.bf16 %v8285, %v8285
  %v8528 = vpack.c.bf16 %v8286, %v8286
  %v8529 = vpack.c.bf16 %v8287, %v8287
  %v8530 = vpack.c.bf16 %v8288, %v8288
  %v8531 = vpack.c.bf16 %v8289, %v8289
  %v8532 = vpack.c.bf16 %v8290, %v8290
  %v8533 = vpack.c.bf16 %v8291, %v8291
  %v8534 = vpack.c.bf16 %v8292, %v8292
  %v8535 = vpack.c.bf16 %v8293, %v8293
  %v8536 = vpack.c.bf16 %v8294, %v8294
  %v8537 = vpack.c.bf16 %v8295, %v8295
  %v8538 = vpack.c.bf16 %v8296, %v8296
  %v8539 = vpack.c.bf16 %v8297, %v8297
  %v8540 = vpack.c.bf16 %v8298, %v8298
  %v8541 = vpack.c.bf16 %v8299, %v8299
  %v8542 = vpack.c.bf16 %v8300, %v8300
  %v8543 = vpack.c.bf16 %v8301, %v8301
  %v8544 = vpack.c.bf16 %v8302, %v8302
  %v8545 = vpack.c.bf16 %v8303, %v8303
  %v8546 = vpack.c.bf16 %v8304, %v8304
  %v8547 = vpack.c.bf16 %v8305, %v8305
  %v8548 = vpack.c.bf16 %v8306, %v8306
  %v8549 = vpack.c.bf16 %v8307, %v8307
  %v8550 = vpack.c.bf16 %v8308, %v8308
  %v8551 = vpack.c.bf16 %v8309, %v8309
  %v8552 = vpack.c.bf16 %v8310, %v8310
  %v8553 = vpack.c.bf16 %v8311, %v8311
  %v8554 = vpack.c.bf16 %v8312, %v8312
  %v8555 = vpack.c.bf16 %v8313, %v8313
  %v8556 = vpack.c.bf16 %v8314, %v8314
  %v8557 = vpack.c.bf16 %v8315, %v8315
  %v8558 = vpack.c.bf16 %v8316, %v8316
  %v8559 = vpack.c.bf16 %v8317, %v8317
  %v8560 = vpack.c.bf16 %v8318, %v8318
  %v8561 = vpack.c.bf16 %v8319, %v8319
  %v8562 = vpack.c.bf16 %v8320, %v8320
  %v8563 = vpack.c.bf16 %v8321, %v8321
  %v8564 = vpack.c.bf16 %v8322, %v8322
  %v8565 = vpack.c.bf16 %v8323, %v8323
  %v8566 = vpack.c.bf16 %v8324, %v8324
  %v8567 = vpack.c.bf16 %v8325, %v8325
  %v8568 = vpack.c.bf16 %v8326, %v8326
  %v8569 = vpack.c.bf16 %v8327, %v8327
  %v8570 = vpack.c.bf16 %v8328, %v8328
  %v8571 = vpack.c.bf16 %v8329, %v8329
  %v8572 = vpack.c.bf16 %v8330, %v8330
  %v8573 = vpack.c.bf16 %v8331, %v8331
  %v8574 = vpack.c.bf16 %v8332, %v8332
  %v8575 = vpack.c.bf16 %v8333, %v8333
  %v8576 = vpack.c.bf16 %v8334, %v8334
  %v8577 = vpack.c.bf16 %v8335, %v8335
  %v8578 = vpack.c.bf16 %v8336, %v8336
  %v8579 = vpack.c.bf16 %v8337, %v8337
  %v8580 = vpack.c.bf16 %v8338, %v8338
  %v8581 = vpack.c.bf16 %v8339, %v8339
  %v8582 = vpack.c.bf16 %v8340, %v8340
  %v8583 = vpack.c.bf16 %v8341, %v8341
  %v8584 = vpack.c.bf16 %v8342, %v8342
  %v8585 = vpack.c.bf16 %v8343, %v8343
  %v8586 = vpack.c.bf16 %v8344, %v8344
  %v8587 = vpack.c.bf16 %v8345, %v8345
  %v8588 = vpack.c.bf16 %v8346, %v8346
  %v8589 = vpack.c.bf16 %v8347, %v8347
  %v8590 = vpack.c.bf16 %v8348, %v8348
  %v8591 = vpack.c.bf16 %v8349, %v8349
  %v8592 = vpack.c.bf16 %v8350, %v8350
  %v8593 = vpack.c.bf16 %v8351, %v8351
  %v8594 = vpack.c.bf16 %v8352, %v8352
  %v8595 = vpack.c.bf16 %v8353, %v8353
  %v8596 = vpack.c.bf16 %v8354, %v8354
  %v8597 = vpack.c.bf16 %v8355, %v8355
  %v8598 = vpack.c.bf16 %v8356, %v8356
  %v8599 = vpack.c.bf16 %v8357, %v8357
  %v8600 = vpack.c.bf16 %v8358, %v8358
  %v8601 = vpack.c.bf16 %v8359, %v8359
  %v8602 = vpack.c.bf16 %v8360, %v8360
  %v8603 = vpack.c.bf16 %v8361, %v8361
  %v8604 = vpack.c.bf16 %v8362, %v8362
  %v8605 = vpack.c.bf16 %v8363, %v8363
  %v8606 = vpack.c.bf16 %v8364, %v8364
  %v8607 = vpack.c.bf16 %v8365, %v8365
  %v8608 = vpack.c.bf16 %v8366, %v8366
  %v8609 = vpack.c.bf16 %v8367, %v8367
  %v8610 = vpack.c.bf16 %v8368, %v8368
  %v8611 = vpack.c.bf16 %v8369, %v8369
  %v8612 = vpack.c.bf16 %v8370, %v8370
  %v8613 = vpack.c.bf16 %v8371, %v8371
  %v8614 = vpack.c.bf16 %v8372, %v8372
  %v8615 = vpack.c.bf16 %v8373, %v8373
  %v8616 = vpack.c.bf16 %v8374, %v8374
  %v8617 = vpack.c.bf16 %v8375, %v8375
  %v8618 = vpack.c.bf16 %v8376, %v8376
  %v8619 = vpack.c.bf16 %v8377, %v8377
  %v8620 = vpack.c.bf16 %v8378, %v8378
  %v8621 = vpack.c.bf16 %v8379, %v8379
  %v8622 = vpack.c.bf16 %v8380, %v8380
  %v8623 = vpack.c.bf16 %v8381, %v8381
  %v8624 = vpack.c.bf16 %v8382, %v8382
  %v8625 = vpack.c.bf16 %v8383, %v8383
  %v8626 = vpack.c.bf16 %v8384, %v8384
  %v8627 = vpack.c.bf16 %v8385, %v8385
  %v8628 = vpack.c.bf16 %v8386, %v8386
  %v8629 = vpack.c.bf16 %v8387, %v8387
  %v8630 = vpack.c.bf16 %v8388, %v8388
  %v8631 = vpack.c.bf16 %v8389, %v8389
  %v8632 = vpack.c.bf16 %v8390, %v8390
  %v8633 = vpack.c.bf16 %v8391, %v8391
  %v8634 = vpack.c.bf16 %v8392, %v8392
  %v8635 = vpack.c.bf16 %v8393, %v8393
  %v8636 = vpack.c.bf16 %v8394, %v8394
  %v8637 = vpack.c.bf16 %v8395, %v8395
  %v8638 = vpack.c.bf16 %v8396, %v8396
  %v8639 = vpack.c.bf16 %v8397, %v8397
  %v8640 = vpack.c.bf16 %v8398, %v8398
  %v8641 = vpack.c.bf16 %v8399, %v8399
  %v8642 = vpack.c.bf16 %v8400, %v8400
  %v8643 = vpack.c.bf16 %v8401, %v8401
  %v8644 = vpack.c.bf16 %v8402, %v8402
  %v8645 = vpack.c.bf16 %v8403, %v8403
  %v8646 = vpack.c.bf16 %v8404, %v8404
  %v8647 = vpack.c.bf16 %v8405, %v8405
  %v8648 = vpack.c.bf16 %v8406, %v8406
  %v8649 = vpack.c.bf16 %v8407, %v8407
  %v8650 = vpack.c.bf16 %v8408, %v8408
  %v8651 = vpack.c.bf16 %v8409, %v8409
  %v8652 = vpack.c.bf16 %v8410, %v8410
  %v8653 = vpack.c.bf16 %v8411, %v8411
  %v8654 = vpack.c.bf16 %v8412, %v8412
  %v8655 = vpack.c.bf16 %v8413, %v8413
  %v8656 = vpack.c.bf16 %v8414, %v8414
  %v8657 = vpack.c.bf16 %v8415, %v8415
  %v8658 = vpack.c.bf16 %v8416, %v8416
  %v8659 = vpack.c.bf16 %v8417, %v8417
  %v8660 = vpack.c.bf16 %v8418, %v8418
  %v8661 = vpack.c.bf16 %v8419, %v8419
  %v8662 = vpack.c.bf16 %v8420, %v8420
  %v8663 = vpack.c.bf16 %v8421, %v8421
  %v8664 = vpack.c.bf16 %v8422, %v8422
  %v8665 = vpack.c.bf16 %v8423, %v8423
  %v8666 = vpack.c.bf16 %v8424, %v8424
  %v8667 = vpack.c.bf16 %v8425, %v8425
  %v8668 = vpack.c.bf16 %v8426, %v8426
  %v8669 = vpack.c.bf16 %v8427, %v8427
  %v8670 = vpack.c.bf16 %v8428, %v8428
  %v8671 = vpack.c.bf16 %v8429, %v8429
  %v8672 = vpack.c.bf16 %v8430, %v8430
  %v8673 = vpack.c.bf16 %v8431, %v8431
  %v8674 = vpack.c.bf16 %v8432, %v8432
  %v8675 = vpack.c.bf16 %v8433, %v8433
  %v8676 = vpack.c.bf16 %v8434, %v8434
  %v8677 = vpack.c.bf16 %v8435, %v8435
  %v8678 = vpack.c.bf16 %v8436, %v8436
  %v8679 = vpack.c.bf16 %v8437, %v8437
  %v8680 = vpack.c.bf16 %v8438, %v8438
  %v8681 = vpack.c.bf16 %v8439, %v8439
  %v8682 = vpack.c.bf16 %v8440, %v8440
  %v8683 = vpack.c.bf16 %v8441, %v8441
  %v8684 = vpack.c.bf16 %v8442, %v8442
  %v8685 = vpack.c.bf16 %v8443, %v8443
  %v8686 = vpack.c.bf16 %v8444, %v8444
  %v8687 = vpack.c.bf16 %v8445, %v8445
  %v8688 = vpack.c.bf16 %v8446, %v8446
  %v8689 = vpack.c.bf16 %v8447, %v8447
  %v8690 = vpack.c.bf16 %v8448, %v8448
  %v8691 = vpack.c.bf16 %v8449, %v8449
  %v8692 = vpack.c.bf16 %v8450, %v8450
  %v8693 = vpack.c.bf16 %v8451, %v8451
  %v8694 = vpack.c.bf16 %v8452, %v8452
  %v8695 = vpack.c.bf16 %v8453, %v8453
  %v8696 = vpack.c.bf16 %v8454, %v8454
  %v8697 = vpack.c.bf16 %v8455, %v8455
  %v8698 = vpack.c.bf16 %v8456, %v8456
  %v8699 = vpack.c.bf16 %v8457, %v8457
  %v8700 = vpack.c.bf16 %v8458, %v8458
  %v8701 = vpack.c.bf16 %v8459, %v8459
  %v8702 = vpack.c.bf16 %v8460, %v8460
  %v8703 = vpack.c.bf16 %v8461, %v8461
  %v8704 = vpack.c.bf16 %v8462, %v8462
  %v8705 = vpack.c.bf16 %v8463, %v8463
  %v8706 = vpack.c.bf16 %v8464, %v8464
  %v8707 = vpack.c.bf16 %v8465, %v8465
  %v8708 = vpack.c.bf16 %v8466, %v8466
  %v8709 = vpack.c.bf16 %v8467, %v8467
  %v8710 = vpack.c.bf16 %v8468, %v8468
  %v8711 = vpack.c.bf16 %v8469, %v8469
  %v8712 = vpack.c.bf16 %v8470, %v8470
  %v8713 = vpack.c.bf16 %v8471, %v8471
  %v8714 = vpack.c.bf16 %v8472, %v8472
  %v8715 = vpack.c.bf16 %v8473, %v8473
  %v8716 = vpack.c.bf16 %v8474, %v8474
  %v8717 = vpack.c.bf16 %v8475, %v8475
  %v8718 = vpack.c.bf16 %v8476, %v8476
  %v8719 = vpack.c.bf16 %v8477, %v8477
  %v8720 = vpack.c.bf16 %v8478, %v8478
  %v8721 = vpack.c.bf16 %v8479, %v8479
  %v8722 = vpack.c.bf16 %v8480, %v8480
  %v8723 = vpack.c.bf16 %v8481, %v8481
  %v8724 = vpack.c.bf16 %v8482, %v8482
  %v8725 = vpack.c.bf16 %v8483, %v8483
  %v8726 = vpack.c.bf16 %v8484, %v8484
  %v8727 = vpack.c.bf16 %v8485, %v8485
  %v8728 = vpack.c.bf16 %v8486, %v8486
  %v8729 = vpack.c.bf16 %v8487, %v8487
  %v8730 = vpack.c.bf16 %v8488, %v8488
  %v8731 = vpack.c.bf16 %v8489, %v8489
  %v8732 = vpack.c.bf16 %v8490, %v8490
  %v8733 = vpack.c.bf16 %v8491, %v8491
  %v8734 = vpack.c.bf16 %v8492, %v8492
  %v8735 = vpack.c.bf16 %v8493, %v8493
  %v8736 = vpack.c.bf16 %v8494, %v8494
  %v8737 = vpack.c.bf16 %v8495, %v8495
  %v8738 = vpack.c.bf16 %v8496, %v8496
  %v8739 = vpack.c.bf16 %v8497, %v8497
  %v8740 = vpack.c.bf16 %v8498, %v8498
  %v8741 = vpack.c.bf16 %v8499, %v8499
  %v8742 = vpack.c.bf16 %v8500, %v8500
  %v8743 = vpack.c.bf16 %v8501, %v8501
  %v8744 = vpack.c.bf16 %v8502, %v8502
  %v8745 = vpack.c.bf16 %v8503, %v8503
  %v8746 = vpack.c.bf16 %v8504, %v8504
  %v8747 = vpack.c.bf16 %v8505, %v8505
  %v8748 = vpack.c.bf16 %v8506, %v8506
  %v8749 = vpack.c.bf16 %v8507, %v8507
  %v8750 = vpack.c.bf16 %v8508, %v8508
  %v8751 = vpack.c.bf16 %v8509, %v8509
  %v8752 = vpack.c.bf16 %v8510, %v8510
  %v8753 = vpack.c.bf16 %v8511, %v8511
  %v8754 = vpack.c.bf16 %v8512, %v8512
  %vm8755 = vcmask 257024
  %8756 = vst.msk [vmem:[%s3] sm:$0xf] %vm8755, %v8513
  %8757 = vst.msk [vmem:[%s3 + $0x4] sm:$0xf] %vm8755, %v8514
  %8758 = vst.msk [vmem:[%s3 + $0x8] sm:$0xf] %vm8755, %v8515
  %8759 = vst.msk [vmem:[%s3 + $0xc] sm:$0xf] %vm8755, %v8516
  %8760 = vst.msk [vmem:[%s3 + $0x10] sm:$0xf] %vm8755, %v8517
  %8761 = vst.msk [vmem:[%s3 + $0x14] sm:$0xf] %vm8755, %v8518
  %8762 = vst.msk [vmem:[%s3 + $0x18] sm:$0xf] %vm8755, %v8519
  %8763 = vst.msk [vmem:[%s3 + $0x1c] sm:$0xf] %vm8755, %v8520
  %8764 = vst.msk [vmem:[%s3 + $0x20] sm:$0xf] %vm8755, %v8521
  %8765 = vst.msk [vmem:[%s3 + $0x24] sm:$0xf] %vm8755, %v8522
  %8766 = vst.msk [vmem:[%s3 + $0x28] sm:$0xf] %vm8755, %v8523
  %8767 = vst.msk [vmem:[%s3 + $0x2c] sm:$0xf] %vm8755, %v8524
  %8768 = vst.msk [vmem:[%s3 + $0x30] sm:$0xf] %vm8755, %v8525
  %8769 = vst.msk [vmem:[%s3 + $0x34] sm:$0xf] %vm8755, %v8526
  %8770 = vst.msk [vmem:[%s3 + $0x38] sm:$0xf] %vm8755, %v8527
  %8771 = vst.msk [vmem:[%s3 + $0x3c] sm:$0xf] %vm8755, %v8528
  %8772 = vst.msk [vmem:[%s3 + $0x40] sm:$0xf] %vm8755, %v8529
  %8773 = vst.msk [vmem:[%s3 + $0x44] sm:$0xf] %vm8755, %v8530
  %8774 = vst.msk [vmem:[%s3 + $0x48] sm:$0xf] %vm8755, %v8531
  %8775 = vst.msk [vmem:[%s3 + $0x4c] sm:$0xf] %vm8755, %v8532
  %8776 = vst.msk [vmem:[%s3 + $0x50] sm:$0xf] %vm8755, %v8533
  %8777 = vst.msk [vmem:[%s3 + $0x54] sm:$0xf] %vm8755, %v8534
  %8778 = vst.msk [vmem:[%s3 + $0x58] sm:$0xf] %vm8755, %v8535
  %8779 = vst.msk [vmem:[%s3 + $0x5c] sm:$0xf] %vm8755, %v8536
  %8780 = vst.msk [vmem:[%s3 + $0x60] sm:$0xf] %vm8755, %v8537
  %8781 = vst.msk [vmem:[%s3 + $0x64] sm:$0xf] %vm8755, %v8538
  %8782 = vst.msk [vmem:[%s3 + $0x68] sm:$0xf] %vm8755, %v8539
  %8783 = vst.msk [vmem:[%s3 + $0x6c] sm:$0xf] %vm8755, %v8540
  %8784 = vst.msk [vmem:[%s3 + $0x70] sm:$0xf] %vm8755, %v8541
  %8785 = vst.msk [vmem:[%s3 + $0x74] sm:$0xf] %vm8755, %v8542
  %8786 = vst.msk [vmem:[%s3 + $0x78] sm:$0xf] %vm8755, %v8543
  %8787 = vst.msk [vmem:[%s3 + $0x7c] sm:$0xf] %vm8755, %v8544
  %8788 = vst.msk [vmem:[%s3 + $0x80] sm:$0xf] %vm8755, %v8545
  %8789 = vst.msk [vmem:[%s3 + $0x84] sm:$0xf] %vm8755, %v8546
  %8790 = vst.msk [vmem:[%s3 + $0x88] sm:$0xf] %vm8755, %v8547
  %8791 = vst.msk [vmem:[%s3 + $0x8c] sm:$0xf] %vm8755, %v8548
  %8792 = vst.msk [vmem:[%s3 + $0x90] sm:$0xf] %vm8755, %v8549
  %8793 = vst.msk [vmem:[%s3 + $0x94] sm:$0xf] %vm8755, %v8550
  %8794 = vst.msk [vmem:[%s3 + $0x98] sm:$0xf] %vm8755, %v8551
  %8795 = vst.msk [vmem:[%s3 + $0x9c] sm:$0xf] %vm8755, %v8552
  %8796 = vst.msk [vmem:[%s3 + $0xa0] sm:$0xf] %vm8755, %v8553
  %8797 = vst.msk [vmem:[%s3 + $0xa4] sm:$0xf] %vm8755, %v8554
  %8798 = vst.msk [vmem:[%s3 + $0xa8] sm:$0xf] %vm8755, %v8555
  %8799 = vst.msk [vmem:[%s3 + $0xac] sm:$0xf] %vm8755, %v8556
  %8800 = vst.msk [vmem:[%s3 + $0xb0] sm:$0xf] %vm8755, %v8557
  %8801 = vst.msk [vmem:[%s3 + $0xb4] sm:$0xf] %vm8755, %v8558
  %8802 = vst.msk [vmem:[%s3 + $0xb8] sm:$0xf] %vm8755, %v8559
  %8803 = vst.msk [vmem:[%s3 + $0xbc] sm:$0xf] %vm8755, %v8560
  %8804 = vst.msk [vmem:[%s3 + $0xc0] sm:$0xf] %vm8755, %v8561
  %8805 = vst.msk [vmem:[%s3 + $0xc4] sm:$0xf] %vm8755, %v8562
  %8806 = vst.msk [vmem:[%s3 + $0xc8] sm:$0xf] %vm8755, %v8563
  %8807 = vst.msk [vmem:[%s3 + $0xcc] sm:$0xf] %vm8755, %v8564
  %8808 = vst.msk [vmem:[%s3 + $0xd0] sm:$0xf] %vm8755, %v8565
  %8809 = vst.msk [vmem:[%s3 + $0xd4] sm:$0xf] %vm8755, %v8566
  %8810 = vst.msk [vmem:[%s3 + $0xd8] sm:$0xf] %vm8755, %v8567
  %8811 = vst.msk [vmem:[%s3 + $0xdc] sm:$0xf] %vm8755, %v8568
  %8812 = vst.msk [vmem:[%s3 + $0xe0] sm:$0xf] %vm8755, %v8569
  %8813 = vst.msk [vmem:[%s3 + $0xe4] sm:$0xf] %vm8755, %v8570
  %8814 = vst.msk [vmem:[%s3 + $0xe8] sm:$0xf] %vm8755, %v8571
  %8815 = vst.msk [vmem:[%s3 + $0xec] sm:$0xf] %vm8755, %v8572
  %8816 = vst.msk [vmem:[%s3 + $0xf0] sm:$0xf] %vm8755, %v8573
  %8817 = vst.msk [vmem:[%s3 + $0xf4] sm:$0xf] %vm8755, %v8574
  %8818 = vst.msk [vmem:[%s3 + $0xf8] sm:$0xf] %vm8755, %v8575
  %8819 = vst.msk [vmem:[%s3 + $0xfc] sm:$0xf] %vm8755, %v8576
  %8820 = vst.msk [vmem:[%s3 + $0x100] sm:$0xf] %vm8755, %v8577
  %8821 = vst.msk [vmem:[%s3 + $0x104] sm:$0xf] %vm8755, %v8578
  %8822 = vst.msk [vmem:[%s3 + $0x108] sm:$0xf] %vm8755, %v8579
  %8823 = vst.msk [vmem:[%s3 + $0x10c] sm:$0xf] %vm8755, %v8580
  %8824 = vst.msk [vmem:[%s3 + $0x110] sm:$0xf] %vm8755, %v8581
  %8825 = vst.msk [vmem:[%s3 + $0x114] sm:$0xf] %vm8755, %v8582
  %8826 = vst.msk [vmem:[%s3 + $0x118] sm:$0xf] %vm8755, %v8583
  %8827 = vst.msk [vmem:[%s3 + $0x11c] sm:$0xf] %vm8755, %v8584
  %8828 = vst.msk [vmem:[%s3 + $0x120] sm:$0xf] %vm8755, %v8585
  %8829 = vst.msk [vmem:[%s3 + $0x124] sm:$0xf] %vm8755, %v8586
  %8830 = vst.msk [vmem:[%s3 + $0x128] sm:$0xf] %vm8755, %v8587
  %8831 = vst.msk [vmem:[%s3 + $0x12c] sm:$0xf] %vm8755, %v8588
  %8832 = vst.msk [vmem:[%s3 + $0x130] sm:$0xf] %vm8755, %v8589
  %8833 = vst.msk [vmem:[%s3 + $0x134] sm:$0xf] %vm8755, %v8590
  %8834 = vst.msk [vmem:[%s3 + $0x138] sm:$0xf] %vm8755, %v8591
  %8835 = vst.msk [vmem:[%s3 + $0x13c] sm:$0xf] %vm8755, %v8592
  %8836 = vst.msk [vmem:[%s3 + $0x140] sm:$0xf] %vm8755, %v8593
  %8837 = vst.msk [vmem:[%s3 + $0x144] sm:$0xf] %vm8755, %v8594
  %8838 = vst.msk [vmem:[%s3 + $0x148] sm:$0xf] %vm8755, %v8595
  %8839 = vst.msk [vmem:[%s3 + $0x14c] sm:$0xf] %vm8755, %v8596
  %8840 = vst.msk [vmem:[%s3 + $0x150] sm:$0xf] %vm8755, %v8597
  %8841 = vst.msk [vmem:[%s3 + $0x154] sm:$0xf] %vm8755, %v8598
  %8842 = vst.msk [vmem:[%s3 + $0x158] sm:$0xf] %vm8755, %v8599
  %8843 = vst.msk [vmem:[%s3 + $0x15c] sm:$0xf] %vm8755, %v8600
  %8844 = vst.msk [vmem:[%s3 + $0x160] sm:$0xf] %vm8755, %v8601
  %8845 = vst.msk [vmem:[%s3 + $0x164] sm:$0xf] %vm8755, %v8602
  %8846 = vst.msk [vmem:[%s3 + $0x168] sm:$0xf] %vm8755, %v8603
  %8847 = vst.msk [vmem:[%s3 + $0x16c] sm:$0xf] %vm8755, %v8604
  %8848 = vst.msk [vmem:[%s3 + $0x170] sm:$0xf] %vm8755, %v8605
  %8849 = vst.msk [vmem:[%s3 + $0x174] sm:$0xf] %vm8755, %v8606
  %8850 = vst.msk [vmem:[%s3 + $0x178] sm:$0xf] %vm8755, %v8607
  %8851 = vst.msk [vmem:[%s3 + $0x17c] sm:$0xf] %vm8755, %v8608
  %8852 = vst.msk [vmem:[%s3 + $0x180] sm:$0xf] %vm8755, %v8609
  %8853 = vst.msk [vmem:[%s3 + $0x184] sm:$0xf] %vm8755, %v8610
  %8854 = vst.msk [vmem:[%s3 + $0x188] sm:$0xf] %vm8755, %v8611
  %8855 = vst.msk [vmem:[%s3 + $0x18c] sm:$0xf] %vm8755, %v8612
  %8856 = vst.msk [vmem:[%s3 + $0x190] sm:$0xf] %vm8755, %v8613
  %8857 = vst.msk [vmem:[%s3 + $0x194] sm:$0xf] %vm8755, %v8614
  %8858 = vst.msk [vmem:[%s3 + $0x198] sm:$0xf] %vm8755, %v8615
  %8859 = vst.msk [vmem:[%s3 + $0x19c] sm:$0xf] %vm8755, %v8616
  %8860 = vst.msk [vmem:[%s3 + $0x1a0] sm:$0xf] %vm8755, %v8617
  %8861 = vst.msk [vmem:[%s3 + $0x1a4] sm:$0xf] %vm8755, %v8618
  %8862 = vst.msk [vmem:[%s3 + $0x1a8] sm:$0xf] %vm8755, %v8619
  %8863 = vst.msk [vmem:[%s3 + $0x1ac] sm:$0xf] %vm8755, %v8620
  %8864 = vst.msk [vmem:[%s3 + $0x1b0] sm:$0xf] %vm8755, %v8621
  %8865 = vst.msk [vmem:[%s3 + $0x1b4] sm:$0xf] %vm8755, %v8622
  %8866 = vst.msk [vmem:[%s3 + $0x1b8] sm:$0xf] %vm8755, %v8623
  %8867 = vst.msk [vmem:[%s3 + $0x1bc] sm:$0xf] %vm8755, %v8624
  %8868 = vst.msk [vmem:[%s3 + $0x1c0] sm:$0xf] %vm8755, %v8625
  %8869 = vst.msk [vmem:[%s3 + $0x1c4] sm:$0xf] %vm8755, %v8626
  %8870 = vst.msk [vmem:[%s3 + $0x1c8] sm:$0xf] %vm8755, %v8627
  %8871 = vst.msk [vmem:[%s3 + $0x1cc] sm:$0xf] %vm8755, %v8628
  %8872 = vst.msk [vmem:[%s3 + $0x1d0] sm:$0xf] %vm8755, %v8629
  %8873 = vst.msk [vmem:[%s3 + $0x1d4] sm:$0xf] %vm8755, %v8630
  %8874 = vst.msk [vmem:[%s3 + $0x1d8] sm:$0xf] %vm8755, %v8631
  %8875 = vst.msk [vmem:[%s3 + $0x1dc] sm:$0xf] %vm8755, %v8632
  %8876 = vst.msk [vmem:[%s3 + $0x1e0] sm:$0xf] %vm8755, %v8633
  %8877 = vst.msk [vmem:[%s3 + $0x1e4] sm:$0xf] %vm8755, %v8634
  %8878 = vst.msk [vmem:[%s3 + $0x1e8] sm:$0xf] %vm8755, %v8635
  %8879 = vst.msk [vmem:[%s3 + $0x1ec] sm:$0xf] %vm8755, %v8636
  %8880 = vst.msk [vmem:[%s3 + $0x1f0] sm:$0xf] %vm8755, %v8637
  %8881 = vst.msk [vmem:[%s3 + $0x1f4] sm:$0xf] %vm8755, %v8638
  %8882 = vst.msk [vmem:[%s3 + $0x1f8] sm:$0xf] %vm8755, %v8639
  %8883 = vst.msk [vmem:[%s3 + $0x1fc] sm:$0xf] %vm8755, %v8640
  %8884 = vst.msk [vmem:[%s3 + $0x200] sm:$0xf] %vm8755, %v8641
  %8885 = vst.msk [vmem:[%s3 + $0x204] sm:$0xf] %vm8755, %v8642
  %8886 = vst.msk [vmem:[%s3 + $0x208] sm:$0xf] %vm8755, %v8643
  %8887 = vst.msk [vmem:[%s3 + $0x20c] sm:$0xf] %vm8755, %v8644
  %8888 = vst.msk [vmem:[%s3 + $0x210] sm:$0xf] %vm8755, %v8645
  %8889 = vst.msk [vmem:[%s3 + $0x214] sm:$0xf] %vm8755, %v8646
  %8890 = vst.msk [vmem:[%s3 + $0x218] sm:$0xf] %vm8755, %v8647
  %8891 = vst.msk [vmem:[%s3 + $0x21c] sm:$0xf] %vm8755, %v8648
  %8892 = vst.msk [vmem:[%s3 + $0x220] sm:$0xf] %vm8755, %v8649
  %8893 = vst.msk [vmem:[%s3 + $0x224] sm:$0xf] %vm8755, %v8650
  %8894 = vst.msk [vmem:[%s3 + $0x228] sm:$0xf] %vm8755, %v8651
  %8895 = vst.msk [vmem:[%s3 + $0x22c] sm:$0xf] %vm8755, %v8652
  %8896 = vst.msk [vmem:[%s3 + $0x230] sm:$0xf] %vm8755, %v8653
  %8897 = vst.msk [vmem:[%s3 + $0x234] sm:$0xf] %vm8755, %v8654
  %8898 = vst.msk [vmem:[%s3 + $0x238] sm:$0xf] %vm8755, %v8655
  %8899 = vst.msk [vmem:[%s3 + $0x23c] sm:$0xf] %vm8755, %v8656
  %8900 = vst.msk [vmem:[%s3 + $0x240] sm:$0xf] %vm8755, %v8657
  %8901 = vst.msk [vmem:[%s3 + $0x244] sm:$0xf] %vm8755, %v8658
  %8902 = vst.msk [vmem:[%s3 + $0x248] sm:$0xf] %vm8755, %v8659
  %8903 = vst.msk [vmem:[%s3 + $0x24c] sm:$0xf] %vm8755, %v8660
  %8904 = vst.msk [vmem:[%s3 + $0x250] sm:$0xf] %vm8755, %v8661
  %8905 = vst.msk [vmem:[%s3 + $0x254] sm:$0xf] %vm8755, %v8662
  %8906 = vst.msk [vmem:[%s3 + $0x258] sm:$0xf] %vm8755, %v8663
  %8907 = vst.msk [vmem:[%s3 + $0x25c] sm:$0xf] %vm8755, %v8664
  %8908 = vst.msk [vmem:[%s3 + $0x260] sm:$0xf] %vm8755, %v8665
  %8909 = vst.msk [vmem:[%s3 + $0x264] sm:$0xf] %vm8755, %v8666
  %8910 = vst.msk [vmem:[%s3 + $0x268] sm:$0xf] %vm8755, %v8667
  %8911 = vst.msk [vmem:[%s3 + $0x26c] sm:$0xf] %vm8755, %v8668
  %8912 = vst.msk [vmem:[%s3 + $0x270] sm:$0xf] %vm8755, %v8669
  %8913 = vst.msk [vmem:[%s3 + $0x274] sm:$0xf] %vm8755, %v8670
  %8914 = vst.msk [vmem:[%s3 + $0x278] sm:$0xf] %vm8755, %v8671
  %8915 = vst.msk [vmem:[%s3 + $0x27c] sm:$0xf] %vm8755, %v8672
  %8916 = vst.msk [vmem:[%s3 + $0x280] sm:$0xf] %vm8755, %v8673
  %8917 = vst.msk [vmem:[%s3 + $0x284] sm:$0xf] %vm8755, %v8674
  %8918 = vst.msk [vmem:[%s3 + $0x288] sm:$0xf] %vm8755, %v8675
  %8919 = vst.msk [vmem:[%s3 + $0x28c] sm:$0xf] %vm8755, %v8676
  %8920 = vst.msk [vmem:[%s3 + $0x290] sm:$0xf] %vm8755, %v8677
  %8921 = vst.msk [vmem:[%s3 + $0x294] sm:$0xf] %vm8755, %v8678
  %8922 = vst.msk [vmem:[%s3 + $0x298] sm:$0xf] %vm8755, %v8679
  %8923 = vst.msk [vmem:[%s3 + $0x29c] sm:$0xf] %vm8755, %v8680
  %8924 = vst.msk [vmem:[%s3 + $0x2a0] sm:$0xf] %vm8755, %v8681
  %8925 = vst.msk [vmem:[%s3 + $0x2a4] sm:$0xf] %vm8755, %v8682
  %8926 = vst.msk [vmem:[%s3 + $0x2a8] sm:$0xf] %vm8755, %v8683
  %8927 = vst.msk [vmem:[%s3 + $0x2ac] sm:$0xf] %vm8755, %v8684
  %8928 = vst.msk [vmem:[%s3 + $0x2b0] sm:$0xf] %vm8755, %v8685
  %8929 = vst.msk [vmem:[%s3 + $0x2b4] sm:$0xf] %vm8755, %v8686
  %8930 = vst.msk [vmem:[%s3 + $0x2b8] sm:$0xf] %vm8755, %v8687
  %8931 = vst.msk [vmem:[%s3 + $0x2bc] sm:$0xf] %vm8755, %v8688
  %8932 = vst.msk [vmem:[%s3 + $0x2c0] sm:$0xf] %vm8755, %v8689
  %8933 = vst.msk [vmem:[%s3 + $0x2c4] sm:$0xf] %vm8755, %v8690
  %8934 = vst.msk [vmem:[%s3 + $0x2c8] sm:$0xf] %vm8755, %v8691
  %8935 = vst.msk [vmem:[%s3 + $0x2cc] sm:$0xf] %vm8755, %v8692
  %8936 = vst.msk [vmem:[%s3 + $0x2d0] sm:$0xf] %vm8755, %v8693
  %8937 = vst.msk [vmem:[%s3 + $0x2d4] sm:$0xf] %vm8755, %v8694
  %8938 = vst.msk [vmem:[%s3 + $0x2d8] sm:$0xf] %vm8755, %v8695
  %8939 = vst.msk [vmem:[%s3 + $0x2dc] sm:$0xf] %vm8755, %v8696
  %8940 = vst.msk [vmem:[%s3 + $0x2e0] sm:$0xf] %vm8755, %v8697
  %8941 = vst.msk [vmem:[%s3 + $0x2e4] sm:$0xf] %vm8755, %v8698
  %8942 = vst.msk [vmem:[%s3 + $0x2e8] sm:$0xf] %vm8755, %v8699
  %8943 = vst.msk [vmem:[%s3 + $0x2ec] sm:$0xf] %vm8755, %v8700
  %8944 = vst.msk [vmem:[%s3 + $0x2f0] sm:$0xf] %vm8755, %v8701
  %8945 = vst.msk [vmem:[%s3 + $0x2f4] sm:$0xf] %vm8755, %v8702
  %8946 = vst.msk [vmem:[%s3 + $0x2f8] sm:$0xf] %vm8755, %v8703
  %8947 = vst.msk [vmem:[%s3 + $0x2fc] sm:$0xf] %vm8755, %v8704
  %8948 = vst.msk [vmem:[%s3 + $0x300] sm:$0xf] %vm8755, %v8705
  %8949 = vst.msk [vmem:[%s3 + $0x304] sm:$0xf] %vm8755, %v8706
  %8950 = vst.msk [vmem:[%s3 + $0x308] sm:$0xf] %vm8755, %v8707
  %8951 = vst.msk [vmem:[%s3 + $0x30c] sm:$0xf] %vm8755, %v8708
  %8952 = vst.msk [vmem:[%s3 + $0x310] sm:$0xf] %vm8755, %v8709
  %8953 = vst.msk [vmem:[%s3 + $0x314] sm:$0xf] %vm8755, %v8710
  %8954 = vst.msk [vmem:[%s3 + $0x318] sm:$0xf] %vm8755, %v8711
  %8955 = vst.msk [vmem:[%s3 + $0x31c] sm:$0xf] %vm8755, %v8712
  %8956 = vst.msk [vmem:[%s3 + $0x320] sm:$0xf] %vm8755, %v8713
  %8957 = vst.msk [vmem:[%s3 + $0x324] sm:$0xf] %vm8755, %v8714
  %8958 = vst.msk [vmem:[%s3 + $0x328] sm:$0xf] %vm8755, %v8715
  %8959 = vst.msk [vmem:[%s3 + $0x32c] sm:$0xf] %vm8755, %v8716
  %8960 = vst.msk [vmem:[%s3 + $0x330] sm:$0xf] %vm8755, %v8717
  %8961 = vst.msk [vmem:[%s3 + $0x334] sm:$0xf] %vm8755, %v8718
  %8962 = vst.msk [vmem:[%s3 + $0x338] sm:$0xf] %vm8755, %v8719
  %8963 = vst.msk [vmem:[%s3 + $0x33c] sm:$0xf] %vm8755, %v8720
  %8964 = vst.msk [vmem:[%s3 + $0x340] sm:$0xf] %vm8755, %v8721
  %8965 = vst.msk [vmem:[%s3 + $0x344] sm:$0xf] %vm8755, %v8722
  %8966 = vst.msk [vmem:[%s3 + $0x348] sm:$0xf] %vm8755, %v8723
  %8967 = vst.msk [vmem:[%s3 + $0x34c] sm:$0xf] %vm8755, %v8724
  %8968 = vst.msk [vmem:[%s3 + $0x350] sm:$0xf] %vm8755, %v8725
  %8969 = vst.msk [vmem:[%s3 + $0x354] sm:$0xf] %vm8755, %v8726
  %8970 = vst.msk [vmem:[%s3 + $0x358] sm:$0xf] %vm8755, %v8727
  %8971 = vst.msk [vmem:[%s3 + $0x35c] sm:$0xf] %vm8755, %v8728
  %8972 = vst.msk [vmem:[%s3 + $0x360] sm:$0xf] %vm8755, %v8729
  %8973 = vst.msk [vmem:[%s3 + $0x364] sm:$0xf] %vm8755, %v8730
  %8974 = vst.msk [vmem:[%s3 + $0x368] sm:$0xf] %vm8755, %v8731
  %8975 = vst.msk [vmem:[%s3 + $0x36c] sm:$0xf] %vm8755, %v8732
  %8976 = vst.msk [vmem:[%s3 + $0x370] sm:$0xf] %vm8755, %v8733
  %8977 = vst.msk [vmem:[%s3 + $0x374] sm:$0xf] %vm8755, %v8734
  %8978 = vst.msk [vmem:[%s3 + $0x378] sm:$0xf] %vm8755, %v8735
  %8979 = vst.msk [vmem:[%s3 + $0x37c] sm:$0xf] %vm8755, %v8736
  %8980 = vst.msk [vmem:[%s3 + $0x380] sm:$0xf] %vm8755, %v8737
  %8981 = vst.msk [vmem:[%s3 + $0x384] sm:$0xf] %vm8755, %v8738
  %8982 = vst.msk [vmem:[%s3 + $0x388] sm:$0xf] %vm8755, %v8739
  %8983 = vst.msk [vmem:[%s3 + $0x38c] sm:$0xf] %vm8755, %v8740
  %8984 = vst.msk [vmem:[%s3 + $0x390] sm:$0xf] %vm8755, %v8741
  %8985 = vst.msk [vmem:[%s3 + $0x394] sm:$0xf] %vm8755, %v8742
  %8986 = vst.msk [vmem:[%s3 + $0x398] sm:$0xf] %vm8755, %v8743
  %8987 = vst.msk [vmem:[%s3 + $0x39c] sm:$0xf] %vm8755, %v8744
  %8988 = vst.msk [vmem:[%s3 + $0x3a0] sm:$0xf] %vm8755, %v8745
  %8989 = vst.msk [vmem:[%s3 + $0x3a4] sm:$0xf] %vm8755, %v8746
  %8990 = vst.msk [vmem:[%s3 + $0x3a8] sm:$0xf] %vm8755, %v8747
  %8991 = vst.msk [vmem:[%s3 + $0x3ac] sm:$0xf] %vm8755, %v8748
  %8992 = vst.msk [vmem:[%s3 + $0x3b0] sm:$0xf] %vm8755, %v8749
  %8993 = vst.msk [vmem:[%s3 + $0x3b4] sm:$0xf] %vm8755, %v8750
  %8994 = vst.msk [vmem:[%s3 + $0x3b8] sm:$0xf] %vm8755, %v8751
  %8995 = vst.msk [vmem:[%s3 + $0x3bc] sm:$0xf] %vm8755, %v8752
  %8996 = vst.msk [vmem:[%s3 + $0x3c0] sm:$0xf] %vm8755, %v8753
  %8997 = vst.msk [vmem:[%s3 + $0x3c4] sm:$0xf] %vm8755, %v8754
  // Predicated region
  $region14: #{_lambda_.2} parent=0 // pred_check
    _
  $region15: #{_lambda_.2} parent=0 // pred_check_branch
    %8999 = sbr.rel (0) target = $region17
  $region16: #{_lambda_.2} parent=0 // pred_region
    _
  $region17: #{_lambda_.2} parent=0 // pred_fallthru
    _
  // Predicated region
  $region18: #{_lambda_.2} parent=0 // pred_check
    _
  $region19: #{_lambda_.2} parent=0 // pred_check_branch
    %9001 = sbr.rel (0) target = $region21
  $region20: #{_lambda_.2} parent=0 // pred_region
    _
  $region21: #{_lambda_.2} parent=0 // pred_fallthru
    _

// kernel: _lambda_.3
$region0: #{_lambda_.3}
  #allocation0 [shape = 'u32[]', space=smem, size = 0x4, offset = 0x4, fixed_abs, tag = 'smem constant byte address 0x4 - core index']
  #allocation1 [shape = 'u32[72,128]{1,0:T(1,128)}', space=vmem, size = 0x9000, scoped, tag = 'internal scratch']
  %s0 = inlined_call_operand.vmem [shape: bf16[4,256,288], index: 0, kind: input, shape index: {}]
  %s1 = inlined_call_operand.vmem [shape: bf16[288,64], index: 1, kind: input, shape index: {}]
  %s2 = inlined_call_operand.vmem [shape: f32[1,64], index: 2, kind: input, shape index: {}]
  %s3 = inlined_call_operand.vmem [shape: f32[16,64], index: 3, kind: input, shape index: {}]
  %s4 = inlined_call_operand.vmem [shape: f32[16,64], index: 4, kind: input, shape index: {}]
  %s5 = inlined_call_operand.vmem [shape: bf16[16,64,128], index: 5, kind: input, shape index: {}]
  %s6 = inlined_call_operand.vmem [shape: f32[1,128], index: 6, kind: input, shape index: {}]
  %s7 = inlined_call_operand.vmem [shape: f32[16,128], index: 7, kind: output, shape index: {}]
  %s8 = sld [smem:[#allocation0]]
  $region38: #{_lambda_.3} parent=0
    _
  %s10 = ssub.s32 1, %s8
  %s11 = scalar_select 0, %s10, %s8
  // Predicated region
  $region2: #{_lambda_.3} parent=0 // pred_check
    _
  $region3: #{_lambda_.3} parent=0 // pred_check_branch
    %13 = sbr.rel (0) target = $region5
  $region4: #{_lambda_.3} parent=0 // pred_region
    _
  $region5: #{_lambda_.3} parent=0 // pred_fallthru
    _
  // Predicated region
  $region6: #{_lambda_.3} parent=0 // pred_check
    _
  $region7: #{_lambda_.3} parent=0 // pred_check_branch
    %15 = sbr.rel (0) target = $region9
  $region8: #{_lambda_.3} parent=0 // pred_region
    _
  $region9: #{_lambda_.3} parent=0 // pred_fallthru
    _
  // Predicated region
  $region10: #{_lambda_.3} parent=0 // pred_check
    _
  $region11: #{_lambda_.3} parent=0 // pred_check_branch
    %17 = sbr.rel (0) target = $region13
  $region12: #{_lambda_.3} parent=0 // pred_region
    _
  $region13: #{_lambda_.3} parent=0 // pred_fallthru
    _
  // Predicated region
  $region14: #{_lambda_.3} parent=0 // pred_check
    _
  $region15: #{_lambda_.3} parent=0 // pred_check_branch
    %19 = sbr.rel (0) target = $region17
  $region16: #{_lambda_.3} parent=0 // pred_region
    _
  $region17: #{_lambda_.3} parent=0 // pred_fallthru
    _
  // Predicated region
  $region18: #{_lambda_.3} parent=0 // pred_check
    _
  $region19: #{_lambda_.3} parent=0 // pred_check_branch
    %21 = sbr.rel (0) target = $region21
  $region20: #{_lambda_.3} parent=0 // pred_region
    _
  $region21: #{_lambda_.3} parent=0 // pred_fallthru
    _
  // Predicated region
  $region22: #{_lambda_.3} parent=0 // pred_check
    _
  $region23: #{_lambda_.3} parent=0 // pred_check_branch
    %23 = sbr.rel (0) target = $region25
  $region24: #{_lambda_.3} parent=0 // pred_region
    _
  $region25: #{_lambda_.3} parent=0 // pred_fallthru
    _
  // Predicated region
  $region26: #{_lambda_.3} parent=0 // pred_check
    _
  $region27: #{_lambda_.3} parent=0 // pred_check_branch
    %25 = sbr.rel (0) target = $region29
  $region28: #{_lambda_.3} parent=0 // pred_region
    _
  $region29: #{_lambda_.3} parent=0 // pred_fallthru
    _
  %v27 = vld [vmem:[%s0] sm:$0xff]
  %v28 = vld [vmem:[%s0 + $0x8] sm:$0xf]
  %v29 = vld [vmem:[%s0 + $0xc] sm:$0xff]
  %v30 = vld [vmem:[%s0 + $0x14] sm:$0xf]
  %v31 = vld [vmem:[%s0 + $0x18] sm:$0xff]
  %v32 = vld [vmem:[%s0 + $0x20] sm:$0xf]
  %v33 = vld [vmem:[%s0 + $0x24] sm:$0xff]
  %v34 = vld [vmem:[%s0 + $0x2c] sm:$0xf]
  %v35 = vld [vmem:[%s0 + $0x30] sm:$0xff]
  %v36 = vld [vmem:[%s0 + $0x38] sm:$0xf]
  %v37 = vld [vmem:[%s0 + $0x3c] sm:$0xff]
  %v38 = vld [vmem:[%s0 + $0x44] sm:$0xf]
  %v39 = vld [vmem:[%s0 + $0x48] sm:$0xff]
  %v40 = vld [vmem:[%s0 + $0x50] sm:$0xf]
  %v41 = vld [vmem:[%s0 + $0x54] sm:$0xff]
  %v42 = vld [vmem:[%s0 + $0x5c] sm:$0xf]
  %v43 = vld [vmem:[%s0 + $0x60] sm:$0xff]
  %v44 = vld [vmem:[%s0 + $0x68] sm:$0xf]
  %v45 = vld [vmem:[%s0 + $0x6c] sm:$0xff]
  %v46 = vld [vmem:[%s0 + $0x74] sm:$0xf]
  %v47 = vld [vmem:[%s0 + $0x78] sm:$0xff]
  %v48 = vld [vmem:[%s0 + $0x80] sm:$0xf]
  %v49 = vld [vmem:[%s0 + $0x84] sm:$0xff]
  %v50 = vld [vmem:[%s0 + $0x8c] sm:$0xf]
  %v51 = vld [vmem:[%s0 + $0x90] sm:$0xff]
  %v52 = vld [vmem:[%s0 + $0x98] sm:$0xf]
  %v53 = vld [vmem:[%s0 + $0x9c] sm:$0xff]
  %v54 = vld [vmem:[%s0 + $0xa4] sm:$0xf]
  %v55 = vld [vmem:[%s0 + $0xa8] sm:$0xff]
  %v56 = vld [vmem:[%s0 + $0xb0] sm:$0xf]
  %v57 = vld [vmem:[%s0 + $0xb4] sm:$0xff]
  %v58 = vld [vmem:[%s0 + $0xbc] sm:$0xf]
  %v59 = vld [vmem:[%s0 + $0xc0] sm:$0xff]
  %v60 = vld [vmem:[%s0 + $0xc8] sm:$0xf]
  %v61 = vld [vmem:[%s0 + $0xcc] sm:$0xff]
  %v62 = vld [vmem:[%s0 + $0xd4] sm:$0xf]
  %v63 = vld [vmem:[%s0 + $0xd8] sm:$0xff]
  %v64 = vld [vmem:[%s0 + $0xe0] sm:$0xf]
  %v65 = vld [vmem:[%s0 + $0xe4] sm:$0xff]
  %v66 = vld [vmem:[%s0 + $0xec] sm:$0xf]
  %v67 = vld [vmem:[%s0 + $0xf0] sm:$0xff]
  %v68 = vld [vmem:[%s0 + $0xf8] sm:$0xf]
  %v69 = vld [vmem:[%s0 + $0xfc] sm:$0xff]
  %v70 = vld [vmem:[%s0 + $0x104] sm:$0xf]
  %v71 = vld [vmem:[%s0 + $0x108] sm:$0xff]
  %v72 = vld [vmem:[%s0 + $0x110] sm:$0xf]
  %v73 = vld [vmem:[%s0 + $0x114] sm:$0xff]
  %v74 = vld [vmem:[%s0 + $0x11c] sm:$0xf]
  %v75 = vld [vmem:[%s0 + $0x120] sm:$0xff]
  %v76 = vld [vmem:[%s0 + $0x128] sm:$0xf]
  %v77 = vld [vmem:[%s0 + $0x12c] sm:$0xff]
  %v78 = vld [vmem:[%s0 + $0x134] sm:$0xf]
  %v79 = vld [vmem:[%s0 + $0x138] sm:$0xff]
  %v80 = vld [vmem:[%s0 + $0x140] sm:$0xf]
  %v81 = vld [vmem:[%s0 + $0x144] sm:$0xff]
  %v82 = vld [vmem:[%s0 + $0x14c] sm:$0xf]
  %v83 = vld [vmem:[%s0 + $0x150] sm:$0xff]
  %v84 = vld [vmem:[%s0 + $0x158] sm:$0xf]
  %v85 = vld [vmem:[%s0 + $0x15c] sm:$0xff]
  %v86 = vld [vmem:[%s0 + $0x164] sm:$0xf]
  %v87 = vld [vmem:[%s0 + $0x168] sm:$0xff]
  %v88 = vld [vmem:[%s0 + $0x170] sm:$0xf]
  %v89 = vld [vmem:[%s0 + $0x174] sm:$0xff]
  %v90 = vld [vmem:[%s0 + $0x17c] sm:$0xf]
  %v91 = vld [vmem:[%s0 + $0x180] sm:$0xff]
  %v92 = vld [vmem:[%s0 + $0x188] sm:$0xf]
  %v93 = vld [vmem:[%s0 + $0x18c] sm:$0xff]
  %v94 = vld [vmem:[%s0 + $0x194] sm:$0xf]
  %v95 = vld [vmem:[%s0 + $0x198] sm:$0xff]
  %v96 = vld [vmem:[%s0 + $0x1a0] sm:$0xf]
  %v97 = vld [vmem:[%s0 + $0x1a4] sm:$0xff]
  %v98 = vld [vmem:[%s0 + $0x1ac] sm:$0xf]
  %v99 = vld [vmem:[%s0 + $0x1b0] sm:$0xff]
  %v100 = vld [vmem:[%s0 + $0x1b8] sm:$0xf]
  %v101 = vld [vmem:[%s0 + $0x1bc] sm:$0xff]
  %v102 = vld [vmem:[%s0 + $0x1c4] sm:$0xf]
  %v103 = vld [vmem:[%s0 + $0x1c8] sm:$0xff]
  %v104 = vld [vmem:[%s0 + $0x1d0] sm:$0xf]
  %v105 = vld [vmem:[%s0 + $0x1d4] sm:$0xff]
  %v106 = vld [vmem:[%s0 + $0x1dc] sm:$0xf]
  %v107 = vld [vmem:[%s0 + $0x1e0] sm:$0xff]
  %v108 = vld [vmem:[%s0 + $0x1e8] sm:$0xf]
  %v109 = vld [vmem:[%s0 + $0x1ec] sm:$0xff]
  %v110 = vld [vmem:[%s0 + $0x1f4] sm:$0xf]
  %v111 = vld [vmem:[%s0 + $0x1f8] sm:$0xff]
  %v112 = vld [vmem:[%s0 + $0x200] sm:$0xf]
  %v113 = vld [vmem:[%s0 + $0x204] sm:$0xff]
  %v114 = vld [vmem:[%s0 + $0x20c] sm:$0xf]
  %v115 = vld [vmem:[%s0 + $0x210] sm:$0xff]
  %v116 = vld [vmem:[%s0 + $0x218] sm:$0xf]
  %v117 = vld [vmem:[%s0 + $0x21c] sm:$0xff]
  %v118 = vld [vmem:[%s0 + $0x224] sm:$0xf]
  %v119 = vld [vmem:[%s0 + $0x228] sm:$0xff]
  %v120 = vld [vmem:[%s0 + $0x230] sm:$0xf]
  %v121 = vld [vmem:[%s0 + $0x234] sm:$0xff]
  %v122 = vld [vmem:[%s0 + $0x23c] sm:$0xf]
  %v123 = vld [vmem:[%s0 + $0x240] sm:$0xff]
  %v124 = vld [vmem:[%s0 + $0x248] sm:$0xf]
  %v125 = vld [vmem:[%s0 + $0x24c] sm:$0xff]
  %v126 = vld [vmem:[%s0 + $0x254] sm:$0xf]
  %v127 = vld [vmem:[%s0 + $0x258] sm:$0xff]
  %v128 = vld [vmem:[%s0 + $0x260] sm:$0xf]
  %v129 = vld [vmem:[%s0 + $0x264] sm:$0xff]
  %v130 = vld [vmem:[%s0 + $0x26c] sm:$0xf]
  %v131 = vld [vmem:[%s0 + $0x270] sm:$0xff]
  %v132 = vld [vmem:[%s0 + $0x278] sm:$0xf]
  %v133 = vld [vmem:[%s0 + $0x27c] sm:$0xff]
  %v134 = vld [vmem:[%s0 + $0x284] sm:$0xf]
  %v135 = vld [vmem:[%s0 + $0x288] sm:$0xff]
  %v136 = vld [vmem:[%s0 + $0x290] sm:$0xf]
  %v137 = vld [vmem:[%s0 + $0x294] sm:$0xff]
  %v138 = vld [vmem:[%s0 + $0x29c] sm:$0xf]
  %v139 = vld [vmem:[%s0 + $0x2a0] sm:$0xff]
  %v140 = vld [vmem:[%s0 + $0x2a8] sm:$0xf]
  %v141 = vld [vmem:[%s0 + $0x2ac] sm:$0xff]
  %v142 = vld [vmem:[%s0 + $0x2b4] sm:$0xf]
  %v143 = vld [vmem:[%s0 + $0x2b8] sm:$0xff]
  %v144 = vld [vmem:[%s0 + $0x2c0] sm:$0xf]
  %v145 = vld [vmem:[%s0 + $0x2c4] sm:$0xff]
  %v146 = vld [vmem:[%s0 + $0x2cc] sm:$0xf]
  %v147 = vld [vmem:[%s0 + $0x2d0] sm:$0xff]
  %v148 = vld [vmem:[%s0 + $0x2d8] sm:$0xf]
  %v149 = vld [vmem:[%s0 + $0x2dc] sm:$0xff]
  %v150 = vld [vmem:[%s0 + $0x2e4] sm:$0xf]
  %v151 = vld [vmem:[%s0 + $0x2e8] sm:$0xff]
  %v152 = vld [vmem:[%s0 + $0x2f0] sm:$0xf]
  %v153 = vld [vmem:[%s0 + $0x2f4] sm:$0xff]
  %v154 = vld [vmem:[%s0 + $0x2fc] sm:$0xf]
  %v155 = vld [vmem:[%s0 + $0x300] sm:$0xff]
  %v156 = vld [vmem:[%s0 + $0x308] sm:$0xf]
  %v157 = vld [vmem:[%s0 + $0x30c] sm:$0xff]
  %v158 = vld [vmem:[%s0 + $0x314] sm:$0xf]
  %v159 = vld [vmem:[%s0 + $0x318] sm:$0xff]
  %v160 = vld [vmem:[%s0 + $0x320] sm:$0xf]
  %v161 = vld [vmem:[%s0 + $0x324] sm:$0xff]
  %v162 = vld [vmem:[%s0 + $0x32c] sm:$0xf]
  %v163 = vld [vmem:[%s0 + $0x330] sm:$0xff]
  %v164 = vld [vmem:[%s0 + $0x338] sm:$0xf]
  %v165 = vld [vmem:[%s0 + $0x33c] sm:$0xff]
  %v166 = vld [vmem:[%s0 + $0x344] sm:$0xf]
  %v167 = vld [vmem:[%s0 + $0x348] sm:$0xff]
  %v168 = vld [vmem:[%s0 + $0x350] sm:$0xf]
  %v169 = vld [vmem:[%s0 + $0x354] sm:$0xff]
  %v170 = vld [vmem:[%s0 + $0x35c] sm:$0xf]
  %v171 = vld [vmem:[%s0 + $0x360] sm:$0xff]
  %v172 = vld [vmem:[%s0 + $0x368] sm:$0xf]
  %v173 = vld [vmem:[%s0 + $0x36c] sm:$0xff]
  %v174 = vld [vmem:[%s0 + $0x374] sm:$0xf]
  %v175 = vld [vmem:[%s0 + $0x378] sm:$0xff]
  %v176 = vld [vmem:[%s0 + $0x380] sm:$0xf]
  %v177 = vld [vmem:[%s0 + $0x384] sm:$0xff]
  %v178 = vld [vmem:[%s0 + $0x38c] sm:$0xf]
  %v179 = vld [vmem:[%s0 + $0x390] sm:$0xff]
  %v180 = vld [vmem:[%s0 + $0x398] sm:$0xf]
  %v181 = vld [vmem:[%s0 + $0x39c] sm:$0xff]
  %v182 = vld [vmem:[%s0 + $0x3a4] sm:$0xf]
  %v183 = vld [vmem:[%s0 + $0x3a8] sm:$0xff]
  %v184 = vld [vmem:[%s0 + $0x3b0] sm:$0xf]
  %v185 = vld [vmem:[%s0 + $0x3b4] sm:$0xff]
  %v186 = vld [vmem:[%s0 + $0x3bc] sm:$0xf]
  %v187 = vld [vmem:[%s0 + $0x3c0] sm:$0xff]
  %v188 = vld [vmem:[%s0 + $0x3c8] sm:$0xf]
  %v189 = vld [vmem:[%s0 + $0x3cc] sm:$0xff]
  %v190 = vld [vmem:[%s0 + $0x3d4] sm:$0xf]
  %v191 = vld [vmem:[%s0 + $0x3d8] sm:$0xff]
  %v192 = vld [vmem:[%s0 + $0x3e0] sm:$0xf]
  %v193 = vld [vmem:[%s0 + $0x3e4] sm:$0xff]
  %v194 = vld [vmem:[%s0 + $0x3ec] sm:$0xf]
  %v195 = vld [vmem:[%s0 + $0x3f0] sm:$0xff]
  %v196 = vld [vmem:[%s0 + $0x3f8] sm:$0xf]
  %v197 = vld [vmem:[%s0 + $0x3fc] sm:$0xff]
  %v198 = vld [vmem:[%s0 + $0x404] sm:$0xf]
  %v199 = vld [vmem:[%s0 + $0x408] sm:$0xff]
  %v200 = vld [vmem:[%s0 + $0x410] sm:$0xf]
  %v201 = vld [vmem:[%s0 + $0x414] sm:$0xff]
  %v202 = vld [vmem:[%s0 + $0x41c] sm:$0xf]
  %v203 = vld [vmem:[%s0 + $0x420] sm:$0xff]
  %v204 = vld [vmem:[%s0 + $0x428] sm:$0xf]
  %v205 = vld [vmem:[%s0 + $0x42c] sm:$0xff]
  %v206 = vld [vmem:[%s0 + $0x434] sm:$0xf]
  %v207 = vld [vmem:[%s0 + $0x438] sm:$0xff]
  %v208 = vld [vmem:[%s0 + $0x440] sm:$0xf]
  %v209 = vld [vmem:[%s0 + $0x444] sm:$0xff]
  %v210 = vld [vmem:[%s0 + $0x44c] sm:$0xf]
  %v211 = vld [vmem:[%s0 + $0x450] sm:$0xff]
  %v212 = vld [vmem:[%s0 + $0x458] sm:$0xf]
  %v213 = vld [vmem:[%s0 + $0x45c] sm:$0xff]
  %v214 = vld [vmem:[%s0 + $0x464] sm:$0xf]
  %v215 = vld [vmem:[%s0 + $0x468] sm:$0xff]
  %v216 = vld [vmem:[%s0 + $0x470] sm:$0xf]
  %v217 = vld [vmem:[%s0 + $0x474] sm:$0xff]
  %v218 = vld [vmem:[%s0 + $0x47c] sm:$0xf]
  %v219 = vld [vmem:[%s0 + $0x480] sm:$0xff]
  %v220 = vld [vmem:[%s0 + $0x488] sm:$0xf]
  %v221 = vld [vmem:[%s0 + $0x48c] sm:$0xff]
  %v222 = vld [vmem:[%s0 + $0x494] sm:$0xf]
  %v223 = vld [vmem:[%s0 + $0x498] sm:$0xff]
  %v224 = vld [vmem:[%s0 + $0x4a0] sm:$0xf]
  %v225 = vld [vmem:[%s0 + $0x4a4] sm:$0xff]
  %v226 = vld [vmem:[%s0 + $0x4ac] sm:$0xf]
  %v227 = vld [vmem:[%s0 + $0x4b0] sm:$0xff]
  %v228 = vld [vmem:[%s0 + $0x4b8] sm:$0xf]
  %v229 = vld [vmem:[%s0 + $0x4bc] sm:$0xff]
  %v230 = vld [vmem:[%s0 + $0x4c4] sm:$0xf]
  %v231 = vld [vmem:[%s0 + $0x4c8] sm:$0xff]
  %v232 = vld [vmem:[%s0 + $0x4d0] sm:$0xf]
  %v233 = vld [vmem:[%s0 + $0x4d4] sm:$0xff]
  %v234 = vld [vmem:[%s0 + $0x4dc] sm:$0xf]
  %v235 = vld [vmem:[%s0 + $0x4e0] sm:$0xff]
  %v236 = vld [vmem:[%s0 + $0x4e8] sm:$0xf]
  %v237 = vld [vmem:[%s0 + $0x4ec] sm:$0xff]
  %v238 = vld [vmem:[%s0 + $0x4f4] sm:$0xf]
  %v239 = vld [vmem:[%s0 + $0x4f8] sm:$0xff]
  %v240 = vld [vmem:[%s0 + $0x500] sm:$0xf]
  %v241 = vld [vmem:[%s0 + $0x504] sm:$0xff]
  %v242 = vld [vmem:[%s0 + $0x50c] sm:$0xf]
  %v243 = vld [vmem:[%s0 + $0x510] sm:$0xff]
  %v244 = vld [vmem:[%s0 + $0x518] sm:$0xf]
  %v245 = vld [vmem:[%s0 + $0x51c] sm:$0xff]
  %v246 = vld [vmem:[%s0 + $0x524] sm:$0xf]
  %v247 = vld [vmem:[%s0 + $0x528] sm:$0xff]
  %v248 = vld [vmem:[%s0 + $0x530] sm:$0xf]
  %v249 = vld [vmem:[%s0 + $0x534] sm:$0xff]
  %v250 = vld [vmem:[%s0 + $0x53c] sm:$0xf]
  %v251 = vld [vmem:[%s0 + $0x540] sm:$0xff]
  %v252 = vld [vmem:[%s0 + $0x548] sm:$0xf]
  %v253 = vld [vmem:[%s0 + $0x54c] sm:$0xff]
  %v254 = vld [vmem:[%s0 + $0x554] sm:$0xf]
  %v255 = vld [vmem:[%s0 + $0x558] sm:$0xff]
  %v256 = vld [vmem:[%s0 + $0x560] sm:$0xf]
  %v257 = vld [vmem:[%s0 + $0x564] sm:$0xff]
  %v258 = vld [vmem:[%s0 + $0x56c] sm:$0xf]
  %v259 = vld [vmem:[%s0 + $0x570] sm:$0xff]
  %v260 = vld [vmem:[%s0 + $0x578] sm:$0xf]
  %v261 = vld [vmem:[%s0 + $0x57c] sm:$0xff]
  %v262 = vld [vmem:[%s0 + $0x584] sm:$0xf]
  %v263 = vld [vmem:[%s0 + $0x588] sm:$0xff]
  %v264 = vld [vmem:[%s0 + $0x590] sm:$0xf]
  %v265 = vld [vmem:[%s0 + $0x594] sm:$0xff]
  %v266 = vld [vmem:[%s0 + $0x59c] sm:$0xf]
  %v267 = vld [vmem:[%s0 + $0x5a0] sm:$0xff]
  %v268 = vld [vmem:[%s0 + $0x5a8] sm:$0xf]
  %v269 = vld [vmem:[%s0 + $0x5ac] sm:$0xff]
  %v270 = vld [vmem:[%s0 + $0x5b4] sm:$0xf]
  %v271 = vld [vmem:[%s0 + $0x5b8] sm:$0xff]
  %v272 = vld [vmem:[%s0 + $0x5c0] sm:$0xf]
  %v273 = vld [vmem:[%s0 + $0x5c4] sm:$0xff]
  %v274 = vld [vmem:[%s0 + $0x5cc] sm:$0xf]
  %v275 = vld [vmem:[%s0 + $0x5d0] sm:$0xff]
  %v276 = vld [vmem:[%s0 + $0x5d8] sm:$0xf]
  %v277 = vld [vmem:[%s0 + $0x5dc] sm:$0xff]
  %v278 = vld [vmem:[%s0 + $0x5e4] sm:$0xf]
  %v279 = vld [vmem:[%s0 + $0x5e8] sm:$0xff]
  %v280 = vld [vmem:[%s0 + $0x5f0] sm:$0xf]
  %v281 = vld [vmem:[%s0 + $0x5f4] sm:$0xff]
  %v282 = vld [vmem:[%s0 + $0x5fc] sm:$0xf]
  %v283 = vld [vmem:[%s1] sm:$0xf]
  %v284 = vld [vmem:[%s1 + $0x4] sm:$0xf]
  %v285 = vld [vmem:[%s1 + $0x8] sm:$0xf]
  %v286 = vld [vmem:[%s1 + $0xc] sm:$0xf]
  %v287 = vld [vmem:[%s1 + $0x10] sm:$0xf]
  %v288 = vld [vmem:[%s1 + $0x14] sm:$0xf]
  %v289 = vld [vmem:[%s1 + $0x18] sm:$0xf]
  %v290 = vld [vmem:[%s1 + $0x1c] sm:$0xf]
  %v291 = vld [vmem:[%s1 + $0x20] sm:$0xf]
  %v292 = vld [vmem:[%s1 + $0x24] sm:$0xf]
  %v293 = vld [vmem:[%s1 + $0x28] sm:$0xf]
  %v294 = vld [vmem:[%s1 + $0x2c] sm:$0xf]
  %v295 = vld [vmem:[%s1 + $0x30] sm:$0xf]
  %v296 = vld [vmem:[%s1 + $0x34] sm:$0xf]
  %v297 = vld [vmem:[%s1 + $0x38] sm:$0xf]
  %v298 = vld [vmem:[%s1 + $0x3c] sm:$0xf]
  %v299 = vld [vmem:[%s1 + $0x40] sm:$0xf]
  %v300 = vld [vmem:[%s1 + $0x44] sm:$0xf]
  %v301 = vld [vmem:[%s1 + $0x48] sm:$0xf]
  %v302 = vld [vmem:[%s1 + $0x4c] sm:$0xf]
  %v303 = vld [vmem:[%s1 + $0x50] sm:$0xf]
  %v304 = vld [vmem:[%s1 + $0x54] sm:$0xf]
  %v305 = vld [vmem:[%s1 + $0x58] sm:$0xf]
  %v306 = vld [vmem:[%s1 + $0x5c] sm:$0xf]
  %v307 = vld [vmem:[%s1 + $0x60] sm:$0xf]
  %v308 = vld [vmem:[%s1 + $0x64] sm:$0xf]
  %v309 = vld [vmem:[%s1 + $0x68] sm:$0xf]
  %v310 = vld [vmem:[%s1 + $0x6c] sm:$0xf]
  %v311 = vld [vmem:[%s1 + $0x70] sm:$0xf]
  %v312 = vld [vmem:[%s1 + $0x74] sm:$0xf]
  %v313 = vld [vmem:[%s1 + $0x78] sm:$0xf]
  %v314 = vld [vmem:[%s1 + $0x7c] sm:$0xf]
  %v315 = vld [vmem:[%s1 + $0x80] sm:$0xf]
  %v316 = vld [vmem:[%s1 + $0x84] sm:$0xf]
  %v317 = vld [vmem:[%s1 + $0x88] sm:$0xf]
  %v318 = vld [vmem:[%s1 + $0x8c] sm:$0xf]
  %v575 = vunpack.c.l.b16 %v27
  %v576 = vunpack.c.h.b16 %v27
  %v577 = vunpack.c.l.b16 %v28
  %v578 = vunpack.c.l.b16 %v29
  %v579 = vunpack.c.h.b16 %v29
  %v580 = vunpack.c.l.b16 %v30
  %v581 = vunpack.c.l.b16 %v31
  %v582 = vunpack.c.h.b16 %v31
  %v583 = vunpack.c.l.b16 %v32
  %v584 = vunpack.c.l.b16 %v33
  %v585 = vunpack.c.h.b16 %v33
  %v586 = vunpack.c.l.b16 %v34
  %v587 = vunpack.c.l.b16 %v35
  %v588 = vunpack.c.h.b16 %v35
  %v589 = vunpack.c.l.b16 %v36
  %v590 = vunpack.c.l.b16 %v37
  %v591 = vunpack.c.h.b16 %v37
  %v592 = vunpack.c.l.b16 %v38
  %v593 = vunpack.c.l.b16 %v39
  %v594 = vunpack.c.h.b16 %v39
  %v595 = vunpack.c.l.b16 %v40
  %v596 = vunpack.c.l.b16 %v41
  %v597 = vunpack.c.h.b16 %v41
  %v598 = vunpack.c.l.b16 %v42
  %v599 = vunpack.c.l.b16 %v43
  %v600 = vunpack.c.h.b16 %v43
  %v601 = vunpack.c.l.b16 %v44
  %v602 = vunpack.c.l.b16 %v45
  %v603 = vunpack.c.h.b16 %v45
  %v604 = vunpack.c.l.b16 %v46
  %v605 = vunpack.c.l.b16 %v47
  %v606 = vunpack.c.h.b16 %v47
  %v607 = vunpack.c.l.b16 %v48
  %v608 = vunpack.c.l.b16 %v49
  %v609 = vunpack.c.h.b16 %v49
  %v610 = vunpack.c.l.b16 %v50
  %v611 = vunpack.c.l.b16 %v51
  %v612 = vunpack.c.h.b16 %v51
  %v613 = vunpack.c.l.b16 %v52
  %v614 = vunpack.c.l.b16 %v53
  %v615 = vunpack.c.h.b16 %v53
  %v616 = vunpack.c.l.b16 %v54
  %v617 = vunpack.c.l.b16 %v55
  %v618 = vunpack.c.h.b16 %v55
  %v619 = vunpack.c.l.b16 %v56
  %v620 = vunpack.c.l.b16 %v57
  %v621 = vunpack.c.h.b16 %v57
  %v622 = vunpack.c.l.b16 %v58
  %v623 = vunpack.c.l.b16 %v59
  %v624 = vunpack.c.h.b16 %v59
  %v625 = vunpack.c.l.b16 %v60
  %v626 = vunpack.c.l.b16 %v61
  %v627 = vunpack.c.h.b16 %v61
  %v628 = vunpack.c.l.b16 %v62
  %v629 = vunpack.c.l.b16 %v63
  %v630 = vunpack.c.h.b16 %v63
  %v631 = vunpack.c.l.b16 %v64
  %v632 = vunpack.c.l.b16 %v65
  %v633 = vunpack.c.h.b16 %v65
  %v634 = vunpack.c.l.b16 %v66
  %v635 = vunpack.c.l.b16 %v67
  %v636 = vunpack.c.h.b16 %v67
  %v637 = vunpack.c.l.b16 %v68
  %v638 = vunpack.c.l.b16 %v69
  %v639 = vunpack.c.h.b16 %v69
  %v640 = vunpack.c.l.b16 %v70
  %v641 = vunpack.c.l.b16 %v71
  %v642 = vunpack.c.h.b16 %v71
  %v643 = vunpack.c.l.b16 %v72
  %v644 = vunpack.c.l.b16 %v73
  %v645 = vunpack.c.h.b16 %v73
  %v646 = vunpack.c.l.b16 %v74
  %v647 = vunpack.c.l.b16 %v75
  %v648 = vunpack.c.h.b16 %v75
  %v649 = vunpack.c.l.b16 %v76
  %v650 = vunpack.c.l.b16 %v77
  %v651 = vunpack.c.h.b16 %v77
  %v652 = vunpack.c.l.b16 %v78
  %v653 = vunpack.c.l.b16 %v79
  %v654 = vunpack.c.h.b16 %v79
  %v655 = vunpack.c.l.b16 %v80
  %v656 = vunpack.c.l.b16 %v81
  %v657 = vunpack.c.h.b16 %v81
  %v658 = vunpack.c.l.b16 %v82
  %v659 = vunpack.c.l.b16 %v83
  %v660 = vunpack.c.h.b16 %v83
  %v661 = vunpack.c.l.b16 %v84
  %v662 = vunpack.c.l.b16 %v85
  %v663 = vunpack.c.h.b16 %v85
  %v664 = vunpack.c.l.b16 %v86
  %v665 = vunpack.c.l.b16 %v87
  %v666 = vunpack.c.h.b16 %v87
  %v667 = vunpack.c.l.b16 %v88
  %v668 = vunpack.c.l.b16 %v89
  %v669 = vunpack.c.h.b16 %v89
  %v670 = vunpack.c.l.b16 %v90
  %v671 = vunpack.c.l.b16 %v91
  %v672 = vunpack.c.h.b16 %v91
  %v673 = vunpack.c.l.b16 %v92
  %v674 = vunpack.c.l.b16 %v93
  %v675 = vunpack.c.h.b16 %v93
  %v676 = vunpack.c.l.b16 %v94
  %v677 = vunpack.c.l.b16 %v95
  %v678 = vunpack.c.h.b16 %v95
  %v679 = vunpack.c.l.b16 %v96
  %v680 = vunpack.c.l.b16 %v97
  %v681 = vunpack.c.h.b16 %v97
  %v682 = vunpack.c.l.b16 %v98
  %v683 = vunpack.c.l.b16 %v99
  %v684 = vunpack.c.h.b16 %v99
  %v685 = vunpack.c.l.b16 %v100
  %v686 = vunpack.c.l.b16 %v101
  %v687 = vunpack.c.h.b16 %v101
  %v688 = vunpack.c.l.b16 %v102
  %v689 = vunpack.c.l.b16 %v103
  %v690 = vunpack.c.h.b16 %v103
  %v691 = vunpack.c.l.b16 %v104
  %v692 = vunpack.c.l.b16 %v105
  %v693 = vunpack.c.h.b16 %v105
  %v694 = vunpack.c.l.b16 %v106
  %v695 = vunpack.c.l.b16 %v107
  %v696 = vunpack.c.h.b16 %v107
  %v697 = vunpack.c.l.b16 %v108
  %v698 = vunpack.c.l.b16 %v109
  %v699 = vunpack.c.h.b16 %v109
  %v700 = vunpack.c.l.b16 %v110
  %v701 = vunpack.c.l.b16 %v111
  %v702 = vunpack.c.h.b16 %v111
  %v703 = vunpack.c.l.b16 %v112
  %v704 = vunpack.c.l.b16 %v113
  %v705 = vunpack.c.h.b16 %v113
  %v706 = vunpack.c.l.b16 %v114
  %v707 = vunpack.c.l.b16 %v115
  %v708 = vunpack.c.h.b16 %v115
  %v709 = vunpack.c.l.b16 %v116
  %v710 = vunpack.c.l.b16 %v117
  %v711 = vunpack.c.h.b16 %v117
  %v712 = vunpack.c.l.b16 %v118
  %v713 = vunpack.c.l.b16 %v119
  %v714 = vunpack.c.h.b16 %v119
  %v715 = vunpack.c.l.b16 %v120
  %v716 = vunpack.c.l.b16 %v121
  %v717 = vunpack.c.h.b16 %v121
  %v718 = vunpack.c.l.b16 %v122
  %v719 = vunpack.c.l.b16 %v123
  %v720 = vunpack.c.h.b16 %v123
  %v721 = vunpack.c.l.b16 %v124
  %v722 = vunpack.c.l.b16 %v125
  %v723 = vunpack.c.h.b16 %v125
  %v724 = vunpack.c.l.b16 %v126
  %v725 = vunpack.c.l.b16 %v127
  %v726 = vunpack.c.h.b16 %v127
  %v727 = vunpack.c.l.b16 %v128
  %v728 = vunpack.c.l.b16 %v129
  %v729 = vunpack.c.h.b16 %v129
  %v730 = vunpack.c.l.b16 %v130
  %v731 = vunpack.c.l.b16 %v131
  %v732 = vunpack.c.h.b16 %v131
  %v733 = vunpack.c.l.b16 %v132
  %v734 = vunpack.c.l.b16 %v133
  %v735 = vunpack.c.h.b16 %v133
  %v736 = vunpack.c.l.b16 %v134
  %v737 = vunpack.c.l.b16 %v135
  %v738 = vunpack.c.h.b16 %v135
  %v739 = vunpack.c.l.b16 %v136
  %v740 = vunpack.c.l.b16 %v137
  %v741 = vunpack.c.h.b16 %v137
  %v742 = vunpack.c.l.b16 %v138
  %v743 = vunpack.c.l.b16 %v139
  %v744 = vunpack.c.h.b16 %v139
  %v745 = vunpack.c.l.b16 %v140
  %v746 = vunpack.c.l.b16 %v141
  %v747 = vunpack.c.h.b16 %v141
  %v748 = vunpack.c.l.b16 %v142
  %v749 = vunpack.c.l.b16 %v143
  %v750 = vunpack.c.h.b16 %v143
  %v751 = vunpack.c.l.b16 %v144
  %v752 = vunpack.c.l.b16 %v145
  %v753 = vunpack.c.h.b16 %v145
  %v754 = vunpack.c.l.b16 %v146
  %v755 = vunpack.c.l.b16 %v147
  %v756 = vunpack.c.h.b16 %v147
  %v757 = vunpack.c.l.b16 %v148
  %v758 = vunpack.c.l.b16 %v149
  %v759 = vunpack.c.h.b16 %v149
  %v760 = vunpack.c.l.b16 %v150
  %v761 = vunpack.c.l.b16 %v151
  %v762 = vunpack.c.h.b16 %v151
  %v763 = vunpack.c.l.b16 %v152
  %v764 = vunpack.c.l.b16 %v153
  %v765 = vunpack.c.h.b16 %v153
  %v766 = vunpack.c.l.b16 %v154
  %v767 = vunpack.c.l.b16 %v155
  %v768 = vunpack.c.h.b16 %v155
  %v769 = vunpack.c.l.b16 %v156
  %v770 = vunpack.c.l.b16 %v157
  %v771 = vunpack.c.h.b16 %v157
  %v772 = vunpack.c.l.b16 %v158
  %v773 = vunpack.c.l.b16 %v159
  %v774 = vunpack.c.h.b16 %v159
  %v775 = vunpack.c.l.b16 %v160
  %v776 = vunpack.c.l.b16 %v161
  %v777 = vunpack.c.h.b16 %v161
  %v778 = vunpack.c.l.b16 %v162
  %v779 = vunpack.c.l.b16 %v163
  %v780 = vunpack.c.h.b16 %v163
  %v781 = vunpack.c.l.b16 %v164
  %v782 = vunpack.c.l.b16 %v165
  %v783 = vunpack.c.h.b16 %v165
  %v784 = vunpack.c.l.b16 %v166
  %v785 = vunpack.c.l.b16 %v167
  %v786 = vunpack.c.h.b16 %v167
  %v787 = vunpack.c.l.b16 %v168
  %v788 = vunpack.c.l.b16 %v169
  %v789 = vunpack.c.h.b16 %v169
  %v790 = vunpack.c.l.b16 %v170
  %v791 = vunpack.c.l.b16 %v171
  %v792 = vunpack.c.h.b16 %v171
  %v793 = vunpack.c.l.b16 %v172
  %v794 = vunpack.c.l.b16 %v173
  %v795 = vunpack.c.h.b16 %v173
  %v796 = vunpack.c.l.b16 %v174
  %v797 = vunpack.c.l.b16 %v175
  %v798 = vunpack.c.h.b16 %v175
  %v799 = vunpack.c.l.b16 %v176
  %v800 = vunpack.c.l.b16 %v177
  %v801 = vunpack.c.h.b16 %v177
  %v802 = vunpack.c.l.b16 %v178
  %v803 = vunpack.c.l.b16 %v179
  %v804 = vunpack.c.h.b16 %v179
  %v805 = vunpack.c.l.b16 %v180
  %v806 = vunpack.c.l.b16 %v181
  %v807 = vunpack.c.h.b16 %v181
  %v808 = vunpack.c.l.b16 %v182
  %v809 = vunpack.c.l.b16 %v183
  %v810 = vunpack.c.h.b16 %v183
  %v811 = vunpack.c.l.b16 %v184
  %v812 = vunpack.c.l.b16 %v185
  %v813 = vunpack.c.h.b16 %v185
  %v814 = vunpack.c.l.b16 %v186
  %v815 = vunpack.c.l.b16 %v187
  %v816 = vunpack.c.h.b16 %v187
  %v817 = vunpack.c.l.b16 %v188
  %v818 = vunpack.c.l.b16 %v189
  %v819 = vunpack.c.h.b16 %v189
  %v820 = vunpack.c.l.b16 %v190
  %v821 = vunpack.c.l.b16 %v191
  %v822 = vunpack.c.h.b16 %v191
  %v823 = vunpack.c.l.b16 %v192
  %v824 = vunpack.c.l.b16 %v193
  %v825 = vunpack.c.h.b16 %v193
  %v826 = vunpack.c.l.b16 %v194
  %v827 = vunpack.c.l.b16 %v195
  %v828 = vunpack.c.h.b16 %v195
  %v829 = vunpack.c.l.b16 %v196
  %v830 = vunpack.c.l.b16 %v197
  %v831 = vunpack.c.h.b16 %v197
  %v832 = vunpack.c.l.b16 %v198
  %v833 = vunpack.c.l.b16 %v199
  %v834 = vunpack.c.h.b16 %v199
  %v835 = vunpack.c.l.b16 %v200
  %v836 = vunpack.c.l.b16 %v201
  %v837 = vunpack.c.h.b16 %v201
  %v838 = vunpack.c.l.b16 %v202
  %v839 = vunpack.c.l.b16 %v203
  %v840 = vunpack.c.h.b16 %v203
  %v841 = vunpack.c.l.b16 %v204
  %v842 = vunpack.c.l.b16 %v205
  %v843 = vunpack.c.h.b16 %v205
  %v844 = vunpack.c.l.b16 %v206
  %v845 = vunpack.c.l.b16 %v207
  %v846 = vunpack.c.h.b16 %v207
  %v847 = vunpack.c.l.b16 %v208
  %v848 = vunpack.c.l.b16 %v209
  %v849 = vunpack.c.h.b16 %v209
  %v850 = vunpack.c.l.b16 %v210
  %v851 = vunpack.c.l.b16 %v211
  %v852 = vunpack.c.h.b16 %v211
  %v853 = vunpack.c.l.b16 %v212
  %v854 = vunpack.c.l.b16 %v213
  %v855 = vunpack.c.h.b16 %v213
  %v856 = vunpack.c.l.b16 %v214
  %v857 = vunpack.c.l.b16 %v215
  %v858 = vunpack.c.h.b16 %v215
  %v859 = vunpack.c.l.b16 %v216
  %v860 = vunpack.c.l.b16 %v217
  %v861 = vunpack.c.h.b16 %v217
  %v862 = vunpack.c.l.b16 %v218
  %v863 = vunpack.c.l.b16 %v219
  %v864 = vunpack.c.h.b16 %v219
  %v865 = vunpack.c.l.b16 %v220
  %v866 = vunpack.c.l.b16 %v221
  %v867 = vunpack.c.h.b16 %v221
  %v868 = vunpack.c.l.b16 %v222
  %v869 = vunpack.c.l.b16 %v223
  %v870 = vunpack.c.h.b16 %v223
  %v871 = vunpack.c.l.b16 %v224
  %v872 = vunpack.c.l.b16 %v225
  %v873 = vunpack.c.h.b16 %v225
  %v874 = vunpack.c.l.b16 %v226
  %v875 = vunpack.c.l.b16 %v227
  %v876 = vunpack.c.h.b16 %v227
  %v877 = vunpack.c.l.b16 %v228
  %v878 = vunpack.c.l.b16 %v229
  %v879 = vunpack.c.h.b16 %v229
  %v880 = vunpack.c.l.b16 %v230
  %v881 = vunpack.c.l.b16 %v231
  %v882 = vunpack.c.h.b16 %v231
  %v883 = vunpack.c.l.b16 %v232
  %v884 = vunpack.c.l.b16 %v233
  %v885 = vunpack.c.h.b16 %v233
  %v886 = vunpack.c.l.b16 %v234
  %v887 = vunpack.c.l.b16 %v235
  %v888 = vunpack.c.h.b16 %v235
  %v889 = vunpack.c.l.b16 %v236
  %v890 = vunpack.c.l.b16 %v237
  %v891 = vunpack.c.h.b16 %v237
  %v892 = vunpack.c.l.b16 %v238
  %v893 = vunpack.c.l.b16 %v239
  %v894 = vunpack.c.h.b16 %v239
  %v895 = vunpack.c.l.b16 %v240
  %v896 = vunpack.c.l.b16 %v241
  %v897 = vunpack.c.h.b16 %v241
  %v898 = vunpack.c.l.b16 %v242
  %v899 = vunpack.c.l.b16 %v243
  %v900 = vunpack.c.h.b16 %v243
  %v901 = vunpack.c.l.b16 %v244
  %v902 = vunpack.c.l.b16 %v245
  %v903 = vunpack.c.h.b16 %v245
  %v904 = vunpack.c.l.b16 %v246
  %v905 = vunpack.c.l.b16 %v247
  %v906 = vunpack.c.h.b16 %v247
  %v907 = vunpack.c.l.b16 %v248
  %v908 = vunpack.c.l.b16 %v249
  %v909 = vunpack.c.h.b16 %v249
  %v910 = vunpack.c.l.b16 %v250
  %v911 = vunpack.c.l.b16 %v251
  %v912 = vunpack.c.h.b16 %v251
  %v913 = vunpack.c.l.b16 %v252
  %v914 = vunpack.c.l.b16 %v253
  %v915 = vunpack.c.h.b16 %v253
  %v916 = vunpack.c.l.b16 %v254
  %v917 = vunpack.c.l.b16 %v255
  %v918 = vunpack.c.h.b16 %v255
  %v919 = vunpack.c.l.b16 %v256
  %v920 = vunpack.c.l.b16 %v257
  %v921 = vunpack.c.h.b16 %v257
  %v922 = vunpack.c.l.b16 %v258
  %v923 = vunpack.c.l.b16 %v259
  %v924 = vunpack.c.h.b16 %v259
  %v925 = vunpack.c.l.b16 %v260
  %v926 = vunpack.c.l.b16 %v261
  %v927 = vunpack.c.h.b16 %v261
  %v928 = vunpack.c.l.b16 %v262
  %v929 = vunpack.c.l.b16 %v263
  %v930 = vunpack.c.h.b16 %v263
  %v931 = vunpack.c.l.b16 %v264
  %v932 = vunpack.c.l.b16 %v265
  %v933 = vunpack.c.h.b16 %v265
  %v934 = vunpack.c.l.b16 %v266
  %v935 = vunpack.c.l.b16 %v267
  %v936 = vunpack.c.h.b16 %v267
  %v937 = vunpack.c.l.b16 %v268
  %v938 = vunpack.c.l.b16 %v269
  %v939 = vunpack.c.h.b16 %v269
  %v940 = vunpack.c.l.b16 %v270
  %v941 = vunpack.c.l.b16 %v271
  %v942 = vunpack.c.h.b16 %v271
  %v943 = vunpack.c.l.b16 %v272
  %v944 = vunpack.c.l.b16 %v273
  %v945 = vunpack.c.h.b16 %v273
  %v946 = vunpack.c.l.b16 %v274
  %v947 = vunpack.c.l.b16 %v275
  %v948 = vunpack.c.h.b16 %v275
  %v949 = vunpack.c.l.b16 %v276
  %v950 = vunpack.c.l.b16 %v277
  %v951 = vunpack.c.h.b16 %v277
  %v952 = vunpack.c.l.b16 %v278
  %v953 = vunpack.c.l.b16 %v279
  %v954 = vunpack.c.h.b16 %v279
  %v955 = vunpack.c.l.b16 %v280
  %v956 = vunpack.c.l.b16 %v281
  %v957 = vunpack.c.h.b16 %v281
  %v958 = vunpack.c.l.b16 %v282
  %v959 = vpack.c.b16 %v578, %v575
  %v960 = vpack.c.b16 %v579, %v576
  %v961 = vpack.c.b16 %v580, %v577
  %v962 = vpack.c.b16 %v584, %v581
  %v963 = vpack.c.b16 %v585, %v582
  %v964 = vpack.c.b16 %v586, %v583
  %v965 = vpack.c.b16 %v590, %v587
  %v966 = vpack.c.b16 %v591, %v588
  %v967 = vpack.c.b16 %v592, %v589
  %v968 = vpack.c.b16 %v596, %v593
  %v969 = vpack.c.b16 %v597, %v594
  %v970 = vpack.c.b16 %v598, %v595
  %v971 = vpack.c.b16 %v602, %v599
  %v972 = vpack.c.b16 %v603, %v600
  %v973 = vpack.c.b16 %v604, %v601
  %v974 = vpack.c.b16 %v608, %v605
  %v975 = vpack.c.b16 %v609, %v606
  %v976 = vpack.c.b16 %v610, %v607
  %v977 = vpack.c.b16 %v614, %v611
  %v978 = vpack.c.b16 %v615, %v612
  %v979 = vpack.c.b16 %v616, %v613
  %v980 = vpack.c.b16 %v620, %v617
  %v981 = vpack.c.b16 %v621, %v618
  %v982 = vpack.c.b16 %v622, %v619
  %v983 = vpack.c.b16 %v626, %v623
  %v984 = vpack.c.b16 %v627, %v624
  %v985 = vpack.c.b16 %v628, %v625
  %v986 = vpack.c.b16 %v632, %v629
  %v987 = vpack.c.b16 %v633, %v630
  %v988 = vpack.c.b16 %v634, %v631
  %v989 = vpack.c.b16 %v638, %v635
  %v990 = vpack.c.b16 %v639, %v636
  %v991 = vpack.c.b16 %v640, %v637
  %v992 = vpack.c.b16 %v644, %v641
  %v993 = vpack.c.b16 %v645, %v642
  %v994 = vpack.c.b16 %v646, %v643
  %v995 = vpack.c.b16 %v650, %v647
  %v996 = vpack.c.b16 %v651, %v648
  %v997 = vpack.c.b16 %v652, %v649
  %v998 = vpack.c.b16 %v656, %v653
  %v999 = vpack.c.b16 %v657, %v654
  %v1000 = vpack.c.b16 %v658, %v655
  %v1001 = vpack.c.b16 %v662, %v659
  %v1002 = vpack.c.b16 %v663, %v660
  %v1003 = vpack.c.b16 %v664, %v661
  %v1004 = vpack.c.b16 %v668, %v665
  %v1005 = vpack.c.b16 %v669, %v666
  %v1006 = vpack.c.b16 %v670, %v667
  %v1007 = vpack.c.b16 %v674, %v671
  %v1008 = vpack.c.b16 %v675, %v672
  %v1009 = vpack.c.b16 %v676, %v673
  %v1010 = vpack.c.b16 %v680, %v677
  %v1011 = vpack.c.b16 %v681, %v678
  %v1012 = vpack.c.b16 %v682, %v679
  %v1013 = vpack.c.b16 %v686, %v683
  %v1014 = vpack.c.b16 %v687, %v684
  %v1015 = vpack.c.b16 %v688, %v685
  %v1016 = vpack.c.b16 %v692, %v689
  %v1017 = vpack.c.b16 %v693, %v690
  %v1018 = vpack.c.b16 %v694, %v691
  %v1019 = vpack.c.b16 %v698, %v695
  %v1020 = vpack.c.b16 %v699, %v696
  %v1021 = vpack.c.b16 %v700, %v697
  %v1022 = vpack.c.b16 %v704, %v701
  %v1023 = vpack.c.b16 %v705, %v702
  %v1024 = vpack.c.b16 %v706, %v703
  %v1025 = vpack.c.b16 %v710, %v707
  %v1026 = vpack.c.b16 %v711, %v708
  %v1027 = vpack.c.b16 %v712, %v709
  %v1028 = vpack.c.b16 %v716, %v713
  %v1029 = vpack.c.b16 %v717, %v714
  %v1030 = vpack.c.b16 %v718, %v715
  %v1031 = vpack.c.b16 %v722, %v719
  %v1032 = vpack.c.b16 %v723, %v720
  %v1033 = vpack.c.b16 %v724, %v721
  %v1034 = vpack.c.b16 %v728, %v725
  %v1035 = vpack.c.b16 %v729, %v726
  %v1036 = vpack.c.b16 %v730, %v727
  %v1037 = vpack.c.b16 %v734, %v731
  %v1038 = vpack.c.b16 %v735, %v732
  %v1039 = vpack.c.b16 %v736, %v733
  %v1040 = vpack.c.b16 %v740, %v737
  %v1041 = vpack.c.b16 %v741, %v738
  %v1042 = vpack.c.b16 %v742, %v739
  %v1043 = vpack.c.b16 %v746, %v743
  %v1044 = vpack.c.b16 %v747, %v744
  %v1045 = vpack.c.b16 %v748, %v745
  %v1046 = vpack.c.b16 %v752, %v749
  %v1047 = vpack.c.b16 %v753, %v750
  %v1048 = vpack.c.b16 %v754, %v751
  %v1049 = vpack.c.b16 %v758, %v755
  %v1050 = vpack.c.b16 %v759, %v756
  %v1051 = vpack.c.b16 %v760, %v757
  %v1052 = vpack.c.b16 %v764, %v761
  %v1053 = vpack.c.b16 %v765, %v762
  %v1054 = vpack.c.b16 %v766, %v763
  %v1055 = vpack.c.b16 %v770, %v767
  %v1056 = vpack.c.b16 %v771, %v768
  %v1057 = vpack.c.b16 %v772, %v769
  %v1058 = vpack.c.b16 %v776, %v773
  %v1059 = vpack.c.b16 %v777, %v774
  %v1060 = vpack.c.b16 %v778, %v775
  %v1061 = vpack.c.b16 %v782, %v779
  %v1062 = vpack.c.b16 %v783, %v780
  %v1063 = vpack.c.b16 %v784, %v781
  %v1064 = vpack.c.b16 %v788, %v785
  %v1065 = vpack.c.b16 %v789, %v786
  %v1066 = vpack.c.b16 %v790, %v787
  %v1067 = vpack.c.b16 %v794, %v791
  %v1068 = vpack.c.b16 %v795, %v792
  %v1069 = vpack.c.b16 %v796, %v793
  %v1070 = vpack.c.b16 %v800, %v797
  %v1071 = vpack.c.b16 %v801, %v798
  %v1072 = vpack.c.b16 %v802, %v799
  %v1073 = vpack.c.b16 %v806, %v803
  %v1074 = vpack.c.b16 %v807, %v804
  %v1075 = vpack.c.b16 %v808, %v805
  %v1076 = vpack.c.b16 %v812, %v809
  %v1077 = vpack.c.b16 %v813, %v810
  %v1078 = vpack.c.b16 %v814, %v811
  %v1079 = vpack.c.b16 %v818, %v815
  %v1080 = vpack.c.b16 %v819, %v816
  %v1081 = vpack.c.b16 %v820, %v817
  %v1082 = vpack.c.b16 %v824, %v821
  %v1083 = vpack.c.b16 %v825, %v822
  %v1084 = vpack.c.b16 %v826, %v823
  %v1085 = vpack.c.b16 %v830, %v827
  %v1086 = vpack.c.b16 %v831, %v828
  %v1087 = vpack.c.b16 %v832, %v829
  %v1088 = vpack.c.b16 %v836, %v833
  %v1089 = vpack.c.b16 %v837, %v834
  %v1090 = vpack.c.b16 %v838, %v835
  %v1091 = vpack.c.b16 %v842, %v839
  %v1092 = vpack.c.b16 %v843, %v840
  %v1093 = vpack.c.b16 %v844, %v841
  %v1094 = vpack.c.b16 %v848, %v845
  %v1095 = vpack.c.b16 %v849, %v846
  %v1096 = vpack.c.b16 %v850, %v847
  %v1097 = vpack.c.b16 %v854, %v851
  %v1098 = vpack.c.b16 %v855, %v852
  %v1099 = vpack.c.b16 %v856, %v853
  %v1100 = vpack.c.b16 %v860, %v857
  %v1101 = vpack.c.b16 %v861, %v858
  %v1102 = vpack.c.b16 %v862, %v859
  %v1103 = vpack.c.b16 %v866, %v863
  %v1104 = vpack.c.b16 %v867, %v864
  %v1105 = vpack.c.b16 %v868, %v865
  %v1106 = vpack.c.b16 %v872, %v869
  %v1107 = vpack.c.b16 %v873, %v870
  %v1108 = vpack.c.b16 %v874, %v871
  %v1109 = vpack.c.b16 %v878, %v875
  %v1110 = vpack.c.b16 %v879, %v876
  %v1111 = vpack.c.b16 %v880, %v877
  %v1112 = vpack.c.b16 %v884, %v881
  %v1113 = vpack.c.b16 %v885, %v882
  %v1114 = vpack.c.b16 %v886, %v883
  %v1115 = vpack.c.b16 %v890, %v887
  %v1116 = vpack.c.b16 %v891, %v888
  %v1117 = vpack.c.b16 %v892, %v889
  %v1118 = vpack.c.b16 %v896, %v893
  %v1119 = vpack.c.b16 %v897, %v894
  %v1120 = vpack.c.b16 %v898, %v895
  %v1121 = vpack.c.b16 %v902, %v899
  %v1122 = vpack.c.b16 %v903, %v900
  %v1123 = vpack.c.b16 %v904, %v901
  %v1124 = vpack.c.b16 %v908, %v905
  %v1125 = vpack.c.b16 %v909, %v906
  %v1126 = vpack.c.b16 %v910, %v907
  %v1127 = vpack.c.b16 %v914, %v911
  %v1128 = vpack.c.b16 %v915, %v912
  %v1129 = vpack.c.b16 %v916, %v913
  %v1130 = vpack.c.b16 %v920, %v917
  %v1131 = vpack.c.b16 %v921, %v918
  %v1132 = vpack.c.b16 %v922, %v919
  %v1133 = vpack.c.b16 %v926, %v923
  %v1134 = vpack.c.b16 %v927, %v924
  %v1135 = vpack.c.b16 %v928, %v925
  %v1136 = vpack.c.b16 %v932, %v929
  %v1137 = vpack.c.b16 %v933, %v930
  %v1138 = vpack.c.b16 %v934, %v931
  %v1139 = vpack.c.b16 %v938, %v935
  %v1140 = vpack.c.b16 %v939, %v936
  %v1141 = vpack.c.b16 %v940, %v937
  %v1142 = vpack.c.b16 %v944, %v941
  %v1143 = vpack.c.b16 %v945, %v942
  %v1144 = vpack.c.b16 %v946, %v943
  %v1145 = vpack.c.b16 %v950, %v947
  %v1146 = vpack.c.b16 %v951, %v948
  %v1147 = vpack.c.b16 %v952, %v949
  %v1148 = vpack.c.b16 %v956, %v953
  %v1149 = vpack.c.b16 %v957, %v954
  %v1150 = vpack.c.b16 %v958, %v955
  %v1315 = vunpack.c.l.b16 %v283
  %v1316 = vunpack.c.l.b16 %v284
  %v1317 = vunpack.c.l.b16 %v285
  %v1318 = vunpack.c.l.b16 %v286
  %v1319 = vunpack.c.l.b16 %v287
  %v1320 = vunpack.c.l.b16 %v288
  %v1321 = vunpack.c.l.b16 %v289
  %v1322 = vunpack.c.l.b16 %v290
  %v1323 = vunpack.c.l.b16 %v291
  %v1324 = vunpack.c.l.b16 %v292
  %v1325 = vunpack.c.l.b16 %v293
  %v1326 = vunpack.c.l.b16 %v294
  %v1327 = vunpack.c.l.b16 %v295
  %v1328 = vunpack.c.l.b16 %v296
  %v1329 = vunpack.c.l.b16 %v297
  %v1330 = vunpack.c.l.b16 %v298
  %v1331 = vunpack.c.l.b16 %v299
  %v1332 = vunpack.c.l.b16 %v300
  %v1333 = vunpack.c.l.b16 %v301
  %v1334 = vunpack.c.l.b16 %v302
  %v1335 = vunpack.c.l.b16 %v303
  %v1336 = vunpack.c.l.b16 %v304
  %v1337 = vunpack.c.l.b16 %v305
  %v1338 = vunpack.c.l.b16 %v306
  %v1339 = vunpack.c.l.b16 %v307
  %v1340 = vunpack.c.l.b16 %v308
  %v1341 = vunpack.c.l.b16 %v309
  %v1342 = vunpack.c.l.b16 %v310
  %v1343 = vunpack.c.l.b16 %v311
  %v1344 = vunpack.c.l.b16 %v312
  %v1345 = vunpack.c.l.b16 %v313
  %v1346 = vunpack.c.l.b16 %v314
  %v1347 = vunpack.c.l.b16 %v315
  %v1348 = vunpack.c.l.b16 %v316
  %v1349 = vunpack.c.l.b16 %v317
  %v1350 = vunpack.c.l.b16 %v318
  %v1351 = vpack.c.b16 %v1316, %v1315
  %v1352 = vpack.c.b16 %v1318, %v1317
  %v1353 = vpack.c.b16 %v1320, %v1319
  %v1354 = vpack.c.b16 %v1322, %v1321
  %v1355 = vpack.c.b16 %v1324, %v1323
  %v1356 = vpack.c.b16 %v1326, %v1325
  %v1357 = vpack.c.b16 %v1328, %v1327
  %v1358 = vpack.c.b16 %v1330, %v1329
  %v1359 = vpack.c.b16 %v1332, %v1331
  %v1360 = vpack.c.b16 %v1334, %v1333
  %v1361 = vpack.c.b16 %v1336, %v1335
  %v1362 = vpack.c.b16 %v1338, %v1337
  %v1363 = vpack.c.b16 %v1340, %v1339
  %v1364 = vpack.c.b16 %v1342, %v1341
  %v1365 = vpack.c.b16 %v1344, %v1343
  %v1366 = vpack.c.b16 %v1346, %v1345
  %v1367 = vpack.c.b16 %v1348, %v1347
  %v1368 = vpack.c.b16 %v1350, %v1349
  %vm1387 = vcmask 261120
  %v1389 = vsel %vm1387, %v961, 0
  %v1392 = vsel %vm1387, %v964, 0
  %v1395 = vsel %vm1387, %v967, 0
  %v1398 = vsel %vm1387, %v970, 0
  %v1401 = vsel %vm1387, %v973, 0
  %v1404 = vsel %vm1387, %v976, 0
  %v1407 = vsel %vm1387, %v979, 0
  %v1410 = vsel %vm1387, %v982, 0
  %v1413 = vsel %vm1387, %v985, 0
  %v1416 = vsel %vm1387, %v988, 0
  %v1419 = vsel %vm1387, %v991, 0
  %v1422 = vsel %vm1387, %v994, 0
  %v1425 = vsel %vm1387, %v997, 0
  %v1428 = vsel %vm1387, %v1000, 0
  %v1431 = vsel %vm1387, %v1003, 0
  %v1434 = vsel %vm1387, %v1006, 0
  %v1437 = vsel %vm1387, %v1009, 0
  %v1440 = vsel %vm1387, %v1012, 0
  %v1443 = vsel %vm1387, %v1015, 0
  %v1446 = vsel %vm1387, %v1018, 0
  %v1449 = vsel %vm1387, %v1021, 0
  %v1452 = vsel %vm1387, %v1024, 0
  %v1455 = vsel %vm1387, %v1027, 0
  %v1458 = vsel %vm1387, %v1030, 0
  %v1461 = vsel %vm1387, %v1033, 0
  %v1464 = vsel %vm1387, %v1036, 0
  %v1467 = vsel %vm1387, %v1039, 0
  %v1470 = vsel %vm1387, %v1042, 0
  %v1473 = vsel %vm1387, %v1045, 0
  %v1476 = vsel %vm1387, %v1048, 0
  %v1479 = vsel %vm1387, %v1051, 0
  %v1482 = vsel %vm1387, %v1054, 0
  %v1485 = vsel %vm1387, %v1057, 0
  %v1488 = vsel %vm1387, %v1060, 0
  %v1491 = vsel %vm1387, %v1063, 0
  %v1494 = vsel %vm1387, %v1066, 0
  %v1497 = vsel %vm1387, %v1069, 0
  %v1500 = vsel %vm1387, %v1072, 0
  %v1503 = vsel %vm1387, %v1075, 0
  %v1506 = vsel %vm1387, %v1078, 0
  %v1509 = vsel %vm1387, %v1081, 0
  %v1512 = vsel %vm1387, %v1084, 0
  %v1515 = vsel %vm1387, %v1087, 0
  %v1518 = vsel %vm1387, %v1090, 0
  %v1521 = vsel %vm1387, %v1093, 0
  %v1524 = vsel %vm1387, %v1096, 0
  %v1527 = vsel %vm1387, %v1099, 0
  %v1530 = vsel %vm1387, %v1102, 0
  %v1533 = vsel %vm1387, %v1105, 0
  %v1536 = vsel %vm1387, %v1108, 0
  %v1539 = vsel %vm1387, %v1111, 0
  %v1542 = vsel %vm1387, %v1114, 0
  %v1545 = vsel %vm1387, %v1117, 0
  %v1548 = vsel %vm1387, %v1120, 0
  %v1551 = vsel %vm1387, %v1123, 0
  %v1554 = vsel %vm1387, %v1126, 0
  %v1557 = vsel %vm1387, %v1129, 0
  %v1560 = vsel %vm1387, %v1132, 0
  %v1563 = vsel %vm1387, %v1135, 0
  %v1566 = vsel %vm1387, %v1138, 0
  %v1569 = vsel %vm1387, %v1141, 0
  %v1572 = vsel %vm1387, %v1144, 0
  %v1575 = vsel %vm1387, %v1147, 0
  %v1578 = vsel %vm1387, %v1150, 0
  %1580 = vmatpush.bf16.msra.mxu0 %v1358
  %1581 = vmatpush.bf16.msra.mxu0 %v1357
  %1582 = vmatpush.bf16.msra.mxu0 %v1356
  %1583 = vmatpush.bf16.msra.mxu0 %v1355
  %1584 = vmatpush.bf16.msra.mxu0 %v1354
  %1585 = vmatpush.bf16.msra.mxu0 %v1353
  %1586 = vmatpush.bf16.msra.mxu0 %v1352
  %1587 = vmatpush.bf16.msra.mxu0 %v1351
  %1588 = vmatmul.bf16.gmra.mxu0 %v959
  %v1589 = vpop.f32.mrf.mxu0
  %v1590 = vadd.f32 0.0, %v1589
  %v1591 = vpop.f32.mrf.mxu0
  %v1592 = vadd.f32 0.0, %v1591
  %1593 = vmatmul.bf16.gmra.mxu0 %v962
  %v1594 = vpop.f32.mrf.mxu0
  %v1595 = vadd.f32 0.0, %v1594
  %v1596 = vpop.f32.mrf.mxu0
  %v1597 = vadd.f32 0.0, %v1596
  %1598 = vmatmul.bf16.gmra.mxu0 %v965
  %v1599 = vpop.f32.mrf.mxu0
  %v1600 = vadd.f32 0.0, %v1599
  %v1601 = vpop.f32.mrf.mxu0
  %v1602 = vadd.f32 0.0, %v1601
  %1603 = vmatmul.bf16.gmra.mxu0 %v968
  %v1604 = vpop.f32.mrf.mxu0
  %v1605 = vadd.f32 0.0, %v1604
  %v1606 = vpop.f32.mrf.mxu0
  %v1607 = vadd.f32 0.0, %v1606
  %1608 = vmatmul.bf16.gmra.mxu0 %v971
  %v1609 = vpop.f32.mrf.mxu0
  %v1610 = vadd.f32 0.0, %v1609
  %v1611 = vpop.f32.mrf.mxu0
  %v1612 = vadd.f32 0.0, %v1611
  %1613 = vmatmul.bf16.gmra.mxu0 %v974
  %v1614 = vpop.f32.mrf.mxu0
  %v1615 = vadd.f32 0.0, %v1614
  %v1616 = vpop.f32.mrf.mxu0
  %v1617 = vadd.f32 0.0, %v1616
  %1618 = vmatmul.bf16.gmra.mxu0 %v977
  %v1619 = vpop.f32.mrf.mxu0
  %v1620 = vadd.f32 0.0, %v1619
  %v1621 = vpop.f32.mrf.mxu0
  %v1622 = vadd.f32 0.0, %v1621
  %1623 = vmatmul.bf16.gmra.mxu0 %v980
  %v1624 = vpop.f32.mrf.mxu0
  %v1625 = vadd.f32 0.0, %v1624
  %v1626 = vpop.f32.mrf.mxu0
  %v1627 = vadd.f32 0.0, %v1626
  %1628 = vmatmul.bf16.gmra.mxu0 %v983
  %v1629 = vpop.f32.mrf.mxu0
  %v1630 = vadd.f32 0.0, %v1629
  %v1631 = vpop.f32.mrf.mxu0
  %v1632 = vadd.f32 0.0, %v1631
  %1633 = vmatmul.bf16.gmra.mxu0 %v986
  %v1634 = vpop.f32.mrf.mxu0
  %v1635 = vadd.f32 0.0, %v1634
  %v1636 = vpop.f32.mrf.mxu0
  %v1637 = vadd.f32 0.0, %v1636
  %1638 = vmatmul.bf16.gmra.mxu0 %v989
  %v1639 = vpop.f32.mrf.mxu0
  %v1640 = vadd.f32 0.0, %v1639
  %v1641 = vpop.f32.mrf.mxu0
  %v1642 = vadd.f32 0.0, %v1641
  %1643 = vmatmul.bf16.gmra.mxu0 %v992
  %v1644 = vpop.f32.mrf.mxu0
  %v1645 = vadd.f32 0.0, %v1644
  %v1646 = vpop.f32.mrf.mxu0
  %v1647 = vadd.f32 0.0, %v1646
  %1648 = vmatmul.bf16.gmra.mxu0 %v995
  %v1649 = vpop.f32.mrf.mxu0
  %v1650 = vadd.f32 0.0, %v1649
  %v1651 = vpop.f32.mrf.mxu0
  %v1652 = vadd.f32 0.0, %v1651
  %1653 = vmatmul.bf16.gmra.mxu0 %v998
  %v1654 = vpop.f32.mrf.mxu0
  %v1655 = vadd.f32 0.0, %v1654
  %v1656 = vpop.f32.mrf.mxu0
  %v1657 = vadd.f32 0.0, %v1656
  %1658 = vmatmul.bf16.gmra.mxu0 %v1001
  %v1659 = vpop.f32.mrf.mxu0
  %v1660 = vadd.f32 0.0, %v1659
  %v1661 = vpop.f32.mrf.mxu0
  %v1662 = vadd.f32 0.0, %v1661
  %1663 = vmatmul.bf16.gmra.mxu0 %v1004
  %v1664 = vpop.f32.mrf.mxu0
  %v1665 = vadd.f32 0.0, %v1664
  %v1666 = vpop.f32.mrf.mxu0
  %v1667 = vadd.f32 0.0, %v1666
  %1668 = vmatmul.bf16.gmra.mxu0 %v1007
  %v1669 = vpop.f32.mrf.mxu0
  %v1670 = vadd.f32 0.0, %v1669
  %v1671 = vpop.f32.mrf.mxu0
  %v1672 = vadd.f32 0.0, %v1671
  %1673 = vmatmul.bf16.gmra.mxu0 %v1010
  %v1674 = vpop.f32.mrf.mxu0
  %v1675 = vadd.f32 0.0, %v1674
  %v1676 = vpop.f32.mrf.mxu0
  %v1677 = vadd.f32 0.0, %v1676
  %1678 = vmatmul.bf16.gmra.mxu0 %v1013
  %v1679 = vpop.f32.mrf.mxu0
  %v1680 = vadd.f32 0.0, %v1679
  %v1681 = vpop.f32.mrf.mxu0
  %v1682 = vadd.f32 0.0, %v1681
  %1683 = vmatmul.bf16.gmra.mxu0 %v1016
  %v1684 = vpop.f32.mrf.mxu0
  %v1685 = vadd.f32 0.0, %v1684
  %v1686 = vpop.f32.mrf.mxu0
  %v1687 = vadd.f32 0.0, %v1686
  %1688 = vmatmul.bf16.gmra.mxu0 %v1019
  %v1689 = vpop.f32.mrf.mxu0
  %v1690 = vadd.f32 0.0, %v1689
  %v1691 = vpop.f32.mrf.mxu0
  %v1692 = vadd.f32 0.0, %v1691
  %1693 = vmatmul.bf16.gmra.mxu0 %v1022
  %v1694 = vpop.f32.mrf.mxu0
  %v1695 = vadd.f32 0.0, %v1694
  %v1696 = vpop.f32.mrf.mxu0
  %v1697 = vadd.f32 0.0, %v1696
  %1698 = vmatmul.bf16.gmra.mxu0 %v1025
  %v1699 = vpop.f32.mrf.mxu0
  %v1700 = vadd.f32 0.0, %v1699
  %v1701 = vpop.f32.mrf.mxu0
  %v1702 = vadd.f32 0.0, %v1701
  %1703 = vmatmul.bf16.gmra.mxu0 %v1028
  %v1704 = vpop.f32.mrf.mxu0
  %v1705 = vadd.f32 0.0, %v1704
  %v1706 = vpop.f32.mrf.mxu0
  %v1707 = vadd.f32 0.0, %v1706
  %1708 = vmatmul.bf16.gmra.mxu0 %v1031
  %v1709 = vpop.f32.mrf.mxu0
  %v1710 = vadd.f32 0.0, %v1709
  %v1711 = vpop.f32.mrf.mxu0
  %v1712 = vadd.f32 0.0, %v1711
  %1713 = vmatmul.bf16.gmra.mxu0 %v1034
  %v1714 = vpop.f32.mrf.mxu0
  %v1715 = vadd.f32 0.0, %v1714
  %v1716 = vpop.f32.mrf.mxu0
  %v1717 = vadd.f32 0.0, %v1716
  %1718 = vmatmul.bf16.gmra.mxu0 %v1037
  %v1719 = vpop.f32.mrf.mxu0
  %v1720 = vadd.f32 0.0, %v1719
  %v1721 = vpop.f32.mrf.mxu0
  %v1722 = vadd.f32 0.0, %v1721
  %1723 = vmatmul.bf16.gmra.mxu0 %v1040
  %v1724 = vpop.f32.mrf.mxu0
  %v1725 = vadd.f32 0.0, %v1724
  %v1726 = vpop.f32.mrf.mxu0
  %v1727 = vadd.f32 0.0, %v1726
  %1728 = vmatmul.bf16.gmra.mxu0 %v1043
  %v1729 = vpop.f32.mrf.mxu0
  %v1730 = vadd.f32 0.0, %v1729
  %v1731 = vpop.f32.mrf.mxu0
  %v1732 = vadd.f32 0.0, %v1731
  %1733 = vmatmul.bf16.gmra.mxu0 %v1046
  %v1734 = vpop.f32.mrf.mxu0
  %v1735 = vadd.f32 0.0, %v1734
  %v1736 = vpop.f32.mrf.mxu0
  %v1737 = vadd.f32 0.0, %v1736
  %1738 = vmatmul.bf16.gmra.mxu0 %v1049
  %v1739 = vpop.f32.mrf.mxu0
  %v1740 = vadd.f32 0.0, %v1739
  %v1741 = vpop.f32.mrf.mxu0
  %v1742 = vadd.f32 0.0, %v1741
  %1743 = vmatmul.bf16.gmra.mxu0 %v1052
  %v1744 = vpop.f32.mrf.mxu0
  %v1745 = vadd.f32 0.0, %v1744
  %v1746 = vpop.f32.mrf.mxu0
  %v1747 = vadd.f32 0.0, %v1746
  %1748 = vmatmul.bf16.gmra.mxu0 %v1055
  %v1749 = vpop.f32.mrf.mxu0
  %v1750 = vadd.f32 0.0, %v1749
  %v1751 = vpop.f32.mrf.mxu0
  %v1752 = vadd.f32 0.0, %v1751
  %1753 = vmatmul.bf16.gmra.mxu0 %v1058
  %v1754 = vpop.f32.mrf.mxu0
  %v1755 = vadd.f32 0.0, %v1754
  %v1756 = vpop.f32.mrf.mxu0
  %v1757 = vadd.f32 0.0, %v1756
  %1758 = vmatmul.bf16.gmra.mxu0 %v1061
  %v1759 = vpop.f32.mrf.mxu0
  %v1760 = vadd.f32 0.0, %v1759
  %v1761 = vpop.f32.mrf.mxu0
  %v1762 = vadd.f32 0.0, %v1761
  %1763 = vmatmul.bf16.gmra.mxu0 %v1064
  %v1764 = vpop.f32.mrf.mxu0
  %v1765 = vadd.f32 0.0, %v1764
  %v1766 = vpop.f32.mrf.mxu0
  %v1767 = vadd.f32 0.0, %v1766
  %1768 = vmatmul.bf16.gmra.mxu0 %v1067
  %v1769 = vpop.f32.mrf.mxu0
  %v1770 = vadd.f32 0.0, %v1769
  %v1771 = vpop.f32.mrf.mxu0
  %v1772 = vadd.f32 0.0, %v1771
  %1773 = vmatmul.bf16.gmra.mxu0 %v1070
  %v1774 = vpop.f32.mrf.mxu0
  %v1775 = vadd.f32 0.0, %v1774
  %v1776 = vpop.f32.mrf.mxu0
  %v1777 = vadd.f32 0.0, %v1776
  %1778 = vmatmul.bf16.gmra.mxu0 %v1073
  %v1779 = vpop.f32.mrf.mxu0
  %v1780 = vadd.f32 0.0, %v1779
  %v1781 = vpop.f32.mrf.mxu0
  %v1782 = vadd.f32 0.0, %v1781
  %1783 = vmatmul.bf16.gmra.mxu0 %v1076
  %v1784 = vpop.f32.mrf.mxu0
  %v1785 = vadd.f32 0.0, %v1784
  %v1786 = vpop.f32.mrf.mxu0
  %v1787 = vadd.f32 0.0, %v1786
  %1788 = vmatmul.bf16.gmra.mxu0 %v1079
  %v1789 = vpop.f32.mrf.mxu0
  %v1790 = vadd.f32 0.0, %v1789
  %v1791 = vpop.f32.mrf.mxu0
  %v1792 = vadd.f32 0.0, %v1791
  %1793 = vmatmul.bf16.gmra.mxu0 %v1082
  %v1794 = vpop.f32.mrf.mxu0
  %v1795 = vadd.f32 0.0, %v1794
  %v1796 = vpop.f32.mrf.mxu0
  %v1797 = vadd.f32 0.0, %v1796
  %1798 = vmatmul.bf16.gmra.mxu0 %v1085
  %v1799 = vpop.f32.mrf.mxu0
  %v1800 = vadd.f32 0.0, %v1799
  %v1801 = vpop.f32.mrf.mxu0
  %v1802 = vadd.f32 0.0, %v1801
  %1803 = vmatmul.bf16.gmra.mxu0 %v1088
  %v1804 = vpop.f32.mrf.mxu0
  %v1805 = vadd.f32 0.0, %v1804
  %v1806 = vpop.f32.mrf.mxu0
  %v1807 = vadd.f32 0.0, %v1806
  %1808 = vmatmul.bf16.gmra.mxu0 %v1091
  %v1809 = vpop.f32.mrf.mxu0
  %v1810 = vadd.f32 0.0, %v1809
  %v1811 = vpop.f32.mrf.mxu0
  %v1812 = vadd.f32 0.0, %v1811
  %1813 = vmatmul.bf16.gmra.mxu0 %v1094
  %v1814 = vpop.f32.mrf.mxu0
  %v1815 = vadd.f32 0.0, %v1814
  %v1816 = vpop.f32.mrf.mxu0
  %v1817 = vadd.f32 0.0, %v1816
  %1818 = vmatmul.bf16.gmra.mxu0 %v1097
  %v1819 = vpop.f32.mrf.mxu0
  %v1820 = vadd.f32 0.0, %v1819
  %v1821 = vpop.f32.mrf.mxu0
  %v1822 = vadd.f32 0.0, %v1821
  %1823 = vmatmul.bf16.gmra.mxu0 %v1100
  %v1824 = vpop.f32.mrf.mxu0
  %v1825 = vadd.f32 0.0, %v1824
  %v1826 = vpop.f32.mrf.mxu0
  %v1827 = vadd.f32 0.0, %v1826
  %1828 = vmatmul.bf16.gmra.mxu0 %v1103
  %v1829 = vpop.f32.mrf.mxu0
  %v1830 = vadd.f32 0.0, %v1829
  %v1831 = vpop.f32.mrf.mxu0
  %v1832 = vadd.f32 0.0, %v1831
  %1833 = vmatmul.bf16.gmra.mxu0 %v1106
  %v1834 = vpop.f32.mrf.mxu0
  %v1835 = vadd.f32 0.0, %v1834
  %v1836 = vpop.f32.mrf.mxu0
  %v1837 = vadd.f32 0.0, %v1836
  %1838 = vmatmul.bf16.gmra.mxu0 %v1109
  %v1839 = vpop.f32.mrf.mxu0
  %v1840 = vadd.f32 0.0, %v1839
  %v1841 = vpop.f32.mrf.mxu0
  %v1842 = vadd.f32 0.0, %v1841
  %1843 = vmatmul.bf16.gmra.mxu0 %v1112
  %v1844 = vpop.f32.mrf.mxu0
  %v1845 = vadd.f32 0.0, %v1844
  %v1846 = vpop.f32.mrf.mxu0
  %v1847 = vadd.f32 0.0, %v1846
  %1848 = vmatmul.bf16.gmra.mxu0 %v1115
  %v1849 = vpop.f32.mrf.mxu0
  %v1850 = vadd.f32 0.0, %v1849
  %v1851 = vpop.f32.mrf.mxu0
  %v1852 = vadd.f32 0.0, %v1851
  %1853 = vmatmul.bf16.gmra.mxu0 %v1118
  %v1854 = vpop.f32.mrf.mxu0
  %v1855 = vadd.f32 0.0, %v1854
  %v1856 = vpop.f32.mrf.mxu0
  %v1857 = vadd.f32 0.0, %v1856
  %1858 = vmatmul.bf16.gmra.mxu0 %v1121
  %v1859 = vpop.f32.mrf.mxu0
  %v1860 = vadd.f32 0.0, %v1859
  %v1861 = vpop.f32.mrf.mxu0
  %v1862 = vadd.f32 0.0, %v1861
  %1863 = vmatmul.bf16.gmra.mxu0 %v1124
  %v1864 = vpop.f32.mrf.mxu0
  %v1865 = vadd.f32 0.0, %v1864
  %v1866 = vpop.f32.mrf.mxu0
  %v1867 = vadd.f32 0.0, %v1866
  %1868 = vmatmul.bf16.gmra.mxu0 %v1127
  %v1869 = vpop.f32.mrf.mxu0
  %v1870 = vadd.f32 0.0, %v1869
  %v1871 = vpop.f32.mrf.mxu0
  %v1872 = vadd.f32 0.0, %v1871
  %1873 = vmatmul.bf16.gmra.mxu0 %v1130
  %v1874 = vpop.f32.mrf.mxu0
  %v1875 = vadd.f32 0.0, %v1874
  %v1876 = vpop.f32.mrf.mxu0
  %v1877 = vadd.f32 0.0, %v1876
  %1878 = vmatmul.bf16.gmra.mxu0 %v1133
  %v1879 = vpop.f32.mrf.mxu0
  %v1880 = vadd.f32 0.0, %v1879
  %v1881 = vpop.f32.mrf.mxu0
  %v1882 = vadd.f32 0.0, %v1881
  %1883 = vmatmul.bf16.gmra.mxu0 %v1136
  %v1884 = vpop.f32.mrf.mxu0
  %v1885 = vadd.f32 0.0, %v1884
  %v1886 = vpop.f32.mrf.mxu0
  %v1887 = vadd.f32 0.0, %v1886
  %1888 = vmatmul.bf16.gmra.mxu0 %v1139
  %v1889 = vpop.f32.mrf.mxu0
  %v1890 = vadd.f32 0.0, %v1889
  %v1891 = vpop.f32.mrf.mxu0
  %v1892 = vadd.f32 0.0, %v1891
  %1893 = vmatmul.bf16.gmra.mxu0 %v1142
  %v1894 = vpop.f32.mrf.mxu0
  %v1895 = vadd.f32 0.0, %v1894
  %v1896 = vpop.f32.mrf.mxu0
  %v1897 = vadd.f32 0.0, %v1896
  %1898 = vmatmul.bf16.gmra.mxu0 %v1145
  %v1899 = vpop.f32.mrf.mxu0
  %v1900 = vadd.f32 0.0, %v1899
  %v1901 = vpop.f32.mrf.mxu0
  %v1902 = vadd.f32 0.0, %v1901
  %1903 = vmatmul.bf16.gmra.mxu0 %v1148
  %v1904 = vpop.f32.mrf.mxu0
  %v1905 = vadd.f32 0.0, %v1904
  %v1906 = vpop.f32.mrf.mxu0
  %v1907 = vadd.f32 0.0, %v1906
  %1908 = vdwg.mxu0
  %1909 = vmatpush.bf16.msra.mxu0 %v1366
  %1910 = vmatpush.bf16.msra.mxu0 %v1365
  %1911 = vmatpush.bf16.msra.mxu0 %v1364
  %1912 = vmatpush.bf16.msra.mxu0 %v1363
  %1913 = vmatpush.bf16.msra.mxu0 %v1362
  %1914 = vmatpush.bf16.msra.mxu0 %v1361
  %1915 = vmatpush.bf16.msra.mxu0 %v1360
  %1916 = vmatpush.bf16.msra.mxu0 %v1359
  %1917 = vmatmul.bf16.gmra.mxu0 %v960
  %v1918 = vpop.f32.mrf.mxu0
  %v1919 = vadd.f32 %v1590, %v1918
  %v1920 = vpop.f32.mrf.mxu0
  %v1921 = vadd.f32 %v1592, %v1920
  %1922 = vmatmul.bf16.gmra.mxu0 %v963
  %v1923 = vpop.f32.mrf.mxu0
  %v1924 = vadd.f32 %v1595, %v1923
  %v1925 = vpop.f32.mrf.mxu0
  %v1926 = vadd.f32 %v1597, %v1925
  %1927 = vmatmul.bf16.gmra.mxu0 %v966
  %v1928 = vpop.f32.mrf.mxu0
  %v1929 = vadd.f32 %v1600, %v1928
  %v1930 = vpop.f32.mrf.mxu0
  %v1931 = vadd.f32 %v1602, %v1930
  %1932 = vmatmul.bf16.gmra.mxu0 %v969
  %v1933 = vpop.f32.mrf.mxu0
  %v1934 = vadd.f32 %v1605, %v1933
  %v1935 = vpop.f32.mrf.mxu0
  %v1936 = vadd.f32 %v1607, %v1935
  %1937 = vmatmul.bf16.gmra.mxu0 %v972
  %v1938 = vpop.f32.mrf.mxu0
  %v1939 = vadd.f32 %v1610, %v1938
  %v1940 = vpop.f32.mrf.mxu0
  %v1941 = vadd.f32 %v1612, %v1940
  %1942 = vmatmul.bf16.gmra.mxu0 %v975
  %v1943 = vpop.f32.mrf.mxu0
  %v1944 = vadd.f32 %v1615, %v1943
  %v1945 = vpop.f32.mrf.mxu0
  %v1946 = vadd.f32 %v1617, %v1945
  %1947 = vmatmul.bf16.gmra.mxu0 %v978
  %v1948 = vpop.f32.mrf.mxu0
  %v1949 = vadd.f32 %v1620, %v1948
  %v1950 = vpop.f32.mrf.mxu0
  %v1951 = vadd.f32 %v1622, %v1950
  %1952 = vmatmul.bf16.gmra.mxu0 %v981
  %v1953 = vpop.f32.mrf.mxu0
  %v1954 = vadd.f32 %v1625, %v1953
  %v1955 = vpop.f32.mrf.mxu0
  %v1956 = vadd.f32 %v1627, %v1955
  %1957 = vmatmul.bf16.gmra.mxu0 %v984
  %v1958 = vpop.f32.mrf.mxu0
  %v1959 = vadd.f32 %v1630, %v1958
  %v1960 = vpop.f32.mrf.mxu0
  %v1961 = vadd.f32 %v1632, %v1960
  %1962 = vmatmul.bf16.gmra.mxu0 %v987
  %v1963 = vpop.f32.mrf.mxu0
  %v1964 = vadd.f32 %v1635, %v1963
  %v1965 = vpop.f32.mrf.mxu0
  %v1966 = vadd.f32 %v1637, %v1965
  %1967 = vmatmul.bf16.gmra.mxu0 %v990
  %v1968 = vpop.f32.mrf.mxu0
  %v1969 = vadd.f32 %v1640, %v1968
  %v1970 = vpop.f32.mrf.mxu0
  %v1971 = vadd.f32 %v1642, %v1970
  %1972 = vmatmul.bf16.gmra.mxu0 %v993
  %v1973 = vpop.f32.mrf.mxu0
  %v1974 = vadd.f32 %v1645, %v1973
  %v1975 = vpop.f32.mrf.mxu0
  %v1976 = vadd.f32 %v1647, %v1975
  %1977 = vmatmul.bf16.gmra.mxu0 %v996
  %v1978 = vpop.f32.mrf.mxu0
  %v1979 = vadd.f32 %v1650, %v1978
  %v1980 = vpop.f32.mrf.mxu0
  %v1981 = vadd.f32 %v1652, %v1980
  %1982 = vmatmul.bf16.gmra.mxu0 %v999
  %v1983 = vpop.f32.mrf.mxu0
  %v1984 = vadd.f32 %v1655, %v1983
  %v1985 = vpop.f32.mrf.mxu0
  %v1986 = vadd.f32 %v1657, %v1985
  %1987 = vmatmul.bf16.gmra.mxu0 %v1002
  %v1988 = vpop.f32.mrf.mxu0
  %v1989 = vadd.f32 %v1660, %v1988
  %v1990 = vpop.f32.mrf.mxu0
  %v1991 = vadd.f32 %v1662, %v1990
  %1992 = vmatmul.bf16.gmra.mxu0 %v1005
  %v1993 = vpop.f32.mrf.mxu0
  %v1994 = vadd.f32 %v1665, %v1993
  %v1995 = vpop.f32.mrf.mxu0
  %v1996 = vadd.f32 %v1667, %v1995
  %1997 = vmatmul.bf16.gmra.mxu0 %v1008
  %v1998 = vpop.f32.mrf.mxu0
  %v1999 = vadd.f32 %v1670, %v1998
  %v2000 = vpop.f32.mrf.mxu0
  %v2001 = vadd.f32 %v1672, %v2000
  %2002 = vmatmul.bf16.gmra.mxu0 %v1011
  %v2003 = vpop.f32.mrf.mxu0
  %v2004 = vadd.f32 %v1675, %v2003
  %v2005 = vpop.f32.mrf.mxu0
  %v2006 = vadd.f32 %v1677, %v2005
  %2007 = vmatmul.bf16.gmra.mxu0 %v1014
  %v2008 = vpop.f32.mrf.mxu0
  %v2009 = vadd.f32 %v1680, %v2008
  %v2010 = vpop.f32.mrf.mxu0
  %v2011 = vadd.f32 %v1682, %v2010
  %2012 = vmatmul.bf16.gmra.mxu0 %v1017
  %v2013 = vpop.f32.mrf.mxu0
  %v2014 = vadd.f32 %v1685, %v2013
  %v2015 = vpop.f32.mrf.mxu0
  %v2016 = vadd.f32 %v1687, %v2015
  %2017 = vmatmul.bf16.gmra.mxu0 %v1020
  %v2018 = vpop.f32.mrf.mxu0
  %v2019 = vadd.f32 %v1690, %v2018
  %v2020 = vpop.f32.mrf.mxu0
  %v2021 = vadd.f32 %v1692, %v2020
  %2022 = vmatmul.bf16.gmra.mxu0 %v1023
  %v2023 = vpop.f32.mrf.mxu0
  %v2024 = vadd.f32 %v1695, %v2023
  %v2025 = vpop.f32.mrf.mxu0
  %v2026 = vadd.f32 %v1697, %v2025
  %2027 = vmatmul.bf16.gmra.mxu0 %v1026
  %v2028 = vpop.f32.mrf.mxu0
  %v2029 = vadd.f32 %v1700, %v2028
  %v2030 = vpop.f32.mrf.mxu0
  %v2031 = vadd.f32 %v1702, %v2030
  %2032 = vmatmul.bf16.gmra.mxu0 %v1029
  %v2033 = vpop.f32.mrf.mxu0
  %v2034 = vadd.f32 %v1705, %v2033
  %v2035 = vpop.f32.mrf.mxu0
  %v2036 = vadd.f32 %v1707, %v2035
  %2037 = vmatmul.bf16.gmra.mxu0 %v1032
  %v2038 = vpop.f32.mrf.mxu0
  %v2039 = vadd.f32 %v1710, %v2038
  %v2040 = vpop.f32.mrf.mxu0
  %v2041 = vadd.f32 %v1712, %v2040
  %2042 = vmatmul.bf16.gmra.mxu0 %v1035
  %v2043 = vpop.f32.mrf.mxu0
  %v2044 = vadd.f32 %v1715, %v2043
  %v2045 = vpop.f32.mrf.mxu0
  %v2046 = vadd.f32 %v1717, %v2045
  %2047 = vmatmul.bf16.gmra.mxu0 %v1038
  %v2048 = vpop.f32.mrf.mxu0
  %v2049 = vadd.f32 %v1720, %v2048
  %v2050 = vpop.f32.mrf.mxu0
  %v2051 = vadd.f32 %v1722, %v2050
  %2052 = vmatmul.bf16.gmra.mxu0 %v1041
  %v2053 = vpop.f32.mrf.mxu0
  %v2054 = vadd.f32 %v1725, %v2053
  %v2055 = vpop.f32.mrf.mxu0
  %v2056 = vadd.f32 %v1727, %v2055
  %2057 = vmatmul.bf16.gmra.mxu0 %v1044
  %v2058 = vpop.f32.mrf.mxu0
  %v2059 = vadd.f32 %v1730, %v2058
  %v2060 = vpop.f32.mrf.mxu0
  %v2061 = vadd.f32 %v1732, %v2060
  %2062 = vmatmul.bf16.gmra.mxu0 %v1047
  %v2063 = vpop.f32.mrf.mxu0
  %v2064 = vadd.f32 %v1735, %v2063
  %v2065 = vpop.f32.mrf.mxu0
  %v2066 = vadd.f32 %v1737, %v2065
  %2067 = vmatmul.bf16.gmra.mxu0 %v1050
  %v2068 = vpop.f32.mrf.mxu0
  %v2069 = vadd.f32 %v1740, %v2068
  %v2070 = vpop.f32.mrf.mxu0
  %v2071 = vadd.f32 %v1742, %v2070
  %2072 = vmatmul.bf16.gmra.mxu0 %v1053
  %v2073 = vpop.f32.mrf.mxu0
  %v2074 = vadd.f32 %v1745, %v2073
  %v2075 = vpop.f32.mrf.mxu0
  %v2076 = vadd.f32 %v1747, %v2075
  %2077 = vmatmul.bf16.gmra.mxu0 %v1056
  %v2078 = vpop.f32.mrf.mxu0
  %v2079 = vadd.f32 %v1750, %v2078
  %v2080 = vpop.f32.mrf.mxu0
  %v2081 = vadd.f32 %v1752, %v2080
  %2082 = vmatmul.bf16.gmra.mxu0 %v1059
  %v2083 = vpop.f32.mrf.mxu0
  %v2084 = vadd.f32 %v1755, %v2083
  %v2085 = vpop.f32.mrf.mxu0
  %v2086 = vadd.f32 %v1757, %v2085
  %2087 = vmatmul.bf16.gmra.mxu0 %v1062
  %v2088 = vpop.f32.mrf.mxu0
  %v2089 = vadd.f32 %v1760, %v2088
  %v2090 = vpop.f32.mrf.mxu0
  %v2091 = vadd.f32 %v1762, %v2090
  %2092 = vmatmul.bf16.gmra.mxu0 %v1065
  %v2093 = vpop.f32.mrf.mxu0
  %v2094 = vadd.f32 %v1765, %v2093
  %v2095 = vpop.f32.mrf.mxu0
  %v2096 = vadd.f32 %v1767, %v2095
  %2097 = vmatmul.bf16.gmra.mxu0 %v1068
  %v2098 = vpop.f32.mrf.mxu0
  %v2099 = vadd.f32 %v1770, %v2098
  %v2100 = vpop.f32.mrf.mxu0
  %v2101 = vadd.f32 %v1772, %v2100
  %2102 = vmatmul.bf16.gmra.mxu0 %v1071
  %v2103 = vpop.f32.mrf.mxu0
  %v2104 = vadd.f32 %v1775, %v2103
  %v2105 = vpop.f32.mrf.mxu0
  %v2106 = vadd.f32 %v1777, %v2105
  %2107 = vmatmul.bf16.gmra.mxu0 %v1074
  %v2108 = vpop.f32.mrf.mxu0
  %v2109 = vadd.f32 %v1780, %v2108
  %v2110 = vpop.f32.mrf.mxu0
  %v2111 = vadd.f32 %v1782, %v2110
  %2112 = vmatmul.bf16.gmra.mxu0 %v1077
  %v2113 = vpop.f32.mrf.mxu0
  %v2114 = vadd.f32 %v1785, %v2113
  %v2115 = vpop.f32.mrf.mxu0
  %v2116 = vadd.f32 %v1787, %v2115
  %2117 = vmatmul.bf16.gmra.mxu0 %v1080
  %v2118 = vpop.f32.mrf.mxu0
  %v2119 = vadd.f32 %v1790, %v2118
  %v2120 = vpop.f32.mrf.mxu0
  %v2121 = vadd.f32 %v1792, %v2120
  %2122 = vmatmul.bf16.gmra.mxu0 %v1083
  %v2123 = vpop.f32.mrf.mxu0
  %v2124 = vadd.f32 %v1795, %v2123
  %v2125 = vpop.f32.mrf.mxu0
  %v2126 = vadd.f32 %v1797, %v2125
  %2127 = vmatmul.bf16.gmra.mxu0 %v1086
  %v2128 = vpop.f32.mrf.mxu0
  %v2129 = vadd.f32 %v1800, %v2128
  %v2130 = vpop.f32.mrf.mxu0
  %v2131 = vadd.f32 %v1802, %v2130
  %2132 = vmatmul.bf16.gmra.mxu0 %v1089
  %v2133 = vpop.f32.mrf.mxu0
  %v2134 = vadd.f32 %v1805, %v2133
  %v2135 = vpop.f32.mrf.mxu0
  %v2136 = vadd.f32 %v1807, %v2135
  %2137 = vmatmul.bf16.gmra.mxu0 %v1092
  %v2138 = vpop.f32.mrf.mxu0
  %v2139 = vadd.f32 %v1810, %v2138
  %v2140 = vpop.f32.mrf.mxu0
  %v2141 = vadd.f32 %v1812, %v2140
  %2142 = vmatmul.bf16.gmra.mxu0 %v1095
  %v2143 = vpop.f32.mrf.mxu0
  %v2144 = vadd.f32 %v1815, %v2143
  %v2145 = vpop.f32.mrf.mxu0
  %v2146 = vadd.f32 %v1817, %v2145
  %2147 = vmatmul.bf16.gmra.mxu0 %v1098
  %v2148 = vpop.f32.mrf.mxu0
  %v2149 = vadd.f32 %v1820, %v2148
  %v2150 = vpop.f32.mrf.mxu0
  %v2151 = vadd.f32 %v1822, %v2150
  %2152 = vmatmul.bf16.gmra.mxu0 %v1101
  %v2153 = vpop.f32.mrf.mxu0
  %v2154 = vadd.f32 %v1825, %v2153
  %v2155 = vpop.f32.mrf.mxu0
  %v2156 = vadd.f32 %v1827, %v2155
  %2157 = vmatmul.bf16.gmra.mxu0 %v1104
  %v2158 = vpop.f32.mrf.mxu0
  %v2159 = vadd.f32 %v1830, %v2158
  %v2160 = vpop.f32.mrf.mxu0
  %v2161 = vadd.f32 %v1832, %v2160
  %2162 = vmatmul.bf16.gmra.mxu0 %v1107
  %v2163 = vpop.f32.mrf.mxu0
  %v2164 = vadd.f32 %v1835, %v2163
  %v2165 = vpop.f32.mrf.mxu0
  %v2166 = vadd.f32 %v1837, %v2165
  %2167 = vmatmul.bf16.gmra.mxu0 %v1110
  %v2168 = vpop.f32.mrf.mxu0
  %v2169 = vadd.f32 %v1840, %v2168
  %v2170 = vpop.f32.mrf.mxu0
  %v2171 = vadd.f32 %v1842, %v2170
  %2172 = vmatmul.bf16.gmra.mxu0 %v1113
  %v2173 = vpop.f32.mrf.mxu0
  %v2174 = vadd.f32 %v1845, %v2173
  %v2175 = vpop.f32.mrf.mxu0
  %v2176 = vadd.f32 %v1847, %v2175
  %2177 = vmatmul.bf16.gmra.mxu0 %v1116
  %v2178 = vpop.f32.mrf.mxu0
  %v2179 = vadd.f32 %v1850, %v2178
  %v2180 = vpop.f32.mrf.mxu0
  %v2181 = vadd.f32 %v1852, %v2180
  %2182 = vmatmul.bf16.gmra.mxu0 %v1119
  %v2183 = vpop.f32.mrf.mxu0
  %v2184 = vadd.f32 %v1855, %v2183
  %v2185 = vpop.f32.mrf.mxu0
  %v2186 = vadd.f32 %v1857, %v2185
  %2187 = vmatmul.bf16.gmra.mxu0 %v1122
  %v2188 = vpop.f32.mrf.mxu0
  %v2189 = vadd.f32 %v1860, %v2188
  %v2190 = vpop.f32.mrf.mxu0
  %v2191 = vadd.f32 %v1862, %v2190
  %2192 = vmatmul.bf16.gmra.mxu0 %v1125
  %v2193 = vpop.f32.mrf.mxu0
  %v2194 = vadd.f32 %v1865, %v2193
  %v2195 = vpop.f32.mrf.mxu0
  %v2196 = vadd.f32 %v1867, %v2195
  %2197 = vmatmul.bf16.gmra.mxu0 %v1128
  %v2198 = vpop.f32.mrf.mxu0
  %v2199 = vadd.f32 %v1870, %v2198
  %v2200 = vpop.f32.mrf.mxu0
  %v2201 = vadd.f32 %v1872, %v2200
  %2202 = vmatmul.bf16.gmra.mxu0 %v1131
  %v2203 = vpop.f32.mrf.mxu0
  %v2204 = vadd.f32 %v1875, %v2203
  %v2205 = vpop.f32.mrf.mxu0
  %v2206 = vadd.f32 %v1877, %v2205
  %2207 = vmatmul.bf16.gmra.mxu0 %v1134
  %v2208 = vpop.f32.mrf.mxu0
  %v2209 = vadd.f32 %v1880, %v2208
  %v2210 = vpop.f32.mrf.mxu0
  %v2211 = vadd.f32 %v1882, %v2210
  %2212 = vmatmul.bf16.gmra.mxu0 %v1137
  %v2213 = vpop.f32.mrf.mxu0
  %v2214 = vadd.f32 %v1885, %v2213
  %v2215 = vpop.f32.mrf.mxu0
  %v2216 = vadd.f32 %v1887, %v2215
  %2217 = vmatmul.bf16.gmra.mxu0 %v1140
  %v2218 = vpop.f32.mrf.mxu0
  %v2219 = vadd.f32 %v1890, %v2218
  %v2220 = vpop.f32.mrf.mxu0
  %v2221 = vadd.f32 %v1892, %v2220
  %2222 = vmatmul.bf16.gmra.mxu0 %v1143
  %v2223 = vpop.f32.mrf.mxu0
  %v2224 = vadd.f32 %v1895, %v2223
  %v2225 = vpop.f32.mrf.mxu0
  %v2226 = vadd.f32 %v1897, %v2225
  %2227 = vmatmul.bf16.gmra.mxu0 %v1146
  %v2228 = vpop.f32.mrf.mxu0
  %v2229 = vadd.f32 %v1900, %v2228
  %v2230 = vpop.f32.mrf.mxu0
  %v2231 = vadd.f32 %v1902, %v2230
  %2232 = vmatmul.bf16.gmra.mxu0 %v1149
  %v2233 = vpop.f32.mrf.mxu0
  %v2234 = vadd.f32 %v1905, %v2233
  %v2235 = vpop.f32.mrf.mxu0
  %v2236 = vadd.f32 %v1907, %v2235
  %2237 = vdwg.mxu0
  %2238 = vmatpush.bf16.msra.mxu0 0
  %2239 = vmatpush.bf16.msra.mxu0 0
  %2240 = vmatpush.bf16.msra.mxu0 0
  %2241 = vmatpush.bf16.msra.mxu0 0
  %2242 = vmatpush.bf16.msra.mxu0 0
  %2243 = vmatpush.bf16.msra.mxu0 0
  %2244 = vmatpush.bf16.msra.mxu0 %v1368
  %2245 = vmatpush.bf16.msra.mxu0 %v1367
  %2246 = vmatmul.bf16.gmra.mxu0 %v1389
  %v2247 = vpop.f32.mrf.mxu0
  %v2248 = vadd.f32 %v1919, %v2247
  %v2249 = vpop.f32.mrf.mxu0
  %v2250 = vadd.f32 %v1921, %v2249
  %2251 = vmatmul.bf16.gmra.mxu0 %v1392
  %v2252 = vpop.f32.mrf.mxu0
  %v2253 = vadd.f32 %v1924, %v2252
  %v2254 = vpop.f32.mrf.mxu0
  %v2255 = vadd.f32 %v1926, %v2254
  %2256 = vmatmul.bf16.gmra.mxu0 %v1395
  %v2257 = vpop.f32.mrf.mxu0
  %v2258 = vadd.f32 %v1929, %v2257
  %v2259 = vpop.f32.mrf.mxu0
  %v2260 = vadd.f32 %v1931, %v2259
  %2261 = vmatmul.bf16.gmra.mxu0 %v1398
  %v2262 = vpop.f32.mrf.mxu0
  %v2263 = vadd.f32 %v1934, %v2262
  %v2264 = vpop.f32.mrf.mxu0
  %v2265 = vadd.f32 %v1936, %v2264
  %2266 = vmatmul.bf16.gmra.mxu0 %v1401
  %v2267 = vpop.f32.mrf.mxu0
  %v2268 = vadd.f32 %v1939, %v2267
  %v2269 = vpop.f32.mrf.mxu0
  %v2270 = vadd.f32 %v1941, %v2269
  %2271 = vmatmul.bf16.gmra.mxu0 %v1404
  %v2272 = vpop.f32.mrf.mxu0
  %v2273 = vadd.f32 %v1944, %v2272
  %v2274 = vpop.f32.mrf.mxu0
  %v2275 = vadd.f32 %v1946, %v2274
  %2276 = vmatmul.bf16.gmra.mxu0 %v1407
  %v2277 = vpop.f32.mrf.mxu0
  %v2278 = vadd.f32 %v1949, %v2277
  %v2279 = vpop.f32.mrf.mxu0
  %v2280 = vadd.f32 %v1951, %v2279
  %2281 = vmatmul.bf16.gmra.mxu0 %v1410
  %v2282 = vpop.f32.mrf.mxu0
  %v2283 = vadd.f32 %v1954, %v2282
  %v2284 = vpop.f32.mrf.mxu0
  %v2285 = vadd.f32 %v1956, %v2284
  %2286 = vmatmul.bf16.gmra.mxu0 %v1413
  %v2287 = vpop.f32.mrf.mxu0
  %v2288 = vadd.f32 %v1959, %v2287
  %v2289 = vpop.f32.mrf.mxu0
  %v2290 = vadd.f32 %v1961, %v2289
  %2291 = vmatmul.bf16.gmra.mxu0 %v1416
  %v2292 = vpop.f32.mrf.mxu0
  %v2293 = vadd.f32 %v1964, %v2292
  %v2294 = vpop.f32.mrf.mxu0
  %v2295 = vadd.f32 %v1966, %v2294
  %2296 = vmatmul.bf16.gmra.mxu0 %v1419
  %v2297 = vpop.f32.mrf.mxu0
  %v2298 = vadd.f32 %v1969, %v2297
  %v2299 = vpop.f32.mrf.mxu0
  %v2300 = vadd.f32 %v1971, %v2299
  %2301 = vmatmul.bf16.gmra.mxu0 %v1422
  %v2302 = vpop.f32.mrf.mxu0
  %v2303 = vadd.f32 %v1974, %v2302
  %v2304 = vpop.f32.mrf.mxu0
  %v2305 = vadd.f32 %v1976, %v2304
  %2306 = vmatmul.bf16.gmra.mxu0 %v1425
  %v2307 = vpop.f32.mrf.mxu0
  %v2308 = vadd.f32 %v1979, %v2307
  %v2309 = vpop.f32.mrf.mxu0
  %v2310 = vadd.f32 %v1981, %v2309
  %2311 = vmatmul.bf16.gmra.mxu0 %v1428
  %v2312 = vpop.f32.mrf.mxu0
  %v2313 = vadd.f32 %v1984, %v2312
  %v2314 = vpop.f32.mrf.mxu0
  %v2315 = vadd.f32 %v1986, %v2314
  %2316 = vmatmul.bf16.gmra.mxu0 %v1431
  %v2317 = vpop.f32.mrf.mxu0
  %v2318 = vadd.f32 %v1989, %v2317
  %v2319 = vpop.f32.mrf.mxu0
  %v2320 = vadd.f32 %v1991, %v2319
  %2321 = vmatmul.bf16.gmra.mxu0 %v1434
  %v2322 = vpop.f32.mrf.mxu0
  %v2323 = vadd.f32 %v1994, %v2322
  %v2324 = vpop.f32.mrf.mxu0
  %v2325 = vadd.f32 %v1996, %v2324
  %2326 = vmatmul.bf16.gmra.mxu0 %v1437
  %v2327 = vpop.f32.mrf.mxu0
  %v2328 = vadd.f32 %v1999, %v2327
  %v2329 = vpop.f32.mrf.mxu0
  %v2330 = vadd.f32 %v2001, %v2329
  %2331 = vmatmul.bf16.gmra.mxu0 %v1440
  %v2332 = vpop.f32.mrf.mxu0
  %v2333 = vadd.f32 %v2004, %v2332
  %v2334 = vpop.f32.mrf.mxu0
  %v2335 = vadd.f32 %v2006, %v2334
  %2336 = vmatmul.bf16.gmra.mxu0 %v1443
  %v2337 = vpop.f32.mrf.mxu0
  %v2338 = vadd.f32 %v2009, %v2337
  %v2339 = vpop.f32.mrf.mxu0
  %v2340 = vadd.f32 %v2011, %v2339
  %2341 = vmatmul.bf16.gmra.mxu0 %v1446
  %v2342 = vpop.f32.mrf.mxu0
  %v2343 = vadd.f32 %v2014, %v2342
  %v2344 = vpop.f32.mrf.mxu0
  %v2345 = vadd.f32 %v2016, %v2344
  %2346 = vmatmul.bf16.gmra.mxu0 %v1449
  %v2347 = vpop.f32.mrf.mxu0
  %v2348 = vadd.f32 %v2019, %v2347
  %v2349 = vpop.f32.mrf.mxu0
  %v2350 = vadd.f32 %v2021, %v2349
  %2351 = vmatmul.bf16.gmra.mxu0 %v1452
  %v2352 = vpop.f32.mrf.mxu0
  %v2353 = vadd.f32 %v2024, %v2352
  %v2354 = vpop.f32.mrf.mxu0
  %v2355 = vadd.f32 %v2026, %v2354
  %2356 = vmatmul.bf16.gmra.mxu0 %v1455
  %v2357 = vpop.f32.mrf.mxu0
  %v2358 = vadd.f32 %v2029, %v2357
  %v2359 = vpop.f32.mrf.mxu0
  %v2360 = vadd.f32 %v2031, %v2359
  %2361 = vmatmul.bf16.gmra.mxu0 %v1458
  %v2362 = vpop.f32.mrf.mxu0
  %v2363 = vadd.f32 %v2034, %v2362
  %v2364 = vpop.f32.mrf.mxu0
  %v2365 = vadd.f32 %v2036, %v2364
  %2366 = vmatmul.bf16.gmra.mxu0 %v1461
  %v2367 = vpop.f32.mrf.mxu0
  %v2368 = vadd.f32 %v2039, %v2367
  %v2369 = vpop.f32.mrf.mxu0
  %v2370 = vadd.f32 %v2041, %v2369
  %2371 = vmatmul.bf16.gmra.mxu0 %v1464
  %v2372 = vpop.f32.mrf.mxu0
  %v2373 = vadd.f32 %v2044, %v2372
  %v2374 = vpop.f32.mrf.mxu0
  %v2375 = vadd.f32 %v2046, %v2374
  %2376 = vmatmul.bf16.gmra.mxu0 %v1467
  %v2377 = vpop.f32.mrf.mxu0
  %v2378 = vadd.f32 %v2049, %v2377
  %v2379 = vpop.f32.mrf.mxu0
  %v2380 = vadd.f32 %v2051, %v2379
  %2381 = vmatmul.bf16.gmra.mxu0 %v1470
  %v2382 = vpop.f32.mrf.mxu0
  %v2383 = vadd.f32 %v2054, %v2382
  %v2384 = vpop.f32.mrf.mxu0
  %v2385 = vadd.f32 %v2056, %v2384
  %2386 = vmatmul.bf16.gmra.mxu0 %v1473
  %v2387 = vpop.f32.mrf.mxu0
  %v2388 = vadd.f32 %v2059, %v2387
  %v2389 = vpop.f32.mrf.mxu0
  %v2390 = vadd.f32 %v2061, %v2389
  %2391 = vmatmul.bf16.gmra.mxu0 %v1476
  %v2392 = vpop.f32.mrf.mxu0
  %v2393 = vadd.f32 %v2064, %v2392
  %v2394 = vpop.f32.mrf.mxu0
  %v2395 = vadd.f32 %v2066, %v2394
  %2396 = vmatmul.bf16.gmra.mxu0 %v1479
  %v2397 = vpop.f32.mrf.mxu0
  %v2398 = vadd.f32 %v2069, %v2397
  %v2399 = vpop.f32.mrf.mxu0
  %v2400 = vadd.f32 %v2071, %v2399
  %2401 = vmatmul.bf16.gmra.mxu0 %v1482
  %v2402 = vpop.f32.mrf.mxu0
  %v2403 = vadd.f32 %v2074, %v2402
  %v2404 = vpop.f32.mrf.mxu0
  %v2405 = vadd.f32 %v2076, %v2404
  %2406 = vmatmul.bf16.gmra.mxu0 %v1485
  %v2407 = vpop.f32.mrf.mxu0
  %v2408 = vadd.f32 %v2079, %v2407
  %v2409 = vpop.f32.mrf.mxu0
  %v2410 = vadd.f32 %v2081, %v2409
  %2411 = vmatmul.bf16.gmra.mxu0 %v1488
  %v2412 = vpop.f32.mrf.mxu0
  %v2413 = vadd.f32 %v2084, %v2412
  %v2414 = vpop.f32.mrf.mxu0
  %v2415 = vadd.f32 %v2086, %v2414
  %2416 = vmatmul.bf16.gmra.mxu0 %v1491
  %v2417 = vpop.f32.mrf.mxu0
  %v2418 = vadd.f32 %v2089, %v2417
  %v2419 = vpop.f32.mrf.mxu0
  %v2420 = vadd.f32 %v2091, %v2419
  %2421 = vmatmul.bf16.gmra.mxu0 %v1494
  %v2422 = vpop.f32.mrf.mxu0
  %v2423 = vadd.f32 %v2094, %v2422
  %v2424 = vpop.f32.mrf.mxu0
  %v2425 = vadd.f32 %v2096, %v2424
  %2426 = vmatmul.bf16.gmra.mxu0 %v1497
  %v2427 = vpop.f32.mrf.mxu0
  %v2428 = vadd.f32 %v2099, %v2427
  %v2429 = vpop.f32.mrf.mxu0
  %v2430 = vadd.f32 %v2101, %v2429
  %2431 = vmatmul.bf16.gmra.mxu0 %v1500
  %v2432 = vpop.f32.mrf.mxu0
  %v2433 = vadd.f32 %v2104, %v2432
  %v2434 = vpop.f32.mrf.mxu0
  %v2435 = vadd.f32 %v2106, %v2434
  %2436 = vmatmul.bf16.gmra.mxu0 %v1503
  %v2437 = vpop.f32.mrf.mxu0
  %v2438 = vadd.f32 %v2109, %v2437
  %v2439 = vpop.f32.mrf.mxu0
  %v2440 = vadd.f32 %v2111, %v2439
  %2441 = vmatmul.bf16.gmra.mxu0 %v1506
  %v2442 = vpop.f32.mrf.mxu0
  %v2443 = vadd.f32 %v2114, %v2442
  %v2444 = vpop.f32.mrf.mxu0
  %v2445 = vadd.f32 %v2116, %v2444
  %2446 = vmatmul.bf16.gmra.mxu0 %v1509
  %v2447 = vpop.f32.mrf.mxu0
  %v2448 = vadd.f32 %v2119, %v2447
  %v2449 = vpop.f32.mrf.mxu0
  %v2450 = vadd.f32 %v2121, %v2449
  %2451 = vmatmul.bf16.gmra.mxu0 %v1512
  %v2452 = vpop.f32.mrf.mxu0
  %v2453 = vadd.f32 %v2124, %v2452
  %v2454 = vpop.f32.mrf.mxu0
  %v2455 = vadd.f32 %v2126, %v2454
  %2456 = vmatmul.bf16.gmra.mxu0 %v1515
  %v2457 = vpop.f32.mrf.mxu0
  %v2458 = vadd.f32 %v2129, %v2457
  %v2459 = vpop.f32.mrf.mxu0
  %v2460 = vadd.f32 %v2131, %v2459
  %2461 = vmatmul.bf16.gmra.mxu0 %v1518
  %v2462 = vpop.f32.mrf.mxu0
  %v2463 = vadd.f32 %v2134, %v2462
  %v2464 = vpop.f32.mrf.mxu0
  %v2465 = vadd.f32 %v2136, %v2464
  %2466 = vmatmul.bf16.gmra.mxu0 %v1521
  %v2467 = vpop.f32.mrf.mxu0
  %v2468 = vadd.f32 %v2139, %v2467
  %v2469 = vpop.f32.mrf.mxu0
  %v2470 = vadd.f32 %v2141, %v2469
  %2471 = vmatmul.bf16.gmra.mxu0 %v1524
  %v2472 = vpop.f32.mrf.mxu0
  %v2473 = vadd.f32 %v2144, %v2472
  %v2474 = vpop.f32.mrf.mxu0
  %v2475 = vadd.f32 %v2146, %v2474
  %2476 = vmatmul.bf16.gmra.mxu0 %v1527
  %v2477 = vpop.f32.mrf.mxu0
  %v2478 = vadd.f32 %v2149, %v2477
  %v2479 = vpop.f32.mrf.mxu0
  %v2480 = vadd.f32 %v2151, %v2479
  %2481 = vmatmul.bf16.gmra.mxu0 %v1530
  %v2482 = vpop.f32.mrf.mxu0
  %v2483 = vadd.f32 %v2154, %v2482
  %v2484 = vpop.f32.mrf.mxu0
  %v2485 = vadd.f32 %v2156, %v2484
  %2486 = vmatmul.bf16.gmra.mxu0 %v1533
  %v2487 = vpop.f32.mrf.mxu0
  %v2488 = vadd.f32 %v2159, %v2487
  %v2489 = vpop.f32.mrf.mxu0
  %v2490 = vadd.f32 %v2161, %v2489
  %2491 = vmatmul.bf16.gmra.mxu0 %v1536
  %v2492 = vpop.f32.mrf.mxu0
  %v2493 = vadd.f32 %v2164, %v2492
  %v2494 = vpop.f32.mrf.mxu0
  %v2495 = vadd.f32 %v2166, %v2494
  %2496 = vmatmul.bf16.gmra.mxu0 %v1539
  %v2497 = vpop.f32.mrf.mxu0
  %v2498 = vadd.f32 %v2169, %v2497
  %v2499 = vpop.f32.mrf.mxu0
  %v2500 = vadd.f32 %v2171, %v2499
  %2501 = vmatmul.bf16.gmra.mxu0 %v1542
  %v2502 = vpop.f32.mrf.mxu0
  %v2503 = vadd.f32 %v2174, %v2502
  %v2504 = vpop.f32.mrf.mxu0
  %v2505 = vadd.f32 %v2176, %v2504
  %2506 = vmatmul.bf16.gmra.mxu0 %v1545
  %v2507 = vpop.f32.mrf.mxu0
  %v2508 = vadd.f32 %v2179, %v2507
  %v2509 = vpop.f32.mrf.mxu0
  %v2510 = vadd.f32 %v2181, %v2509
  %2511 = vmatmul.bf16.gmra.mxu0 %v1548
  %v2512 = vpop.f32.mrf.mxu0
  %v2513 = vadd.f32 %v2184, %v2512
  %v2514 = vpop.f32.mrf.mxu0
  %v2515 = vadd.f32 %v2186, %v2514
  %2516 = vmatmul.bf16.gmra.mxu0 %v1551
  %v2517 = vpop.f32.mrf.mxu0
  %v2518 = vadd.f32 %v2189, %v2517
  %v2519 = vpop.f32.mrf.mxu0
  %v2520 = vadd.f32 %v2191, %v2519
  %2521 = vmatmul.bf16.gmra.mxu0 %v1554
  %v2522 = vpop.f32.mrf.mxu0
  %v2523 = vadd.f32 %v2194, %v2522
  %v2524 = vpop.f32.mrf.mxu0
  %v2525 = vadd.f32 %v2196, %v2524
  %2526 = vmatmul.bf16.gmra.mxu0 %v1557
  %v2527 = vpop.f32.mrf.mxu0
  %v2528 = vadd.f32 %v2199, %v2527
  %v2529 = vpop.f32.mrf.mxu0
  %v2530 = vadd.f32 %v2201, %v2529
  %2531 = vmatmul.bf16.gmra.mxu0 %v1560
  %v2532 = vpop.f32.mrf.mxu0
  %v2533 = vadd.f32 %v2204, %v2532
  %v2534 = vpop.f32.mrf.mxu0
  %v2535 = vadd.f32 %v2206, %v2534
  %2536 = vmatmul.bf16.gmra.mxu0 %v1563
  %v2537 = vpop.f32.mrf.mxu0
  %v2538 = vadd.f32 %v2209, %v2537
  %v2539 = vpop.f32.mrf.mxu0
  %v2540 = vadd.f32 %v2211, %v2539
  %2541 = vmatmul.bf16.gmra.mxu0 %v1566
  %v2542 = vpop.f32.mrf.mxu0
  %v2543 = vadd.f32 %v2214, %v2542
  %v2544 = vpop.f32.mrf.mxu0
  %v2545 = vadd.f32 %v2216, %v2544
  %2546 = vmatmul.bf16.gmra.mxu0 %v1569
  %v2547 = vpop.f32.mrf.mxu0
  %v2548 = vadd.f32 %v2219, %v2547
  %v2549 = vpop.f32.mrf.mxu0
  %v2550 = vadd.f32 %v2221, %v2549
  %2551 = vmatmul.bf16.gmra.mxu0 %v1572
  %v2552 = vpop.f32.mrf.mxu0
  %v2553 = vadd.f32 %v2224, %v2552
  %v2554 = vpop.f32.mrf.mxu0
  %v2555 = vadd.f32 %v2226, %v2554
  %2556 = vmatmul.bf16.gmra.mxu0 %v1575
  %v2557 = vpop.f32.mrf.mxu0
  %v2558 = vadd.f32 %v2229, %v2557
  %v2559 = vpop.f32.mrf.mxu0
  %v2560 = vadd.f32 %v2231, %v2559
  %2561 = vmatmul.bf16.gmra.mxu0 %v1578
  %v2562 = vpop.f32.mrf.mxu0
  %v2563 = vadd.f32 %v2234, %v2562
  %v2564 = vpop.f32.mrf.mxu0
  %v2565 = vadd.f32 %v2236, %v2564
  %2566 = vdwg.mxu0
  %v2567 = vmax.f32 %v2248, %v2328
  %v2568 = vmax.f32 %v2250, %v2330
  %v2569 = vmax.f32 %v2253, %v2333
  %v2570 = vmax.f32 %v2255, %v2335
  %v2571 = vmax.f32 %v2258, %v2338
  %v2572 = vmax.f32 %v2260, %v2340
  %v2573 = vmax.f32 %v2263, %v2343
  %v2574 = vmax.f32 %v2265, %v2345
  %v2575 = vmax.f32 %v2268, %v2348
  %v2576 = vmax.f32 %v2270, %v2350
  %v2577 = vmax.f32 %v2273, %v2353
  %v2578 = vmax.f32 %v2275, %v2355
  %v2579 = vmax.f32 %v2278, %v2358
  %v2580 = vmax.f32 %v2280, %v2360
  %v2581 = vmax.f32 %v2283, %v2363
  %v2582 = vmax.f32 %v2285, %v2365
  %v2583 = vmax.f32 %v2288, %v2368
  %v2584 = vmax.f32 %v2290, %v2370
  %v2585 = vmax.f32 %v2293, %v2373
  %v2586 = vmax.f32 %v2295, %v2375
  %v2587 = vmax.f32 %v2298, %v2378
  %v2588 = vmax.f32 %v2300, %v2380
  %v2589 = vmax.f32 %v2303, %v2383
  %v2590 = vmax.f32 %v2305, %v2385
  %v2591 = vmax.f32 %v2308, %v2388
  %v2592 = vmax.f32 %v2310, %v2390
  %v2593 = vmax.f32 %v2313, %v2393
  %v2594 = vmax.f32 %v2315, %v2395
  %v2595 = vmax.f32 %v2318, %v2398
  %v2596 = vmax.f32 %v2320, %v2400
  %v2597 = vmax.f32 %v2323, %v2403
  %v2598 = vmax.f32 %v2325, %v2405
  %v2599 = vmax.f32 %v2408, %v2488
  %v2600 = vmax.f32 %v2410, %v2490
  %v2601 = vmax.f32 %v2413, %v2493
  %v2602 = vmax.f32 %v2415, %v2495
  %v2603 = vmax.f32 %v2418, %v2498
  %v2604 = vmax.f32 %v2420, %v2500
  %v2605 = vmax.f32 %v2423, %v2503
  %v2606 = vmax.f32 %v2425, %v2505
  %v2607 = vmax.f32 %v2428, %v2508
  %v2608 = vmax.f32 %v2430, %v2510
  %v2609 = vmax.f32 %v2433, %v2513
  %v2610 = vmax.f32 %v2435, %v2515
  %v2611 = vmax.f32 %v2438, %v2518
  %v2612 = vmax.f32 %v2440, %v2520
  %v2613 = vmax.f32 %v2443, %v2523
  %v2614 = vmax.f32 %v2445, %v2525
  %v2615 = vmax.f32 %v2448, %v2528
  %v2616 = vmax.f32 %v2450, %v2530
  %v2617 = vmax.f32 %v2453, %v2533
  %v2618 = vmax.f32 %v2455, %v2535
  %v2619 = vmax.f32 %v2458, %v2538
  %v2620 = vmax.f32 %v2460, %v2540
  %v2621 = vmax.f32 %v2463, %v2543
  %v2622 = vmax.f32 %v2465, %v2545
  %v2623 = vmax.f32 %v2468, %v2548
  %v2624 = vmax.f32 %v2470, %v2550
  %v2625 = vmax.f32 %v2473, %v2553
  %v2626 = vmax.f32 %v2475, %v2555
  %v2627 = vmax.f32 %v2478, %v2558
  %v2628 = vmax.f32 %v2480, %v2560
  %v2629 = vmax.f32 %v2483, %v2563
  %v2630 = vmax.f32 %v2485, %v2565
  %v2631 = vmax.f32 %v2567, %v2599
  %v2632 = vmax.f32 %v2568, %v2600
  %v2633 = vmax.f32 %v2569, %v2601
  %v2634 = vmax.f32 %v2570, %v2602
  %v2635 = vmax.f32 %v2571, %v2603
  %v2636 = vmax.f32 %v2572, %v2604
  %v2637 = vmax.f32 %v2573, %v2605
  %v2638 = vmax.f32 %v2574, %v2606
  %v2639 = vmax.f32 %v2575, %v2607
  %v2640 = vmax.f32 %v2576, %v2608
  %v2641 = vmax.f32 %v2577, %v2609
  %v2642 = vmax.f32 %v2578, %v2610
  %v2643 = vmax.f32 %v2579, %v2611
  %v2644 = vmax.f32 %v2580, %v2612
  %v2645 = vmax.f32 %v2581, %v2613
  %v2646 = vmax.f32 %v2582, %v2614
  %v2647 = vmax.f32 %v2583, %v2615
  %v2648 = vmax.f32 %v2584, %v2616
  %v2649 = vmax.f32 %v2585, %v2617
  %v2650 = vmax.f32 %v2586, %v2618
  %v2651 = vmax.f32 %v2587, %v2619
  %v2652 = vmax.f32 %v2588, %v2620
  %v2653 = vmax.f32 %v2589, %v2621
  %v2654 = vmax.f32 %v2590, %v2622
  %v2655 = vmax.f32 %v2591, %v2623
  %v2656 = vmax.f32 %v2592, %v2624
  %v2657 = vmax.f32 %v2593, %v2625
  %v2658 = vmax.f32 %v2594, %v2626
  %v2659 = vmax.f32 %v2595, %v2627
  %v2660 = vmax.f32 %v2596, %v2628
  %v2661 = vmax.f32 %v2597, %v2629
  %v2662 = vmax.f32 %v2598, %v2630
  %v2663 = vld [vmem:[%s2] sm:$0x1]
  %v2665 = vperm.slane %v2663, 0
  %v2667 = vadd.f32 %v2631, %v2665
  %v2668 = vadd.f32 %v2632, %v2665
  %v2669 = vadd.f32 %v2633, %v2665
  %v2670 = vadd.f32 %v2634, %v2665
  %v2671 = vadd.f32 %v2635, %v2665
  %v2672 = vadd.f32 %v2636, %v2665
  %v2673 = vadd.f32 %v2637, %v2665
  %v2674 = vadd.f32 %v2638, %v2665
  %v2675 = vadd.f32 %v2639, %v2665
  %v2676 = vadd.f32 %v2640, %v2665
  %v2677 = vadd.f32 %v2641, %v2665
  %v2678 = vadd.f32 %v2642, %v2665
  %v2679 = vadd.f32 %v2643, %v2665
  %v2680 = vadd.f32 %v2644, %v2665
  %v2681 = vadd.f32 %v2645, %v2665
  %v2682 = vadd.f32 %v2646, %v2665
  %v2683 = vadd.f32 %v2647, %v2665
  %v2684 = vadd.f32 %v2648, %v2665
  %v2685 = vadd.f32 %v2649, %v2665
  %v2686 = vadd.f32 %v2650, %v2665
  %v2687 = vadd.f32 %v2651, %v2665
  %v2688 = vadd.f32 %v2652, %v2665
  %v2689 = vadd.f32 %v2653, %v2665
  %v2690 = vadd.f32 %v2654, %v2665
  %v2691 = vadd.f32 %v2655, %v2665
  %v2692 = vadd.f32 %v2656, %v2665
  %v2693 = vadd.f32 %v2657, %v2665
  %v2694 = vadd.f32 %v2658, %v2665
  %v2695 = vadd.f32 %v2659, %v2665
  %v2696 = vadd.f32 %v2660, %v2665
  %v2697 = vadd.f32 %v2661, %v2665
  %v2698 = vadd.f32 %v2662, %v2665
  %v2699 = vmax.f32 %v2667, 0.0
  %v2700 = vmax.f32 %v2668, 0.0
  %v2701 = vmax.f32 %v2669, 0.0
  %v2702 = vmax.f32 %v2670, 0.0
  %v2703 = vmax.f32 %v2671, 0.0
  %v2704 = vmax.f32 %v2672, 0.0
  %v2705 = vmax.f32 %v2673, 0.0
  %v2706 = vmax.f32 %v2674, 0.0
  %v2707 = vmax.f32 %v2675, 0.0
  %v2708 = vmax.f32 %v2676, 0.0
  %v2709 = vmax.f32 %v2677, 0.0
  %v2710 = vmax.f32 %v2678, 0.0
  %v2711 = vmax.f32 %v2679, 0.0
  %v2712 = vmax.f32 %v2680, 0.0
  %v2713 = vmax.f32 %v2681, 0.0
  %v2714 = vmax.f32 %v2682, 0.0
  %v2715 = vmax.f32 %v2683, 0.0
  %v2716 = vmax.f32 %v2684, 0.0
  %v2717 = vmax.f32 %v2685, 0.0
  %v2718 = vmax.f32 %v2686, 0.0
  %v2719 = vmax.f32 %v2687, 0.0
  %v2720 = vmax.f32 %v2688, 0.0
  %v2721 = vmax.f32 %v2689, 0.0
  %v2722 = vmax.f32 %v2690, 0.0
  %v2723 = vmax.f32 %v2691, 0.0
  %v2724 = vmax.f32 %v2692, 0.0
  %v2725 = vmax.f32 %v2693, 0.0
  %v2726 = vmax.f32 %v2694, 0.0
  %v2727 = vmax.f32 %v2695, 0.0
  %v2728 = vmax.f32 %v2696, 0.0
  %v2729 = vmax.f32 %v2697, 0.0
  %v2730 = vmax.f32 %v2698, 0.0
  %v2731 = vld [vmem:[%s3] sm:$0xff]
  %v2732 = vld [vmem:[%s3 + $0x8] sm:$0xff]
  %v2733 = vmul.f32 %v2699, %v2731
  %v2734 = vmul.f32 %v2700, %v2732
  %v2735 = vmul.f32 %v2701, %v2731
  %v2736 = vmul.f32 %v2702, %v2732
  %v2737 = vmul.f32 %v2703, %v2731
  %v2738 = vmul.f32 %v2704, %v2732
  %v2739 = vmul.f32 %v2705, %v2731
  %v2740 = vmul.f32 %v2706, %v2732
  %v2741 = vmul.f32 %v2707, %v2731
  %v2742 = vmul.f32 %v2708, %v2732
  %v2743 = vmul.f32 %v2709, %v2731
  %v2744 = vmul.f32 %v2710, %v2732
  %v2745 = vmul.f32 %v2711, %v2731
  %v2746 = vmul.f32 %v2712, %v2732
  %v2747 = vmul.f32 %v2713, %v2731
  %v2748 = vmul.f32 %v2714, %v2732
  %v2749 = vmul.f32 %v2715, %v2731
  %v2750 = vmul.f32 %v2716, %v2732
  %v2751 = vmul.f32 %v2717, %v2731
  %v2752 = vmul.f32 %v2718, %v2732
  %v2753 = vmul.f32 %v2719, %v2731
  %v2754 = vmul.f32 %v2720, %v2732
  %v2755 = vmul.f32 %v2721, %v2731
  %v2756 = vmul.f32 %v2722, %v2732
  %v2757 = vmul.f32 %v2723, %v2731
  %v2758 = vmul.f32 %v2724, %v2732
  %v2759 = vmul.f32 %v2725, %v2731
  %v2760 = vmul.f32 %v2726, %v2732
  %v2761 = vmul.f32 %v2727, %v2731
  %v2762 = vmul.f32 %v2728, %v2732
  %v2763 = vmul.f32 %v2729, %v2731
  %v2764 = vmul.f32 %v2730, %v2732
  %v2765 = vld [vmem:[%s4] sm:$0xff]
  %v2766 = vld [vmem:[%s4 + $0x8] sm:$0xff]
  %v2767 = vadd.f32 %v2733, %v2765
  %v2768 = vadd.f32 %v2734, %v2766
  %v2769 = vadd.f32 %v2735, %v2765
  %v2770 = vadd.f32 %v2736, %v2766
  %v2771 = vadd.f32 %v2737, %v2765
  %v2772 = vadd.f32 %v2738, %v2766
  %v2773 = vadd.f32 %v2739, %v2765
  %v2774 = vadd.f32 %v2740, %v2766
  %v2775 = vadd.f32 %v2741, %v2765
  %v2776 = vadd.f32 %v2742, %v2766
  %v2777 = vadd.f32 %v2743, %v2765
  %v2778 = vadd.f32 %v2744, %v2766
  %v2779 = vadd.f32 %v2745, %v2765
  %v2780 = vadd.f32 %v2746, %v2766
  %v2781 = vadd.f32 %v2747, %v2765
  %v2782 = vadd.f32 %v2748, %v2766
  %v2783 = vadd.f32 %v2749, %v2765
  %v2784 = vadd.f32 %v2750, %v2766
  %v2785 = vadd.f32 %v2751, %v2765
  %v2786 = vadd.f32 %v2752, %v2766
  %v2787 = vadd.f32 %v2753, %v2765
  %v2788 = vadd.f32 %v2754, %v2766
  %v2789 = vadd.f32 %v2755, %v2765
  %v2790 = vadd.f32 %v2756, %v2766
  %v2791 = vadd.f32 %v2757, %v2765
  %v2792 = vadd.f32 %v2758, %v2766
  %v2793 = vadd.f32 %v2759, %v2765
  %v2794 = vadd.f32 %v2760, %v2766
  %v2795 = vadd.f32 %v2761, %v2765
  %v2796 = vadd.f32 %v2762, %v2766
  %v2797 = vadd.f32 %v2763, %v2765
  %v2798 = vadd.f32 %v2764, %v2766
  %v2799 = vmax.f32 %v2767, 0.0
  %v2800 = vmax.f32 %v2768, 0.0
  %v2801 = vmax.f32 %v2769, 0.0
  %v2802 = vmax.f32 %v2770, 0.0
  %v2803 = vmax.f32 %v2771, 0.0
  %v2804 = vmax.f32 %v2772, 0.0
  %v2805 = vmax.f32 %v2773, 0.0
  %v2806 = vmax.f32 %v2774, 0.0
  %v2807 = vmax.f32 %v2775, 0.0
  %v2808 = vmax.f32 %v2776, 0.0
  %v2809 = vmax.f32 %v2777, 0.0
  %v2810 = vmax.f32 %v2778, 0.0
  %v2811 = vmax.f32 %v2779, 0.0
  %v2812 = vmax.f32 %v2780, 0.0
  %v2813 = vmax.f32 %v2781, 0.0
  %v2814 = vmax.f32 %v2782, 0.0
  %v2815 = vmax.f32 %v2783, 0.0
  %v2816 = vmax.f32 %v2784, 0.0
  %v2817 = vmax.f32 %v2785, 0.0
  %v2818 = vmax.f32 %v2786, 0.0
  %v2819 = vmax.f32 %v2787, 0.0
  %v2820 = vmax.f32 %v2788, 0.0
  %v2821 = vmax.f32 %v2789, 0.0
  %v2822 = vmax.f32 %v2790, 0.0
  %v2823 = vmax.f32 %v2791, 0.0
  %v2824 = vmax.f32 %v2792, 0.0
  %v2825 = vmax.f32 %v2793, 0.0
  %v2826 = vmax.f32 %v2794, 0.0
  %v2827 = vmax.f32 %v2795, 0.0
  %v2828 = vmax.f32 %v2796, 0.0
  %v2829 = vmax.f32 %v2797, 0.0
  %v2830 = vmax.f32 %v2798, 0.0
  %v2831 = vpack.c.bf16 %v2799, %v2799
  %v2832 = vpack.c.bf16 %v2800, %v2800
  %v2833 = vpack.c.bf16 %v2801, %v2801
  %v2834 = vpack.c.bf16 %v2802, %v2802
  %v2835 = vpack.c.bf16 %v2803, %v2803
  %v2836 = vpack.c.bf16 %v2804, %v2804
  %v2837 = vpack.c.bf16 %v2805, %v2805
  %v2838 = vpack.c.bf16 %v2806, %v2806
  %v2839 = vpack.c.bf16 %v2807, %v2807
  %v2840 = vpack.c.bf16 %v2808, %v2808
  %v2841 = vpack.c.bf16 %v2809, %v2809
  %v2842 = vpack.c.bf16 %v2810, %v2810
  %v2843 = vpack.c.bf16 %v2811, %v2811
  %v2844 = vpack.c.bf16 %v2812, %v2812
  %v2845 = vpack.c.bf16 %v2813, %v2813
  %v2846 = vpack.c.bf16 %v2814, %v2814
  %v2847 = vpack.c.bf16 %v2815, %v2815
  %v2848 = vpack.c.bf16 %v2816, %v2816
  %v2849 = vpack.c.bf16 %v2817, %v2817
  %v2850 = vpack.c.bf16 %v2818, %v2818
  %v2851 = vpack.c.bf16 %v2819, %v2819
  %v2852 = vpack.c.bf16 %v2820, %v2820
  %v2853 = vpack.c.bf16 %v2821, %v2821
  %v2854 = vpack.c.bf16 %v2822, %v2822
  %v2855 = vpack.c.bf16 %v2823, %v2823
  %v2856 = vpack.c.bf16 %v2824, %v2824
  %v2857 = vpack.c.bf16 %v2825, %v2825
  %v2858 = vpack.c.bf16 %v2826, %v2826
  %v2859 = vpack.c.bf16 %v2827, %v2827
  %v2860 = vpack.c.bf16 %v2828, %v2828
  %v2861 = vpack.c.bf16 %v2829, %v2829
  %v2862 = vpack.c.bf16 %v2830, %v2830
  %v2863 = vld [vmem:[%s5] sm:$0xf]
  %v2864 = vld [vmem:[%s5 + $0x4] sm:$0xf]
  %v2865 = vld [vmem:[%s5 + $0x8] sm:$0xf]
  %v2866 = vld [vmem:[%s5 + $0xc] sm:$0xf]
  %v2867 = vld [vmem:[%s5 + $0x10] sm:$0xf]
  %v2868 = vld [vmem:[%s5 + $0x14] sm:$0xf]
  %v2869 = vld [vmem:[%s5 + $0x18] sm:$0xf]
  %v2870 = vld [vmem:[%s5 + $0x1c] sm:$0xf]
  %s2871 = scalar_lea.vmem %s5, 32
  %v2872 = vld [vmem:[%s2871] sm:$0xf]
  %v2873 = vld [vmem:[%s2871 + $0x4] sm:$0xf]
  %v2874 = vld [vmem:[%s2871 + $0x8] sm:$0xf]
  %v2875 = vld [vmem:[%s2871 + $0xc] sm:$0xf]
  %v2876 = vld [vmem:[%s2871 + $0x10] sm:$0xf]
  %v2877 = vld [vmem:[%s2871 + $0x14] sm:$0xf]
  %v2878 = vld [vmem:[%s2871 + $0x18] sm:$0xf]
  %v2879 = vld [vmem:[%s2871 + $0x1c] sm:$0xf]
  %v2896 = vunpack.c.l.b16 %v2831
  %v2897 = vunpack.c.l.b16 %v2833
  %v2898 = vunpack.c.l.b16 %v2835
  %v2899 = vunpack.c.l.b16 %v2837
  %v2900 = vunpack.c.l.b16 %v2839
  %v2901 = vunpack.c.l.b16 %v2841
  %v2902 = vunpack.c.l.b16 %v2843
  %v2903 = vunpack.c.l.b16 %v2845
  %v2904 = vunpack.c.l.b16 %v2847
  %v2905 = vunpack.c.l.b16 %v2849
  %v2906 = vunpack.c.l.b16 %v2851
  %v2907 = vunpack.c.l.b16 %v2853
  %v2908 = vunpack.c.l.b16 %v2855
  %v2909 = vunpack.c.l.b16 %v2857
  %v2910 = vunpack.c.l.b16 %v2859
  %v2911 = vunpack.c.l.b16 %v2861
  %v2912 = vpack.c.b16 %v2896, %v2896
  %v2913 = vpack.c.b16 %v2897, %v2897
  %v2914 = vpack.c.b16 %v2898, %v2898
  %v2915 = vpack.c.b16 %v2899, %v2899
  %v2916 = vpack.c.b16 %v2900, %v2900
  %v2917 = vpack.c.b16 %v2901, %v2901
  %v2918 = vpack.c.b16 %v2902, %v2902
  %v2919 = vpack.c.b16 %v2903, %v2903
  %v2920 = vpack.c.b16 %v2904, %v2904
  %v2921 = vpack.c.b16 %v2905, %v2905
  %v2922 = vpack.c.b16 %v2906, %v2906
  %v2923 = vpack.c.b16 %v2907, %v2907
  %v2924 = vpack.c.b16 %v2908, %v2908
  %v2925 = vpack.c.b16 %v2909, %v2909
  %v2926 = vpack.c.b16 %v2910, %v2910
  %v2927 = vpack.c.b16 %v2911, %v2911
  %v2928 = vunpack.c.l.b16 %v2912
  %v2929 = vunpack.c.l.b16 %v2913
  %v2930 = vunpack.c.l.b16 %v2914
  %v2931 = vunpack.c.l.b16 %v2915
  %v2932 = vunpack.c.l.b16 %v2916
  %v2933 = vunpack.c.l.b16 %v2917
  %v2934 = vunpack.c.l.b16 %v2918
  %v2935 = vunpack.c.l.b16 %v2919
  %v2936 = vunpack.c.l.b16 %v2920
  %v2937 = vunpack.c.l.b16 %v2921
  %v2938 = vunpack.c.l.b16 %v2922
  %v2939 = vunpack.c.l.b16 %v2923
  %v2940 = vunpack.c.l.b16 %v2924
  %v2941 = vunpack.c.l.b16 %v2925
  %v2942 = vunpack.c.l.b16 %v2926
  %v2943 = vunpack.c.l.b16 %v2927
  %v2944 = vrot.slane %v2928, 1
  %vm2945 = vcmask 1041409
  %v2946 = vsel %vm2945, %v2929, %v2944
  %v2947 = vrot.slane %v2930, 7
  %vm2948 = vcmask 1042434
  %v2949 = vsel %vm2948, %v2947, %v2946
  %v2950 = vrot.slane %v2931, 6
  %vm2951 = vcmask 1043459
  %v2952 = vsel %vm2951, %v2950, %v2949
  %v2953 = vrot.slane %v2932, 5
  %vm2954 = vcmask 1044484
  %v2955 = vsel %vm2954, %v2953, %v2952
  %v2956 = vrot.slane %v2933, 4
  %vm2957 = vcmask 1045509
  %v2958 = vsel %vm2957, %v2956, %v2955
  %v2959 = vrot.slane %v2934, 3
  %vm2960 = vcmask 1046534
  %v2961 = vsel %vm2960, %v2959, %v2958
  %v2962 = vrot.slane %v2935, 2
  %vm2963 = vcmask 1047559
  %v2964 = vsel %vm2963, %v2962, %v2961
  %v2965 = vrot.slane %v2936, 1
  %v2966 = vsel %vm2945, %v2937, %v2965
  %v2967 = vrot.slane %v2938, 7
  %v2968 = vsel %vm2948, %v2967, %v2966
  %v2969 = vrot.slane %v2939, 6
  %v2970 = vsel %vm2951, %v2969, %v2968
  %v2971 = vrot.slane %v2940, 5
  %v2972 = vsel %vm2954, %v2971, %v2970
  %v2973 = vrot.slane %v2941, 4
  %v2974 = vsel %vm2957, %v2973, %v2972
  %v2975 = vrot.slane %v2942, 3
  %v2976 = vsel %vm2960, %v2975, %v2974
  %v2977 = vrot.slane %v2943, 2
  %v2978 = vsel %vm2963, %v2977, %v2976
  %v2979 = vpack.c.b16 %v2978, %v2964
  %v2988 = vunpack.c.l.b16 %v2872
  %v2989 = vunpack.c.l.b16 %v2873
  %v2990 = vunpack.c.l.b16 %v2874
  %v2991 = vunpack.c.l.b16 %v2875
  %v2992 = vunpack.c.l.b16 %v2876
  %v2993 = vunpack.c.l.b16 %v2877
  %v2994 = vunpack.c.l.b16 %v2878
  %v2995 = vunpack.c.l.b16 %v2879
  %v2996 = vpack.c.b16 %v2989, %v2988
  %v2997 = vpack.c.b16 %v2991, %v2990
  %v2998 = vpack.c.b16 %v2993, %v2992
  %v2999 = vpack.c.b16 %v2995, %v2994
  %vm3004 = vcmask 523264
  %v3006 = vsel %vm3004, %v2979, 0
  %3008 = vmatpush.bf16.msra.mxu0 0
  %3009 = vmatpush.bf16.msra.mxu0 0
  %3010 = vmatpush.bf16.msra.mxu0 0
  %3011 = vmatpush.bf16.msra.mxu0 0
  %3012 = vmatpush.bf16.msra.mxu0 %v2999
  %3013 = vmatpush.bf16.msra.mxu0 %v2998
  %3014 = vmatpush.bf16.msra.mxu0 %v2997
  %3015 = vmatpush.bf16.msra.mxu0 %v2996
  %3016 = vmatmul.bf16.gmra.mxu0 %v3006
  %v3017 = vpop.f32.mrf.mxu0
  %v3018 = vadd.f32 0.0, %v3017
  %v3019 = vpop.f32.mrf.mxu0
  %v3020 = vadd.f32 0.0, %v3019
  %3021 = vdwg.mxu0
  %v3022 = vrot.slane %v2929, 7
  %v3023 = vsel %vm2945, %v3022, %v2928
  %v3024 = vrot.slane %v2930, 6
  %v3025 = vsel %vm2948, %v3024, %v3023
  %v3026 = vrot.slane %v2931, 5
  %v3027 = vsel %vm2951, %v3026, %v3025
  %v3028 = vrot.slane %v2932, 4
  %v3029 = vsel %vm2954, %v3028, %v3027
  %v3030 = vrot.slane %v2933, 3
  %v3031 = vsel %vm2957, %v3030, %v3029
  %v3032 = vrot.slane %v2934, 2
  %v3033 = vsel %vm2960, %v3032, %v3031
  %v3034 = vrot.slane %v2935, 1
  %v3035 = vsel %vm2963, %v3034, %v3033
  %v3036 = vrot.slane %v2937, 7
  %v3037 = vsel %vm2945, %v3036, %v2936
  %v3038 = vrot.slane %v2938, 6
  %v3039 = vsel %vm2948, %v3038, %v3037
  %v3040 = vrot.slane %v2939, 5
  %v3041 = vsel %vm2951, %v3040, %v3039
  %v3042 = vrot.slane %v2940, 4
  %v3043 = vsel %vm2954, %v3042, %v3041
  %v3044 = vrot.slane %v2941, 3
  %v3045 = vsel %vm2957, %v3044, %v3043
  %v3046 = vrot.slane %v2942, 2
  %v3047 = vsel %vm2960, %v3046, %v3045
  %v3048 = vrot.slane %v2943, 1
  %v3049 = vsel %vm2963, %v3048, %v3047
  %v3050 = vpack.c.b16 %v3049, %v3035
  %v3059 = vunpack.c.l.b16 %v2863
  %v3060 = vunpack.c.l.b16 %v2864
  %v3061 = vunpack.c.l.b16 %v2865
  %v3062 = vunpack.c.l.b16 %v2866
  %v3063 = vunpack.c.l.b16 %v2867
  %v3064 = vunpack.c.l.b16 %v2868
  %v3065 = vunpack.c.l.b16 %v2869
  %v3066 = vunpack.c.l.b16 %v2870
  %v3067 = vpack.c.b16 %v3060, %v3059
  %v3068 = vpack.c.b16 %v3062, %v3061
  %v3069 = vpack.c.b16 %v3064, %v3063
  %v3070 = vpack.c.b16 %v3066, %v3065
  %v3076 = vsel %vm3004, %v3050, 0
  %3078 = vmatpush.bf16.msra.mxu0 0
  %3079 = vmatpush.bf16.msra.mxu0 0
  %3080 = vmatpush.bf16.msra.mxu0 0
  %3081 = vmatpush.bf16.msra.mxu0 0
  %3082 = vmatpush.bf16.msra.mxu0 %v3070
  %3083 = vmatpush.bf16.msra.mxu0 %v3069
  %3084 = vmatpush.bf16.msra.mxu0 %v3068
  %3085 = vmatpush.bf16.msra.mxu0 %v3067
  %3086 = vmatmul.bf16.gmra.mxu0 %v3076
  %v3087 = vpop.f32.mrf.mxu0
  %v3088 = vadd.f32 %v3018, %v3087
  %v3089 = vpop.f32.mrf.mxu0
  %v3090 = vadd.f32 %v3020, %v3089
  %3091 = vdwg.mxu0
  %s3092 = scalar_lea.vmem %s5, 64
  %v3093 = vld [vmem:[%s3092] sm:$0xf]
  %v3094 = vld [vmem:[%s3092 + $0x4] sm:$0xf]
  %v3095 = vld [vmem:[%s3092 + $0x8] sm:$0xf]
  %v3096 = vld [vmem:[%s3092 + $0xc] sm:$0xf]
  %v3097 = vld [vmem:[%s3092 + $0x10] sm:$0xf]
  %v3098 = vld [vmem:[%s3092 + $0x14] sm:$0xf]
  %v3099 = vld [vmem:[%s3092 + $0x18] sm:$0xf]
  %v3100 = vld [vmem:[%s3092 + $0x1c] sm:$0xf]
  %v3101 = vrot.slane %v2928, 2
  %v3102 = vrot.slane %v2929, 1
  %v3103 = vsel %vm2945, %v3102, %v3101
  %v3104 = vsel %vm2948, %v2930, %v3103
  %v3105 = vrot.slane %v2931, 7
  %v3106 = vsel %vm2951, %v3105, %v3104
  %v3107 = vrot.slane %v2932, 6
  %v3108 = vsel %vm2954, %v3107, %v3106
  %v3109 = vrot.slane %v2933, 5
  %v3110 = vsel %vm2957, %v3109, %v3108
  %v3111 = vrot.slane %v2934, 4
  %v3112 = vsel %vm2960, %v3111, %v3110
  %v3113 = vrot.slane %v2935, 3
  %v3114 = vsel %vm2963, %v3113, %v3112
  %v3115 = vrot.slane %v2936, 2
  %v3116 = vrot.slane %v2937, 1
  %v3117 = vsel %vm2945, %v3116, %v3115
  %v3118 = vsel %vm2948, %v2938, %v3117
  %v3119 = vrot.slane %v2939, 7
  %v3120 = vsel %vm2951, %v3119, %v3118
  %v3121 = vrot.slane %v2940, 6
  %v3122 = vsel %vm2954, %v3121, %v3120
  %v3123 = vrot.slane %v2941, 5
  %v3124 = vsel %vm2957, %v3123, %v3122
  %v3125 = vrot.slane %v2942, 4
  %v3126 = vsel %vm2960, %v3125, %v3124
  %v3127 = vrot.slane %v2943, 3
  %v3128 = vsel %vm2963, %v3127, %v3126
  %v3129 = vpack.c.b16 %v3128, %v3114
  %v3138 = vunpack.c.l.b16 %v3093
  %v3139 = vunpack.c.l.b16 %v3094
  %v3140 = vunpack.c.l.b16 %v3095
  %v3141 = vunpack.c.l.b16 %v3096
  %v3142 = vunpack.c.l.b16 %v3097
  %v3143 = vunpack.c.l.b16 %v3098
  %v3144 = vunpack.c.l.b16 %v3099
  %v3145 = vunpack.c.l.b16 %v3100
  %v3146 = vpack.c.b16 %v3139, %v3138
  %v3147 = vpack.c.b16 %v3141, %v3140
  %v3148 = vpack.c.b16 %v3143, %v3142
  %v3149 = vpack.c.b16 %v3145, %v3144
  %v3155 = vsel %vm3004, %v3129, 0
  %3157 = vmatpush.bf16.msra.mxu0 0
  %3158 = vmatpush.bf16.msra.mxu0 0
  %3159 = vmatpush.bf16.msra.mxu0 0
  %3160 = vmatpush.bf16.msra.mxu0 0
  %3161 = vmatpush.bf16.msra.mxu0 %v3149
  %3162 = vmatpush.bf16.msra.mxu0 %v3148
  %3163 = vmatpush.bf16.msra.mxu0 %v3147
  %3164 = vmatpush.bf16.msra.mxu0 %v3146
  %3165 = vmatmul.bf16.gmra.mxu0 %v3155
  %v3166 = vpop.f32.mrf.mxu0
  %v3167 = vadd.f32 0.0, %v3166
  %v3168 = vpop.f32.mrf.mxu0
  %v3169 = vadd.f32 0.0, %v3168
  %3170 = vdwg.mxu0
  %v3171 = vadd.f32 %v3088, %v3167
  %v3172 = vadd.f32 %v3090, %v3169
  %s3173 = scalar_lea.vmem %s5, 96
  %v3174 = vld [vmem:[%s3173] sm:$0xf]
  %v3175 = vld [vmem:[%s3173 + $0x4] sm:$0xf]
  %v3176 = vld [vmem:[%s3173 + $0x8] sm:$0xf]
  %v3177 = vld [vmem:[%s3173 + $0xc] sm:$0xf]
  %v3178 = vld [vmem:[%s3173 + $0x10] sm:$0xf]
  %v3179 = vld [vmem:[%s3173 + $0x14] sm:$0xf]
  %v3180 = vld [vmem:[%s3173 + $0x18] sm:$0xf]
  %v3181 = vld [vmem:[%s3173 + $0x1c] sm:$0xf]
  %v3182 = vrot.slane %v2928, 3
  %v3183 = vrot.slane %v2929, 2
  %v3184 = vsel %vm2945, %v3183, %v3182
  %v3185 = vrot.slane %v2930, 1
  %v3186 = vsel %vm2948, %v3185, %v3184
  %v3187 = vsel %vm2951, %v2931, %v3186
  %v3188 = vrot.slane %v2932, 7
  %v3189 = vsel %vm2954, %v3188, %v3187
  %v3190 = vrot.slane %v2933, 6
  %v3191 = vsel %vm2957, %v3190, %v3189
  %v3192 = vrot.slane %v2934, 5
  %v3193 = vsel %vm2960, %v3192, %v3191
  %v3194 = vrot.slane %v2935, 4
  %v3195 = vsel %vm2963, %v3194, %v3193
  %v3196 = vrot.slane %v2936, 3
  %v3197 = vrot.slane %v2937, 2
  %v3198 = vsel %vm2945, %v3197, %v3196
  %v3199 = vrot.slane %v2938, 1
  %v3200 = vsel %vm2948, %v3199, %v3198
  %v3201 = vsel %vm2951, %v2939, %v3200
  %v3202 = vrot.slane %v2940, 7
  %v3203 = vsel %vm2954, %v3202, %v3201
  %v3204 = vrot.slane %v2941, 6
  %v3205 = vsel %vm2957, %v3204, %v3203
  %v3206 = vrot.slane %v2942, 5
  %v3207 = vsel %vm2960, %v3206, %v3205
  %v3208 = vrot.slane %v2943, 4
  %v3209 = vsel %vm2963, %v3208, %v3207
  %v3210 = vpack.c.b16 %v3209, %v3195
  %v3219 = vunpack.c.l.b16 %v3174
  %v3220 = vunpack.c.l.b16 %v3175
  %v3221 = vunpack.c.l.b16 %v3176
  %v3222 = vunpack.c.l.b16 %v3177
  %v3223 = vunpack.c.l.b16 %v3178
  %v3224 = vunpack.c.l.b16 %v3179
  %v3225 = vunpack.c.l.b16 %v3180
  %v3226 = vunpack.c.l.b16 %v3181
  %v3227 = vpack.c.b16 %v3220, %v3219
  %v3228 = vpack.c.b16 %v3222, %v3221
  %v3229 = vpack.c.b16 %v3224, %v3223
  %v3230 = vpack.c.b16 %v3226, %v3225
  %v3236 = vsel %vm3004, %v3210, 0
  %3238 = vmatpush.bf16.msra.mxu0 0
  %3239 = vmatpush.bf16.msra.mxu0 0
  %3240 = vmatpush.bf16.msra.mxu0 0
  %3241 = vmatpush.bf16.msra.mxu0 0
  %3242 = vmatpush.bf16.msra.mxu0 %v3230
  %3243 = vmatpush.bf16.msra.mxu0 %v3229
  %3244 = vmatpush.bf16.msra.mxu0 %v3228
  %3245 = vmatpush.bf16.msra.mxu0 %v3227
  %3246 = vmatmul.bf16.gmra.mxu0 %v3236
  %v3247 = vpop.f32.mrf.mxu0
  %v3248 = vadd.f32 0.0, %v3247
  %v3249 = vpop.f32.mrf.mxu0
  %v3250 = vadd.f32 0.0, %v3249
  %3251 = vdwg.mxu0
  %v3252 = vadd.f32 %v3171, %v3248
  %v3253 = vadd.f32 %v3172, %v3250
  %s3254 = scalar_lea.vmem %s5, 128
  %v3255 = vld [vmem:[%s3254] sm:$0xf]
  %v3256 = vld [vmem:[%s3254 + $0x4] sm:$0xf]
  %v3257 = vld [vmem:[%s3254 + $0x8] sm:$0xf]
  %v3258 = vld [vmem:[%s3254 + $0xc] sm:$0xf]
  %v3259 = vld [vmem:[%s3254 + $0x10] sm:$0xf]
  %v3260 = vld [vmem:[%s3254 + $0x14] sm:$0xf]
  %v3261 = vld [vmem:[%s3254 + $0x18] sm:$0xf]
  %v3262 = vld [vmem:[%s3254 + $0x1c] sm:$0xf]
  %v3263 = vrot.slane %v2928, 4
  %v3264 = vrot.slane %v2929, 3
  %v3265 = vsel %vm2945, %v3264, %v3263
  %v3266 = vrot.slane %v2930, 2
  %v3267 = vsel %vm2948, %v3266, %v3265
  %v3268 = vrot.slane %v2931, 1
  %v3269 = vsel %vm2951, %v3268, %v3267
  %v3270 = vsel %vm2954, %v2932, %v3269
  %v3271 = vrot.slane %v2933, 7
  %v3272 = vsel %vm2957, %v3271, %v3270
  %v3273 = vrot.slane %v2934, 6
  %v3274 = vsel %vm2960, %v3273, %v3272
  %v3275 = vrot.slane %v2935, 5
  %v3276 = vsel %vm2963, %v3275, %v3274
  %v3277 = vrot.slane %v2936, 4
  %v3278 = vrot.slane %v2937, 3
  %v3279 = vsel %vm2945, %v3278, %v3277
  %v3280 = vrot.slane %v2938, 2
  %v3281 = vsel %vm2948, %v3280, %v3279
  %v3282 = vrot.slane %v2939, 1
  %v3283 = vsel %vm2951, %v3282, %v3281
  %v3284 = vsel %vm2954, %v2940, %v3283
  %v3285 = vrot.slane %v2941, 7
  %v3286 = vsel %vm2957, %v3285, %v3284
  %v3287 = vrot.slane %v2942, 6
  %v3288 = vsel %vm2960, %v3287, %v3286
  %v3289 = vrot.slane %v2943, 5
  %v3290 = vsel %vm2963, %v3289, %v3288
  %v3291 = vpack.c.b16 %v3290, %v3276
  %v3300 = vunpack.c.l.b16 %v3255
  %v3301 = vunpack.c.l.b16 %v3256
  %v3302 = vunpack.c.l.b16 %v3257
  %v3303 = vunpack.c.l.b16 %v3258
  %v3304 = vunpack.c.l.b16 %v3259
  %v3305 = vunpack.c.l.b16 %v3260
  %v3306 = vunpack.c.l.b16 %v3261
  %v3307 = vunpack.c.l.b16 %v3262
  %v3308 = vpack.c.b16 %v3301, %v3300
  %v3309 = vpack.c.b16 %v3303, %v3302
  %v3310 = vpack.c.b16 %v3305, %v3304
  %v3311 = vpack.c.b16 %v3307, %v3306
  %v3317 = vsel %vm3004, %v3291, 0
  %3319 = vmatpush.bf16.msra.mxu0 0
  %3320 = vmatpush.bf16.msra.mxu0 0
  %3321 = vmatpush.bf16.msra.mxu0 0
  %3322 = vmatpush.bf16.msra.mxu0 0
  %3323 = vmatpush.bf16.msra.mxu0 %v3311
  %3324 = vmatpush.bf16.msra.mxu0 %v3310
  %3325 = vmatpush.bf16.msra.mxu0 %v3309
  %3326 = vmatpush.bf16.msra.mxu0 %v3308
  %3327 = vmatmul.bf16.gmra.mxu0 %v3317
  %v3328 = vpop.f32.mrf.mxu0
  %v3329 = vadd.f32 0.0, %v3328
  %v3330 = vpop.f32.mrf.mxu0
  %v3331 = vadd.f32 0.0, %v3330
  %3332 = vdwg.mxu0
  %v3333 = vadd.f32 %v3252, %v3329
  %v3334 = vadd.f32 %v3253, %v3331
  %s3335 = scalar_lea.vmem %s5, 160
  %v3336 = vld [vmem:[%s3335] sm:$0xf]
  %v3337 = vld [vmem:[%s3335 + $0x4] sm:$0xf]
  %v3338 = vld [vmem:[%s3335 + $0x8] sm:$0xf]
  %v3339 = vld [vmem:[%s3335 + $0xc] sm:$0xf]
  %v3340 = vld [vmem:[%s3335 + $0x10] sm:$0xf]
  %v3341 = vld [vmem:[%s3335 + $0x14] sm:$0xf]
  %v3342 = vld [vmem:[%s3335 + $0x18] sm:$0xf]
  %v3343 = vld [vmem:[%s3335 + $0x1c] sm:$0xf]
  %v3344 = vrot.slane %v2928, 5
  %v3345 = vrot.slane %v2929, 4
  %v3346 = vsel %vm2945, %v3345, %v3344
  %v3347 = vrot.slane %v2930, 3
  %v3348 = vsel %vm2948, %v3347, %v3346
  %v3349 = vrot.slane %v2931, 2
  %v3350 = vsel %vm2951, %v3349, %v3348
  %v3351 = vrot.slane %v2932, 1
  %v3352 = vsel %vm2954, %v3351, %v3350
  %v3353 = vsel %vm2957, %v2933, %v3352
  %v3354 = vrot.slane %v2934, 7
  %v3355 = vsel %vm2960, %v3354, %v3353
  %v3356 = vrot.slane %v2935, 6
  %v3357 = vsel %vm2963, %v3356, %v3355
  %v3358 = vrot.slane %v2936, 5
  %v3359 = vrot.slane %v2937, 4
  %v3360 = vsel %vm2945, %v3359, %v3358
  %v3361 = vrot.slane %v2938, 3
  %v3362 = vsel %vm2948, %v3361, %v3360
  %v3363 = vrot.slane %v2939, 2
  %v3364 = vsel %vm2951, %v3363, %v3362
  %v3365 = vrot.slane %v2940, 1
  %v3366 = vsel %vm2954, %v3365, %v3364
  %v3367 = vsel %vm2957, %v2941, %v3366
  %v3368 = vrot.slane %v2942, 7
  %v3369 = vsel %vm2960, %v3368, %v3367
  %v3370 = vrot.slane %v2943, 6
  %v3371 = vsel %vm2963, %v3370, %v3369
  %v3372 = vpack.c.b16 %v3371, %v3357
  %v3381 = vunpack.c.l.b16 %v3336
  %v3382 = vunpack.c.l.b16 %v3337
  %v3383 = vunpack.c.l.b16 %v3338
  %v3384 = vunpack.c.l.b16 %v3339
  %v3385 = vunpack.c.l.b16 %v3340
  %v3386 = vunpack.c.l.b16 %v3341
  %v3387 = vunpack.c.l.b16 %v3342
  %v3388 = vunpack.c.l.b16 %v3343
  %v3389 = vpack.c.b16 %v3382, %v3381
  %v3390 = vpack.c.b16 %v3384, %v3383
  %v3391 = vpack.c.b16 %v3386, %v3385
  %v3392 = vpack.c.b16 %v3388, %v3387
  %v3398 = vsel %vm3004, %v3372, 0
  %3400 = vmatpush.bf16.msra.mxu0 0
  %3401 = vmatpush.bf16.msra.mxu0 0
  %3402 = vmatpush.bf16.msra.mxu0 0
  %3403 = vmatpush.bf16.msra.mxu0 0
  %3404 = vmatpush.bf16.msra.mxu0 %v3392
  %3405 = vmatpush.bf16.msra.mxu0 %v3391
  %3406 = vmatpush.bf16.msra.mxu0 %v3390
  %3407 = vmatpush.bf16.msra.mxu0 %v3389
  %3408 = vmatmul.bf16.gmra.mxu0 %v3398
  %v3409 = vpop.f32.mrf.mxu0
  %v3410 = vadd.f32 0.0, %v3409
  %v3411 = vpop.f32.mrf.mxu0
  %v3412 = vadd.f32 0.0, %v3411
  %3413 = vdwg.mxu0
  %v3414 = vadd.f32 %v3333, %v3410
  %v3415 = vadd.f32 %v3334, %v3412
  %s3416 = scalar_lea.vmem %s5, 192
  %v3417 = vld [vmem:[%s3416] sm:$0xf]
  %v3418 = vld [vmem:[%s3416 + $0x4] sm:$0xf]
  %v3419 = vld [vmem:[%s3416 + $0x8] sm:$0xf]
  %v3420 = vld [vmem:[%s3416 + $0xc] sm:$0xf]
  %v3421 = vld [vmem:[%s3416 + $0x10] sm:$0xf]
  %v3422 = vld [vmem:[%s3416 + $0x14] sm:$0xf]
  %v3423 = vld [vmem:[%s3416 + $0x18] sm:$0xf]
  %v3424 = vld [vmem:[%s3416 + $0x1c] sm:$0xf]
  %v3425 = vrot.slane %v2928, 6
  %v3426 = vrot.slane %v2929, 5
  %v3427 = vsel %vm2945, %v3426, %v3425
  %v3428 = vrot.slane %v2930, 4
  %v3429 = vsel %vm2948, %v3428, %v3427
  %v3430 = vrot.slane %v2931, 3
  %v3431 = vsel %vm2951, %v3430, %v3429
  %v3432 = vrot.slane %v2932, 2
  %v3433 = vsel %vm2954, %v3432, %v3431
  %v3434 = vrot.slane %v2933, 1
  %v3435 = vsel %vm2957, %v3434, %v3433
  %v3436 = vsel %vm2960, %v2934, %v3435
  %v3437 = vrot.slane %v2935, 7
  %v3438 = vsel %vm2963, %v3437, %v3436
  %v3439 = vrot.slane %v2936, 6
  %v3440 = vrot.slane %v2937, 5
  %v3441 = vsel %vm2945, %v3440, %v3439
  %v3442 = vrot.slane %v2938, 4
  %v3443 = vsel %vm2948, %v3442, %v3441
  %v3444 = vrot.slane %v2939, 3
  %v3445 = vsel %vm2951, %v3444, %v3443
  %v3446 = vrot.slane %v2940, 2
  %v3447 = vsel %vm2954, %v3446, %v3445
  %v3448 = vrot.slane %v2941, 1
  %v3449 = vsel %vm2957, %v3448, %v3447
  %v3450 = vsel %vm2960, %v2942, %v3449
  %v3451 = vrot.slane %v2943, 7
  %v3452 = vsel %vm2963, %v3451, %v3450
  %v3453 = vpack.c.b16 %v3452, %v3438
  %v3462 = vunpack.c.l.b16 %v3417
  %v3463 = vunpack.c.l.b16 %v3418
  %v3464 = vunpack.c.l.b16 %v3419
  %v3465 = vunpack.c.l.b16 %v3420
  %v3466 = vunpack.c.l.b16 %v3421
  %v3467 = vunpack.c.l.b16 %v3422
  %v3468 = vunpack.c.l.b16 %v3423
  %v3469 = vunpack.c.l.b16 %v3424
  %v3470 = vpack.c.b16 %v3463, %v3462
  %v3471 = vpack.c.b16 %v3465, %v3464
  %v3472 = vpack.c.b16 %v3467, %v3466
  %v3473 = vpack.c.b16 %v3469, %v3468
  %v3479 = vsel %vm3004, %v3453, 0
  %3481 = vmatpush.bf16.msra.mxu0 0
  %3482 = vmatpush.bf16.msra.mxu0 0
  %3483 = vmatpush.bf16.msra.mxu0 0
  %3484 = vmatpush.bf16.msra.mxu0 0
  %3485 = vmatpush.bf16.msra.mxu0 %v3473
  %3486 = vmatpush.bf16.msra.mxu0 %v3472
  %3487 = vmatpush.bf16.msra.mxu0 %v3471
  %3488 = vmatpush.bf16.msra.mxu0 %v3470
  %3489 = vmatmul.bf16.gmra.mxu0 %v3479
  %v3490 = vpop.f32.mrf.mxu0
  %v3491 = vadd.f32 0.0, %v3490
  %v3492 = vpop.f32.mrf.mxu0
  %v3493 = vadd.f32 0.0, %v3492
  %3494 = vdwg.mxu0
  %v3495 = vadd.f32 %v3414, %v3491
  %v3496 = vadd.f32 %v3415, %v3493
  %s3497 = scalar_lea.vmem %s5, 224
  %v3498 = vld [vmem:[%s3497] sm:$0xf]
  %v3499 = vld [vmem:[%s3497 + $0x4] sm:$0xf]
  %v3500 = vld [vmem:[%s3497 + $0x8] sm:$0xf]
  %v3501 = vld [vmem:[%s3497 + $0xc] sm:$0xf]
  %v3502 = vld [vmem:[%s3497 + $0x10] sm:$0xf]
  %v3503 = vld [vmem:[%s3497 + $0x14] sm:$0xf]
  %v3504 = vld [vmem:[%s3497 + $0x18] sm:$0xf]
  %v3505 = vld [vmem:[%s3497 + $0x1c] sm:$0xf]
  %v3506 = vrot.slane %v2928, 7
  %v3507 = vrot.slane %v2929, 6
  %v3508 = vsel %vm2945, %v3507, %v3506
  %v3509 = vrot.slane %v2930, 5
  %v3510 = vsel %vm2948, %v3509, %v3508
  %v3511 = vrot.slane %v2931, 4
  %v3512 = vsel %vm2951, %v3511, %v3510
  %v3513 = vrot.slane %v2932, 3
  %v3514 = vsel %vm2954, %v3513, %v3512
  %v3515 = vrot.slane %v2933, 2
  %v3516 = vsel %vm2957, %v3515, %v3514
  %v3517 = vrot.slane %v2934, 1
  %v3518 = vsel %vm2960, %v3517, %v3516
  %v3519 = vsel %vm2963, %v2935, %v3518
  %v3520 = vrot.slane %v2936, 7
  %v3521 = vrot.slane %v2937, 6
  %v3522 = vsel %vm2945, %v3521, %v3520
  %v3523 = vrot.slane %v2938, 5
  %v3524 = vsel %vm2948, %v3523, %v3522
  %v3525 = vrot.slane %v2939, 4
  %v3526 = vsel %vm2951, %v3525, %v3524
  %v3527 = vrot.slane %v2940, 3
  %v3528 = vsel %vm2954, %v3527, %v3526
  %v3529 = vrot.slane %v2941, 2
  %v3530 = vsel %vm2957, %v3529, %v3528
  %v3531 = vrot.slane %v2942, 1
  %v3532 = vsel %vm2960, %v3531, %v3530
  %v3533 = vsel %vm2963, %v2943, %v3532
  %v3534 = vpack.c.b16 %v3533, %v3519
  %v3543 = vunpack.c.l.b16 %v3498
  %v3544 = vunpack.c.l.b16 %v3499
  %v3545 = vunpack.c.l.b16 %v3500
  %v3546 = vunpack.c.l.b16 %v3501
  %v3547 = vunpack.c.l.b16 %v3502
  %v3548 = vunpack.c.l.b16 %v3503
  %v3549 = vunpack.c.l.b16 %v3504
  %v3550 = vunpack.c.l.b16 %v3505
  %v3551 = vpack.c.b16 %v3544, %v3543
  %v3552 = vpack.c.b16 %v3546, %v3545
  %v3553 = vpack.c.b16 %v3548, %v3547
  %v3554 = vpack.c.b16 %v3550, %v3549
  %v3560 = vsel %vm3004, %v3534, 0
  %3562 = vmatpush.bf16.msra.mxu0 0
  %3563 = vmatpush.bf16.msra.mxu0 0
  %3564 = vmatpush.bf16.msra.mxu0 0
  %3565 = vmatpush.bf16.msra.mxu0 0
  %3566 = vmatpush.bf16.msra.mxu0 %v3554
  %3567 = vmatpush.bf16.msra.mxu0 %v3553
  %3568 = vmatpush.bf16.msra.mxu0 %v3552
  %3569 = vmatpush.bf16.msra.mxu0 %v3551
  %3570 = vmatmul.bf16.gmra.mxu0 %v3560
  %v3571 = vpop.f32.mrf.mxu0
  %v3572 = vadd.f32 0.0, %v3571
  %v3573 = vpop.f32.mrf.mxu0
  %v3574 = vadd.f32 0.0, %v3573
  %3575 = vdwg.mxu0
  %v3576 = vadd.f32 %v3495, %v3572
  %v3577 = vadd.f32 %v3496, %v3574
  %s3578 = scalar_lea.vmem %s5, 256
  %v3579 = vld [vmem:[%s3578] sm:$0xf]
  %v3580 = vld [vmem:[%s3578 + $0x4] sm:$0xf]
  %v3581 = vld [vmem:[%s3578 + $0x8] sm:$0xf]
  %v3582 = vld [vmem:[%s3578 + $0xc] sm:$0xf]
  %v3583 = vld [vmem:[%s3578 + $0x10] sm:$0xf]
  %v3584 = vld [vmem:[%s3578 + $0x14] sm:$0xf]
  %v3585 = vld [vmem:[%s3578 + $0x18] sm:$0xf]
  %v3586 = vld [vmem:[%s3578 + $0x1c] sm:$0xf]
  %v3603 = vunpack.c.l.b16 %v2832
  %v3604 = vunpack.c.l.b16 %v2834
  %v3605 = vunpack.c.l.b16 %v2836
  %v3606 = vunpack.c.l.b16 %v2838
  %v3607 = vunpack.c.l.b16 %v2840
  %v3608 = vunpack.c.l.b16 %v2842
  %v3609 = vunpack.c.l.b16 %v2844
  %v3610 = vunpack.c.l.b16 %v2846
  %v3611 = vunpack.c.l.b16 %v2848
  %v3612 = vunpack.c.l.b16 %v2850
  %v3613 = vunpack.c.l.b16 %v2852
  %v3614 = vunpack.c.l.b16 %v2854
  %v3615 = vunpack.c.l.b16 %v2856
  %v3616 = vunpack.c.l.b16 %v2858
  %v3617 = vunpack.c.l.b16 %v2860
  %v3618 = vunpack.c.l.b16 %v2862
  %v3619 = vpack.c.b16 %v3603, %v3603
  %v3620 = vpack.c.b16 %v3604, %v3604
  %v3621 = vpack.c.b16 %v3605, %v3605
  %v3622 = vpack.c.b16 %v3606, %v3606
  %v3623 = vpack.c.b16 %v3607, %v3607
  %v3624 = vpack.c.b16 %v3608, %v3608
  %v3625 = vpack.c.b16 %v3609, %v3609
  %v3626 = vpack.c.b16 %v3610, %v3610
  %v3627 = vpack.c.b16 %v3611, %v3611
  %v3628 = vpack.c.b16 %v3612, %v3612
  %v3629 = vpack.c.b16 %v3613, %v3613
  %v3630 = vpack.c.b16 %v3614, %v3614
  %v3631 = vpack.c.b16 %v3615, %v3615
  %v3632 = vpack.c.b16 %v3616, %v3616
  %v3633 = vpack.c.b16 %v3617, %v3617
  %v3634 = vpack.c.b16 %v3618, %v3618
  %v3635 = vunpack.c.l.b16 %v3619
  %v3636 = vunpack.c.l.b16 %v3620
  %v3637 = vunpack.c.l.b16 %v3621
  %v3638 = vunpack.c.l.b16 %v3622
  %v3639 = vunpack.c.l.b16 %v3623
  %v3640 = vunpack.c.l.b16 %v3624
  %v3641 = vunpack.c.l.b16 %v3625
  %v3642 = vunpack.c.l.b16 %v3626
  %v3643 = vunpack.c.l.b16 %v3627
  %v3644 = vunpack.c.l.b16 %v3628
  %v3645 = vunpack.c.l.b16 %v3629
  %v3646 = vunpack.c.l.b16 %v3630
  %v3647 = vunpack.c.l.b16 %v3631
  %v3648 = vunpack.c.l.b16 %v3632
  %v3649 = vunpack.c.l.b16 %v3633
  %v3650 = vunpack.c.l.b16 %v3634
  %v3651 = vrot.slane %v3636, 7
  %v3652 = vsel %vm2945, %v3651, %v3635
  %v3653 = vrot.slane %v3637, 6
  %v3654 = vsel %vm2948, %v3653, %v3652
  %v3655 = vrot.slane %v3638, 5
  %v3656 = vsel %vm2951, %v3655, %v3654
  %v3657 = vrot.slane %v3639, 4
  %v3658 = vsel %vm2954, %v3657, %v3656
  %v3659 = vrot.slane %v3640, 3
  %v3660 = vsel %vm2957, %v3659, %v3658
  %v3661 = vrot.slane %v3641, 2
  %v3662 = vsel %vm2960, %v3661, %v3660
  %v3663 = vrot.slane %v3642, 1
  %v3664 = vsel %vm2963, %v3663, %v3662
  %v3665 = vrot.slane %v3644, 7
  %v3666 = vsel %vm2945, %v3665, %v3643
  %v3667 = vrot.slane %v3645, 6
  %v3668 = vsel %vm2948, %v3667, %v3666
  %v3669 = vrot.slane %v3646, 5
  %v3670 = vsel %vm2951, %v3669, %v3668
  %v3671 = vrot.slane %v3647, 4
  %v3672 = vsel %vm2954, %v3671, %v3670
  %v3673 = vrot.slane %v3648, 3
  %v3674 = vsel %vm2957, %v3673, %v3672
  %v3675 = vrot.slane %v3649, 2
  %v3676 = vsel %vm2960, %v3675, %v3674
  %v3677 = vrot.slane %v3650, 1
  %v3678 = vsel %vm2963, %v3677, %v3676
  %v3679 = vpack.c.b16 %v3678, %v3664
  %v3688 = vunpack.c.l.b16 %v3579
  %v3689 = vunpack.c.l.b16 %v3580
  %v3690 = vunpack.c.l.b16 %v3581
  %v3691 = vunpack.c.l.b16 %v3582
  %v3692 = vunpack.c.l.b16 %v3583
  %v3693 = vunpack.c.l.b16 %v3584
  %v3694 = vunpack.c.l.b16 %v3585
  %v3695 = vunpack.c.l.b16 %v3586
  %v3696 = vpack.c.b16 %v3689, %v3688
  %v3697 = vpack.c.b16 %v3691, %v3690
  %v3698 = vpack.c.b16 %v3693, %v3692
  %v3699 = vpack.c.b16 %v3695, %v3694
  %v3705 = vsel %vm3004, %v3679, 0
  %3707 = vmatpush.bf16.msra.mxu0 0
  %3708 = vmatpush.bf16.msra.mxu0 0
  %3709 = vmatpush.bf16.msra.mxu0 0
  %3710 = vmatpush.bf16.msra.mxu0 0
  %3711 = vmatpush.bf16.msra.mxu0 %v3699
  %3712 = vmatpush.bf16.msra.mxu0 %v3698
  %3713 = vmatpush.bf16.msra.mxu0 %v3697
  %3714 = vmatpush.bf16.msra.mxu0 %v3696
  %3715 = vmatmul.bf16.gmra.mxu0 %v3705
  %v3716 = vpop.f32.mrf.mxu0
  %v3717 = vadd.f32 0.0, %v3716
  %v3718 = vpop.f32.mrf.mxu0
  %v3719 = vadd.f32 0.0, %v3718
  %3720 = vdwg.mxu0
  %v3721 = vadd.f32 %v3576, %v3717
  %v3722 = vadd.f32 %v3577, %v3719
  %s3723 = scalar_lea.vmem %s5, 288
  %v3724 = vld [vmem:[%s3723] sm:$0xf]
  %v3725 = vld [vmem:[%s3723 + $0x4] sm:$0xf]
  %v3726 = vld [vmem:[%s3723 + $0x8] sm:$0xf]
  %v3727 = vld [vmem:[%s3723 + $0xc] sm:$0xf]
  %v3728 = vld [vmem:[%s3723 + $0x10] sm:$0xf]
  %v3729 = vld [vmem:[%s3723 + $0x14] sm:$0xf]
  %v3730 = vld [vmem:[%s3723 + $0x18] sm:$0xf]
  %v3731 = vld [vmem:[%s3723 + $0x1c] sm:$0xf]
  %v3732 = vrot.slane %v3635, 1
  %v3733 = vsel %vm2945, %v3636, %v3732
  %v3734 = vrot.slane %v3637, 7
  %v3735 = vsel %vm2948, %v3734, %v3733
  %v3736 = vrot.slane %v3638, 6
  %v3737 = vsel %vm2951, %v3736, %v3735
  %v3738 = vrot.slane %v3639, 5
  %v3739 = vsel %vm2954, %v3738, %v3737
  %v3740 = vrot.slane %v3640, 4
  %v3741 = vsel %vm2957, %v3740, %v3739
  %v3742 = vrot.slane %v3641, 3
  %v3743 = vsel %vm2960, %v3742, %v3741
  %v3744 = vrot.slane %v3642, 2
  %v3745 = vsel %vm2963, %v3744, %v3743
  %v3746 = vrot.slane %v3643, 1
  %v3747 = vsel %vm2945, %v3644, %v3746
  %v3748 = vrot.slane %v3645, 7
  %v3749 = vsel %vm2948, %v3748, %v3747
  %v3750 = vrot.slane %v3646, 6
  %v3751 = vsel %vm2951, %v3750, %v3749
  %v3752 = vrot.slane %v3647, 5
  %v3753 = vsel %vm2954, %v3752, %v3751
  %v3754 = vrot.slane %v3648, 4
  %v3755 = vsel %vm2957, %v3754, %v3753
  %v3756 = vrot.slane %v3649, 3
  %v3757 = vsel %vm2960, %v3756, %v3755
  %v3758 = vrot.slane %v3650, 2
  %v3759 = vsel %vm2963, %v3758, %v3757
  %v3760 = vpack.c.b16 %v3759, %v3745
  %v3769 = vunpack.c.l.b16 %v3724
  %v3770 = vunpack.c.l.b16 %v3725
  %v3771 = vunpack.c.l.b16 %v3726
  %v3772 = vunpack.c.l.b16 %v3727
  %v3773 = vunpack.c.l.b16 %v3728
  %v3774 = vunpack.c.l.b16 %v3729
  %v3775 = vunpack.c.l.b16 %v3730
  %v3776 = vunpack.c.l.b16 %v3731
  %v3777 = vpack.c.b16 %v3770, %v3769
  %v3778 = vpack.c.b16 %v3772, %v3771
  %v3779 = vpack.c.b16 %v3774, %v3773
  %v3780 = vpack.c.b16 %v3776, %v3775
  %v3786 = vsel %vm3004, %v3760, 0
  %3788 = vmatpush.bf16.msra.mxu0 0
  %3789 = vmatpush.bf16.msra.mxu0 0
  %3790 = vmatpush.bf16.msra.mxu0 0
  %3791 = vmatpush.bf16.msra.mxu0 0
  %3792 = vmatpush.bf16.msra.mxu0 %v3780
  %3793 = vmatpush.bf16.msra.mxu0 %v3779
  %3794 = vmatpush.bf16.msra.mxu0 %v3778
  %3795 = vmatpush.bf16.msra.mxu0 %v3777
  %3796 = vmatmul.bf16.gmra.mxu0 %v3786
  %v3797 = vpop.f32.mrf.mxu0
  %v3798 = vadd.f32 0.0, %v3797
  %v3799 = vpop.f32.mrf.mxu0
  %v3800 = vadd.f32 0.0, %v3799
  %3801 = vdwg.mxu0
  %v3802 = vadd.f32 %v3721, %v3798
  %v3803 = vadd.f32 %v3722, %v3800
  %s3804 = scalar_lea.vmem %s5, 320
  %v3805 = vld [vmem:[%s3804] sm:$0xf]
  %v3806 = vld [vmem:[%s3804 + $0x4] sm:$0xf]
  %v3807 = vld [vmem:[%s3804 + $0x8] sm:$0xf]
  %v3808 = vld [vmem:[%s3804 + $0xc] sm:$0xf]
  %v3809 = vld [vmem:[%s3804 + $0x10] sm:$0xf]
  %v3810 = vld [vmem:[%s3804 + $0x14] sm:$0xf]
  %v3811 = vld [vmem:[%s3804 + $0x18] sm:$0xf]
  %v3812 = vld [vmem:[%s3804 + $0x1c] sm:$0xf]
  %v3813 = vrot.slane %v3635, 2
  %v3814 = vrot.slane %v3636, 1
  %v3815 = vsel %vm2945, %v3814, %v3813
  %v3816 = vsel %vm2948, %v3637, %v3815
  %v3817 = vrot.slane %v3638, 7
  %v3818 = vsel %vm2951, %v3817, %v3816
  %v3819 = vrot.slane %v3639, 6
  %v3820 = vsel %vm2954, %v3819, %v3818
  %v3821 = vrot.slane %v3640, 5
  %v3822 = vsel %vm2957, %v3821, %v3820
  %v3823 = vrot.slane %v3641, 4
  %v3824 = vsel %vm2960, %v3823, %v3822
  %v3825 = vrot.slane %v3642, 3
  %v3826 = vsel %vm2963, %v3825, %v3824
  %v3827 = vrot.slane %v3643, 2
  %v3828 = vrot.slane %v3644, 1
  %v3829 = vsel %vm2945, %v3828, %v3827
  %v3830 = vsel %vm2948, %v3645, %v3829
  %v3831 = vrot.slane %v3646, 7
  %v3832 = vsel %vm2951, %v3831, %v3830
  %v3833 = vrot.slane %v3647, 6
  %v3834 = vsel %vm2954, %v3833, %v3832
  %v3835 = vrot.slane %v3648, 5
  %v3836 = vsel %vm2957, %v3835, %v3834
  %v3837 = vrot.slane %v3649, 4
  %v3838 = vsel %vm2960, %v3837, %v3836
  %v3839 = vrot.slane %v3650, 3
  %v3840 = vsel %vm2963, %v3839, %v3838
  %v3841 = vpack.c.b16 %v3840, %v3826
  %v3850 = vunpack.c.l.b16 %v3805
  %v3851 = vunpack.c.l.b16 %v3806
  %v3852 = vunpack.c.l.b16 %v3807
  %v3853 = vunpack.c.l.b16 %v3808
  %v3854 = vunpack.c.l.b16 %v3809
  %v3855 = vunpack.c.l.b16 %v3810
  %v3856 = vunpack.c.l.b16 %v3811
  %v3857 = vunpack.c.l.b16 %v3812
  %v3858 = vpack.c.b16 %v3851, %v3850
  %v3859 = vpack.c.b16 %v3853, %v3852
  %v3860 = vpack.c.b16 %v3855, %v3854
  %v3861 = vpack.c.b16 %v3857, %v3856
  %v3867 = vsel %vm3004, %v3841, 0
  %3869 = vmatpush.bf16.msra.mxu0 0
  %3870 = vmatpush.bf16.msra.mxu0 0
  %3871 = vmatpush.bf16.msra.mxu0 0
  %3872 = vmatpush.bf16.msra.mxu0 0
  %3873 = vmatpush.bf16.msra.mxu0 %v3861
  %3874 = vmatpush.bf16.msra.mxu0 %v3860
  %3875 = vmatpush.bf16.msra.mxu0 %v3859
  %3876 = vmatpush.bf16.msra.mxu0 %v3858
  %3877 = vmatmul.bf16.gmra.mxu0 %v3867
  %v3878 = vpop.f32.mrf.mxu0
  %v3879 = vadd.f32 0.0, %v3878
  %v3880 = vpop.f32.mrf.mxu0
  %v3881 = vadd.f32 0.0, %v3880
  %3882 = vdwg.mxu0
  %v3883 = vadd.f32 %v3802, %v3879
  %v3884 = vadd.f32 %v3803, %v3881
  %s3885 = scalar_lea.vmem %s5, 352
  %v3886 = vld [vmem:[%s3885] sm:$0xf]
  %v3887 = vld [vmem:[%s3885 + $0x4] sm:$0xf]
  %v3888 = vld [vmem:[%s3885 + $0x8] sm:$0xf]
  %v3889 = vld [vmem:[%s3885 + $0xc] sm:$0xf]
  %v3890 = vld [vmem:[%s3885 + $0x10] sm:$0xf]
  %v3891 = vld [vmem:[%s3885 + $0x14] sm:$0xf]
  %v3892 = vld [vmem:[%s3885 + $0x18] sm:$0xf]
  %v3893 = vld [vmem:[%s3885 + $0x1c] sm:$0xf]
  %v3894 = vrot.slane %v3635, 3
  %v3895 = vrot.slane %v3636, 2
  %v3896 = vsel %vm2945, %v3895, %v3894
  %v3897 = vrot.slane %v3637, 1
  %v3898 = vsel %vm2948, %v3897, %v3896
  %v3899 = vsel %vm2951, %v3638, %v3898
  %v3900 = vrot.slane %v3639, 7
  %v3901 = vsel %vm2954, %v3900, %v3899
  %v3902 = vrot.slane %v3640, 6
  %v3903 = vsel %vm2957, %v3902, %v3901
  %v3904 = vrot.slane %v3641, 5
  %v3905 = vsel %vm2960, %v3904, %v3903
  %v3906 = vrot.slane %v3642, 4
  %v3907 = vsel %vm2963, %v3906, %v3905
  %v3908 = vrot.slane %v3643, 3
  %v3909 = vrot.slane %v3644, 2
  %v3910 = vsel %vm2945, %v3909, %v3908
  %v3911 = vrot.slane %v3645, 1
  %v3912 = vsel %vm2948, %v3911, %v3910
  %v3913 = vsel %vm2951, %v3646, %v3912
  %v3914 = vrot.slane %v3647, 7
  %v3915 = vsel %vm2954, %v3914, %v3913
  %v3916 = vrot.slane %v3648, 6
  %v3917 = vsel %vm2957, %v3916, %v3915
  %v3918 = vrot.slane %v3649, 5
  %v3919 = vsel %vm2960, %v3918, %v3917
  %v3920 = vrot.slane %v3650, 4
  %v3921 = vsel %vm2963, %v3920, %v3919
  %v3922 = vpack.c.b16 %v3921, %v3907
  %v3931 = vunpack.c.l.b16 %v3886
  %v3932 = vunpack.c.l.b16 %v3887
  %v3933 = vunpack.c.l.b16 %v3888
  %v3934 = vunpack.c.l.b16 %v3889
  %v3935 = vunpack.c.l.b16 %v3890
  %v3936 = vunpack.c.l.b16 %v3891
  %v3937 = vunpack.c.l.b16 %v3892
  %v3938 = vunpack.c.l.b16 %v3893
  %v3939 = vpack.c.b16 %v3932, %v3931
  %v3940 = vpack.c.b16 %v3934, %v3933
  %v3941 = vpack.c.b16 %v3936, %v3935
  %v3942 = vpack.c.b16 %v3938, %v3937
  %v3948 = vsel %vm3004, %v3922, 0
  %3950 = vmatpush.bf16.msra.mxu0 0
  %3951 = vmatpush.bf16.msra.mxu0 0
  %3952 = vmatpush.bf16.msra.mxu0 0
  %3953 = vmatpush.bf16.msra.mxu0 0
  %3954 = vmatpush.bf16.msra.mxu0 %v3942
  %3955 = vmatpush.bf16.msra.mxu0 %v3941
  %3956 = vmatpush.bf16.msra.mxu0 %v3940
  %3957 = vmatpush.bf16.msra.mxu0 %v3939
  %3958 = vmatmul.bf16.gmra.mxu0 %v3948
  %v3959 = vpop.f32.mrf.mxu0
  %v3960 = vadd.f32 0.0, %v3959
  %v3961 = vpop.f32.mrf.mxu0
  %v3962 = vadd.f32 0.0, %v3961
  %3963 = vdwg.mxu0
  %v3964 = vadd.f32 %v3883, %v3960
  %v3965 = vadd.f32 %v3884, %v3962
  %s3966 = scalar_lea.vmem %s5, 384
  %v3967 = vld [vmem:[%s3966] sm:$0xf]
  %v3968 = vld [vmem:[%s3966 + $0x4] sm:$0xf]
  %v3969 = vld [vmem:[%s3966 + $0x8] sm:$0xf]
  %v3970 = vld [vmem:[%s3966 + $0xc] sm:$0xf]
  %v3971 = vld [vmem:[%s3966 + $0x10] sm:$0xf]
  %v3972 = vld [vmem:[%s3966 + $0x14] sm:$0xf]
  %v3973 = vld [vmem:[%s3966 + $0x18] sm:$0xf]
  %v3974 = vld [vmem:[%s3966 + $0x1c] sm:$0xf]
  %v3975 = vrot.slane %v3635, 4
  %v3976 = vrot.slane %v3636, 3
  %v3977 = vsel %vm2945, %v3976, %v3975
  %v3978 = vrot.slane %v3637, 2
  %v3979 = vsel %vm2948, %v3978, %v3977
  %v3980 = vrot.slane %v3638, 1
  %v3981 = vsel %vm2951, %v3980, %v3979
  %v3982 = vsel %vm2954, %v3639, %v3981
  %v3983 = vrot.slane %v3640, 7
  %v3984 = vsel %vm2957, %v3983, %v3982
  %v3985 = vrot.slane %v3641, 6
  %v3986 = vsel %vm2960, %v3985, %v3984
  %v3987 = vrot.slane %v3642, 5
  %v3988 = vsel %vm2963, %v3987, %v3986
  %v3989 = vrot.slane %v3643, 4
  %v3990 = vrot.slane %v3644, 3
  %v3991 = vsel %vm2945, %v3990, %v3989
  %v3992 = vrot.slane %v3645, 2
  %v3993 = vsel %vm2948, %v3992, %v3991
  %v3994 = vrot.slane %v3646, 1
  %v3995 = vsel %vm2951, %v3994, %v3993
  %v3996 = vsel %vm2954, %v3647, %v3995
  %v3997 = vrot.slane %v3648, 7
  %v3998 = vsel %vm2957, %v3997, %v3996
  %v3999 = vrot.slane %v3649, 6
  %v4000 = vsel %vm2960, %v3999, %v3998
  %v4001 = vrot.slane %v3650, 5
  %v4002 = vsel %vm2963, %v4001, %v4000
  %v4003 = vpack.c.b16 %v4002, %v3988
  %v4012 = vunpack.c.l.b16 %v3967
  %v4013 = vunpack.c.l.b16 %v3968
  %v4014 = vunpack.c.l.b16 %v3969
  %v4015 = vunpack.c.l.b16 %v3970
  %v4016 = vunpack.c.l.b16 %v3971
  %v4017 = vunpack.c.l.b16 %v3972
  %v4018 = vunpack.c.l.b16 %v3973
  %v4019 = vunpack.c.l.b16 %v3974
  %v4020 = vpack.c.b16 %v4013, %v4012
  %v4021 = vpack.c.b16 %v4015, %v4014
  %v4022 = vpack.c.b16 %v4017, %v4016
  %v4023 = vpack.c.b16 %v4019, %v4018
  %v4029 = vsel %vm3004, %v4003, 0
  %4031 = vmatpush.bf16.msra.mxu0 0
  %4032 = vmatpush.bf16.msra.mxu0 0
  %4033 = vmatpush.bf16.msra.mxu0 0
  %4034 = vmatpush.bf16.msra.mxu0 0
  %4035 = vmatpush.bf16.msra.mxu0 %v4023
  %4036 = vmatpush.bf16.msra.mxu0 %v4022
  %4037 = vmatpush.bf16.msra.mxu0 %v4021
  %4038 = vmatpush.bf16.msra.mxu0 %v4020
  %4039 = vmatmul.bf16.gmra.mxu0 %v4029
  %v4040 = vpop.f32.mrf.mxu0
  %v4041 = vadd.f32 0.0, %v4040
  %v4042 = vpop.f32.mrf.mxu0
  %v4043 = vadd.f32 0.0, %v4042
  %4044 = vdwg.mxu0
  %v4045 = vadd.f32 %v3964, %v4041
  %v4046 = vadd.f32 %v3965, %v4043
  %s4047 = scalar_lea.vmem %s5, 416
  %v4048 = vld [vmem:[%s4047] sm:$0xf]
  %v4049 = vld [vmem:[%s4047 + $0x4] sm:$0xf]
  %v4050 = vld [vmem:[%s4047 + $0x8] sm:$0xf]
  %v4051 = vld [vmem:[%s4047 + $0xc] sm:$0xf]
  %v4052 = vld [vmem:[%s4047 + $0x10] sm:$0xf]
  %v4053 = vld [vmem:[%s4047 + $0x14] sm:$0xf]
  %v4054 = vld [vmem:[%s4047 + $0x18] sm:$0xf]
  %v4055 = vld [vmem:[%s4047 + $0x1c] sm:$0xf]
  %v4056 = vrot.slane %v3635, 5
  %v4057 = vrot.slane %v3636, 4
  %v4058 = vsel %vm2945, %v4057, %v4056
  %v4059 = vrot.slane %v3637, 3
  %v4060 = vsel %vm2948, %v4059, %v4058
  %v4061 = vrot.slane %v3638, 2
  %v4062 = vsel %vm2951, %v4061, %v4060
  %v4063 = vrot.slane %v3639, 1
  %v4064 = vsel %vm2954, %v4063, %v4062
  %v4065 = vsel %vm2957, %v3640, %v4064
  %v4066 = vrot.slane %v3641, 7
  %v4067 = vsel %vm2960, %v4066, %v4065
  %v4068 = vrot.slane %v3642, 6
  %v4069 = vsel %vm2963, %v4068, %v4067
  %v4070 = vrot.slane %v3643, 5
  %v4071 = vrot.slane %v3644, 4
  %v4072 = vsel %vm2945, %v4071, %v4070
  %v4073 = vrot.slane %v3645, 3
  %v4074 = vsel %vm2948, %v4073, %v4072
  %v4075 = vrot.slane %v3646, 2
  %v4076 = vsel %vm2951, %v4075, %v4074
  %v4077 = vrot.slane %v3647, 1
  %v4078 = vsel %vm2954, %v4077, %v4076
  %v4079 = vsel %vm2957, %v3648, %v4078
  %v4080 = vrot.slane %v3649, 7
  %v4081 = vsel %vm2960, %v4080, %v4079
  %v4082 = vrot.slane %v3650, 6
  %v4083 = vsel %vm2963, %v4082, %v4081
  %v4084 = vpack.c.b16 %v4083, %v4069
  %v4093 = vunpack.c.l.b16 %v4048
  %v4094 = vunpack.c.l.b16 %v4049
  %v4095 = vunpack.c.l.b16 %v4050
  %v4096 = vunpack.c.l.b16 %v4051
  %v4097 = vunpack.c.l.b16 %v4052
  %v4098 = vunpack.c.l.b16 %v4053
  %v4099 = vunpack.c.l.b16 %v4054
  %v4100 = vunpack.c.l.b16 %v4055
  %v4101 = vpack.c.b16 %v4094, %v4093
  %v4102 = vpack.c.b16 %v4096, %v4095
  %v4103 = vpack.c.b16 %v4098, %v4097
  %v4104 = vpack.c.b16 %v4100, %v4099
  %v4110 = vsel %vm3004, %v4084, 0
  %4112 = vmatpush.bf16.msra.mxu0 0
  %4113 = vmatpush.bf16.msra.mxu0 0
  %4114 = vmatpush.bf16.msra.mxu0 0
  %4115 = vmatpush.bf16.msra.mxu0 0
  %4116 = vmatpush.bf16.msra.mxu0 %v4104
  %4117 = vmatpush.bf16.msra.mxu0 %v4103
  %4118 = vmatpush.bf16.msra.mxu0 %v4102
  %4119 = vmatpush.bf16.msra.mxu0 %v4101
  %4120 = vmatmul.bf16.gmra.mxu0 %v4110
  %v4121 = vpop.f32.mrf.mxu0
  %v4122 = vadd.f32 0.0, %v4121
  %v4123 = vpop.f32.mrf.mxu0
  %v4124 = vadd.f32 0.0, %v4123
  %4125 = vdwg.mxu0
  %v4126 = vadd.f32 %v4045, %v4122
  %v4127 = vadd.f32 %v4046, %v4124
  %s4128 = scalar_lea.vmem %s5, 448
  %v4129 = vld [vmem:[%s4128] sm:$0xf]
  %v4130 = vld [vmem:[%s4128 + $0x4] sm:$0xf]
  %v4131 = vld [vmem:[%s4128 + $0x8] sm:$0xf]
  %v4132 = vld [vmem:[%s4128 + $0xc] sm:$0xf]
  %v4133 = vld [vmem:[%s4128 + $0x10] sm:$0xf]
  %v4134 = vld [vmem:[%s4128 + $0x14] sm:$0xf]
  %v4135 = vld [vmem:[%s4128 + $0x18] sm:$0xf]
  %v4136 = vld [vmem:[%s4128 + $0x1c] sm:$0xf]
  %v4137 = vrot.slane %v3635, 6
  %v4138 = vrot.slane %v3636, 5
  %v4139 = vsel %vm2945, %v4138, %v4137
  %v4140 = vrot.slane %v3637, 4
  %v4141 = vsel %vm2948, %v4140, %v4139
  %v4142 = vrot.slane %v3638, 3
  %v4143 = vsel %vm2951, %v4142, %v4141
  %v4144 = vrot.slane %v3639, 2
  %v4145 = vsel %vm2954, %v4144, %v4143
  %v4146 = vrot.slane %v3640, 1
  %v4147 = vsel %vm2957, %v4146, %v4145
  %v4148 = vsel %vm2960, %v3641, %v4147
  %v4149 = vrot.slane %v3642, 7
  %v4150 = vsel %vm2963, %v4149, %v4148
  %v4151 = vrot.slane %v3643, 6
  %v4152 = vrot.slane %v3644, 5
  %v4153 = vsel %vm2945, %v4152, %v4151
  %v4154 = vrot.slane %v3645, 4
  %v4155 = vsel %vm2948, %v4154, %v4153
  %v4156 = vrot.slane %v3646, 3
  %v4157 = vsel %vm2951, %v4156, %v4155
  %v4158 = vrot.slane %v3647, 2
  %v4159 = vsel %vm2954, %v4158, %v4157
  %v4160 = vrot.slane %v3648, 1
  %v4161 = vsel %vm2957, %v4160, %v4159
  %v4162 = vsel %vm2960, %v3649, %v4161
  %v4163 = vrot.slane %v3650, 7
  %v4164 = vsel %vm2963, %v4163, %v4162
  %v4165 = vpack.c.b16 %v4164, %v4150
  %v4174 = vunpack.c.l.b16 %v4129
  %v4175 = vunpack.c.l.b16 %v4130
  %v4176 = vunpack.c.l.b16 %v4131
  %v4177 = vunpack.c.l.b16 %v4132
  %v4178 = vunpack.c.l.b16 %v4133
  %v4179 = vunpack.c.l.b16 %v4134
  %v4180 = vunpack.c.l.b16 %v4135
  %v4181 = vunpack.c.l.b16 %v4136
  %v4182 = vpack.c.b16 %v4175, %v4174
  %v4183 = vpack.c.b16 %v4177, %v4176
  %v4184 = vpack.c.b16 %v4179, %v4178
  %v4185 = vpack.c.b16 %v4181, %v4180
  %v4191 = vsel %vm3004, %v4165, 0
  %4193 = vmatpush.bf16.msra.mxu0 0
  %4194 = vmatpush.bf16.msra.mxu0 0
  %4195 = vmatpush.bf16.msra.mxu0 0
  %4196 = vmatpush.bf16.msra.mxu0 0
  %4197 = vmatpush.bf16.msra.mxu0 %v4185
  %4198 = vmatpush.bf16.msra.mxu0 %v4184
  %4199 = vmatpush.bf16.msra.mxu0 %v4183
  %4200 = vmatpush.bf16.msra.mxu0 %v4182
  %4201 = vmatmul.bf16.gmra.mxu0 %v4191
  %v4202 = vpop.f32.mrf.mxu0
  %v4203 = vadd.f32 0.0, %v4202
  %v4204 = vpop.f32.mrf.mxu0
  %v4205 = vadd.f32 0.0, %v4204
  %4206 = vdwg.mxu0
  %v4207 = vadd.f32 %v4126, %v4203
  %v4208 = vadd.f32 %v4127, %v4205
  %s4209 = scalar_lea.vmem %s5, 480
  %v4210 = vld [vmem:[%s4209] sm:$0xf]
  %v4211 = vld [vmem:[%s4209 + $0x4] sm:$0xf]
  %v4212 = vld [vmem:[%s4209 + $0x8] sm:$0xf]
  %v4213 = vld [vmem:[%s4209 + $0xc] sm:$0xf]
  %v4214 = vld [vmem:[%s4209 + $0x10] sm:$0xf]
  %v4215 = vld [vmem:[%s4209 + $0x14] sm:$0xf]
  %v4216 = vld [vmem:[%s4209 + $0x18] sm:$0xf]
  %v4217 = vld [vmem:[%s4209 + $0x1c] sm:$0xf]
  %v4218 = vrot.slane %v3635, 7
  %v4219 = vrot.slane %v3636, 6
  %v4220 = vsel %vm2945, %v4219, %v4218
  %v4221 = vrot.slane %v3637, 5
  %v4222 = vsel %vm2948, %v4221, %v4220
  %v4223 = vrot.slane %v3638, 4
  %v4224 = vsel %vm2951, %v4223, %v4222
  %v4225 = vrot.slane %v3639, 3
  %v4226 = vsel %vm2954, %v4225, %v4224
  %v4227 = vrot.slane %v3640, 2
  %v4228 = vsel %vm2957, %v4227, %v4226
  %v4229 = vrot.slane %v3641, 1
  %v4230 = vsel %vm2960, %v4229, %v4228
  %v4231 = vsel %vm2963, %v3642, %v4230
  %v4232 = vrot.slane %v3643, 7
  %v4233 = vrot.slane %v3644, 6
  %v4234 = vsel %vm2945, %v4233, %v4232
  %v4235 = vrot.slane %v3645, 5
  %v4236 = vsel %vm2948, %v4235, %v4234
  %v4237 = vrot.slane %v3646, 4
  %v4238 = vsel %vm2951, %v4237, %v4236
  %v4239 = vrot.slane %v3647, 3
  %v4240 = vsel %vm2954, %v4239, %v4238
  %v4241 = vrot.slane %v3648, 2
  %v4242 = vsel %vm2957, %v4241, %v4240
  %v4243 = vrot.slane %v3649, 1
  %v4244 = vsel %vm2960, %v4243, %v4242
  %v4245 = vsel %vm2963, %v3650, %v4244
  %v4246 = vpack.c.b16 %v4245, %v4231
  %v4255 = vunpack.c.l.b16 %v4210
  %v4256 = vunpack.c.l.b16 %v4211
  %v4257 = vunpack.c.l.b16 %v4212
  %v4258 = vunpack.c.l.b16 %v4213
  %v4259 = vunpack.c.l.b16 %v4214
  %v4260 = vunpack.c.l.b16 %v4215
  %v4261 = vunpack.c.l.b16 %v4216
  %v4262 = vunpack.c.l.b16 %v4217
  %v4263 = vpack.c.b16 %v4256, %v4255
  %v4264 = vpack.c.b16 %v4258, %v4257
  %v4265 = vpack.c.b16 %v4260, %v4259
  %v4266 = vpack.c.b16 %v4262, %v4261
  %v4272 = vsel %vm3004, %v4246, 0
  %4274 = vmatpush.bf16.msra.mxu0 0
  %4275 = vmatpush.bf16.msra.mxu0 0
  %4276 = vmatpush.bf16.msra.mxu0 0
  %4277 = vmatpush.bf16.msra.mxu0 0
  %4278 = vmatpush.bf16.msra.mxu0 %v4266
  %4279 = vmatpush.bf16.msra.mxu0 %v4265
  %4280 = vmatpush.bf16.msra.mxu0 %v4264
  %4281 = vmatpush.bf16.msra.mxu0 %v4263
  %4282 = vmatmul.bf16.gmra.mxu0 %v4272
  %v4283 = vpop.f32.mrf.mxu0
  %v4284 = vadd.f32 0.0, %v4283
  %v4285 = vpop.f32.mrf.mxu0
  %v4286 = vadd.f32 0.0, %v4285
  %4287 = vdwg.mxu0
  %v4288 = vadd.f32 %v4207, %v4284
  %v4289 = vadd.f32 %v4208, %v4286
  %v4290 = vld [vmem:[%s6] sm:$0x1]
  %v4292 = vperm.slane %v4290, 0
  %v4294 = vadd.f32 %v4288, %v4292
  %v4295 = vadd.f32 %v4289, %v4292
  %4296 = vmax.xlane.f32.xlu0 %v4294
  %v4297 = vpop.xlane.xlu0 %4296
  %4298 = vmax.xlane.f32.xlu0 %v4295
  %v4299 = vpop.xlane.xlu0 %4298
  %v4300 = vsub.f32 %v4294, %v4297
  %v4301 = vsub.f32 %v4295, %v4299
  %v4302 = vmul.f32 %v4300, 1.442695
  %v4303 = vpow.pop %v4302
  %v4304 = vmul.f32 %v4301, 1.442695
  %v4305 = vpow.pop %v4304
  %4306 = vadd.xlane.f32.xlu0 %v4303
  %v4307 = vpop.xlane.xlu0 %4306
  %4308 = vadd.xlane.f32.xlu0 %v4305
  %v4309 = vpop.xlane.xlu0 %4308
  %v4310 = vlog2.pop %v4307
  %v4311 = vmul.f32 %v4310, 0.6931472
  %v4312 = vlog2.pop %v4309
  %v4313 = vmul.f32 %v4312, 0.6931472
  %v4314 = vadd.f32 %v4311, %v4297
  %v4315 = vadd.f32 %v4313, %v4299
  %v4316 = vsub.f32 %v4294, %v4314
  %v4317 = vsub.f32 %v4295, %v4315
  %4318 = vst [vmem:[%s7] sm:$0xff] %v4316
  %4319 = vst [vmem:[%s7 + $0x8] sm:$0xff] %v4317
  // Predicated region
  $region30: #{_lambda_.3} parent=0 // pred_check
    _
  $region31: #{_lambda_.3} parent=0 // pred_check_branch
    %4321 = sbr.rel (0) target = $region33
  $region32: #{_lambda_.3} parent=0 // pred_region
    _
  $region33: #{_lambda_.3} parent=0 // pred_fallthru
    _
  // Predicated region
  $region34: #{_lambda_.3} parent=0 // pred_check
    _
  $region35: #{_lambda_.3} parent=0 // pred_check_branch
    %4323 = sbr.rel (0) target = $region37
  $region36: #{_lambda_.3} parent=0 // pred_region
    _
  $region37: #{_lambda_.3} parent=0 // pred_fallthru
    _

</llo_original>
